<compile_context>
chip_gen: v7x
topology: tpu7x:2x2x1
jax: 0.10.0
libtpu: 0.0.40
codegen_flags: <defaults>
</compile_context>

<pallas_src>
import functools

import jax
import jax.numpy as jnp
from jax import lax
from jax.experimental import pallas as pl
from jax.experimental.pallas import tpu as pltpu


# ------------------------------ fused kernel -------------------------------

def _rat_layer_kernel(enc_ref, dec_ref, pos_ref,
                      wsq_ref, bsq_ref, bhd_ref, lng_ref, lnb_ref,
                      w1_ref, b1_ref, w2_ref, b2_ref,
                      o_ref, merge_ref, *, num_heads, tau, bblk):
    R, E = dec_ref.shape                    # R = bblk * T rows per grid step
    Bb = bblk
    T = R // Bb
    H = num_heads
    hd = E // H
    N = H * Bb                              # flattened (head-major, batch) attention batch
    scale = hd ** -0.5
    bf16, f32 = jnp.bfloat16, jnp.float32

    # ---- invariants hoisted once (review: don't rebuild band mask / pad counts per call) ----
    t_i = lax.broadcasted_iota(jnp.int32, (T, T), 0)
    s_i = lax.broadcasted_iota(jnp.int32, (T, T), 1)
    band3 = ((s_i <= t_i) & (s_i >= t_i - (tau - 1)))[None]              # (1, T, T)
    n_pad3 = jnp.maximum(
        (tau - 1) - lax.broadcasted_iota(jnp.int32, (T, 1), 0), 0
    ).astype(f32)[None]                                                  # (1, T, 1)

    # ---- helpers (all intermediates stay in VMEM / vregs) ----
    def dense(x2d, wi):                     # (R, E) -> (R, E); bf16 MXU, f32 accumulate
        return (jnp.dot(x2d.astype(bf16), wsq_ref[wi],
                        preferred_element_type=f32) + bsq_ref[wi])

    def split_heads(y2d):                   # (R, E) -> (N, T, hd), n = h * Bb + b
        cols = [y2d[:, h * hd:(h + 1) * hd] for h in range(H)]           # (R, hd) each
        return jnp.stack(cols, axis=0).reshape(N, T, hd)

    def merge_heads(xn):                    # (N, T, hd) -> (R, E) via VMEM scratch scatter
        xh = xn.reshape(H, R, hd)
        for h in range(H):
            merge_ref[:, h * hd:(h + 1) * hd] = xh[h]
        return merge_ref[...]

    def qk(a, b):                           # (N,T,hd),(N,S,hd) -> (N,T,S)
        return jnp.einsum('ntd,nsd->nts', a.astype(bf16), b.astype(bf16),
                          preferred_element_type=f32)

    def pv(p, v):                           # (N,T,S),(N,S,hd) -> (N,T,hd)
        return jnp.einsum('nts,nsd->ntd', p.astype(bf16), v.astype(bf16),
                          preferred_element_type=f32)

    def ca_block(query, key, value, wi):
        """CABlock: ONE shared proj on q/k/v, tau-wide causal window; zero-pad window slots
        pass through the proj, i.e. contribute its bias as key/value."""
        qp = dense(query, wi)
        kp = qp if key is query else dense(key, wi)
        if value is query:
            vp = qp
        elif value is key:
            vp = kp
        else:
            vp = dense(value, wi)
        qh = split_heads(qp)
        kh = qh if kp is qp else split_heads(kp)
        if vp is qp:
            vh = qh
        elif vp is kp:
            vh = kh
        else:
            vh = split_heads(vp)

        bh = bhd_ref[wi]                                                 # (N, 1, hd)
        s = qk(qh, kh) * scale                                           # (N, T, T)
        s = jnp.where(band3, s, -1e30)
        s_pad = jnp.sum(qh * bh, axis=-1, keepdims=True) * scale         # (N, T, 1)
        m = jnp.maximum(jnp.max(s, axis=-1, keepdims=True), s_pad)
        p = jnp.where(band3, jnp.exp(s - m), 0.0)
        p_pad = n_pad3 * jnp.exp(s_pad - m)                              # (N, T, 1)
        denom = jnp.sum(p, axis=-1, keepdims=True) + p_pad
        ctx = pv(p, vh) + p_pad * bh                                     # (N, T, hd)
        return ctx * pl.reciprocal(denom, approx=True)

    def mha(qh, kh, vh):                    # full softmax attention, (head,batch)-batched
        s = qk(qh, kh) * scale
        m = jnp.max(s, axis=-1, keepdims=True)
        p = jnp.exp(s - m)
        l = jnp.sum(p, axis=-1, keepdims=True)
        return pv(p, vh) * pl.reciprocal(l, approx=True)

    def context_attention_block(query, key, value, wi):
        # NOTE: reference forward never applies output_proj, so neither do we.
        qh = ca_block(query, key, value, wi)
        kh = ca_block(key, query, value, wi + 1)
        vh = split_heads(dense(value, wi + 2))
        return merge_heads(mha(qh, kh, vh))                              # (R, E)

    def rel_attention(x, wi):               # nn.MultiheadAttention-style
        qh = split_heads(dense(x, wi))
        kh = split_heads(dense(x, wi + 1))
        vh = split_heads(dense(x, wi + 2))
        return dense(merge_heads(mha(qh, kh, vh)), wi + 3)

    def layer_norm(z, i):                   # LayerNorm over embed axis, eps=1e-5
        mu = jnp.mean(z, axis=-1, keepdims=True)
        var = jnp.mean((z - mu) ** 2, axis=-1, keepdims=True)
        return (z - mu) * lax.rsqrt(var + 1e-5) * lng_ref[i] + lnb_ref[i]

    def mlp(x):
        h = (jnp.dot(x.astype(bf16), w1_ref[...], preferred_element_type=f32)
             + b1_ref[...])
        h = 0.5 * h * (1.0 + lax.erf(h * 0.7071067811865476))           # exact GELU, f32
        return (jnp.dot(h.astype(bf16), w2_ref[...], preferred_element_type=f32)
                + b2_ref[...])

    # ---- the decoder layer for one block of batch elements ----
    x0 = dec_ref[...] + pos_ref[...]                                     # (R, E)
    enc = enc_ref[...]

    x1 = context_attention_block(x0, x0, x0, 0)                          # weights 0..2
    x2 = rel_attention(x1, 3)                                            # weights 3..6
    xa = layer_norm(x0 + x2, 0)
    x3 = context_attention_block(xa, enc, enc, 7)                        # weights 7..9
    xb = layer_norm(xa + x3, 1)
    x4 = mlp(xb)
    o_ref[...] = layer_norm(xb + x4, 2).astype(o_ref.dtype)


# ------------------------------- wrapper ------------------------------------

def _pick_batch_block(batch, tokens, row_target=128, row_cap=1024):
    """Largest batch block whose row count stays VMEM-friendly; prefer >= row_target rows so
    dense / MLP matmuls fill the MXU's M dimension (review item 1)."""
    divisors = [c for c in range(1, batch + 1) if batch % c == 0]
    valid = [c for c in divisors if c == batch or (c * tokens) % 8 == 0]
    capped = [c for c in valid if c * tokens <= row_cap] or valid[:1]
    for c in capped:
        if c * tokens >= row_target:
            return c
    return capped[-1]


def rat_decoder_layer(params, enc_output, dec_input, *, num_heads, tau,
                      batch_block=None):
    B, T, E = dec_input.shape
    H = num_heads
    hd = E // H
    assert hd * H == E, "embed_dim must be divisible by num_heads"
    pos = params["pos_enc"].astype(jnp.float32)
    assert pos.shape == (T, E), "num_tokens must equal window_size"

    Bblk = _pick_batch_block(B, T) if batch_block is None else batch_block
    assert B % Bblk == 0, "batch must be divisible by the batch block"
    nblk = B // Bblk
    R = Bblk * T
    N = H * Bblk
    H4 = params["mlp_w1"].shape[1]

    sa1, sa2, ra = params["seq_attn_1"], params["seq_attn_2"], params["rel_attn"]
    w_list = [sa1["q_w"], sa1["k_w"], sa1["v_w"],
              ra["wq"], ra["wk"], ra["wv"], ra["wo"],
              sa2["q_w"], sa2["k_w"], sa2["v_w"]]
    b_list = [sa1["q_b"], sa1["k_b"], sa1["v_b"],
              ra["bq"], ra["bk"], ra["bv"], ra["bo"],
              sa2["q_b"], sa2["k_b"], sa2["v_b"]]
    wsq = jnp.stack(w_list, axis=0).astype(jnp.bfloat16)                  # (10, E, E)
    bflat = jnp.stack(b_list, axis=0).astype(jnp.float32)                 # (10, E)
    bsq = bflat.reshape(10, 1, E)
    # Per-head pad biases, pre-split and pre-repeated over the batch block in head-major
    # (n = h*Bblk + b) order -> no bias head-splitting inside the kernel (review item E).
    bhd = jnp.broadcast_to(bflat.reshape(10, H, 1, 1, hd),
                           (10, H, Bblk, 1, hd)).reshape(10, N, 1, hd)
    lng = jnp.stack([params["ln1_g"], params["ln2_g"], params["ln3_g"]],
                    axis=0).astype(jnp.float32).reshape(3, 1, E)
    lnb = jnp.stack([params["ln1_b"], params["ln2_b"], params["ln3_b"]],
                    axis=0).astype(jnp.float32).reshape(3, 1, E)
    w1 = params["mlp_w1"].astype(jnp.bfloat16)                            # (E, 4E)
    b1 = params["mlp_b1"].astype(jnp.float32).reshape(1, H4)
    w2 = params["mlp_w2"].astype(jnp.bfloat16)                            # (4E, E)
    b2 = params["mlp_b2"].astype(jnp.float32).reshape(1, E)

    enc2d = enc_output.astype(jnp.float32).reshape(B * T, E)
    dec2d = dec_input.astype(jnp.float32).reshape(B * T, E)
    pos_t = jnp.tile(pos, (Bblk, 1))                                      # (R, E)

    kernel = functools.partial(_rat_layer_kernel, num_heads=H, tau=tau, bblk=Bblk)

    cost = pl.CostEstimate(
        flops=int(2 * B * T * E * E * 18 + 4 * B * T * E * H4
                  + 28 * H * B * T * T * hd),
        transcendentals=int(B * (7 * H * T * T + 8 * H * T + T * H4 + 3 * T)),
        bytes_accessed=int(4 * 3 * B * T * E + 2 * (10 * E * E + 2 * E * H4)
                           + 4 * (R * E + 10 * N * hd + 16 * E + H4)),
    )

    # Explicit scoped-VMEM budget (review: defaults are 16/32 MiB and the fused kernel keeps
    # everything resident); rough residency estimate with headroom, clamped.
    act_bytes = 4 * (24 * R * E + 3 * R * H4 + 10 * N * T * T)
    wgt_bytes = 2 * (10 * E * E + 2 * E * H4) + 4 * (R * E + 10 * N * hd + 16 * E + H4)
    vmem_limit = int(min(96 * 2 ** 20, max(32 * 2 ** 20, 3 * (act_bytes + wgt_bytes))))

    out2d = pl.pallas_call(
        kernel,
        out_shape=jax.ShapeDtypeStruct((B * T, E), jnp.float32),
        grid=(nblk,),
        in_specs=[
            pl.BlockSpec((R, E), lambda b: (b, 0)),              # enc (row-flattened)
            pl.BlockSpec((R, E), lambda b: (b, 0)),              # dec (row-flattened)
            pl.BlockSpec((R, E), lambda b: (0, 0)),              # pos, tiled to R rows
            pl.BlockSpec((10, E, E), lambda b: (0, 0, 0)),       # square weights (bf16)
            pl.BlockSpec((10, 1, E), lambda b: (0, 0, 0)),       # merged biases
            pl.BlockSpec((10, N, 1, hd), lambda b: (0, 0, 0, 0)),  # per-head pad biases
            pl.BlockSpec((3, 1, E), lambda b: (0, 0, 0)),        # LN gammas
            pl.BlockSpec((3, 1, E), lambda b: (0, 0, 0)),        # LN betas
            pl.BlockSpec((E, H4), lambda b: (0, 0)),             # mlp w1 (bf16)
            pl.BlockSpec((1, H4), lambda b: (0, 0)),             # mlp b1
            pl.BlockSpec((H4, E), lambda b: (0, 0)),             # mlp w2 (bf16)
            pl.BlockSpec((1, E), lambda b: (0, 0)),              # mlp b2
        ],
        out_specs=pl.BlockSpec((R, E), lambda b: (b, 0)),
        scratch_shapes=[pltpu.VMEM((R, E), jnp.float32)],        # head-merge scatter buffer
        compiler_params=pltpu.CompilerParams(
            dimension_semantics=("parallel",),
            vmem_limit_bytes=vmem_limit),
        cost_estimate=cost,
    )(enc2d, dec2d, pos_t, wsq, bsq, bhd, lng, lnb, w1, b1, w2, b2)

    return out2d.reshape(B, T, E)


# ------------------------- deterministic parameters ------------------------

def init_params(key, embed_dim, window_size):
    E = embed_dim

    def lin(k, fin, fout, scale=0.05):
        kw, kb = jax.random.split(k)
        return (scale * jax.random.normal(kw, (fin, fout), jnp.float32),
                scale * jax.random.normal(kb, (fout,), jnp.float32))

    def ca_params(k):
        k1, k2, k3 = jax.random.split(k, 3)
        qw, qb = lin(k1, E, E)
        kw_, kb_ = lin(k2, E, E)
        vw, vb = lin(k3, E, E)
        return {"q_w": qw, "q_b": qb, "k_w": kw_, "k_b": kb_, "v_w": vw, "v_b": vb}

    ks = jax.random.split(key, 6)
    kr = jax.random.split(ks[2], 4)
    wq, bq = lin(kr[0], E, E)
    wk, bk = lin(kr[1], E, E)
    wv, bv = lin(kr[2], E, E)
    wo, bo = lin(kr[3], E, E)
    w1, b1 = lin(ks[3], E, 4 * E)
    w2, b2 = lin(ks[4], 4 * E, E)
    ones = jnp.ones((E,), jnp.float32)
    zeros = jnp.zeros((E,), jnp.float32)
    return {
        "pos_enc": 0.1 * jax.random.normal(ks[5], (window_size, E), jnp.float32),
        "seq_attn_1": ca_params(ks[0]),
        "seq_attn_2": ca_params(ks[1]),
        "rel_attn": {"wq": wq, "bq": bq, "wk": wk, "bk": bk,
                     "wv": wv, "bv": bv, "wo": wo, "bo": bo},
        "ln1_g": ones, "ln1_b": zeros,
        "ln2_g": ones, "ln2_b": zeros,
        "ln3_g": ones, "ln3_b": zeros,
        "mlp_w1": w1, "mlp_b1": b1, "mlp_w2": w2, "mlp_b2": b2,
    }


if __name__ == "__main__":
    B, W, E, H, TAU = 2, 8, 32, 4, 4   # batch, window_size(tokens), embed_dim, heads, tau
    key = jax.random.PRNGKey(0)
    kp, ke, kd = jax.random.split(key, 3)
    params = init_params(kp, E, W)
    enc_output = jax.random.normal(ke, (B, W, E), jnp.float32)
    dec_input = jax.random.normal(kd, (B, W, E), jnp.float32)

    fwd = jax.jit(functools.partial(rat_decoder_layer, num_heads=H, tau=TAU))
    out = fwd(params, enc_output, dec_input)
    jax.block_until_ready(out)
    assert out.shape == (B, W, E) and bool(jnp.all(jnp.isfinite(out)))
    print("KERNEL_OK")
</pallas_src>

<mosaic_0001>
module attributes {stable_mosaic.version = 11 : i64} {
  func.func @_rat_layer_kernel(%arg0: i32, %arg1: memref<16x32xf32, #tpu.memory_space<vmem>>, %arg2: memref<16x32xf32, #tpu.memory_space<vmem>>, %arg3: memref<16x32xf32, #tpu.memory_space<vmem>>, %arg4: memref<10x32x32xbf16, #tpu.memory_space<vmem>>, %arg5: memref<10x1x32xf32, #tpu.memory_space<vmem>>, %arg6: memref<10x8x1x8xf32, #tpu.memory_space<vmem>>, %arg7: memref<3x1x32xf32, #tpu.memory_space<vmem>>, %arg8: memref<3x1x32xf32, #tpu.memory_space<vmem>>, %arg9: memref<32x128xbf16, #tpu.memory_space<vmem>>, %arg10: memref<1x128xf32, #tpu.memory_space<vmem>>, %arg11: memref<128x32xbf16, #tpu.memory_space<vmem>>, %arg12: memref<1x32xf32, #tpu.memory_space<vmem>>, %arg13: memref<16x32xf32, #tpu.memory_space<vmem>>, %arg14: memref<16x32xf32, #tpu.memory_space<vmem>>) attributes {dimension_semantics = [#tpu.dimension_semantics<parallel>], iteration_bounds = array<i64: 1>, scalar_prefetch = 0 : i64, scratch_operands = 1 : i64, tpu.core_type = #tpu.core_type<tc>, window_params = [{transform_indices = @transform_0, window_bounds = array<i64: 16, 32>}, {transform_indices = @transform_1, window_bounds = array<i64: 16, 32>}, {pipeline_mode = #tpu.pipeline_mode<synchronous>, transform_indices = @transform_2, window_bounds = array<i64: 16, 32>}, {pipeline_mode = #tpu.pipeline_mode<synchronous>, transform_indices = @transform_3, window_bounds = array<i64: 10, 32, 32>}, {pipeline_mode = #tpu.pipeline_mode<synchronous>, transform_indices = @transform_4, window_bounds = array<i64: 10, 1, 32>}, {pipeline_mode = #tpu.pipeline_mode<synchronous>, transform_indices = @transform_5, window_bounds = array<i64: 10, 8, 1, 8>}, {pipeline_mode = #tpu.pipeline_mode<synchronous>, transform_indices = @transform_6, window_bounds = array<i64: 3, 1, 32>}, {pipeline_mode = #tpu.pipeline_mode<synchronous>, transform_indices = @transform_7, window_bounds = array<i64: 3, 1, 32>}, {pipeline_mode = #tpu.pipeline_mode<synchronous>, transform_indices = @transform_8, window_bounds = array<i64: 32, 128>}, {pipeline_mode = #tpu.pipeline_mode<synchronous>, transform_indices = @transform_9, window_bounds = array<i64: 1, 128>}, {pipeline_mode = #tpu.pipeline_mode<synchronous>, transform_indices = @transform_10, window_bounds = array<i64: 128, 32>}, {pipeline_mode = #tpu.pipeline_mode<synchronous>, transform_indices = @transform_11, window_bounds = array<i64: 1, 32>}, {transform_indices = @transform_12, window_bounds = array<i64: 16, 32>}]} {
    %0 = tpu.iota {dimensions = array<i32: 0>} : vector<8x8xi32>
    %1 = tpu.iota {dimensions = array<i32: 1>} : vector<8x8xi32>
    %2 = arith.cmpi sle, %1, %0 : vector<8x8xi32>
    %c3_i32 = arith.constant 3 : i32
    %3 = vector.broadcast %c3_i32 : i32 to vector<8x8xi32>
    %4 = arith.subi %0, %3 : vector<8x8xi32>
    %5 = arith.cmpi sge, %1, %4 : vector<8x8xi32>
    %6 = arith.andi %2, %5 : vector<8x8xi1>
    %7 = vector.shape_cast %6 : vector<8x8xi1> to vector<1x8x8xi1>
    %8 = tpu.iota {dimensions = array<i32: 0>} : vector<8x1xi32>
    %c3_i32_0 = arith.constant 3 : i32
    %9 = vector.broadcast %c3_i32_0 : i32 to vector<8x1xi32>
    %10 = arith.subi %9, %8 : vector<8x1xi32>
    %c0_i32 = arith.constant 0 : i32
    %11 = vector.broadcast %c0_i32 : i32 to vector<8x1xi32>
    %12 = arith.maxsi %10, %11 : vector<8x1xi32>
    %13 = arith.sitofp %12 : vector<8x1xi32> to vector<8x1xf32>
    %14 = vector.shape_cast %13 : vector<8x1xf32> to vector<1x8x1xf32>
    %c0 = arith.constant 0 : index
    %c0_1 = arith.constant 0 : index
    %15 = vector.load %arg2[%c0, %c0_1] : memref<16x32xf32, #tpu.memory_space<vmem>>, vector<16x32xf32>
    %c0_2 = arith.constant 0 : index
    %c0_3 = arith.constant 0 : index
    %16 = vector.load %arg3[%c0_2, %c0_3] : memref<16x32xf32, #tpu.memory_space<vmem>>, vector<16x32xf32>
    %17 = arith.addf %15, %16 : vector<16x32xf32>
    %c0_4 = arith.constant 0 : index
    %c0_5 = arith.constant 0 : index
    %18 = vector.load %arg1[%c0_4, %c0_5] : memref<16x32xf32, #tpu.memory_space<vmem>>, vector<16x32xf32>
    %19 = arith.truncf %17 : vector<16x32xf32> to vector<16x32xbf16>
    %c0_6 = arith.constant 0 : index
    %c0_7 = arith.constant 0 : index
    %c0_8 = arith.constant 0 : index
    %20 = vector.load %arg4[%c0_6, %c0_7, %c0_8] : memref<10x32x32xbf16, #tpu.memory_space<vmem>>, vector<1x32x32xbf16>
    %21 = vector.shape_cast %20 : vector<1x32x32xbf16> to vector<32x32xbf16>
    %cst = arith.constant dense<0.000000e+00> : vector<16x32xf32>
    %22 = tpu.matmul %19, %21, %cst {dimension_numbers = #tpu.dot_dimension_numbers<[1], [0], [0], [1], [0, 0, 1, 1], [], []>} : vector<16x32xbf16>, vector<32x32xbf16>, vector<16x32xf32> -> vector<16x32xf32>
    %c0_9 = arith.constant 0 : index
    %c0_10 = arith.constant 0 : index
    %c0_11 = arith.constant 0 : index
    %23 = vector.load %arg5[%c0_9, %c0_10, %c0_11] : memref<10x1x32xf32, #tpu.memory_space<vmem>>, vector<1x1x32xf32>
    %24 = vector.shape_cast %23 : vector<1x1x32xf32> to vector<1x32xf32>
    %25 = vector.broadcast %24 : vector<1x32xf32> to vector<16x32xf32>
    %26 = arith.addf %22, %25 : vector<16x32xf32>
    %27 = vector.extract_strided_slice %26 {offsets = [0, 0], sizes = [16, 8], strides = [1, 1]} : vector<16x32xf32> to vector<16x8xf32>
    %28 = vector.extract_strided_slice %26 {offsets = [0, 8], sizes = [16, 8], strides = [1, 1]} : vector<16x32xf32> to vector<16x8xf32>
    %29 = vector.extract_strided_slice %26 {offsets = [0, 16], sizes = [16, 8], strides = [1, 1]} : vector<16x32xf32> to vector<16x8xf32>
    %30 = vector.extract_strided_slice %26 {offsets = [0, 24], sizes = [16, 8], strides = [1, 1]} : vector<16x32xf32> to vector<16x8xf32>
    %31 = vector.shape_cast %27 : vector<16x8xf32> to vector<1x16x8xf32>
    %32 = vector.shape_cast %28 : vector<16x8xf32> to vector<1x16x8xf32>
    %33 = vector.shape_cast %29 : vector<16x8xf32> to vector<1x16x8xf32>
    %34 = vector.shape_cast %30 : vector<16x8xf32> to vector<1x16x8xf32>
    %35 = tpu.concatenate %31, %32, %33, %34 in 0 : vector<1x16x8xf32>, vector<1x16x8xf32>, vector<1x16x8xf32>, vector<1x16x8xf32> -> vector<4x16x8xf32>
    %36 = vector.shape_cast %35 : vector<4x16x8xf32> to vector<8x8x8xf32>
    %c0_12 = arith.constant 0 : index
    %c0_13 = arith.constant 0 : index
    %c0_14 = arith.constant 0 : index
    %c0_15 = arith.constant 0 : index
    %37 = vector.load %arg6[%c0_12, %c0_13, %c0_14, %c0_15] : memref<10x8x1x8xf32, #tpu.memory_space<vmem>>, vector<1x8x1x8xf32>
    %38 = vector.shape_cast %37 : vector<1x8x1x8xf32> to vector<8x1x8xf32>
    %39 = arith.truncf %36 : vector<8x8x8xf32> to vector<8x8x8xbf16>
    %40 = arith.truncf %36 : vector<8x8x8xf32> to vector<8x8x8xbf16>
    "tpu.trace_start"() <{level = 10 : i32, message = "ntd,nsd->nts"}> : () -> ()
    %cst_16 = arith.constant dense<0.000000e+00> : vector<8x8x8xf32>
    %41 = tpu.matmul %39, %40, %cst_16 {dimension_numbers = #tpu.dot_dimension_numbers<[2], [2], [1], [1], [0, 0, 0, 1, 1, 1], [0], [0]>} : vector<8x8x8xbf16>, vector<8x8x8xbf16>, vector<8x8x8xf32> -> vector<8x8x8xf32>
    "tpu.trace_stop"() : () -> ()
    %cst_17 = arith.constant 0.353553385 : f32
    %42 = vector.broadcast %cst_17 : f32 to vector<8x8x8xf32>
    %43 = arith.mulf %41, %42 : vector<8x8x8xf32>
    %cst_18 = arith.constant -1.000000e+30 : f32
    %44 = vector.shape_cast %7 : vector<1x8x8xi1> to vector<1x8x8xi1>
    %45 = vector.broadcast %44 : vector<1x8x8xi1> to vector<8x8x8xi1>
    %46 = vector.broadcast %cst_18 : f32 to vector<8x8x8xf32>
    %47 = arith.select %45, %43, %46 : vector<8x8x8xi1>, vector<8x8x8xf32>
    %48 = vector.broadcast %38 : vector<8x1x8xf32> to vector<8x8x8xf32>
    %49 = arith.mulf %36, %48 : vector<8x8x8xf32>
    %cst_19 = arith.constant dense<0.000000e+00> : vector<8x8xf32>
    %50 = vector.multi_reduction <add>, %49, %cst_19 [2] : vector<8x8x8xf32> to vector<8x8xf32>
    %51 = vector.shape_cast %50 : vector<8x8xf32> to vector<8x8x1xf32>
    %cst_20 = arith.constant 0.353553385 : f32
    %52 = vector.broadcast %cst_20 : f32 to vector<8x8x1xf32>
    %53 = arith.mulf %51, %52 : vector<8x8x1xf32>
    %cst_21 = arith.constant dense<0xFF800000> : vector<8x8xf32>
    %54 = vector.multi_reduction <maximumf>, %47, %cst_21 [2] : vector<8x8x8xf32> to vector<8x8xf32>
    %55 = vector.shape_cast %54 : vector<8x8xf32> to vector<8x8x1xf32>
    %56 = arith.maximumf %55, %53 : vector<8x8x1xf32>
    %57 = vector.broadcast %56 : vector<8x8x1xf32> to vector<8x8x8xf32>
    %58 = arith.subf %47, %57 : vector<8x8x8xf32>
    %59 = math.exp %58 : vector<8x8x8xf32>
    %cst_22 = arith.constant 0.000000e+00 : f32
    %60 = vector.shape_cast %7 : vector<1x8x8xi1> to vector<1x8x8xi1>
    %61 = vector.broadcast %60 : vector<1x8x8xi1> to vector<8x8x8xi1>
    %62 = vector.broadcast %cst_22 : f32 to vector<8x8x8xf32>
    %63 = arith.select %61, %59, %62 : vector<8x8x8xi1>, vector<8x8x8xf32>
    %64 = arith.subf %53, %56 : vector<8x8x1xf32>
    %65 = math.exp %64 : vector<8x8x1xf32>
    %66 = vector.broadcast %14 : vector<1x8x1xf32> to vector<8x8x1xf32>
    %67 = arith.mulf %66, %65 : vector<8x8x1xf32>
    %cst_23 = arith.constant dense<0.000000e+00> : vector<8x8xf32>
    %68 = vector.multi_reduction <add>, %63, %cst_23 [2] : vector<8x8x8xf32> to vector<8x8xf32>
    %69 = vector.shape_cast %68 : vector<8x8xf32> to vector<8x8x1xf32>
    %70 = arith.addf %69, %67 : vector<8x8x1xf32>
    %71 = arith.truncf %63 : vector<8x8x8xf32> to vector<8x8x8xbf16>
    %72 = arith.truncf %36 : vector<8x8x8xf32> to vector<8x8x8xbf16>
    "tpu.trace_start"() <{level = 10 : i32, message = "nts,nsd->ntd"}> : () -> ()
    %cst_24 = arith.constant dense<0.000000e+00> : vector<8x8x8xf32>
    %73 = tpu.matmul %71, %72, %cst_24 {dimension_numbers = #tpu.dot_dimension_numbers<[2], [1], [1], [2], [0, 0, 0, 1, 1, 2], [0], [0]>} : vector<8x8x8xbf16>, vector<8x8x8xbf16>, vector<8x8x8xf32> -> vector<8x8x8xf32>
    "tpu.trace_stop"() : () -> ()
    %74 = vector.broadcast %67 : vector<8x8x1xf32> to vector<8x8x8xf32>
    %75 = vector.broadcast %38 : vector<8x1x8xf32> to vector<8x8x8xf32>
    %76 = arith.mulf %74, %75 : vector<8x8x8xf32>
    %77 = arith.addf %73, %76 : vector<8x8x8xf32>
    %78 = tpu.reciprocal %70 {approx = true} : vector<8x8x1xf32> -> vector<8x8x1xf32>
    %79 = vector.broadcast %78 : vector<8x8x1xf32> to vector<8x8x8xf32>
    %80 = arith.mulf %77, %79 : vector<8x8x8xf32>
    %81 = arith.truncf %17 : vector<16x32xf32> to vector<16x32xbf16>
    %c1 = arith.constant 1 : index
    %c0_25 = arith.constant 0 : index
    %c0_26 = arith.constant 0 : index
    %82 = vector.load %arg4[%c1, %c0_25, %c0_26] : memref<10x32x32xbf16, #tpu.memory_space<vmem>>, vector<1x32x32xbf16>
    %83 = vector.shape_cast %82 : vector<1x32x32xbf16> to vector<32x32xbf16>
    %cst_27 = arith.constant dense<0.000000e+00> : vector<16x32xf32>
    %84 = tpu.matmul %81, %83, %cst_27 {dimension_numbers = #tpu.dot_dimension_numbers<[1], [0], [0], [1], [0, 0, 1, 1], [], []>} : vector<16x32xbf16>, vector<32x32xbf16>, vector<16x32xf32> -> vector<16x32xf32>
    %c1_28 = arith.constant 1 : index
    %c0_29 = arith.constant 0 : index
    %c0_30 = arith.constant 0 : index
    %85 = vector.load %arg5[%c1_28, %c0_29, %c0_30] : memref<10x1x32xf32, #tpu.memory_space<vmem>>, vector<1x1x32xf32>
    %86 = vector.shape_cast %85 : vector<1x1x32xf32> to vector<1x32xf32>
    %87 = vector.broadcast %86 : vector<1x32xf32> to vector<16x32xf32>
    %88 = arith.addf %84, %87 : vector<16x32xf32>
    %89 = vector.extract_strided_slice %88 {offsets = [0, 0], sizes = [16, 8], strides = [1, 1]} : vector<16x32xf32> to vector<16x8xf32>
    %90 = vector.extract_strided_slice %88 {offsets = [0, 8], sizes = [16, 8], strides = [1, 1]} : vector<16x32xf32> to vector<16x8xf32>
    %91 = vector.extract_strided_slice %88 {offsets = [0, 16], sizes = [16, 8], strides = [1, 1]} : vector<16x32xf32> to vector<16x8xf32>
    %92 = vector.extract_strided_slice %88 {offsets = [0, 24], sizes = [16, 8], strides = [1, 1]} : vector<16x32xf32> to vector<16x8xf32>
    %93 = vector.shape_cast %89 : vector<16x8xf32> to vector<1x16x8xf32>
    %94 = vector.shape_cast %90 : vector<16x8xf32> to vector<1x16x8xf32>
    %95 = vector.shape_cast %91 : vector<16x8xf32> to vector<1x16x8xf32>
    %96 = vector.shape_cast %92 : vector<16x8xf32> to vector<1x16x8xf32>
    %97 = tpu.concatenate %93, %94, %95, %96 in 0 : vector<1x16x8xf32>, vector<1x16x8xf32>, vector<1x16x8xf32>, vector<1x16x8xf32> -> vector<4x16x8xf32>
    %98 = vector.shape_cast %97 : vector<4x16x8xf32> to vector<8x8x8xf32>
    %c1_31 = arith.constant 1 : index
    %c0_32 = arith.constant 0 : index
    %c0_33 = arith.constant 0 : index
    %c0_34 = arith.constant 0 : index
    %99 = vector.load %arg6[%c1_31, %c0_32, %c0_33, %c0_34] : memref<10x8x1x8xf32, #tpu.memory_space<vmem>>, vector<1x8x1x8xf32>
    %100 = vector.shape_cast %99 : vector<1x8x1x8xf32> to vector<8x1x8xf32>
    %101 = arith.truncf %98 : vector<8x8x8xf32> to vector<8x8x8xbf16>
    %102 = arith.truncf %98 : vector<8x8x8xf32> to vector<8x8x8xbf16>
    "tpu.trace_start"() <{level = 10 : i32, message = "ntd,nsd->nts"}> : () -> ()
    %cst_35 = arith.constant dense<0.000000e+00> : vector<8x8x8xf32>
    %103 = tpu.matmul %101, %102, %cst_35 {dimension_numbers = #tpu.dot_dimension_numbers<[2], [2], [1], [1], [0, 0, 0, 1, 1, 1], [0], [0]>} : vector<8x8x8xbf16>, vector<8x8x8xbf16>, vector<8x8x8xf32> -> vector<8x8x8xf32>
    "tpu.trace_stop"() : () -> ()
    %cst_36 = arith.constant 0.353553385 : f32
    %104 = vector.broadcast %cst_36 : f32 to vector<8x8x8xf32>
    %105 = arith.mulf %103, %104 : vector<8x8x8xf32>
    %cst_37 = arith.constant -1.000000e+30 : f32
    %106 = vector.shape_cast %7 : vector<1x8x8xi1> to vector<1x8x8xi1>
    %107 = vector.broadcast %106 : vector<1x8x8xi1> to vector<8x8x8xi1>
    %108 = vector.broadcast %cst_37 : f32 to vector<8x8x8xf32>
    %109 = arith.select %107, %105, %108 : vector<8x8x8xi1>, vector<8x8x8xf32>
    %110 = vector.broadcast %100 : vector<8x1x8xf32> to vector<8x8x8xf32>
    %111 = arith.mulf %98, %110 : vector<8x8x8xf32>
    %cst_38 = arith.constant dense<0.000000e+00> : vector<8x8xf32>
    %112 = vector.multi_reduction <add>, %111, %cst_38 [2] : vector<8x8x8xf32> to vector<8x8xf32>
    %113 = vector.shape_cast %112 : vector<8x8xf32> to vector<8x8x1xf32>
    %cst_39 = arith.constant 0.353553385 : f32
    %114 = vector.broadcast %cst_39 : f32 to vector<8x8x1xf32>
    %115 = arith.mulf %113, %114 : vector<8x8x1xf32>
    %cst_40 = arith.constant dense<0xFF800000> : vector<8x8xf32>
    %116 = vector.multi_reduction <maximumf>, %109, %cst_40 [2] : vector<8x8x8xf32> to vector<8x8xf32>
    %117 = vector.shape_cast %116 : vector<8x8xf32> to vector<8x8x1xf32>
    %118 = arith.maximumf %117, %115 : vector<8x8x1xf32>
    %119 = vector.broadcast %118 : vector<8x8x1xf32> to vector<8x8x8xf32>
    %120 = arith.subf %109, %119 : vector<8x8x8xf32>
    %121 = math.exp %120 : vector<8x8x8xf32>
    %cst_41 = arith.constant 0.000000e+00 : f32
    %122 = vector.shape_cast %7 : vector<1x8x8xi1> to vector<1x8x8xi1>
    %123 = vector.broadcast %122 : vector<1x8x8xi1> to vector<8x8x8xi1>
    %124 = vector.broadcast %cst_41 : f32 to vector<8x8x8xf32>
    %125 = arith.select %123, %121, %124 : vector<8x8x8xi1>, vector<8x8x8xf32>
    %126 = arith.subf %115, %118 : vector<8x8x1xf32>
    %127 = math.exp %126 : vector<8x8x1xf32>
    %128 = vector.broadcast %14 : vector<1x8x1xf32> to vector<8x8x1xf32>
    %129 = arith.mulf %128, %127 : vector<8x8x1xf32>
    %cst_42 = arith.constant dense<0.000000e+00> : vector<8x8xf32>
    %130 = vector.multi_reduction <add>, %125, %cst_42 [2] : vector<8x8x8xf32> to vector<8x8xf32>
    %131 = vector.shape_cast %130 : vector<8x8xf32> to vector<8x8x1xf32>
    %132 = arith.addf %131, %129 : vector<8x8x1xf32>
    %133 = arith.truncf %125 : vector<8x8x8xf32> to vector<8x8x8xbf16>
    %134 = arith.truncf %98 : vector<8x8x8xf32> to vector<8x8x8xbf16>
    "tpu.trace_start"() <{level = 10 : i32, message = "nts,nsd->ntd"}> : () -> ()
    %cst_43 = arith.constant dense<0.000000e+00> : vector<8x8x8xf32>
    %135 = tpu.matmul %133, %134, %cst_43 {dimension_numbers = #tpu.dot_dimension_numbers<[2], [1], [1], [2], [0, 0, 0, 1, 1, 2], [0], [0]>} : vector<8x8x8xbf16>, vector<8x8x8xbf16>, vector<8x8x8xf32> -> vector<8x8x8xf32>
    "tpu.trace_stop"() : () -> ()
    %136 = vector.broadcast %129 : vector<8x8x1xf32> to vector<8x8x8xf32>
    %137 = vector.broadcast %100 : vector<8x1x8xf32> to vector<8x8x8xf32>
    %138 = arith.mulf %136, %137 : vector<8x8x8xf32>
    %139 = arith.addf %135, %138 : vector<8x8x8xf32>
    %140 = tpu.reciprocal %132 {approx = true} : vector<8x8x1xf32> -> vector<8x8x1xf32>
    %141 = vector.broadcast %140 : vector<8x8x1xf32> to vector<8x8x8xf32>
    %142 = arith.mulf %139, %141 : vector<8x8x8xf32>
    %143 = arith.truncf %17 : vector<16x32xf32> to vector<16x32xbf16>
    %c2 = arith.constant 2 : index
    %c0_44 = arith.constant 0 : index
    %c0_45 = arith.constant 0 : index
    %144 = vector.load %arg4[%c2, %c0_44, %c0_45] : memref<10x32x32xbf16, #tpu.memory_space<vmem>>, vector<1x32x32xbf16>
    %145 = vector.shape_cast %144 : vector<1x32x32xbf16> to vector<32x32xbf16>
    %cst_46 = arith.constant dense<0.000000e+00> : vector<16x32xf32>
    %146 = tpu.matmul %143, %145, %cst_46 {dimension_numbers = #tpu.dot_dimension_numbers<[1], [0], [0], [1], [0, 0, 1, 1], [], []>} : vector<16x32xbf16>, vector<32x32xbf16>, vector<16x32xf32> -> vector<16x32xf32>
    %c2_47 = arith.constant 2 : index
    %c0_48 = arith.constant 0 : index
    %c0_49 = arith.constant 0 : index
    %147 = vector.load %arg5[%c2_47, %c0_48, %c0_49] : memref<10x1x32xf32, #tpu.memory_space<vmem>>, vector<1x1x32xf32>
    %148 = vector.shape_cast %147 : vector<1x1x32xf32> to vector<1x32xf32>
    %149 = vector.broadcast %148 : vector<1x32xf32> to vector<16x32xf32>
    %150 = arith.addf %146, %149 : vector<16x32xf32>
    %151 = vector.extract_strided_slice %150 {offsets = [0, 0], sizes = [16, 8], strides = [1, 1]} : vector<16x32xf32> to vector<16x8xf32>
    %152 = vector.extract_strided_slice %150 {offsets = [0, 8], sizes = [16, 8], strides = [1, 1]} : vector<16x32xf32> to vector<16x8xf32>
    %153 = vector.extract_strided_slice %150 {offsets = [0, 16], sizes = [16, 8], strides = [1, 1]} : vector<16x32xf32> to vector<16x8xf32>
    %154 = vector.extract_strided_slice %150 {offsets = [0, 24], sizes = [16, 8], strides = [1, 1]} : vector<16x32xf32> to vector<16x8xf32>
    %155 = vector.shape_cast %151 : vector<16x8xf32> to vector<1x16x8xf32>
    %156 = vector.shape_cast %152 : vector<16x8xf32> to vector<1x16x8xf32>
    %157 = vector.shape_cast %153 : vector<16x8xf32> to vector<1x16x8xf32>
    %158 = vector.shape_cast %154 : vector<16x8xf32> to vector<1x16x8xf32>
    %159 = tpu.concatenate %155, %156, %157, %158 in 0 : vector<1x16x8xf32>, vector<1x16x8xf32>, vector<1x16x8xf32>, vector<1x16x8xf32> -> vector<4x16x8xf32>
    %160 = vector.shape_cast %159 : vector<4x16x8xf32> to vector<8x8x8xf32>
    %161 = arith.truncf %80 : vector<8x8x8xf32> to vector<8x8x8xbf16>
    %162 = arith.truncf %142 : vector<8x8x8xf32> to vector<8x8x8xbf16>
    "tpu.trace_start"() <{level = 10 : i32, message = "ntd,nsd->nts"}> : () -> ()
    %cst_50 = arith.constant dense<0.000000e+00> : vector<8x8x8xf32>
    %163 = tpu.matmul %161, %162, %cst_50 {dimension_numbers = #tpu.dot_dimension_numbers<[2], [2], [1], [1], [0, 0, 0, 1, 1, 1], [0], [0]>} : vector<8x8x8xbf16>, vector<8x8x8xbf16>, vector<8x8x8xf32> -> vector<8x8x8xf32>
    "tpu.trace_stop"() : () -> ()
    %cst_51 = arith.constant 0.353553385 : f32
    %164 = vector.broadcast %cst_51 : f32 to vector<8x8x8xf32>
    %165 = arith.mulf %163, %164 : vector<8x8x8xf32>
    %cst_52 = arith.constant dense<0xFF800000> : vector<8x8xf32>
    %166 = vector.multi_reduction <maximumf>, %165, %cst_52 [2] : vector<8x8x8xf32> to vector<8x8xf32>
    %167 = vector.shape_cast %166 : vector<8x8xf32> to vector<8x8x1xf32>
    %168 = vector.broadcast %167 : vector<8x8x1xf32> to vector<8x8x8xf32>
    %169 = arith.subf %165, %168 : vector<8x8x8xf32>
    %170 = math.exp %169 : vector<8x8x8xf32>
    %cst_53 = arith.constant dense<0.000000e+00> : vector<8x8xf32>
    %171 = vector.multi_reduction <add>, %170, %cst_53 [2] : vector<8x8x8xf32> to vector<8x8xf32>
    %172 = vector.shape_cast %171 : vector<8x8xf32> to vector<8x8x1xf32>
    %173 = arith.truncf %170 : vector<8x8x8xf32> to vector<8x8x8xbf16>
    %174 = arith.truncf %160 : vector<8x8x8xf32> to vector<8x8x8xbf16>
    "tpu.trace_start"() <{level = 10 : i32, message = "nts,nsd->ntd"}> : () -> ()
    %cst_54 = arith.constant dense<0.000000e+00> : vector<8x8x8xf32>
    %175 = tpu.matmul %173, %174, %cst_54 {dimension_numbers = #tpu.dot_dimension_numbers<[2], [1], [1], [2], [0, 0, 0, 1, 1, 2], [0], [0]>} : vector<8x8x8xbf16>, vector<8x8x8xbf16>, vector<8x8x8xf32> -> vector<8x8x8xf32>
    "tpu.trace_stop"() : () -> ()
    %176 = tpu.reciprocal %172 {approx = true} : vector<8x8x1xf32> -> vector<8x8x1xf32>
    %177 = vector.broadcast %176 : vector<8x8x1xf32> to vector<8x8x8xf32>
    %178 = arith.mulf %175, %177 : vector<8x8x8xf32>
    %179 = vector.shape_cast %178 : vector<8x8x8xf32> to vector<4x16x8xf32>
    %180 = vector.extract_strided_slice %179 {offsets = [0, 0, 0], sizes = [1, 16, 8], strides = [1, 1, 1]} : vector<4x16x8xf32> to vector<1x16x8xf32>
    %181 = vector.shape_cast %180 : vector<1x16x8xf32> to vector<16x8xf32>
    %c0_55 = arith.constant 0 : index
    %c0_56 = arith.constant 0 : index
    %182 = vector.load %arg14[%c0_55, %c0_56] : memref<16x32xf32, #tpu.memory_space<vmem>>, vector<16x8xf32>
    tpu.vector_store %arg14[%c0_55, %c0_56], %181 {strides = array<i32>} : memref<16x32xf32, #tpu.memory_space<vmem>>, vector<16x8xf32>,
    %183 = vector.extract_strided_slice %179 {offsets = [1, 0, 0], sizes = [1, 16, 8], strides = [1, 1, 1]} : vector<4x16x8xf32> to vector<1x16x8xf32>
    %184 = vector.shape_cast %183 : vector<1x16x8xf32> to vector<16x8xf32>
    %c0_57 = arith.constant 0 : index
    %c8 = arith.constant 8 : index
    %185 = vector.load %arg14[%c0_57, %c8] : memref<16x32xf32, #tpu.memory_space<vmem>>, vector<16x8xf32>
    tpu.vector_store %arg14[%c0_57, %c8], %184 {strides = array<i32>} : memref<16x32xf32, #tpu.memory_space<vmem>>, vector<16x8xf32>,
    %186 = vector.extract_strided_slice %179 {offsets = [2, 0, 0], sizes = [1, 16, 8], strides = [1, 1, 1]} : vector<4x16x8xf32> to vector<1x16x8xf32>
    %187 = vector.shape_cast %186 : vector<1x16x8xf32> to vector<16x8xf32>
    %c0_58 = arith.constant 0 : index
    %c16 = arith.constant 16 : index
    %188 = vector.load %arg14[%c0_58, %c16] : memref<16x32xf32, #tpu.memory_space<vmem>>, vector<16x8xf32>
    tpu.vector_store %arg14[%c0_58, %c16], %187 {strides = array<i32>} : memref<16x32xf32, #tpu.memory_space<vmem>>, vector<16x8xf32>,
    %189 = vector.extract_strided_slice %179 {offsets = [3, 0, 0], sizes = [1, 16, 8], strides = [1, 1, 1]} : vector<4x16x8xf32> to vector<1x16x8xf32>
    %190 = vector.shape_cast %189 : vector<1x16x8xf32> to vector<16x8xf32>
    %c0_59 = arith.constant 0 : index
    %c24 = arith.constant 24 : index
    %191 = vector.load %arg14[%c0_59, %c24] : memref<16x32xf32, #tpu.memory_space<vmem>>, vector<16x8xf32>
    tpu.vector_store %arg14[%c0_59, %c24], %190 {strides = array<i32>} : memref<16x32xf32, #tpu.memory_space<vmem>>, vector<16x8xf32>,
    %c0_60 = arith.constant 0 : index
    %c0_61 = arith.constant 0 : index
    %192 = vector.load %arg14[%c0_60, %c0_61] : memref<16x32xf32, #tpu.memory_space<vmem>>, vector<16x32xf32>
    %193 = arith.truncf %192 : vector<16x32xf32> to vector<16x32xbf16>
    %c3 = arith.constant 3 : index
    %c0_62 = arith.constant 0 : index
    %c0_63 = arith.constant 0 : index
    %194 = vector.load %arg4[%c3, %c0_62, %c0_63] : memref<10x32x32xbf16, #tpu.memory_space<vmem>>, vector<1x32x32xbf16>
    %195 = vector.shape_cast %194 : vector<1x32x32xbf16> to vector<32x32xbf16>
    %cst_64 = arith.constant dense<0.000000e+00> : vector<16x32xf32>
    %196 = tpu.matmul %193, %195, %cst_64 {dimension_numbers = #tpu.dot_dimension_numbers<[1], [0], [0], [1], [0, 0, 1, 1], [], []>} : vector<16x32xbf16>, vector<32x32xbf16>, vector<16x32xf32> -> vector<16x32xf32>
    %c3_65 = arith.constant 3 : index
    %c0_66 = arith.constant 0 : index
    %c0_67 = arith.constant 0 : index
    %197 = vector.load %arg5[%c3_65, %c0_66, %c0_67] : memref<10x1x32xf32, #tpu.memory_space<vmem>>, vector<1x1x32xf32>
    %198 = vector.shape_cast %197 : vector<1x1x32xf32> to vector<1x32xf32>
    %199 = vector.broadcast %198 : vector<1x32xf32> to vector<16x32xf32>
    %200 = arith.addf %196, %199 : vector<16x32xf32>
    %201 = vector.extract_strided_slice %200 {offsets = [0, 0], sizes = [16, 8], strides = [1, 1]} : vector<16x32xf32> to vector<16x8xf32>
    %202 = vector.extract_strided_slice %200 {offsets = [0, 8], sizes = [16, 8], strides = [1, 1]} : vector<16x32xf32> to vector<16x8xf32>
    %203 = vector.extract_strided_slice %200 {offsets = [0, 16], sizes = [16, 8], strides = [1, 1]} : vector<16x32xf32> to vector<16x8xf32>
    %204 = vector.extract_strided_slice %200 {offsets = [0, 24], sizes = [16, 8], strides = [1, 1]} : vector<16x32xf32> to vector<16x8xf32>
    %205 = vector.shape_cast %201 : vector<16x8xf32> to vector<1x16x8xf32>
    %206 = vector.shape_cast %202 : vector<16x8xf32> to vector<1x16x8xf32>
    %207 = vector.shape_cast %203 : vector<16x8xf32> to vector<1x16x8xf32>
    %208 = vector.shape_cast %204 : vector<16x8xf32> to vector<1x16x8xf32>
    %209 = tpu.concatenate %205, %206, %207, %208 in 0 : vector<1x16x8xf32>, vector<1x16x8xf32>, vector<1x16x8xf32>, vector<1x16x8xf32> -> vector<4x16x8xf32>
    %210 = vector.shape_cast %209 : vector<4x16x8xf32> to vector<8x8x8xf32>
    %211 = arith.truncf %192 : vector<16x32xf32> to vector<16x32xbf16>
    %c4 = arith.constant 4 : index
    %c0_68 = arith.constant 0 : index
    %c0_69 = arith.constant 0 : index
    %212 = vector.load %arg4[%c4, %c0_68, %c0_69] : memref<10x32x32xbf16, #tpu.memory_space<vmem>>, vector<1x32x32xbf16>
    %213 = vector.shape_cast %212 : vector<1x32x32xbf16> to vector<32x32xbf16>
    %cst_70 = arith.constant dense<0.000000e+00> : vector<16x32xf32>
    %214 = tpu.matmul %211, %213, %cst_70 {dimension_numbers = #tpu.dot_dimension_numbers<[1], [0], [0], [1], [0, 0, 1, 1], [], []>} : vector<16x32xbf16>, vector<32x32xbf16>, vector<16x32xf32> -> vector<16x32xf32>
    %c4_71 = arith.constant 4 : index
    %c0_72 = arith.constant 0 : index
    %c0_73 = arith.constant 0 : index
    %215 = vector.load %arg5[%c4_71, %c0_72, %c0_73] : memref<10x1x32xf32, #tpu.memory_space<vmem>>, vector<1x1x32xf32>
    %216 = vector.shape_cast %215 : vector<1x1x32xf32> to vector<1x32xf32>
    %217 = vector.broadcast %216 : vector<1x32xf32> to vector<16x32xf32>
    %218 = arith.addf %214, %217 : vector<16x32xf32>
    %219 = vector.extract_strided_slice %218 {offsets = [0, 0], sizes = [16, 8], strides = [1, 1]} : vector<16x32xf32> to vector<16x8xf32>
    %220 = vector.extract_strided_slice %218 {offsets = [0, 8], sizes = [16, 8], strides = [1, 1]} : vector<16x32xf32> to vector<16x8xf32>
    %221 = vector.extract_strided_slice %218 {offsets = [0, 16], sizes = [16, 8], strides = [1, 1]} : vector<16x32xf32> to vector<16x8xf32>
    %222 = vector.extract_strided_slice %218 {offsets = [0, 24], sizes = [16, 8], strides = [1, 1]} : vector<16x32xf32> to vector<16x8xf32>
    %223 = vector.shape_cast %219 : vector<16x8xf32> to vector<1x16x8xf32>
    %224 = vector.shape_cast %220 : vector<16x8xf32> to vector<1x16x8xf32>
    %225 = vector.shape_cast %221 : vector<16x8xf32> to vector<1x16x8xf32>
    %226 = vector.shape_cast %222 : vector<16x8xf32> to vector<1x16x8xf32>
    %227 = tpu.concatenate %223, %224, %225, %226 in 0 : vector<1x16x8xf32>, vector<1x16x8xf32>, vector<1x16x8xf32>, vector<1x16x8xf32> -> vector<4x16x8xf32>
    %228 = vector.shape_cast %227 : vector<4x16x8xf32> to vector<8x8x8xf32>
    %229 = arith.truncf %192 : vector<16x32xf32> to vector<16x32xbf16>
    %c5 = arith.constant 5 : index
    %c0_74 = arith.constant 0 : index
    %c0_75 = arith.constant 0 : index
    %230 = vector.load %arg4[%c5, %c0_74, %c0_75] : memref<10x32x32xbf16, #tpu.memory_space<vmem>>, vector<1x32x32xbf16>
    %231 = vector.shape_cast %230 : vector<1x32x32xbf16> to vector<32x32xbf16>
    %cst_76 = arith.constant dense<0.000000e+00> : vector<16x32xf32>
    %232 = tpu.matmul %229, %231, %cst_76 {dimension_numbers = #tpu.dot_dimension_numbers<[1], [0], [0], [1], [0, 0, 1, 1], [], []>} : vector<16x32xbf16>, vector<32x32xbf16>, vector<16x32xf32> -> vector<16x32xf32>
    %c5_77 = arith.constant 5 : index
    %c0_78 = arith.constant 0 : index
    %c0_79 = arith.constant 0 : index
    %233 = vector.load %arg5[%c5_77, %c0_78, %c0_79] : memref<10x1x32xf32, #tpu.memory_space<vmem>>, vector<1x1x32xf32>
    %234 = vector.shape_cast %233 : vector<1x1x32xf32> to vector<1x32xf32>
    %235 = vector.broadcast %234 : vector<1x32xf32> to vector<16x32xf32>
    %236 = arith.addf %232, %235 : vector<16x32xf32>
    %237 = vector.extract_strided_slice %236 {offsets = [0, 0], sizes = [16, 8], strides = [1, 1]} : vector<16x32xf32> to vector<16x8xf32>
    %238 = vector.extract_strided_slice %236 {offsets = [0, 8], sizes = [16, 8], strides = [1, 1]} : vector<16x32xf32> to vector<16x8xf32>
    %239 = vector.extract_strided_slice %236 {offsets = [0, 16], sizes = [16, 8], strides = [1, 1]} : vector<16x32xf32> to vector<16x8xf32>
    %240 = vector.extract_strided_slice %236 {offsets = [0, 24], sizes = [16, 8], strides = [1, 1]} : vector<16x32xf32> to vector<16x8xf32>
    %241 = vector.shape_cast %237 : vector<16x8xf32> to vector<1x16x8xf32>
    %242 = vector.shape_cast %238 : vector<16x8xf32> to vector<1x16x8xf32>
    %243 = vector.shape_cast %239 : vector<16x8xf32> to vector<1x16x8xf32>
    %244 = vector.shape_cast %240 : vector<16x8xf32> to vector<1x16x8xf32>
    %245 = tpu.concatenate %241, %242, %243, %244 in 0 : vector<1x16x8xf32>, vector<1x16x8xf32>, vector<1x16x8xf32>, vector<1x16x8xf32> -> vector<4x16x8xf32>
    %246 = vector.shape_cast %245 : vector<4x16x8xf32> to vector<8x8x8xf32>
    %247 = arith.truncf %210 : vector<8x8x8xf32> to vector<8x8x8xbf16>
    %248 = arith.truncf %228 : vector<8x8x8xf32> to vector<8x8x8xbf16>
    "tpu.trace_start"() <{level = 10 : i32, message = "ntd,nsd->nts"}> : () -> ()
    %cst_80 = arith.constant dense<0.000000e+00> : vector<8x8x8xf32>
    %249 = tpu.matmul %247, %248, %cst_80 {dimension_numbers = #tpu.dot_dimension_numbers<[2], [2], [1], [1], [0, 0, 0, 1, 1, 1], [0], [0]>} : vector<8x8x8xbf16>, vector<8x8x8xbf16>, vector<8x8x8xf32> -> vector<8x8x8xf32>
    "tpu.trace_stop"() : () -> ()
    %cst_81 = arith.constant 0.353553385 : f32
    %250 = vector.broadcast %cst_81 : f32 to vector<8x8x8xf32>
    %251 = arith.mulf %249, %250 : vector<8x8x8xf32>
    %cst_82 = arith.constant dense<0xFF800000> : vector<8x8xf32>
    %252 = vector.multi_reduction <maximumf>, %251, %cst_82 [2] : vector<8x8x8xf32> to vector<8x8xf32>
    %253 = vector.shape_cast %252 : vector<8x8xf32> to vector<8x8x1xf32>
    %254 = vector.broadcast %253 : vector<8x8x1xf32> to vector<8x8x8xf32>
    %255 = arith.subf %251, %254 : vector<8x8x8xf32>
    %256 = math.exp %255 : vector<8x8x8xf32>
    %cst_83 = arith.constant dense<0.000000e+00> : vector<8x8xf32>
    %257 = vector.multi_reduction <add>, %256, %cst_83 [2] : vector<8x8x8xf32> to vector<8x8xf32>
    %258 = vector.shape_cast %257 : vector<8x8xf32> to vector<8x8x1xf32>
    %259 = arith.truncf %256 : vector<8x8x8xf32> to vector<8x8x8xbf16>
    %260 = arith.truncf %246 : vector<8x8x8xf32> to vector<8x8x8xbf16>
    "tpu.trace_start"() <{level = 10 : i32, message = "nts,nsd->ntd"}> : () -> ()
    %cst_84 = arith.constant dense<0.000000e+00> : vector<8x8x8xf32>
    %261 = tpu.matmul %259, %260, %cst_84 {dimension_numbers = #tpu.dot_dimension_numbers<[2], [1], [1], [2], [0, 0, 0, 1, 1, 2], [0], [0]>} : vector<8x8x8xbf16>, vector<8x8x8xbf16>, vector<8x8x8xf32> -> vector<8x8x8xf32>
    "tpu.trace_stop"() : () -> ()
    %262 = tpu.reciprocal %258 {approx = true} : vector<8x8x1xf32> -> vector<8x8x1xf32>
    %263 = vector.broadcast %262 : vector<8x8x1xf32> to vector<8x8x8xf32>
    %264 = arith.mulf %261, %263 : vector<8x8x8xf32>
    %265 = vector.shape_cast %264 : vector<8x8x8xf32> to vector<4x16x8xf32>
    %266 = vector.extract_strided_slice %265 {offsets = [0, 0, 0], sizes = [1, 16, 8], strides = [1, 1, 1]} : vector<4x16x8xf32> to vector<1x16x8xf32>
    %267 = vector.shape_cast %266 : vector<1x16x8xf32> to vector<16x8xf32>
    %c0_85 = arith.constant 0 : index
    %c0_86 = arith.constant 0 : index
    %268 = vector.load %arg14[%c0_85, %c0_86] : memref<16x32xf32, #tpu.memory_space<vmem>>, vector<16x8xf32>
    tpu.vector_store %arg14[%c0_85, %c0_86], %267 {strides = array<i32>} : memref<16x32xf32, #tpu.memory_space<vmem>>, vector<16x8xf32>,
    %269 = vector.extract_strided_slice %265 {offsets = [1, 0, 0], sizes = [1, 16, 8], strides = [1, 1, 1]} : vector<4x16x8xf32> to vector<1x16x8xf32>
    %270 = vector.shape_cast %269 : vector<1x16x8xf32> to vector<16x8xf32>
    %c0_87 = arith.constant 0 : index
    %c8_88 = arith.constant 8 : index
    %271 = vector.load %arg14[%c0_87, %c8_88] : memref<16x32xf32, #tpu.memory_space<vmem>>, vector<16x8xf32>
    tpu.vector_store %arg14[%c0_87, %c8_88], %270 {strides = array<i32>} : memref<16x32xf32, #tpu.memory_space<vmem>>, vector<16x8xf32>,
    %272 = vector.extract_strided_slice %265 {offsets = [2, 0, 0], sizes = [1, 16, 8], strides = [1, 1, 1]} : vector<4x16x8xf32> to vector<1x16x8xf32>
    %273 = vector.shape_cast %272 : vector<1x16x8xf32> to vector<16x8xf32>
    %c0_89 = arith.constant 0 : index
    %c16_90 = arith.constant 16 : index
    %274 = vector.load %arg14[%c0_89, %c16_90] : memref<16x32xf32, #tpu.memory_space<vmem>>, vector<16x8xf32>
    tpu.vector_store %arg14[%c0_89, %c16_90], %273 {strides = array<i32>} : memref<16x32xf32, #tpu.memory_space<vmem>>, vector<16x8xf32>,
    %275 = vector.extract_strided_slice %265 {offsets = [3, 0, 0], sizes = [1, 16, 8], strides = [1, 1, 1]} : vector<4x16x8xf32> to vector<1x16x8xf32>
    %276 = vector.shape_cast %275 : vector<1x16x8xf32> to vector<16x8xf32>
    %c0_91 = arith.constant 0 : index
    %c24_92 = arith.constant 24 : index
    %277 = vector.load %arg14[%c0_91, %c24_92] : memref<16x32xf32, #tpu.memory_space<vmem>>, vector<16x8xf32>
    tpu.vector_store %arg14[%c0_91, %c24_92], %276 {strides = array<i32>} : memref<16x32xf32, #tpu.memory_space<vmem>>, vector<16x8xf32>,
    %c0_93 = arith.constant 0 : index
    %c0_94 = arith.constant 0 : index
    %278 = vector.load %arg14[%c0_93, %c0_94] : memref<16x32xf32, #tpu.memory_space<vmem>>, vector<16x32xf32>
    %279 = arith.truncf %278 : vector<16x32xf32> to vector<16x32xbf16>
    %c6 = arith.constant 6 : index
    %c0_95 = arith.constant 0 : index
    %c0_96 = arith.constant 0 : index
    %280 = vector.load %arg4[%c6, %c0_95, %c0_96] : memref<10x32x32xbf16, #tpu.memory_space<vmem>>, vector<1x32x32xbf16>
    %281 = vector.shape_cast %280 : vector<1x32x32xbf16> to vector<32x32xbf16>
    %cst_97 = arith.constant dense<0.000000e+00> : vector<16x32xf32>
    %282 = tpu.matmul %279, %281, %cst_97 {dimension_numbers = #tpu.dot_dimension_numbers<[1], [0], [0], [1], [0, 0, 1, 1], [], []>} : vector<16x32xbf16>, vector<32x32xbf16>, vector<16x32xf32> -> vector<16x32xf32>
    %c6_98 = arith.constant 6 : index
    %c0_99 = arith.constant 0 : index
    %c0_100 = arith.constant 0 : index
    %283 = vector.load %arg5[%c6_98, %c0_99, %c0_100] : memref<10x1x32xf32, #tpu.memory_space<vmem>>, vector<1x1x32xf32>
    %284 = vector.shape_cast %283 : vector<1x1x32xf32> to vector<1x32xf32>
    %285 = vector.broadcast %284 : vector<1x32xf32> to vector<16x32xf32>
    %286 = arith.addf %282, %285 : vector<16x32xf32>
    %287 = arith.addf %17, %286 : vector<16x32xf32>
    %cst_101 = arith.constant dense<0.000000e+00> : vector<16xf32>
    %288 = vector.multi_reduction <add>, %287, %cst_101 [1] : vector<16x32xf32> to vector<16xf32>
    %289 = vector.shape_cast %288 : vector<16xf32> to vector<16x1xf32>
    %cst_102 = arith.constant 3.200000e+01 : f32
    %290 = vector.broadcast %cst_102 : f32 to vector<16x1xf32>
    %291 = arith.divf %289, %290 : vector<16x1xf32>
    %292 = vector.broadcast %291 : vector<16x1xf32> to vector<16x32xf32>
    %293 = arith.subf %287, %292 : vector<16x32xf32>
    %294 = arith.mulf %293, %293 : vector<16x32xf32>
    %cst_103 = arith.constant dense<0.000000e+00> : vector<16xf32>
    %295 = vector.multi_reduction <add>, %294, %cst_103 [1] : vector<16x32xf32> to vector<16xf32>
    %296 = vector.shape_cast %295 : vector<16xf32> to vector<16x1xf32>
    %cst_104 = arith.constant 3.200000e+01 : f32
    %297 = vector.broadcast %cst_104 : f32 to vector<16x1xf32>
    %298 = arith.divf %296, %297 : vector<16x1xf32>
    %299 = vector.broadcast %291 : vector<16x1xf32> to vector<16x32xf32>
    %300 = arith.subf %287, %299 : vector<16x32xf32>
    %cst_105 = arith.constant 9.99999974E-6 : f32
    %301 = vector.broadcast %cst_105 : f32 to vector<16x1xf32>
    %302 = arith.addf %298, %301 : vector<16x1xf32>
    %303 = math.rsqrt %302 : vector<16x1xf32>
    %304 = vector.broadcast %303 : vector<16x1xf32> to vector<16x32xf32>
    %305 = arith.mulf %300, %304 : vector<16x32xf32>
    %c0_106 = arith.constant 0 : index
    %c0_107 = arith.constant 0 : index
    %c0_108 = arith.constant 0 : index
    %306 = vector.load %arg7[%c0_106, %c0_107, %c0_108] : memref<3x1x32xf32, #tpu.memory_space<vmem>>, vector<1x1x32xf32>
    %307 = vector.shape_cast %306 : vector<1x1x32xf32> to vector<1x32xf32>
    %308 = vector.broadcast %307 : vector<1x32xf32> to vector<16x32xf32>
    %309 = arith.mulf %305, %308 : vector<16x32xf32>
    %c0_109 = arith.constant 0 : index
    %c0_110 = arith.constant 0 : index
    %c0_111 = arith.constant 0 : index
    %310 = vector.load %arg8[%c0_109, %c0_110, %c0_111] : memref<3x1x32xf32, #tpu.memory_space<vmem>>, vector<1x1x32xf32>
    %311 = vector.shape_cast %310 : vector<1x1x32xf32> to vector<1x32xf32>
    %312 = vector.broadcast %311 : vector<1x32xf32> to vector<16x32xf32>
    %313 = arith.addf %309, %312 : vector<16x32xf32>
    %314 = arith.truncf %313 : vector<16x32xf32> to vector<16x32xbf16>
    %c7 = arith.constant 7 : index
    %c0_112 = arith.constant 0 : index
    %c0_113 = arith.constant 0 : index
    %315 = vector.load %arg4[%c7, %c0_112, %c0_113] : memref<10x32x32xbf16, #tpu.memory_space<vmem>>, vector<1x32x32xbf16>
    %316 = vector.shape_cast %315 : vector<1x32x32xbf16> to vector<32x32xbf16>
    %cst_114 = arith.constant dense<0.000000e+00> : vector<16x32xf32>
    %317 = tpu.matmul %314, %316, %cst_114 {dimension_numbers = #tpu.dot_dimension_numbers<[1], [0], [0], [1], [0, 0, 1, 1], [], []>} : vector<16x32xbf16>, vector<32x32xbf16>, vector<16x32xf32> -> vector<16x32xf32>
    %c7_115 = arith.constant 7 : index
    %c0_116 = arith.constant 0 : index
    %c0_117 = arith.constant 0 : index
    %318 = vector.load %arg5[%c7_115, %c0_116, %c0_117] : memref<10x1x32xf32, #tpu.memory_space<vmem>>, vector<1x1x32xf32>
    %319 = vector.shape_cast %318 : vector<1x1x32xf32> to vector<1x32xf32>
    %320 = vector.broadcast %319 : vector<1x32xf32> to vector<16x32xf32>
    %321 = arith.addf %317, %320 : vector<16x32xf32>
    %322 = arith.truncf %18 : vector<16x32xf32> to vector<16x32xbf16>
    %c7_118 = arith.constant 7 : index
    %c0_119 = arith.constant 0 : index
    %c0_120 = arith.constant 0 : index
    %323 = vector.load %arg4[%c7_118, %c0_119, %c0_120] : memref<10x32x32xbf16, #tpu.memory_space<vmem>>, vector<1x32x32xbf16>
    %324 = vector.shape_cast %323 : vector<1x32x32xbf16> to vector<32x32xbf16>
    %cst_121 = arith.constant dense<0.000000e+00> : vector<16x32xf32>
    %325 = tpu.matmul %322, %324, %cst_121 {dimension_numbers = #tpu.dot_dimension_numbers<[1], [0], [0], [1], [0, 0, 1, 1], [], []>} : vector<16x32xbf16>, vector<32x32xbf16>, vector<16x32xf32> -> vector<16x32xf32>
    %c7_122 = arith.constant 7 : index
    %c0_123 = arith.constant 0 : index
    %c0_124 = arith.constant 0 : index
    %326 = vector.load %arg5[%c7_122, %c0_123, %c0_124] : memref<10x1x32xf32, #tpu.memory_space<vmem>>, vector<1x1x32xf32>
    %327 = vector.shape_cast %326 : vector<1x1x32xf32> to vector<1x32xf32>
    %328 = vector.broadcast %327 : vector<1x32xf32> to vector<16x32xf32>
    %329 = arith.addf %325, %328 : vector<16x32xf32>
    %330 = vector.extract_strided_slice %321 {offsets = [0, 0], sizes = [16, 8], strides = [1, 1]} : vector<16x32xf32> to vector<16x8xf32>
    %331 = vector.extract_strided_slice %321 {offsets = [0, 8], sizes = [16, 8], strides = [1, 1]} : vector<16x32xf32> to vector<16x8xf32>
    %332 = vector.extract_strided_slice %321 {offsets = [0, 16], sizes = [16, 8], strides = [1, 1]} : vector<16x32xf32> to vector<16x8xf32>
    %333 = vector.extract_strided_slice %321 {offsets = [0, 24], sizes = [16, 8], strides = [1, 1]} : vector<16x32xf32> to vector<16x8xf32>
    %334 = vector.shape_cast %330 : vector<16x8xf32> to vector<1x16x8xf32>
    %335 = vector.shape_cast %331 : vector<16x8xf32> to vector<1x16x8xf32>
    %336 = vector.shape_cast %332 : vector<16x8xf32> to vector<1x16x8xf32>
    %337 = vector.shape_cast %333 : vector<16x8xf32> to vector<1x16x8xf32>
    %338 = tpu.concatenate %334, %335, %336, %337 in 0 : vector<1x16x8xf32>, vector<1x16x8xf32>, vector<1x16x8xf32>, vector<1x16x8xf32> -> vector<4x16x8xf32>
    %339 = vector.shape_cast %338 : vector<4x16x8xf32> to vector<8x8x8xf32>
    %340 = vector.extract_strided_slice %329 {offsets = [0, 0], sizes = [16, 8], strides = [1, 1]} : vector<16x32xf32> to vector<16x8xf32>
    %341 = vector.extract_strided_slice %329 {offsets = [0, 8], sizes = [16, 8], strides = [1, 1]} : vector<16x32xf32> to vector<16x8xf32>
    %342 = vector.extract_strided_slice %329 {offsets = [0, 16], sizes = [16, 8], strides = [1, 1]} : vector<16x32xf32> to vector<16x8xf32>
    %343 = vector.extract_strided_slice %329 {offsets = [0, 24], sizes = [16, 8], strides = [1, 1]} : vector<16x32xf32> to vector<16x8xf32>
    %344 = vector.shape_cast %340 : vector<16x8xf32> to vector<1x16x8xf32>
    %345 = vector.shape_cast %341 : vector<16x8xf32> to vector<1x16x8xf32>
    %346 = vector.shape_cast %342 : vector<16x8xf32> to vector<1x16x8xf32>
    %347 = vector.shape_cast %343 : vector<16x8xf32> to vector<1x16x8xf32>
    %348 = tpu.concatenate %344, %345, %346, %347 in 0 : vector<1x16x8xf32>, vector<1x16x8xf32>, vector<1x16x8xf32>, vector<1x16x8xf32> -> vector<4x16x8xf32>
    %349 = vector.shape_cast %348 : vector<4x16x8xf32> to vector<8x8x8xf32>
    %c7_125 = arith.constant 7 : index
    %c0_126 = arith.constant 0 : index
    %c0_127 = arith.constant 0 : index
    %c0_128 = arith.constant 0 : index
    %350 = vector.load %arg6[%c7_125, %c0_126, %c0_127, %c0_128] : memref<10x8x1x8xf32, #tpu.memory_space<vmem>>, vector<1x8x1x8xf32>
    %351 = vector.shape_cast %350 : vector<1x8x1x8xf32> to vector<8x1x8xf32>
    %352 = arith.truncf %339 : vector<8x8x8xf32> to vector<8x8x8xbf16>
    %353 = arith.truncf %349 : vector<8x8x8xf32> to vector<8x8x8xbf16>
    "tpu.trace_start"() <{level = 10 : i32, message = "ntd,nsd->nts"}> : () -> ()
    %cst_129 = arith.constant dense<0.000000e+00> : vector<8x8x8xf32>
    %354 = tpu.matmul %352, %353, %cst_129 {dimension_numbers = #tpu.dot_dimension_numbers<[2], [2], [1], [1], [0, 0, 0, 1, 1, 1], [0], [0]>} : vector<8x8x8xbf16>, vector<8x8x8xbf16>, vector<8x8x8xf32> -> vector<8x8x8xf32>
    "tpu.trace_stop"() : () -> ()
    %cst_130 = arith.constant 0.353553385 : f32
    %355 = vector.broadcast %cst_130 : f32 to vector<8x8x8xf32>
    %356 = arith.mulf %354, %355 : vector<8x8x8xf32>
    %cst_131 = arith.constant -1.000000e+30 : f32
    %357 = vector.shape_cast %7 : vector<1x8x8xi1> to vector<1x8x8xi1>
    %358 = vector.broadcast %357 : vector<1x8x8xi1> to vector<8x8x8xi1>
    %359 = vector.broadcast %cst_131 : f32 to vector<8x8x8xf32>
    %360 = arith.select %358, %356, %359 : vector<8x8x8xi1>, vector<8x8x8xf32>
    %361 = vector.broadcast %351 : vector<8x1x8xf32> to vector<8x8x8xf32>
    %362 = arith.mulf %339, %361 : vector<8x8x8xf32>
    %cst_132 = arith.constant dense<0.000000e+00> : vector<8x8xf32>
    %363 = vector.multi_reduction <add>, %362, %cst_132 [2] : vector<8x8x8xf32> to vector<8x8xf32>
    %364 = vector.shape_cast %363 : vector<8x8xf32> to vector<8x8x1xf32>
    %cst_133 = arith.constant 0.353553385 : f32
    %365 = vector.broadcast %cst_133 : f32 to vector<8x8x1xf32>
    %366 = arith.mulf %364, %365 : vector<8x8x1xf32>
    %cst_134 = arith.constant dense<0xFF800000> : vector<8x8xf32>
    %367 = vector.multi_reduction <maximumf>, %360, %cst_134 [2] : vector<8x8x8xf32> to vector<8x8xf32>
    %368 = vector.shape_cast %367 : vector<8x8xf32> to vector<8x8x1xf32>
    %369 = arith.maximumf %368, %366 : vector<8x8x1xf32>
    %370 = vector.broadcast %369 : vector<8x8x1xf32> to vector<8x8x8xf32>
    %371 = arith.subf %360, %370 : vector<8x8x8xf32>
    %372 = math.exp %371 : vector<8x8x8xf32>
    %cst_135 = arith.constant 0.000000e+00 : f32
    %373 = vector.shape_cast %7 : vector<1x8x8xi1> to vector<1x8x8xi1>
    %374 = vector.broadcast %373 : vector<1x8x8xi1> to vector<8x8x8xi1>
    %375 = vector.broadcast %cst_135 : f32 to vector<8x8x8xf32>
    %376 = arith.select %374, %372, %375 : vector<8x8x8xi1>, vector<8x8x8xf32>
    %377 = arith.subf %366, %369 : vector<8x8x1xf32>
    %378 = math.exp %377 : vector<8x8x1xf32>
    %379 = vector.broadcast %14 : vector<1x8x1xf32> to vector<8x8x1xf32>
    %380 = arith.mulf %379, %378 : vector<8x8x1xf32>
    %cst_136 = arith.constant dense<0.000000e+00> : vector<8x8xf32>
    %381 = vector.multi_reduction <add>, %376, %cst_136 [2] : vector<8x8x8xf32> to vector<8x8xf32>
    %382 = vector.shape_cast %381 : vector<8x8xf32> to vector<8x8x1xf32>
    %383 = arith.addf %382, %380 : vector<8x8x1xf32>
    %384 = arith.truncf %376 : vector<8x8x8xf32> to vector<8x8x8xbf16>
    %385 = arith.truncf %349 : vector<8x8x8xf32> to vector<8x8x8xbf16>
    "tpu.trace_start"() <{level = 10 : i32, message = "nts,nsd->ntd"}> : () -> ()
    %cst_137 = arith.constant dense<0.000000e+00> : vector<8x8x8xf32>
    %386 = tpu.matmul %384, %385, %cst_137 {dimension_numbers = #tpu.dot_dimension_numbers<[2], [1], [1], [2], [0, 0, 0, 1, 1, 2], [0], [0]>} : vector<8x8x8xbf16>, vector<8x8x8xbf16>, vector<8x8x8xf32> -> vector<8x8x8xf32>
    "tpu.trace_stop"() : () -> ()
    %387 = vector.broadcast %380 : vector<8x8x1xf32> to vector<8x8x8xf32>
    %388 = vector.broadcast %351 : vector<8x1x8xf32> to vector<8x8x8xf32>
    %389 = arith.mulf %387, %388 : vector<8x8x8xf32>
    %390 = arith.addf %386, %389 : vector<8x8x8xf32>
    %391 = tpu.reciprocal %383 {approx = true} : vector<8x8x1xf32> -> vector<8x8x1xf32>
    %392 = vector.broadcast %391 : vector<8x8x1xf32> to vector<8x8x8xf32>
    %393 = arith.mulf %390, %392 : vector<8x8x8xf32>
    %394 = arith.truncf %18 : vector<16x32xf32> to vector<16x32xbf16>
    %c8_138 = arith.constant 8 : index
    %c0_139 = arith.constant 0 : index
    %c0_140 = arith.constant 0 : index
    %395 = vector.load %arg4[%c8_138, %c0_139, %c0_140] : memref<10x32x32xbf16, #tpu.memory_space<vmem>>, vector<1x32x32xbf16>
    %396 = vector.shape_cast %395 : vector<1x32x32xbf16> to vector<32x32xbf16>
    %cst_141 = arith.constant dense<0.000000e+00> : vector<16x32xf32>
    %397 = tpu.matmul %394, %396, %cst_141 {dimension_numbers = #tpu.dot_dimension_numbers<[1], [0], [0], [1], [0, 0, 1, 1], [], []>} : vector<16x32xbf16>, vector<32x32xbf16>, vector<16x32xf32> -> vector<16x32xf32>
    %c8_142 = arith.constant 8 : index
    %c0_143 = arith.constant 0 : index
    %c0_144 = arith.constant 0 : index
    %398 = vector.load %arg5[%c8_142, %c0_143, %c0_144] : memref<10x1x32xf32, #tpu.memory_space<vmem>>, vector<1x1x32xf32>
    %399 = vector.shape_cast %398 : vector<1x1x32xf32> to vector<1x32xf32>
    %400 = vector.broadcast %399 : vector<1x32xf32> to vector<16x32xf32>
    %401 = arith.addf %397, %400 : vector<16x32xf32>
    %402 = arith.truncf %313 : vector<16x32xf32> to vector<16x32xbf16>
    %c8_145 = arith.constant 8 : index
    %c0_146 = arith.constant 0 : index
    %c0_147 = arith.constant 0 : index
    %403 = vector.load %arg4[%c8_145, %c0_146, %c0_147] : memref<10x32x32xbf16, #tpu.memory_space<vmem>>, vector<1x32x32xbf16>
    %404 = vector.shape_cast %403 : vector<1x32x32xbf16> to vector<32x32xbf16>
    %cst_148 = arith.constant dense<0.000000e+00> : vector<16x32xf32>
    %405 = tpu.matmul %402, %404, %cst_148 {dimension_numbers = #tpu.dot_dimension_numbers<[1], [0], [0], [1], [0, 0, 1, 1], [], []>} : vector<16x32xbf16>, vector<32x32xbf16>, vector<16x32xf32> -> vector<16x32xf32>
    %c8_149 = arith.constant 8 : index
    %c0_150 = arith.constant 0 : index
    %c0_151 = arith.constant 0 : index
    %406 = vector.load %arg5[%c8_149, %c0_150, %c0_151] : memref<10x1x32xf32, #tpu.memory_space<vmem>>, vector<1x1x32xf32>
    %407 = vector.shape_cast %406 : vector<1x1x32xf32> to vector<1x32xf32>
    %408 = vector.broadcast %407 : vector<1x32xf32> to vector<16x32xf32>
    %409 = arith.addf %405, %408 : vector<16x32xf32>
    %410 = vector.extract_strided_slice %401 {offsets = [0, 0], sizes = [16, 8], strides = [1, 1]} : vector<16x32xf32> to vector<16x8xf32>
    %411 = vector.extract_strided_slice %401 {offsets = [0, 8], sizes = [16, 8], strides = [1, 1]} : vector<16x32xf32> to vector<16x8xf32>
    %412 = vector.extract_strided_slice %401 {offsets = [0, 16], sizes = [16, 8], strides = [1, 1]} : vector<16x32xf32> to vector<16x8xf32>
    %413 = vector.extract_strided_slice %401 {offsets = [0, 24], sizes = [16, 8], strides = [1, 1]} : vector<16x32xf32> to vector<16x8xf32>
    %414 = vector.shape_cast %410 : vector<16x8xf32> to vector<1x16x8xf32>
    %415 = vector.shape_cast %411 : vector<16x8xf32> to vector<1x16x8xf32>
    %416 = vector.shape_cast %412 : vector<16x8xf32> to vector<1x16x8xf32>
    %417 = vector.shape_cast %413 : vector<16x8xf32> to vector<1x16x8xf32>
    %418 = tpu.concatenate %414, %415, %416, %417 in 0 : vector<1x16x8xf32>, vector<1x16x8xf32>, vector<1x16x8xf32>, vector<1x16x8xf32> -> vector<4x16x8xf32>
    %419 = vector.shape_cast %418 : vector<4x16x8xf32> to vector<8x8x8xf32>
    %420 = vector.extract_strided_slice %409 {offsets = [0, 0], sizes = [16, 8], strides = [1, 1]} : vector<16x32xf32> to vector<16x8xf32>
    %421 = vector.extract_strided_slice %409 {offsets = [0, 8], sizes = [16, 8], strides = [1, 1]} : vector<16x32xf32> to vector<16x8xf32>
    %422 = vector.extract_strided_slice %409 {offsets = [0, 16], sizes = [16, 8], strides = [1, 1]} : vector<16x32xf32> to vector<16x8xf32>
    %423 = vector.extract_strided_slice %409 {offsets = [0, 24], sizes = [16, 8], strides = [1, 1]} : vector<16x32xf32> to vector<16x8xf32>
    %424 = vector.shape_cast %420 : vector<16x8xf32> to vector<1x16x8xf32>
    %425 = vector.shape_cast %421 : vector<16x8xf32> to vector<1x16x8xf32>
    %426 = vector.shape_cast %422 : vector<16x8xf32> to vector<1x16x8xf32>
    %427 = vector.shape_cast %423 : vector<16x8xf32> to vector<1x16x8xf32>
    %428 = tpu.concatenate %424, %425, %426, %427 in 0 : vector<1x16x8xf32>, vector<1x16x8xf32>, vector<1x16x8xf32>, vector<1x16x8xf32> -> vector<4x16x8xf32>
    %429 = vector.shape_cast %428 : vector<4x16x8xf32> to vector<8x8x8xf32>
    %c8_152 = arith.constant 8 : index
    %c0_153 = arith.constant 0 : index
    %c0_154 = arith.constant 0 : index
    %c0_155 = arith.constant 0 : index
    %430 = vector.load %arg6[%c8_152, %c0_153, %c0_154, %c0_155] : memref<10x8x1x8xf32, #tpu.memory_space<vmem>>, vector<1x8x1x8xf32>
    %431 = vector.shape_cast %430 : vector<1x8x1x8xf32> to vector<8x1x8xf32>
    %432 = arith.truncf %419 : vector<8x8x8xf32> to vector<8x8x8xbf16>
    %433 = arith.truncf %429 : vector<8x8x8xf32> to vector<8x8x8xbf16>
    "tpu.trace_start"() <{level = 10 : i32, message = "ntd,nsd->nts"}> : () -> ()
    %cst_156 = arith.constant dense<0.000000e+00> : vector<8x8x8xf32>
    %434 = tpu.matmul %432, %433, %cst_156 {dimension_numbers = #tpu.dot_dimension_numbers<[2], [2], [1], [1], [0, 0, 0, 1, 1, 1], [0], [0]>} : vector<8x8x8xbf16>, vector<8x8x8xbf16>, vector<8x8x8xf32> -> vector<8x8x8xf32>
    "tpu.trace_stop"() : () -> ()
    %cst_157 = arith.constant 0.353553385 : f32
    %435 = vector.broadcast %cst_157 : f32 to vector<8x8x8xf32>
    %436 = arith.mulf %434, %435 : vector<8x8x8xf32>
    %cst_158 = arith.constant -1.000000e+30 : f32
    %437 = vector.shape_cast %7 : vector<1x8x8xi1> to vector<1x8x8xi1>
    %438 = vector.broadcast %437 : vector<1x8x8xi1> to vector<8x8x8xi1>
    %439 = vector.broadcast %cst_158 : f32 to vector<8x8x8xf32>
    %440 = arith.select %438, %436, %439 : vector<8x8x8xi1>, vector<8x8x8xf32>
    %441 = vector.broadcast %431 : vector<8x1x8xf32> to vector<8x8x8xf32>
    %442 = arith.mulf %419, %441 : vector<8x8x8xf32>
    %cst_159 = arith.constant dense<0.000000e+00> : vector<8x8xf32>
    %443 = vector.multi_reduction <add>, %442, %cst_159 [2] : vector<8x8x8xf32> to vector<8x8xf32>
    %444 = vector.shape_cast %443 : vector<8x8xf32> to vector<8x8x1xf32>
    %cst_160 = arith.constant 0.353553385 : f32
    %445 = vector.broadcast %cst_160 : f32 to vector<8x8x1xf32>
    %446 = arith.mulf %444, %445 : vector<8x8x1xf32>
    %cst_161 = arith.constant dense<0xFF800000> : vector<8x8xf32>
    %447 = vector.multi_reduction <maximumf>, %440, %cst_161 [2] : vector<8x8x8xf32> to vector<8x8xf32>
    %448 = vector.shape_cast %447 : vector<8x8xf32> to vector<8x8x1xf32>
    %449 = arith.maximumf %448, %446 : vector<8x8x1xf32>
    %450 = vector.broadcast %449 : vector<8x8x1xf32> to vector<8x8x8xf32>
    %451 = arith.subf %440, %450 : vector<8x8x8xf32>
    %452 = math.exp %451 : vector<8x8x8xf32>
    %cst_162 = arith.constant 0.000000e+00 : f32
    %453 = vector.shape_cast %7 : vector<1x8x8xi1> to vector<1x8x8xi1>
    %454 = vector.broadcast %453 : vector<1x8x8xi1> to vector<8x8x8xi1>
    %455 = vector.broadcast %cst_162 : f32 to vector<8x8x8xf32>
    %456 = arith.select %454, %452, %455 : vector<8x8x8xi1>, vector<8x8x8xf32>
    %457 = arith.subf %446, %449 : vector<8x8x1xf32>
    %458 = math.exp %457 : vector<8x8x1xf32>
    %459 = vector.broadcast %14 : vector<1x8x1xf32> to vector<8x8x1xf32>
    %460 = arith.mulf %459, %458 : vector<8x8x1xf32>
    %cst_163 = arith.constant dense<0.000000e+00> : vector<8x8xf32>
    %461 = vector.multi_reduction <add>, %456, %cst_163 [2] : vector<8x8x8xf32> to vector<8x8xf32>
    %462 = vector.shape_cast %461 : vector<8x8xf32> to vector<8x8x1xf32>
    %463 = arith.addf %462, %460 : vector<8x8x1xf32>
    %464 = arith.truncf %456 : vector<8x8x8xf32> to vector<8x8x8xbf16>
    %465 = arith.truncf %419 : vector<8x8x8xf32> to vector<8x8x8xbf16>
    "tpu.trace_start"() <{level = 10 : i32, message = "nts,nsd->ntd"}> : () -> ()
    %cst_164 = arith.constant dense<0.000000e+00> : vector<8x8x8xf32>
    %466 = tpu.matmul %464, %465, %cst_164 {dimension_numbers = #tpu.dot_dimension_numbers<[2], [1], [1], [2], [0, 0, 0, 1, 1, 2], [0], [0]>} : vector<8x8x8xbf16>, vector<8x8x8xbf16>, vector<8x8x8xf32> -> vector<8x8x8xf32>
    "tpu.trace_stop"() : () -> ()
    %467 = vector.broadcast %460 : vector<8x8x1xf32> to vector<8x8x8xf32>
    %468 = vector.broadcast %431 : vector<8x1x8xf32> to vector<8x8x8xf32>
    %469 = arith.mulf %467, %468 : vector<8x8x8xf32>
    %470 = arith.addf %466, %469 : vector<8x8x8xf32>
    %471 = tpu.reciprocal %463 {approx = true} : vector<8x8x1xf32> -> vector<8x8x1xf32>
    %472 = vector.broadcast %471 : vector<8x8x1xf32> to vector<8x8x8xf32>
    %473 = arith.mulf %470, %472 : vector<8x8x8xf32>
    %474 = arith.truncf %18 : vector<16x32xf32> to vector<16x32xbf16>
    %c9 = arith.constant 9 : index
    %c0_165 = arith.constant 0 : index
    %c0_166 = arith.constant 0 : index
    %475 = vector.load %arg4[%c9, %c0_165, %c0_166] : memref<10x32x32xbf16, #tpu.memory_space<vmem>>, vector<1x32x32xbf16>
    %476 = vector.shape_cast %475 : vector<1x32x32xbf16> to vector<32x32xbf16>
    %cst_167 = arith.constant dense<0.000000e+00> : vector<16x32xf32>
    %477 = tpu.matmul %474, %476, %cst_167 {dimension_numbers = #tpu.dot_dimension_numbers<[1], [0], [0], [1], [0, 0, 1, 1], [], []>} : vector<16x32xbf16>, vector<32x32xbf16>, vector<16x32xf32> -> vector<16x32xf32>
    %c9_168 = arith.constant 9 : index
    %c0_169 = arith.constant 0 : index
    %c0_170 = arith.constant 0 : index
    %478 = vector.load %arg5[%c9_168, %c0_169, %c0_170] : memref<10x1x32xf32, #tpu.memory_space<vmem>>, vector<1x1x32xf32>
    %479 = vector.shape_cast %478 : vector<1x1x32xf32> to vector<1x32xf32>
    %480 = vector.broadcast %479 : vector<1x32xf32> to vector<16x32xf32>
    %481 = arith.addf %477, %480 : vector<16x32xf32>
    %482 = vector.extract_strided_slice %481 {offsets = [0, 0], sizes = [16, 8], strides = [1, 1]} : vector<16x32xf32> to vector<16x8xf32>
    %483 = vector.extract_strided_slice %481 {offsets = [0, 8], sizes = [16, 8], strides = [1, 1]} : vector<16x32xf32> to vector<16x8xf32>
    %484 = vector.extract_strided_slice %481 {offsets = [0, 16], sizes = [16, 8], strides = [1, 1]} : vector<16x32xf32> to vector<16x8xf32>
    %485 = vector.extract_strided_slice %481 {offsets = [0, 24], sizes = [16, 8], strides = [1, 1]} : vector<16x32xf32> to vector<16x8xf32>
    %486 = vector.shape_cast %482 : vector<16x8xf32> to vector<1x16x8xf32>
    %487 = vector.shape_cast %483 : vector<16x8xf32> to vector<1x16x8xf32>
    %488 = vector.shape_cast %484 : vector<16x8xf32> to vector<1x16x8xf32>
    %489 = vector.shape_cast %485 : vector<16x8xf32> to vector<1x16x8xf32>
    %490 = tpu.concatenate %486, %487, %488, %489 in 0 : vector<1x16x8xf32>, vector<1x16x8xf32>, vector<1x16x8xf32>, vector<1x16x8xf32> -> vector<4x16x8xf32>
    %491 = vector.shape_cast %490 : vector<4x16x8xf32> to vector<8x8x8xf32>
    %492 = arith.truncf %393 : vector<8x8x8xf32> to vector<8x8x8xbf16>
    %493 = arith.truncf %473 : vector<8x8x8xf32> to vector<8x8x8xbf16>
    "tpu.trace_start"() <{level = 10 : i32, message = "ntd,nsd->nts"}> : () -> ()
    %cst_171 = arith.constant dense<0.000000e+00> : vector<8x8x8xf32>
    %494 = tpu.matmul %492, %493, %cst_171 {dimension_numbers = #tpu.dot_dimension_numbers<[2], [2], [1], [1], [0, 0, 0, 1, 1, 1], [0], [0]>} : vector<8x8x8xbf16>, vector<8x8x8xbf16>, vector<8x8x8xf32> -> vector<8x8x8xf32>
    "tpu.trace_stop"() : () -> ()
    %cst_172 = arith.constant 0.353553385 : f32
    %495 = vector.broadcast %cst_172 : f32 to vector<8x8x8xf32>
    %496 = arith.mulf %494, %495 : vector<8x8x8xf32>
    %cst_173 = arith.constant dense<0xFF800000> : vector<8x8xf32>
    %497 = vector.multi_reduction <maximumf>, %496, %cst_173 [2] : vector<8x8x8xf32> to vector<8x8xf32>
    %498 = vector.shape_cast %497 : vector<8x8xf32> to vector<8x8x1xf32>
    %499 = vector.broadcast %498 : vector<8x8x1xf32> to vector<8x8x8xf32>
    %500 = arith.subf %496, %499 : vector<8x8x8xf32>
    %501 = math.exp %500 : vector<8x8x8xf32>
    %cst_174 = arith.constant dense<0.000000e+00> : vector<8x8xf32>
    %502 = vector.multi_reduction <add>, %501, %cst_174 [2] : vector<8x8x8xf32> to vector<8x8xf32>
    %503 = vector.shape_cast %502 : vector<8x8xf32> to vector<8x8x1xf32>
    %504 = arith.truncf %501 : vector<8x8x8xf32> to vector<8x8x8xbf16>
    %505 = arith.truncf %491 : vector<8x8x8xf32> to vector<8x8x8xbf16>
    "tpu.trace_start"() <{level = 10 : i32, message = "nts,nsd->ntd"}> : () -> ()
    %cst_175 = arith.constant dense<0.000000e+00> : vector<8x8x8xf32>
    %506 = tpu.matmul %504, %505, %cst_175 {dimension_numbers = #tpu.dot_dimension_numbers<[2], [1], [1], [2], [0, 0, 0, 1, 1, 2], [0], [0]>} : vector<8x8x8xbf16>, vector<8x8x8xbf16>, vector<8x8x8xf32> -> vector<8x8x8xf32>
    "tpu.trace_stop"() : () -> ()
    %507 = tpu.reciprocal %503 {approx = true} : vector<8x8x1xf32> -> vector<8x8x1xf32>
    %508 = vector.broadcast %507 : vector<8x8x1xf32> to vector<8x8x8xf32>
    %509 = arith.mulf %506, %508 : vector<8x8x8xf32>
    %510 = vector.shape_cast %509 : vector<8x8x8xf32> to vector<4x16x8xf32>
    %511 = vector.extract_strided_slice %510 {offsets = [0, 0, 0], sizes = [1, 16, 8], strides = [1, 1, 1]} : vector<4x16x8xf32> to vector<1x16x8xf32>
    %512 = vector.shape_cast %511 : vector<1x16x8xf32> to vector<16x8xf32>
    %c0_176 = arith.constant 0 : index
    %c0_177 = arith.constant 0 : index
    %513 = vector.load %arg14[%c0_176, %c0_177] : memref<16x32xf32, #tpu.memory_space<vmem>>, vector<16x8xf32>
    tpu.vector_store %arg14[%c0_176, %c0_177], %512 {strides = array<i32>} : memref<16x32xf32, #tpu.memory_space<vmem>>, vector<16x8xf32>,
    %514 = vector.extract_strided_slice %510 {offsets = [1, 0, 0], sizes = [1, 16, 8], strides = [1, 1, 1]} : vector<4x16x8xf32> to vector<1x16x8xf32>
    %515 = vector.shape_cast %514 : vector<1x16x8xf32> to vector<16x8xf32>
    %c0_178 = arith.constant 0 : index
    %c8_179 = arith.constant 8 : index
    %516 = vector.load %arg14[%c0_178, %c8_179] : memref<16x32xf32, #tpu.memory_space<vmem>>, vector<16x8xf32>
    tpu.vector_store %arg14[%c0_178, %c8_179], %515 {strides = array<i32>} : memref<16x32xf32, #tpu.memory_space<vmem>>, vector<16x8xf32>,
    %517 = vector.extract_strided_slice %510 {offsets = [2, 0, 0], sizes = [1, 16, 8], strides = [1, 1, 1]} : vector<4x16x8xf32> to vector<1x16x8xf32>
    %518 = vector.shape_cast %517 : vector<1x16x8xf32> to vector<16x8xf32>
    %c0_180 = arith.constant 0 : index
    %c16_181 = arith.constant 16 : index
    %519 = vector.load %arg14[%c0_180, %c16_181] : memref<16x32xf32, #tpu.memory_space<vmem>>, vector<16x8xf32>
    tpu.vector_store %arg14[%c0_180, %c16_181], %518 {strides = array<i32>} : memref<16x32xf32, #tpu.memory_space<vmem>>, vector<16x8xf32>,
    %520 = vector.extract_strided_slice %510 {offsets = [3, 0, 0], sizes = [1, 16, 8], strides = [1, 1, 1]} : vector<4x16x8xf32> to vector<1x16x8xf32>
    %521 = vector.shape_cast %520 : vector<1x16x8xf32> to vector<16x8xf32>
    %c0_182 = arith.constant 0 : index
    %c24_183 = arith.constant 24 : index
    %522 = vector.load %arg14[%c0_182, %c24_183] : memref<16x32xf32, #tpu.memory_space<vmem>>, vector<16x8xf32>
    tpu.vector_store %arg14[%c0_182, %c24_183], %521 {strides = array<i32>} : memref<16x32xf32, #tpu.memory_space<vmem>>, vector<16x8xf32>,
    %c0_184 = arith.constant 0 : index
    %c0_185 = arith.constant 0 : index
    %523 = vector.load %arg14[%c0_184, %c0_185] : memref<16x32xf32, #tpu.memory_space<vmem>>, vector<16x32xf32>
    %524 = arith.addf %313, %523 : vector<16x32xf32>
    %cst_186 = arith.constant dense<0.000000e+00> : vector<16xf32>
    %525 = vector.multi_reduction <add>, %524, %cst_186 [1] : vector<16x32xf32> to vector<16xf32>
    %526 = vector.shape_cast %525 : vector<16xf32> to vector<16x1xf32>
    %cst_187 = arith.constant 3.200000e+01 : f32
    %527 = vector.broadcast %cst_187 : f32 to vector<16x1xf32>
    %528 = arith.divf %526, %527 : vector<16x1xf32>
    %529 = vector.broadcast %528 : vector<16x1xf32> to vector<16x32xf32>
    %530 = arith.subf %524, %529 : vector<16x32xf32>
    %531 = arith.mulf %530, %530 : vector<16x32xf32>
    %cst_188 = arith.constant dense<0.000000e+00> : vector<16xf32>
    %532 = vector.multi_reduction <add>, %531, %cst_188 [1] : vector<16x32xf32> to vector<16xf32>
    %533 = vector.shape_cast %532 : vector<16xf32> to vector<16x1xf32>
    %cst_189 = arith.constant 3.200000e+01 : f32
    %534 = vector.broadcast %cst_189 : f32 to vector<16x1xf32>
    %535 = arith.divf %533, %534 : vector<16x1xf32>
    %536 = vector.broadcast %528 : vector<16x1xf32> to vector<16x32xf32>
    %537 = arith.subf %524, %536 : vector<16x32xf32>
    %cst_190 = arith.constant 9.99999974E-6 : f32
    %538 = vector.broadcast %cst_190 : f32 to vector<16x1xf32>
    %539 = arith.addf %535, %538 : vector<16x1xf32>
    %540 = math.rsqrt %539 : vector<16x1xf32>
    %541 = vector.broadcast %540 : vector<16x1xf32> to vector<16x32xf32>
    %542 = arith.mulf %537, %541 : vector<16x32xf32>
    %c1_191 = arith.constant 1 : index
    %c0_192 = arith.constant 0 : index
    %c0_193 = arith.constant 0 : index
    %543 = vector.load %arg7[%c1_191, %c0_192, %c0_193] : memref<3x1x32xf32, #tpu.memory_space<vmem>>, vector<1x1x32xf32>
    %544 = vector.shape_cast %543 : vector<1x1x32xf32> to vector<1x32xf32>
    %545 = vector.broadcast %544 : vector<1x32xf32> to vector<16x32xf32>
    %546 = arith.mulf %542, %545 : vector<16x32xf32>
    %c1_194 = arith.constant 1 : index
    %c0_195 = arith.constant 0 : index
    %c0_196 = arith.constant 0 : index
    %547 = vector.load %arg8[%c1_194, %c0_195, %c0_196] : memref<3x1x32xf32, #tpu.memory_space<vmem>>, vector<1x1x32xf32>
    %548 = vector.shape_cast %547 : vector<1x1x32xf32> to vector<1x32xf32>
    %549 = vector.broadcast %548 : vector<1x32xf32> to vector<16x32xf32>
    %550 = arith.addf %546, %549 : vector<16x32xf32>
    %551 = arith.truncf %550 : vector<16x32xf32> to vector<16x32xbf16>
    %c0_197 = arith.constant 0 : index
    %c0_198 = arith.constant 0 : index
    %552 = vector.load %arg9[%c0_197, %c0_198] : memref<32x128xbf16, #tpu.memory_space<vmem>>, vector<32x128xbf16>
    %cst_199 = arith.constant dense<0.000000e+00> : vector<16x128xf32>
    %553 = tpu.matmul %551, %552, %cst_199 {dimension_numbers = #tpu.dot_dimension_numbers<[1], [0], [0], [1], [0, 0, 1, 1], [], []>} : vector<16x32xbf16>, vector<32x128xbf16>, vector<16x128xf32> -> vector<16x128xf32>
    %c0_200 = arith.constant 0 : index
    %c0_201 = arith.constant 0 : index
    %554 = vector.load %arg10[%c0_200, %c0_201] : memref<1x128xf32, #tpu.memory_space<vmem>>, vector<1x128xf32>
    %555 = vector.broadcast %554 : vector<1x128xf32> to vector<16x128xf32>
    %556 = arith.addf %553, %555 : vector<16x128xf32>
    %cst_202 = arith.constant 5.000000e-01 : f32
    %557 = vector.broadcast %cst_202 : f32 to vector<16x128xf32>
    %558 = arith.mulf %557, %556 : vector<16x128xf32>
    %cst_203 = arith.constant 0.707106769 : f32
    %559 = vector.broadcast %cst_203 : f32 to vector<16x128xf32>
    %560 = arith.mulf %556, %559 : vector<16x128xf32>
    %561 = math.erf %560 : vector<16x128xf32>
    %cst_204 = arith.constant 1.000000e+00 : f32
    %562 = vector.broadcast %cst_204 : f32 to vector<16x128xf32>
    %563 = arith.addf %562, %561 : vector<16x128xf32>
    %564 = arith.mulf %558, %563 : vector<16x128xf32>
    %565 = arith.truncf %564 : vector<16x128xf32> to vector<16x128xbf16>
    %c0_205 = arith.constant 0 : index
    %c0_206 = arith.constant 0 : index
    %566 = vector.load %arg11[%c0_205, %c0_206] : memref<128x32xbf16, #tpu.memory_space<vmem>>, vector<128x32xbf16>
    %cst_207 = arith.constant dense<0.000000e+00> : vector<16x32xf32>
    %567 = tpu.matmul %565, %566, %cst_207 {dimension_numbers = #tpu.dot_dimension_numbers<[1], [0], [0], [1], [0, 0, 1, 1], [], []>} : vector<16x128xbf16>, vector<128x32xbf16>, vector<16x32xf32> -> vector<16x32xf32>
    %c0_208 = arith.constant 0 : index
    %c0_209 = arith.constant 0 : index
    %568 = vector.load %arg12[%c0_208, %c0_209] : memref<1x32xf32, #tpu.memory_space<vmem>>, vector<1x32xf32>
    %569 = vector.broadcast %568 : vector<1x32xf32> to vector<16x32xf32>
    %570 = arith.addf %567, %569 : vector<16x32xf32>
    %571 = arith.addf %550, %570 : vector<16x32xf32>
    %cst_210 = arith.constant dense<0.000000e+00> : vector<16xf32>
    %572 = vector.multi_reduction <add>, %571, %cst_210 [1] : vector<16x32xf32> to vector<16xf32>
    %573 = vector.shape_cast %572 : vector<16xf32> to vector<16x1xf32>
    %cst_211 = arith.constant 3.200000e+01 : f32
    %574 = vector.broadcast %cst_211 : f32 to vector<16x1xf32>
    %575 = arith.divf %573, %574 : vector<16x1xf32>
    %576 = vector.broadcast %575 : vector<16x1xf32> to vector<16x32xf32>
    %577 = arith.subf %571, %576 : vector<16x32xf32>
    %578 = arith.mulf %577, %577 : vector<16x32xf32>
    %cst_212 = arith.constant dense<0.000000e+00> : vector<16xf32>
    %579 = vector.multi_reduction <add>, %578, %cst_212 [1] : vector<16x32xf32> to vector<16xf32>
    %580 = vector.shape_cast %579 : vector<16xf32> to vector<16x1xf32>
    %cst_213 = arith.constant 3.200000e+01 : f32
    %581 = vector.broadcast %cst_213 : f32 to vector<16x1xf32>
    %582 = arith.divf %580, %581 : vector<16x1xf32>
    %583 = vector.broadcast %575 : vector<16x1xf32> to vector<16x32xf32>
    %584 = arith.subf %571, %583 : vector<16x32xf32>
    %cst_214 = arith.constant 9.99999974E-6 : f32
    %585 = vector.broadcast %cst_214 : f32 to vector<16x1xf32>
    %586 = arith.addf %582, %585 : vector<16x1xf32>
    %587 = math.rsqrt %586 : vector<16x1xf32>
    %588 = vector.broadcast %587 : vector<16x1xf32> to vector<16x32xf32>
    %589 = arith.mulf %584, %588 : vector<16x32xf32>
    %c2_215 = arith.constant 2 : index
    %c0_216 = arith.constant 0 : index
    %c0_217 = arith.constant 0 : index
    %590 = vector.load %arg7[%c2_215, %c0_216, %c0_217] : memref<3x1x32xf32, #tpu.memory_space<vmem>>, vector<1x1x32xf32>
    %591 = vector.shape_cast %590 : vector<1x1x32xf32> to vector<1x32xf32>
    %592 = vector.broadcast %591 : vector<1x32xf32> to vector<16x32xf32>
    %593 = arith.mulf %589, %592 : vector<16x32xf32>
    %c2_218 = arith.constant 2 : index
    %c0_219 = arith.constant 0 : index
    %c0_220 = arith.constant 0 : index
    %594 = vector.load %arg8[%c2_218, %c0_219, %c0_220] : memref<3x1x32xf32, #tpu.memory_space<vmem>>, vector<1x1x32xf32>
    %595 = vector.shape_cast %594 : vector<1x1x32xf32> to vector<1x32xf32>
    %596 = vector.broadcast %595 : vector<1x32xf32> to vector<16x32xf32>
    %597 = arith.addf %593, %596 : vector<16x32xf32>
    %c0_221 = arith.constant 0 : index
    %c0_222 = arith.constant 0 : index
    %598 = vector.load %arg13[%c0_221, %c0_222] : memref<16x32xf32, #tpu.memory_space<vmem>>, vector<16x32xf32>
    tpu.vector_store %arg13[%c0_221, %c0_222], %597 {strides = array<i32>} : memref<16x32xf32, #tpu.memory_space<vmem>>, vector<16x32xf32>,
    return
  }
  func.func @transform_0(%arg0: i32) -> (i32, i32) {
    %c0_i32 = arith.constant 0 : i32
    %c0_i32_0 = arith.constant 0 : i32
    return %arg0, %c0_i32 : i32, i32
  }
  func.func @transform_1(%arg0: i32) -> (i32, i32) {
    %c0_i32 = arith.constant 0 : i32
    %c0_i32_0 = arith.constant 0 : i32
    return %arg0, %c0_i32 : i32, i32
  }
  func.func @transform_2(%arg0: i32) -> (i32, i32) {
    %c0_i32 = arith.constant 0 : i32
    %c0_i32_0 = arith.constant 0 : i32
    %c0_i32_1 = arith.constant 0 : i32
    return %c0_i32, %c0_i32_0 : i32, i32
  }
  func.func @transform_3(%arg0: i32) -> (i32, i32, i32) {
    %c0_i32 = arith.constant 0 : i32
    %c0_i32_0 = arith.constant 0 : i32
    %c0_i32_1 = arith.constant 0 : i32
    %c0_i32_2 = arith.constant 0 : i32
    return %c0_i32, %c0_i32_0, %c0_i32_1 : i32, i32, i32
  }
  func.func @transform_4(%arg0: i32) -> (i32, i32, i32) {
    %c0_i32 = arith.constant 0 : i32
    %c0_i32_0 = arith.constant 0 : i32
    %c0_i32_1 = arith.constant 0 : i32
    %c0_i32_2 = arith.constant 0 : i32
    return %c0_i32, %c0_i32_0, %c0_i32_1 : i32, i32, i32
  }
  func.func @transform_5(%arg0: i32) -> (i32, i32, i32, i32) {
    %c0_i32 = arith.constant 0 : i32
    %c0_i32_0 = arith.constant 0 : i32
    %c0_i32_1 = arith.constant 0 : i32
    %c0_i32_2 = arith.constant 0 : i32
    %c0_i32_3 = arith.constant 0 : i32
    return %c0_i32, %c0_i32_0, %c0_i32_1, %c0_i32_2 : i32, i32, i32, i32
  }
  func.func @transform_6(%arg0: i32) -> (i32, i32, i32) {
    %c0_i32 = arith.constant 0 : i32
    %c0_i32_0 = arith.constant 0 : i32
    %c0_i32_1 = arith.constant 0 : i32
    %c0_i32_2 = arith.constant 0 : i32
    return %c0_i32, %c0_i32_0, %c0_i32_1 : i32, i32, i32
  }
  func.func @transform_7(%arg0: i32) -> (i32, i32, i32) {
    %c0_i32 = arith.constant 0 : i32
    %c0_i32_0 = arith.constant 0 : i32
    %c0_i32_1 = arith.constant 0 : i32
    %c0_i32_2 = arith.constant 0 : i32
    return %c0_i32, %c0_i32_0, %c0_i32_1 : i32, i32, i32
  }
  func.func @transform_8(%arg0: i32) -> (i32, i32) {
    %c0_i32 = arith.constant 0 : i32
    %c0_i32_0 = arith.constant 0 : i32
    %c0_i32_1 = arith.constant 0 : i32
    return %c0_i32, %c0_i32_0 : i32, i32
  }
  func.func @transform_9(%arg0: i32) -> (i32, i32) {
    %c0_i32 = arith.constant 0 : i32
    %c0_i32_0 = arith.constant 0 : i32
    %c0_i32_1 = arith.constant 0 : i32
    return %c0_i32, %c0_i32_0 : i32, i32
  }
  func.func @transform_10(%arg0: i32) -> (i32, i32) {
    %c0_i32 = arith.constant 0 : i32
    %c0_i32_0 = arith.constant 0 : i32
    %c0_i32_1 = arith.constant 0 : i32
    return %c0_i32, %c0_i32_0 : i32, i32
  }
  func.func @transform_11(%arg0: i32) -> (i32, i32) {
    %c0_i32 = arith.constant 0 : i32
    %c0_i32_0 = arith.constant 0 : i32
    %c0_i32_1 = arith.constant 0 : i32
    return %c0_i32, %c0_i32_0 : i32, i32
  }
  func.func @transform_12(%arg0: i32) -> (i32, i32) {
    %c0_i32 = arith.constant 0 : i32
    %c0_i32_0 = arith.constant 0 : i32
    return %arg0, %c0_i32 : i32, i32
  }
}

</mosaic_0001>

<llo_original>
// kernel: rat_decoder_layer.1
$region0: #{rat_decoder_layer.1}
  #allocation0 [shape = 'u32[]', space=smem, size = 0x4, offset = 0x4, fixed_abs, tag = 'smem constant byte address 0x4 - core index']
  #allocation1 [shape = 'u32[144,128]{1,0:T(1,128)}', space=vmem, size = 0x12000, scoped, tag = 'internal scratch']
  #allocation2 [shape = 'f32[16,32]{1,0:T(8,128)}', space=vmem, size = 0x2000, scoped, tag = 'scratch operand']
  %s0 = inlined_call_operand.vmem [shape: f32[16,32], index: 0, kind: input, shape index: {}]
  %s1 = inlined_call_operand.vmem [shape: f32[16,32], index: 1, kind: input, shape index: {}]
  %s2 = inlined_call_operand.vmem [shape: f32[16,32], index: 2, kind: input, shape index: {}]
  %s3 = inlined_call_operand.vmem [shape: bf16[10,32,32], index: 3, kind: input, shape index: {}]
  %s4 = inlined_call_operand.vmem [shape: f32[10,1,32], index: 4, kind: input, shape index: {}]
  %s5 = inlined_call_operand.vmem [shape: f32[10,8,1,8], index: 5, kind: input, shape index: {}]
  %s6 = inlined_call_operand.vmem [shape: f32[3,1,32], index: 6, kind: input, shape index: {}]
  %s7 = inlined_call_operand.vmem [shape: f32[3,1,32], index: 7, kind: input, shape index: {}]
  %s8 = inlined_call_operand.vmem [shape: bf16[32,128], index: 8, kind: input, shape index: {}]
  %s9 = inlined_call_operand.vmem [shape: f32[1,128], index: 9, kind: input, shape index: {}]
  %s10 = inlined_call_operand.vmem [shape: bf16[128,32], index: 10, kind: input, shape index: {}]
  %s11 = inlined_call_operand.vmem [shape: f32[1,32], index: 11, kind: input, shape index: {}]
  %s12 = inlined_call_operand.hbm [shape: f32[16,32], index: 12, kind: output, shape index: {}]
  %s13 = sld [smem:[#allocation0]]
  $region58: #{rat_decoder_layer.1} parent=0
    _
  %s15 = ssub.s32 1, %s13
  %s16 = scalar_select 0, %s15, %s13
  $region1: #{rat_decoder_layer.1} parent=0
    #allocation3 [shape = 'u8[8192]{0}', space=vmem, size = 0x2000, scoped, tag = 'output window, operand 0, single buffered']
    #allocation4 [shape = 's32[1]{0}', space=sflag, size = 0x4, scoped, tag = 'scoped memory for rat_decoder_layer.1']
    %17 = vsyncpa [#allocation4], 0
    // Predicated region
    $region2: #{rat_decoder_layer.1} parent=1 // pred_check
      _
    $region3: #{rat_decoder_layer.1} parent=1 // pred_check_branch
      %19 = sbr.rel (0) target = $region5
    $region4: #{rat_decoder_layer.1} parent=1 // pred_region
      _
    $region5: #{rat_decoder_layer.1} parent=1 // pred_fallthru
      _
    // Predicated region
    $region6: #{rat_decoder_layer.1} parent=1 // pred_check
      _
    $region7: #{rat_decoder_layer.1} parent=1 // pred_check_branch
      %21 = sbr.rel (0) target = $region9
    $region8: #{rat_decoder_layer.1} parent=1 // pred_region
      _
    $region9: #{rat_decoder_layer.1} parent=1 // pred_fallthru
      _
    // Predicated region
    $region10: #{rat_decoder_layer.1} parent=1 // pred_check
      _
    $region11: #{rat_decoder_layer.1} parent=1 // pred_check_branch
      %23 = sbr.rel (0) target = $region13
    $region12: #{rat_decoder_layer.1} parent=1 // pred_region
      _
    $region13: #{rat_decoder_layer.1} parent=1 // pred_fallthru
      _
    // Predicated region
    $region14: #{rat_decoder_layer.1} parent=1 // pred_check
      _
    $region15: #{rat_decoder_layer.1} parent=1 // pred_check_branch
      %25 = sbr.rel (0) target = $region17
    $region16: #{rat_decoder_layer.1} parent=1 // pred_region
      _
    $region17: #{rat_decoder_layer.1} parent=1 // pred_fallthru
      _
    // Predicated region
    $region18: #{rat_decoder_layer.1} parent=1 // pred_check
      _
    $region19: #{rat_decoder_layer.1} parent=1 // pred_check_branch
      %27 = sbr.rel (0) target = $region21
    $region20: #{rat_decoder_layer.1} parent=1 // pred_region
      _
    $region21: #{rat_decoder_layer.1} parent=1 // pred_fallthru
      _
    // Predicated region
    $region22: #{rat_decoder_layer.1} parent=1 // pred_check
      _
    $region23: #{rat_decoder_layer.1} parent=1 // pred_check_branch
      %29 = sbr.rel (0) target = $region25
    $region24: #{rat_decoder_layer.1} parent=1 // pred_region
      _
    $region25: #{rat_decoder_layer.1} parent=1 // pred_fallthru
      _
    // Predicated region
    $region26: #{rat_decoder_layer.1} parent=1 // pred_check
      _
    $region27: #{rat_decoder_layer.1} parent=1 // pred_check_branch
      %31 = sbr.rel (0) target = $region29
    $region28: #{rat_decoder_layer.1} parent=1 // pred_region
      _
    $region29: #{rat_decoder_layer.1} parent=1 // pred_fallthru
      _
    // Predicated region
    $region30: #{rat_decoder_layer.1} parent=1 // pred_check
      _
    $region31: #{rat_decoder_layer.1} parent=1 // pred_check_branch
      %33 = sbr.rel (0) target = $region33
    $region32: #{rat_decoder_layer.1} parent=1 // pred_region
      _
    $region33: #{rat_decoder_layer.1} parent=1 // pred_fallthru
      _
    // Predicated region
    $region34: #{rat_decoder_layer.1} parent=1 // pred_check
      _
    $region35: #{rat_decoder_layer.1} parent=1 // pred_check_branch
      %35 = sbr.rel (0) target = $region37
    $region36: #{rat_decoder_layer.1} parent=1 // pred_region
      _
    $region37: #{rat_decoder_layer.1} parent=1 // pred_fallthru
      _
    // Predicated region
    $region38: #{rat_decoder_layer.1} parent=1 // pred_check
      _
    $region39: #{rat_decoder_layer.1} parent=1 // pred_check_branch
      %37 = sbr.rel (0) target = $region41
    $region40: #{rat_decoder_layer.1} parent=1 // pred_region
      _
    $region41: #{rat_decoder_layer.1} parent=1 // pred_fallthru
      _
    // Predicated region
    $region42: #{rat_decoder_layer.1} parent=1 // pred_check
      _
    $region43: #{rat_decoder_layer.1} parent=1 // pred_check_branch
      %39 = sbr.rel (0) target = $region45
    $region44: #{rat_decoder_layer.1} parent=1 // pred_region
      _
    $region45: #{rat_decoder_layer.1} parent=1 // pred_fallthru
      _
    // Predicated region
    $region46: #{rat_decoder_layer.1} parent=1 // pred_check
      _
    $region47: #{rat_decoder_layer.1} parent=1 // pred_check_branch
      %41 = sbr.rel (0) target = $region49
    $region48: #{rat_decoder_layer.1} parent=1 // pred_region
      _
    $region49: #{rat_decoder_layer.1} parent=1 // pred_fallthru
      _
    %v43 = vlaneseq
    %v44 = vshrl.u32 %v43, 7
    %v45 = vlaneseq
    %v46 = vand.u32 %v45, 127
    %vm47 = vcmp.le.s32.totalorder %v46, %v44
    %v48 = vsub.s32 %v44, 3
    %vm49 = vcmp.ge.s32.totalorder %v46, %v48
    %vm50 = vmand %vm47, %vm49
    %v51 = vsub.s32 3, %v44
    %vm52 = vcmp.gt.s32.totalorder %v51, 0
    %v53 = vsel %vm52, %v51, 0
    %v54 = vcvt.s32.f32 %v53
    %v55 = vld [vmem:[%s1] sm:$0xff]
    %v56 = vld [vmem:[%s1 + $0x8] sm:$0xff]
    %v57 = vld [vmem:[%s2] sm:$0xff]
    %v58 = vld [vmem:[%s2 + $0x8] sm:$0xff]
    %v59 = vadd.f32 %v55, %v57
    %v60 = vadd.f32 %v56, %v58
    %v61 = vld [vmem:[%s0] sm:$0xff]
    %v62 = vld [vmem:[%s0 + $0x8] sm:$0xff]
    %v63 = vpack.c.bf16 %v60, %v59
    %v64 = vld [vmem:[%s3] sm:$0xf]
    %v65 = vld [vmem:[%s3 + $0x4] sm:$0xf]
    %v66 = vld [vmem:[%s3 + $0x8] sm:$0xf]
    %v67 = vld [vmem:[%s3 + $0xc] sm:$0xf]
    %v68 = vld [vmem:[%s4] sm:$0x1]
    %v70 = vlaneseq
    %v71 = vshrl.u32 %v70, 7
    %v72 = vsub.s32 0, %v71
    %v73 = vrot.slane %v68, %v72
    %v79 = vunpack.c.l.b16 %v64
    %v80 = vunpack.c.l.b16 %v65
    %v81 = vunpack.c.l.b16 %v66
    %v82 = vunpack.c.l.b16 %v67
    %v83 = vpack.c.b16 %v80, %v79
    %v84 = vpack.c.b16 %v82, %v81
    %vm87 = vcmask 261120
    %v89 = vsel %vm87, %v63, 0
    %91 = vmatprep.subr.bf16.mxu0 0
    %92 = vmatpush1.bf16.msra.mxu0 %v83
    %93 = vmatprep.subr.bf16.mxu0 0
    %94 = vmatpush1.bf16.msra.mxu0 %v84
    %95 = vmatprep.subr.bf16.mxu0 0
    %96 = vmatpush1.bf16.msra.mxu0 0
    %97 = vmatprep.subr.bf16.mxu0 0
    %98 = vmatpush1.bf16.msra.mxu0 0
    %99 = vmatprep.subr.bf16.mxu0 0
    %100 = vmatpush1.bf16.msra.mxu0 0
    %101 = vmatprep.subr.bf16.mxu0 0
    %102 = vmatpush1.bf16.msra.mxu0 0
    %103 = vmatprep.subr.bf16.mxu0 0
    %104 = vmatpush1.bf16.msra.mxu0 0
    %105 = vmatprep.subr.bf16.mxu0 0
    %106 = vmatpush1.bf16.msra.mxu0 0
    %107 = vmatprep.subr.bf16.mxu0 0
    %108 = vmatpush1.bf16.msra.mxu0 0
    %109 = vmatprep.subr.bf16.mxu0 0
    %110 = vmatpush1.bf16.msra.mxu0 0
    %111 = vmatprep.subr.bf16.mxu0 0
    %112 = vmatpush1.bf16.msra.mxu0 0
    %113 = vmatprep.subr.bf16.mxu0 0
    %114 = vmatpush1.bf16.msra.mxu0 0
    %115 = vmatprep.subr.bf16.mxu0 0
    %116 = vmatpush1.bf16.msra.mxu0 0
    %117 = vmatprep.subr.bf16.mxu0 0
    %118 = vmatpush1.bf16.msra.mxu0 0
    %119 = vmatprep.subr.bf16.mxu0 0
    %120 = vmatpush1.bf16.msra.mxu0 0
    %121 = vmatprep.subr.bf16.mxu0 0
    %122 = vmatpush1.bf16.msra.mxu0 0
    %123 = vmatprep.mubr.bf16.mxu0 0
    %124 = vmatmul.mubr.bf16.gmra.mrb[0].mxu0 %v89
    %v125 = vpop.f32.mrb[0].mxu0
    %v126 = vadd.f32 %v73, %v125
    %v127 = vpop.f32.mrb[0].mxu0
    %v128 = vpop.f32.mrb[0].mxu0
    %v129 = vadd.f32 %v73, %v128
    %v130 = vpop.f32.mrb[0].mxu0
    %131 = vdwg.mxu0
    %134 = vrot.lane.b32.xlu0 %v126, 120
    %v135 = vpop.permute.xlu0 %134
    %136 = vrot.lane.b32.xlu0 %v129, 120
    %v137 = vpop.permute.xlu0 %136
    %140 = vrot.lane.b32.xlu0 %v126, 112
    %v141 = vpop.permute.xlu0 %140
    %142 = vrot.lane.b32.xlu0 %v129, 112
    %v143 = vpop.permute.xlu0 %142
    %146 = vrot.lane.b32.xlu0 %v126, 104
    %v147 = vpop.permute.xlu0 %146
    %148 = vrot.lane.b32.xlu0 %v129, 104
    %v149 = vpop.permute.xlu0 %148
    %v152 = vld [vmem:[%s5] sm:$0x1]
    %v153 = vld [vmem:[%s5 + $0x1] sm:$0x1]
    %v154 = vld [vmem:[%s5 + $0x2] sm:$0x1]
    %v155 = vld [vmem:[%s5 + $0x3] sm:$0x1]
    %v156 = vld [vmem:[%s5 + $0x4] sm:$0x1]
    %v157 = vld [vmem:[%s5 + $0x5] sm:$0x1]
    %v158 = vld [vmem:[%s5 + $0x6] sm:$0x1]
    %v159 = vld [vmem:[%s5 + $0x7] sm:$0x1]
    %v160 = vpack.c.bf16 %v126, %v126
    %v161 = vpack.c.bf16 %v129, %v129
    %v162 = vpack.c.bf16 %v135, %v135
    %v163 = vpack.c.bf16 %v137, %v137
    %v164 = vpack.c.bf16 %v141, %v141
    %v165 = vpack.c.bf16 %v143, %v143
    %v166 = vpack.c.bf16 %v147, %v147
    %v167 = vpack.c.bf16 %v149, %v149
    %vm168 = vcmask 64512
    %v170 = vsel %vm168, %v160, 0
    %172 = vmatprep.subr.bf16.mxu0 0
    %173 = vmatpush1.bf16.xpose.msra.mxu0 %v170
    %174 = vmatprep.subr.bf16.mxu0 0
    %175 = vmatpush1.bf16.xpose.msra.mxu0 0
    %176 = vmatprep.subr.bf16.mxu0 0
    %177 = vmatpush1.bf16.xpose.msra.mxu0 0
    %178 = vmatprep.subr.bf16.mxu0 0
    %179 = vmatpush1.bf16.xpose.msra.mxu0 0
    %180 = vmatprep.subr.bf16.mxu0 0
    %181 = vmatpush1.bf16.xpose.msra.mxu0 0
    %182 = vmatprep.subr.bf16.mxu0 0
    %183 = vmatpush1.bf16.xpose.msra.mxu0 0
    %184 = vmatprep.subr.bf16.mxu0 0
    %185 = vmatpush1.bf16.xpose.msra.mxu0 0
    %186 = vmatprep.subr.bf16.mxu0 0
    %187 = vmatpush1.bf16.xpose.msra.mxu0 0
    %188 = vmatprep.subr.bf16.mxu0 0
    %189 = vmatpush1.bf16.xpose.msra.mxu0 0
    %190 = vmatprep.subr.bf16.mxu0 0
    %191 = vmatpush1.bf16.xpose.msra.mxu0 0
    %192 = vmatprep.subr.bf16.mxu0 0
    %193 = vmatpush1.bf16.xpose.msra.mxu0 0
    %194 = vmatprep.subr.bf16.mxu0 0
    %195 = vmatpush1.bf16.xpose.msra.mxu0 0
    %196 = vmatprep.subr.bf16.mxu0 0
    %197 = vmatpush1.bf16.xpose.msra.mxu0 0
    %198 = vmatprep.subr.bf16.mxu0 0
    %199 = vmatpush1.bf16.xpose.msra.mxu0 0
    %200 = vmatprep.subr.bf16.mxu0 0
    %201 = vmatpush1.bf16.xpose.msra.mxu0 0
    %202 = vmatprep.subr.bf16.mxu0 0
    %203 = vmatpush1.bf16.xpose.msra.mxu0 0
    %204 = vmatprep.mubr.bf16.mxu0 0
    %205 = vmatmul.mubr.bf16.gmra.mrb[0].mxu0 %v170
    %v206 = vpop.f32.mrb[0].mxu0
    %v207 = vadd.f32 0.0, %v206
    %v208 = vpop.f32.mrb[0].mxu0
    %v209 = vpop.f32.mrb[0].mxu0
    %v210 = vpop.f32.mrb[0].mxu0
    %211 = vdwg.mxu0
    %v213 = vsel %vm168, %v161, 0
    %215 = vmatprep.subr.bf16.mxu0 0
    %216 = vmatpush1.bf16.xpose.msra.mxu0 %v213
    %217 = vmatprep.subr.bf16.mxu0 0
    %218 = vmatpush1.bf16.xpose.msra.mxu0 0
    %219 = vmatprep.subr.bf16.mxu0 0
    %220 = vmatpush1.bf16.xpose.msra.mxu0 0
    %221 = vmatprep.subr.bf16.mxu0 0
    %222 = vmatpush1.bf16.xpose.msra.mxu0 0
    %223 = vmatprep.subr.bf16.mxu0 0
    %224 = vmatpush1.bf16.xpose.msra.mxu0 0
    %225 = vmatprep.subr.bf16.mxu0 0
    %226 = vmatpush1.bf16.xpose.msra.mxu0 0
    %227 = vmatprep.subr.bf16.mxu0 0
    %228 = vmatpush1.bf16.xpose.msra.mxu0 0
    %229 = vmatprep.subr.bf16.mxu0 0
    %230 = vmatpush1.bf16.xpose.msra.mxu0 0
    %231 = vmatprep.subr.bf16.mxu0 0
    %232 = vmatpush1.bf16.xpose.msra.mxu0 0
    %233 = vmatprep.subr.bf16.mxu0 0
    %234 = vmatpush1.bf16.xpose.msra.mxu0 0
    %235 = vmatprep.subr.bf16.mxu0 0
    %236 = vmatpush1.bf16.xpose.msra.mxu0 0
    %237 = vmatprep.subr.bf16.mxu0 0
    %238 = vmatpush1.bf16.xpose.msra.mxu0 0
    %239 = vmatprep.subr.bf16.mxu0 0
    %240 = vmatpush1.bf16.xpose.msra.mxu0 0
    %241 = vmatprep.subr.bf16.mxu0 0
    %242 = vmatpush1.bf16.xpose.msra.mxu0 0
    %243 = vmatprep.subr.bf16.mxu0 0
    %244 = vmatpush1.bf16.xpose.msra.mxu0 0
    %245 = vmatprep.subr.bf16.mxu0 0
    %246 = vmatpush1.bf16.xpose.msra.mxu0 0
    %247 = vmatprep.mubr.bf16.mxu0 0
    %248 = vmatmul.mubr.bf16.gmra.mrb[0].mxu0 %v213
    %v249 = vpop.f32.mrb[0].mxu0
    %v250 = vadd.f32 0.0, %v249
    %v251 = vpop.f32.mrb[0].mxu0
    %v252 = vpop.f32.mrb[0].mxu0
    %v253 = vpop.f32.mrb[0].mxu0
    %254 = vdwg.mxu0
    %v256 = vsel %vm168, %v162, 0
    %258 = vmatprep.subr.bf16.mxu0 0
    %259 = vmatpush1.bf16.xpose.msra.mxu0 %v256
    %260 = vmatprep.subr.bf16.mxu0 0
    %261 = vmatpush1.bf16.xpose.msra.mxu0 0
    %262 = vmatprep.subr.bf16.mxu0 0
    %263 = vmatpush1.bf16.xpose.msra.mxu0 0
    %264 = vmatprep.subr.bf16.mxu0 0
    %265 = vmatpush1.bf16.xpose.msra.mxu0 0
    %266 = vmatprep.subr.bf16.mxu0 0
    %267 = vmatpush1.bf16.xpose.msra.mxu0 0
    %268 = vmatprep.subr.bf16.mxu0 0
    %269 = vmatpush1.bf16.xpose.msra.mxu0 0
    %270 = vmatprep.subr.bf16.mxu0 0
    %271 = vmatpush1.bf16.xpose.msra.mxu0 0
    %272 = vmatprep.subr.bf16.mxu0 0
    %273 = vmatpush1.bf16.xpose.msra.mxu0 0
    %274 = vmatprep.subr.bf16.mxu0 0
    %275 = vmatpush1.bf16.xpose.msra.mxu0 0
    %276 = vmatprep.subr.bf16.mxu0 0
    %277 = vmatpush1.bf16.xpose.msra.mxu0 0
    %278 = vmatprep.subr.bf16.mxu0 0
    %279 = vmatpush1.bf16.xpose.msra.mxu0 0
    %280 = vmatprep.subr.bf16.mxu0 0
    %281 = vmatpush1.bf16.xpose.msra.mxu0 0
    %282 = vmatprep.subr.bf16.mxu0 0
    %283 = vmatpush1.bf16.xpose.msra.mxu0 0
    %284 = vmatprep.subr.bf16.mxu0 0
    %285 = vmatpush1.bf16.xpose.msra.mxu0 0
    %286 = vmatprep.subr.bf16.mxu0 0
    %287 = vmatpush1.bf16.xpose.msra.mxu0 0
    %288 = vmatprep.subr.bf16.mxu0 0
    %289 = vmatpush1.bf16.xpose.msra.mxu0 0
    %290 = vmatprep.mubr.bf16.mxu0 0
    %291 = vmatmul.mubr.bf16.gmra.mrb[0].mxu0 %v256
    %v292 = vpop.f32.mrb[0].mxu0
    %v293 = vadd.f32 0.0, %v292
    %v294 = vpop.f32.mrb[0].mxu0
    %v295 = vpop.f32.mrb[0].mxu0
    %v296 = vpop.f32.mrb[0].mxu0
    %297 = vdwg.mxu0
    %v299 = vsel %vm168, %v163, 0
    %301 = vmatprep.subr.bf16.mxu0 0
    %302 = vmatpush1.bf16.xpose.msra.mxu0 %v299
    %303 = vmatprep.subr.bf16.mxu0 0
    %304 = vmatpush1.bf16.xpose.msra.mxu0 0
    %305 = vmatprep.subr.bf16.mxu0 0
    %306 = vmatpush1.bf16.xpose.msra.mxu0 0
    %307 = vmatprep.subr.bf16.mxu0 0
    %308 = vmatpush1.bf16.xpose.msra.mxu0 0
    %309 = vmatprep.subr.bf16.mxu0 0
    %310 = vmatpush1.bf16.xpose.msra.mxu0 0
    %311 = vmatprep.subr.bf16.mxu0 0
    %312 = vmatpush1.bf16.xpose.msra.mxu0 0
    %313 = vmatprep.subr.bf16.mxu0 0
    %314 = vmatpush1.bf16.xpose.msra.mxu0 0
    %315 = vmatprep.subr.bf16.mxu0 0
    %316 = vmatpush1.bf16.xpose.msra.mxu0 0
    %317 = vmatprep.subr.bf16.mxu0 0
    %318 = vmatpush1.bf16.xpose.msra.mxu0 0
    %319 = vmatprep.subr.bf16.mxu0 0
    %320 = vmatpush1.bf16.xpose.msra.mxu0 0
    %321 = vmatprep.subr.bf16.mxu0 0
    %322 = vmatpush1.bf16.xpose.msra.mxu0 0
    %323 = vmatprep.subr.bf16.mxu0 0
    %324 = vmatpush1.bf16.xpose.msra.mxu0 0
    %325 = vmatprep.subr.bf16.mxu0 0
    %326 = vmatpush1.bf16.xpose.msra.mxu0 0
    %327 = vmatprep.subr.bf16.mxu0 0
    %328 = vmatpush1.bf16.xpose.msra.mxu0 0
    %329 = vmatprep.subr.bf16.mxu0 0
    %330 = vmatpush1.bf16.xpose.msra.mxu0 0
    %331 = vmatprep.subr.bf16.mxu0 0
    %332 = vmatpush1.bf16.xpose.msra.mxu0 0
    %333 = vmatprep.mubr.bf16.mxu0 0
    %334 = vmatmul.mubr.bf16.gmra.mrb[0].mxu0 %v299
    %v335 = vpop.f32.mrb[0].mxu0
    %v336 = vadd.f32 0.0, %v335
    %v337 = vpop.f32.mrb[0].mxu0
    %v338 = vpop.f32.mrb[0].mxu0
    %v339 = vpop.f32.mrb[0].mxu0
    %340 = vdwg.mxu0
    %v342 = vsel %vm168, %v164, 0
    %344 = vmatprep.subr.bf16.mxu0 0
    %345 = vmatpush1.bf16.xpose.msra.mxu0 %v342
    %346 = vmatprep.subr.bf16.mxu0 0
    %347 = vmatpush1.bf16.xpose.msra.mxu0 0
    %348 = vmatprep.subr.bf16.mxu0 0
    %349 = vmatpush1.bf16.xpose.msra.mxu0 0
    %350 = vmatprep.subr.bf16.mxu0 0
    %351 = vmatpush1.bf16.xpose.msra.mxu0 0
    %352 = vmatprep.subr.bf16.mxu0 0
    %353 = vmatpush1.bf16.xpose.msra.mxu0 0
    %354 = vmatprep.subr.bf16.mxu0 0
    %355 = vmatpush1.bf16.xpose.msra.mxu0 0
    %356 = vmatprep.subr.bf16.mxu0 0
    %357 = vmatpush1.bf16.xpose.msra.mxu0 0
    %358 = vmatprep.subr.bf16.mxu0 0
    %359 = vmatpush1.bf16.xpose.msra.mxu0 0
    %360 = vmatprep.subr.bf16.mxu0 0
    %361 = vmatpush1.bf16.xpose.msra.mxu0 0
    %362 = vmatprep.subr.bf16.mxu0 0
    %363 = vmatpush1.bf16.xpose.msra.mxu0 0
    %364 = vmatprep.subr.bf16.mxu0 0
    %365 = vmatpush1.bf16.xpose.msra.mxu0 0
    %366 = vmatprep.subr.bf16.mxu0 0
    %367 = vmatpush1.bf16.xpose.msra.mxu0 0
    %368 = vmatprep.subr.bf16.mxu0 0
    %369 = vmatpush1.bf16.xpose.msra.mxu0 0
    %370 = vmatprep.subr.bf16.mxu0 0
    %371 = vmatpush1.bf16.xpose.msra.mxu0 0
    %372 = vmatprep.subr.bf16.mxu0 0
    %373 = vmatpush1.bf16.xpose.msra.mxu0 0
    %374 = vmatprep.subr.bf16.mxu0 0
    %375 = vmatpush1.bf16.xpose.msra.mxu0 0
    %376 = vmatprep.mubr.bf16.mxu0 0
    %377 = vmatmul.mubr.bf16.gmra.mrb[0].mxu0 %v342
    %v378 = vpop.f32.mrb[0].mxu0
    %v379 = vadd.f32 0.0, %v378
    %v380 = vpop.f32.mrb[0].mxu0
    %v381 = vpop.f32.mrb[0].mxu0
    %v382 = vpop.f32.mrb[0].mxu0
    %383 = vdwg.mxu0
    %v385 = vsel %vm168, %v165, 0
    %387 = vmatprep.subr.bf16.mxu0 0
    %388 = vmatpush1.bf16.xpose.msra.mxu0 %v385
    %389 = vmatprep.subr.bf16.mxu0 0
    %390 = vmatpush1.bf16.xpose.msra.mxu0 0
    %391 = vmatprep.subr.bf16.mxu0 0
    %392 = vmatpush1.bf16.xpose.msra.mxu0 0
    %393 = vmatprep.subr.bf16.mxu0 0
    %394 = vmatpush1.bf16.xpose.msra.mxu0 0
    %395 = vmatprep.subr.bf16.mxu0 0
    %396 = vmatpush1.bf16.xpose.msra.mxu0 0
    %397 = vmatprep.subr.bf16.mxu0 0
    %398 = vmatpush1.bf16.xpose.msra.mxu0 0
    %399 = vmatprep.subr.bf16.mxu0 0
    %400 = vmatpush1.bf16.xpose.msra.mxu0 0
    %401 = vmatprep.subr.bf16.mxu0 0
    %402 = vmatpush1.bf16.xpose.msra.mxu0 0
    %403 = vmatprep.subr.bf16.mxu0 0
    %404 = vmatpush1.bf16.xpose.msra.mxu0 0
    %405 = vmatprep.subr.bf16.mxu0 0
    %406 = vmatpush1.bf16.xpose.msra.mxu0 0
    %407 = vmatprep.subr.bf16.mxu0 0
    %408 = vmatpush1.bf16.xpose.msra.mxu0 0
    %409 = vmatprep.subr.bf16.mxu0 0
    %410 = vmatpush1.bf16.xpose.msra.mxu0 0
    %411 = vmatprep.subr.bf16.mxu0 0
    %412 = vmatpush1.bf16.xpose.msra.mxu0 0
    %413 = vmatprep.subr.bf16.mxu0 0
    %414 = vmatpush1.bf16.xpose.msra.mxu0 0
    %415 = vmatprep.subr.bf16.mxu0 0
    %416 = vmatpush1.bf16.xpose.msra.mxu0 0
    %417 = vmatprep.subr.bf16.mxu0 0
    %418 = vmatpush1.bf16.xpose.msra.mxu0 0
    %419 = vmatprep.mubr.bf16.mxu0 0
    %420 = vmatmul.mubr.bf16.gmra.mrb[0].mxu0 %v385
    %v421 = vpop.f32.mrb[0].mxu0
    %v422 = vadd.f32 0.0, %v421
    %v423 = vpop.f32.mrb[0].mxu0
    %v424 = vpop.f32.mrb[0].mxu0
    %v425 = vpop.f32.mrb[0].mxu0
    %426 = vdwg.mxu0
    %v428 = vsel %vm168, %v166, 0
    %430 = vmatprep.subr.bf16.mxu0 0
    %431 = vmatpush1.bf16.xpose.msra.mxu0 %v428
    %432 = vmatprep.subr.bf16.mxu0 0
    %433 = vmatpush1.bf16.xpose.msra.mxu0 0
    %434 = vmatprep.subr.bf16.mxu0 0
    %435 = vmatpush1.bf16.xpose.msra.mxu0 0
    %436 = vmatprep.subr.bf16.mxu0 0
    %437 = vmatpush1.bf16.xpose.msra.mxu0 0
    %438 = vmatprep.subr.bf16.mxu0 0
    %439 = vmatpush1.bf16.xpose.msra.mxu0 0
    %440 = vmatprep.subr.bf16.mxu0 0
    %441 = vmatpush1.bf16.xpose.msra.mxu0 0
    %442 = vmatprep.subr.bf16.mxu0 0
    %443 = vmatpush1.bf16.xpose.msra.mxu0 0
    %444 = vmatprep.subr.bf16.mxu0 0
    %445 = vmatpush1.bf16.xpose.msra.mxu0 0
    %446 = vmatprep.subr.bf16.mxu0 0
    %447 = vmatpush1.bf16.xpose.msra.mxu0 0
    %448 = vmatprep.subr.bf16.mxu0 0
    %449 = vmatpush1.bf16.xpose.msra.mxu0 0
    %450 = vmatprep.subr.bf16.mxu0 0
    %451 = vmatpush1.bf16.xpose.msra.mxu0 0
    %452 = vmatprep.subr.bf16.mxu0 0
    %453 = vmatpush1.bf16.xpose.msra.mxu0 0
    %454 = vmatprep.subr.bf16.mxu0 0
    %455 = vmatpush1.bf16.xpose.msra.mxu0 0
    %456 = vmatprep.subr.bf16.mxu0 0
    %457 = vmatpush1.bf16.xpose.msra.mxu0 0
    %458 = vmatprep.subr.bf16.mxu0 0
    %459 = vmatpush1.bf16.xpose.msra.mxu0 0
    %460 = vmatprep.subr.bf16.mxu0 0
    %461 = vmatpush1.bf16.xpose.msra.mxu0 0
    %462 = vmatprep.mubr.bf16.mxu0 0
    %463 = vmatmul.mubr.bf16.gmra.mrb[0].mxu0 %v428
    %v464 = vpop.f32.mrb[0].mxu0
    %v465 = vadd.f32 0.0, %v464
    %v466 = vpop.f32.mrb[0].mxu0
    %v467 = vpop.f32.mrb[0].mxu0
    %v468 = vpop.f32.mrb[0].mxu0
    %469 = vdwg.mxu0
    %v471 = vsel %vm168, %v167, 0
    %473 = vmatprep.subr.bf16.mxu0 0
    %474 = vmatpush1.bf16.xpose.msra.mxu0 %v471
    %475 = vmatprep.subr.bf16.mxu0 0
    %476 = vmatpush1.bf16.xpose.msra.mxu0 0
    %477 = vmatprep.subr.bf16.mxu0 0
    %478 = vmatpush1.bf16.xpose.msra.mxu0 0
    %479 = vmatprep.subr.bf16.mxu0 0
    %480 = vmatpush1.bf16.xpose.msra.mxu0 0
    %481 = vmatprep.subr.bf16.mxu0 0
    %482 = vmatpush1.bf16.xpose.msra.mxu0 0
    %483 = vmatprep.subr.bf16.mxu0 0
    %484 = vmatpush1.bf16.xpose.msra.mxu0 0
    %485 = vmatprep.subr.bf16.mxu0 0
    %486 = vmatpush1.bf16.xpose.msra.mxu0 0
    %487 = vmatprep.subr.bf16.mxu0 0
    %488 = vmatpush1.bf16.xpose.msra.mxu0 0
    %489 = vmatprep.subr.bf16.mxu0 0
    %490 = vmatpush1.bf16.xpose.msra.mxu0 0
    %491 = vmatprep.subr.bf16.mxu0 0
    %492 = vmatpush1.bf16.xpose.msra.mxu0 0
    %493 = vmatprep.subr.bf16.mxu0 0
    %494 = vmatpush1.bf16.xpose.msra.mxu0 0
    %495 = vmatprep.subr.bf16.mxu0 0
    %496 = vmatpush1.bf16.xpose.msra.mxu0 0
    %497 = vmatprep.subr.bf16.mxu0 0
    %498 = vmatpush1.bf16.xpose.msra.mxu0 0
    %499 = vmatprep.subr.bf16.mxu0 0
    %500 = vmatpush1.bf16.xpose.msra.mxu0 0
    %501 = vmatprep.subr.bf16.mxu0 0
    %502 = vmatpush1.bf16.xpose.msra.mxu0 0
    %503 = vmatprep.subr.bf16.mxu0 0
    %504 = vmatpush1.bf16.xpose.msra.mxu0 0
    %505 = vmatprep.mubr.bf16.mxu0 0
    %506 = vmatmul.mubr.bf16.gmra.mrb[0].mxu0 %v471
    %v507 = vpop.f32.mrb[0].mxu0
    %v508 = vadd.f32 0.0, %v507
    %v509 = vpop.f32.mrb[0].mxu0
    %v510 = vpop.f32.mrb[0].mxu0
    %v511 = vpop.f32.mrb[0].mxu0
    %512 = vdwg.mxu0
    %v513 = vmul.f32 %v207, 0.35355338
    %v514 = vmul.f32 %v250, 0.35355338
    %v515 = vmul.f32 %v293, 0.35355338
    %v516 = vmul.f32 %v336, 0.35355338
    %v517 = vmul.f32 %v379, 0.35355338
    %v518 = vmul.f32 %v422, 0.35355338
    %v519 = vmul.f32 %v465, 0.35355338
    %v520 = vmul.f32 %v508, 0.35355338
    %v521 = vsel %vm50, 1, 0
    %vm522 = vcmp.eq.s32.totalorder %v521, 1
    %v523 = vsel %vm522, %v513, -1e+30
    %v524 = vsel %vm522, %v514, -1e+30
    %v525 = vsel %vm522, %v515, -1e+30
    %v526 = vsel %vm522, %v516, -1e+30
    %v527 = vsel %vm522, %v517, -1e+30
    %v528 = vsel %vm522, %v518, -1e+30
    %v529 = vsel %vm522, %v519, -1e+30
    %v530 = vsel %vm522, %v520, -1e+30
    %v539 = vlaneseq
    %v540 = vshrl.u32 %v539, 7
    %v541 = vsub.s32 0, %v540
    %v542 = vrot.slane %v152, %v541
    %v543 = vlaneseq
    %v544 = vshrl.u32 %v543, 7
    %v545 = vsub.s32 0, %v544
    %v546 = vrot.slane %v153, %v545
    %v547 = vlaneseq
    %v548 = vshrl.u32 %v547, 7
    %v549 = vsub.s32 0, %v548
    %v550 = vrot.slane %v154, %v549
    %v551 = vlaneseq
    %v552 = vshrl.u32 %v551, 7
    %v553 = vsub.s32 0, %v552
    %v554 = vrot.slane %v155, %v553
    %v555 = vlaneseq
    %v556 = vshrl.u32 %v555, 7
    %v557 = vsub.s32 0, %v556
    %v558 = vrot.slane %v156, %v557
    %v559 = vlaneseq
    %v560 = vshrl.u32 %v559, 7
    %v561 = vsub.s32 0, %v560
    %v562 = vrot.slane %v157, %v561
    %v563 = vlaneseq
    %v564 = vshrl.u32 %v563, 7
    %v565 = vsub.s32 0, %v564
    %v566 = vrot.slane %v158, %v565
    %v567 = vlaneseq
    %v568 = vshrl.u32 %v567, 7
    %v569 = vsub.s32 0, %v568
    %v570 = vrot.slane %v159, %v569
    %v579 = vmul.f32 %v126, %v542
    %v580 = vmul.f32 %v129, %v546
    %v581 = vmul.f32 %v135, %v550
    %v582 = vmul.f32 %v137, %v554
    %v583 = vmul.f32 %v141, %v558
    %v584 = vmul.f32 %v143, %v562
    %v585 = vmul.f32 %v147, %v566
    %v586 = vmul.f32 %v149, %v570
    %v587 = vsel %vm168, %v579, 0.0
    %588 = vadd.xlane.f32.xlu0 %v587
    %v589 = vpop.xlane.xlu0 %588
    %v590 = vsel %vm168, %v580, 0.0
    %591 = vadd.xlane.f32.xlu0 %v590
    %v592 = vpop.xlane.xlu0 %591
    %v593 = vsel %vm168, %v581, 0.0
    %594 = vadd.xlane.f32.xlu0 %v593
    %v595 = vpop.xlane.xlu0 %594
    %v596 = vsel %vm168, %v582, 0.0
    %597 = vadd.xlane.f32.xlu0 %v596
    %v598 = vpop.xlane.xlu0 %597
    %v599 = vsel %vm168, %v583, 0.0
    %600 = vadd.xlane.f32.xlu0 %v599
    %v601 = vpop.xlane.xlu0 %600
    %v602 = vsel %vm168, %v584, 0.0
    %603 = vadd.xlane.f32.xlu0 %v602
    %v604 = vpop.xlane.xlu0 %603
    %v605 = vsel %vm168, %v585, 0.0
    %606 = vadd.xlane.f32.xlu0 %v605
    %v607 = vpop.xlane.xlu0 %606
    %v608 = vsel %vm168, %v586, 0.0
    %609 = vadd.xlane.f32.xlu0 %v608
    %v610 = vpop.xlane.xlu0 %609
    %v611 = vmul.f32 %v589, 0.35355338
    %v612 = vmul.f32 %v592, 0.35355338
    %v613 = vmul.f32 %v595, 0.35355338
    %v614 = vmul.f32 %v598, 0.35355338
    %v615 = vmul.f32 %v601, 0.35355338
    %v616 = vmul.f32 %v604, 0.35355338
    %v617 = vmul.f32 %v607, 0.35355338
    %v618 = vmul.f32 %v610, 0.35355338
    %v619 = vsel %vm168, %v523, -inf
    %620 = vmax.xlane.f32.xlu0 %v619
    %v621 = vpop.xlane.xlu0 %620
    %v622 = vsel %vm168, %v524, -inf
    %623 = vmax.xlane.f32.xlu0 %v622
    %v624 = vpop.xlane.xlu0 %623
    %v625 = vsel %vm168, %v525, -inf
    %626 = vmax.xlane.f32.xlu0 %v625
    %v627 = vpop.xlane.xlu0 %626
    %v628 = vsel %vm168, %v526, -inf
    %629 = vmax.xlane.f32.xlu0 %v628
    %v630 = vpop.xlane.xlu0 %629
    %v631 = vsel %vm168, %v527, -inf
    %632 = vmax.xlane.f32.xlu0 %v631
    %v633 = vpop.xlane.xlu0 %632
    %v634 = vsel %vm168, %v528, -inf
    %635 = vmax.xlane.f32.xlu0 %v634
    %v636 = vpop.xlane.xlu0 %635
    %v637 = vsel %vm168, %v529, -inf
    %638 = vmax.xlane.f32.xlu0 %v637
    %v639 = vpop.xlane.xlu0 %638
    %v640 = vsel %vm168, %v530, -inf
    %641 = vmax.xlane.f32.xlu0 %v640
    %v642 = vpop.xlane.xlu0 %641
    %v643 = vmax.f32 %v621, %v611
    %v644 = vmax.f32 %v624, %v612
    %v645 = vmax.f32 %v627, %v613
    %v646 = vmax.f32 %v630, %v614
    %v647 = vmax.f32 %v633, %v615
    %v648 = vmax.f32 %v636, %v616
    %v649 = vmax.f32 %v639, %v617
    %v650 = vmax.f32 %v642, %v618
    %v651 = vsub.f32 %v523, %v643
    %v652 = vsub.f32 %v524, %v644
    %v653 = vsub.f32 %v525, %v645
    %v654 = vsub.f32 %v526, %v646
    %v655 = vsub.f32 %v527, %v647
    %v656 = vsub.f32 %v528, %v648
    %v657 = vsub.f32 %v529, %v649
    %v658 = vsub.f32 %v530, %v650
    %v659 = vmul.f32 %v651, 1.442695
    %v660 = vpow.pop %v659
    %v661 = vmul.f32 %v652, 1.442695
    %v662 = vpow.pop %v661
    %v663 = vmul.f32 %v653, 1.442695
    %v664 = vpow.pop %v663
    %v665 = vmul.f32 %v654, 1.442695
    %v666 = vpow.pop %v665
    %v667 = vmul.f32 %v655, 1.442695
    %v668 = vpow.pop %v667
    %v669 = vmul.f32 %v656, 1.442695
    %v670 = vpow.pop %v669
    %v671 = vmul.f32 %v657, 1.442695
    %v672 = vpow.pop %v671
    %v673 = vmul.f32 %v658, 1.442695
    %v674 = vpow.pop %v673
    %v675 = vsel %vm522, %v660, 0.0
    %v676 = vsel %vm522, %v662, 0.0
    %v677 = vsel %vm522, %v664, 0.0
    %v678 = vsel %vm522, %v666, 0.0
    %v679 = vsel %vm522, %v668, 0.0
    %v680 = vsel %vm522, %v670, 0.0
    %v681 = vsel %vm522, %v672, 0.0
    %v682 = vsel %vm522, %v674, 0.0
    %v683 = vsub.f32 %v611, %v643
    %v684 = vsub.f32 %v612, %v644
    %v685 = vsub.f32 %v613, %v645
    %v686 = vsub.f32 %v614, %v646
    %v687 = vsub.f32 %v615, %v647
    %v688 = vsub.f32 %v616, %v648
    %v689 = vsub.f32 %v617, %v649
    %v690 = vsub.f32 %v618, %v650
    %v691 = vmul.f32 %v683, 1.442695
    %v692 = vpow.pop %v691
    %v693 = vmul.f32 %v684, 1.442695
    %v694 = vpow.pop %v693
    %v695 = vmul.f32 %v685, 1.442695
    %v696 = vpow.pop %v695
    %v697 = vmul.f32 %v686, 1.442695
    %v698 = vpow.pop %v697
    %v699 = vmul.f32 %v687, 1.442695
    %v700 = vpow.pop %v699
    %v701 = vmul.f32 %v688, 1.442695
    %v702 = vpow.pop %v701
    %v703 = vmul.f32 %v689, 1.442695
    %v704 = vpow.pop %v703
    %v705 = vmul.f32 %v690, 1.442695
    %v706 = vpow.pop %v705
    %v707 = vmul.f32 %v54, %v692
    %v708 = vmul.f32 %v54, %v694
    %v709 = vmul.f32 %v54, %v696
    %v710 = vmul.f32 %v54, %v698
    %v711 = vmul.f32 %v54, %v700
    %v712 = vmul.f32 %v54, %v702
    %v713 = vmul.f32 %v54, %v704
    %v714 = vmul.f32 %v54, %v706
    %v715 = vsel %vm168, %v675, 0.0
    %716 = vadd.xlane.f32.xlu0 %v715
    %v717 = vpop.xlane.xlu0 %716
    %v718 = vsel %vm168, %v676, 0.0
    %719 = vadd.xlane.f32.xlu0 %v718
    %v720 = vpop.xlane.xlu0 %719
    %v721 = vsel %vm168, %v677, 0.0
    %722 = vadd.xlane.f32.xlu0 %v721
    %v723 = vpop.xlane.xlu0 %722
    %v724 = vsel %vm168, %v678, 0.0
    %725 = vadd.xlane.f32.xlu0 %v724
    %v726 = vpop.xlane.xlu0 %725
    %v727 = vsel %vm168, %v679, 0.0
    %728 = vadd.xlane.f32.xlu0 %v727
    %v729 = vpop.xlane.xlu0 %728
    %v730 = vsel %vm168, %v680, 0.0
    %731 = vadd.xlane.f32.xlu0 %v730
    %v732 = vpop.xlane.xlu0 %731
    %v733 = vsel %vm168, %v681, 0.0
    %734 = vadd.xlane.f32.xlu0 %v733
    %v735 = vpop.xlane.xlu0 %734
    %v736 = vsel %vm168, %v682, 0.0
    %737 = vadd.xlane.f32.xlu0 %v736
    %v738 = vpop.xlane.xlu0 %737
    %v739 = vadd.f32 %v717, %v707
    %v740 = vadd.f32 %v720, %v708
    %v741 = vadd.f32 %v723, %v709
    %v742 = vadd.f32 %v726, %v710
    %v743 = vadd.f32 %v729, %v711
    %v744 = vadd.f32 %v732, %v712
    %v745 = vadd.f32 %v735, %v713
    %v746 = vadd.f32 %v738, %v714
    %v747 = vpack.c.bf16 %v675, %v675
    %v748 = vpack.c.bf16 %v676, %v676
    %v749 = vpack.c.bf16 %v677, %v677
    %v750 = vpack.c.bf16 %v678, %v678
    %v751 = vpack.c.bf16 %v679, %v679
    %v752 = vpack.c.bf16 %v680, %v680
    %v753 = vpack.c.bf16 %v681, %v681
    %v754 = vpack.c.bf16 %v682, %v682
    %v755 = vmul.f32 %v707, %v542
    %v756 = vmul.f32 %v708, %v546
    %v757 = vmul.f32 %v709, %v550
    %v758 = vmul.f32 %v710, %v554
    %v759 = vmul.f32 %v711, %v558
    %v760 = vmul.f32 %v712, %v562
    %v761 = vmul.f32 %v713, %v566
    %v762 = vmul.f32 %v714, %v570
    %v764 = vsel %vm168, %v747, 0
    %vm766 = vcmask 1043456
    %v767 = vsel %vm766, %v160, 0
    %769 = vmatprep.subr.bf16.mxu0 0
    %770 = vmatpush1.bf16.msra.mxu0 %v767
    %771 = vmatprep.subr.bf16.mxu0 0
    %772 = vmatpush1.bf16.msra.mxu0 0
    %773 = vmatprep.subr.bf16.mxu0 0
    %774 = vmatpush1.bf16.msra.mxu0 0
    %775 = vmatprep.subr.bf16.mxu0 0
    %776 = vmatpush1.bf16.msra.mxu0 0
    %777 = vmatprep.subr.bf16.mxu0 0
    %778 = vmatpush1.bf16.msra.mxu0 0
    %779 = vmatprep.subr.bf16.mxu0 0
    %780 = vmatpush1.bf16.msra.mxu0 0
    %781 = vmatprep.subr.bf16.mxu0 0
    %782 = vmatpush1.bf16.msra.mxu0 0
    %783 = vmatprep.subr.bf16.mxu0 0
    %784 = vmatpush1.bf16.msra.mxu0 0
    %785 = vmatprep.subr.bf16.mxu0 0
    %786 = vmatpush1.bf16.msra.mxu0 0
    %787 = vmatprep.subr.bf16.mxu0 0
    %788 = vmatpush1.bf16.msra.mxu0 0
    %789 = vmatprep.subr.bf16.mxu0 0
    %790 = vmatpush1.bf16.msra.mxu0 0
    %791 = vmatprep.subr.bf16.mxu0 0
    %792 = vmatpush1.bf16.msra.mxu0 0
    %793 = vmatprep.subr.bf16.mxu0 0
    %794 = vmatpush1.bf16.msra.mxu0 0
    %795 = vmatprep.subr.bf16.mxu0 0
    %796 = vmatpush1.bf16.msra.mxu0 0
    %797 = vmatprep.subr.bf16.mxu0 0
    %798 = vmatpush1.bf16.msra.mxu0 0
    %799 = vmatprep.subr.bf16.mxu0 0
    %800 = vmatpush1.bf16.msra.mxu0 0
    %801 = vmatprep.mubr.bf16.mxu0 0
    %802 = vmatmul.mubr.bf16.gmra.mrb[0].mxu0 %v764
    %v803 = vpop.f32.mrb[0].mxu0
    %v804 = vadd.f32 %v755, %v803
    %v805 = vpop.f32.mrb[0].mxu0
    %v806 = vpop.f32.mrb[0].mxu0
    %v807 = vpop.f32.mrb[0].mxu0
    %808 = vdwg.mxu0
    %v810 = vsel %vm168, %v748, 0
    %v812 = vsel %vm766, %v161, 0
    %814 = vmatprep.subr.bf16.mxu0 0
    %815 = vmatpush1.bf16.msra.mxu0 %v812
    %816 = vmatprep.subr.bf16.mxu0 0
    %817 = vmatpush1.bf16.msra.mxu0 0
    %818 = vmatprep.subr.bf16.mxu0 0
    %819 = vmatpush1.bf16.msra.mxu0 0
    %820 = vmatprep.subr.bf16.mxu0 0
    %821 = vmatpush1.bf16.msra.mxu0 0
    %822 = vmatprep.subr.bf16.mxu0 0
    %823 = vmatpush1.bf16.msra.mxu0 0
    %824 = vmatprep.subr.bf16.mxu0 0
    %825 = vmatpush1.bf16.msra.mxu0 0
    %826 = vmatprep.subr.bf16.mxu0 0
    %827 = vmatpush1.bf16.msra.mxu0 0
    %828 = vmatprep.subr.bf16.mxu0 0
    %829 = vmatpush1.bf16.msra.mxu0 0
    %830 = vmatprep.subr.bf16.mxu0 0
    %831 = vmatpush1.bf16.msra.mxu0 0
    %832 = vmatprep.subr.bf16.mxu0 0
    %833 = vmatpush1.bf16.msra.mxu0 0
    %834 = vmatprep.subr.bf16.mxu0 0
    %835 = vmatpush1.bf16.msra.mxu0 0
    %836 = vmatprep.subr.bf16.mxu0 0
    %837 = vmatpush1.bf16.msra.mxu0 0
    %838 = vmatprep.subr.bf16.mxu0 0
    %839 = vmatpush1.bf16.msra.mxu0 0
    %840 = vmatprep.subr.bf16.mxu0 0
    %841 = vmatpush1.bf16.msra.mxu0 0
    %842 = vmatprep.subr.bf16.mxu0 0
    %843 = vmatpush1.bf16.msra.mxu0 0
    %844 = vmatprep.subr.bf16.mxu0 0
    %845 = vmatpush1.bf16.msra.mxu0 0
    %846 = vmatprep.mubr.bf16.mxu0 0
    %847 = vmatmul.mubr.bf16.gmra.mrb[0].mxu0 %v810
    %v848 = vpop.f32.mrb[0].mxu0
    %v849 = vadd.f32 %v756, %v848
    %v850 = vpop.f32.mrb[0].mxu0
    %v851 = vpop.f32.mrb[0].mxu0
    %v852 = vpop.f32.mrb[0].mxu0
    %853 = vdwg.mxu0
    %v855 = vsel %vm168, %v749, 0
    %v857 = vsel %vm766, %v162, 0
    %859 = vmatprep.subr.bf16.mxu0 0
    %860 = vmatpush1.bf16.msra.mxu0 %v857
    %861 = vmatprep.subr.bf16.mxu0 0
    %862 = vmatpush1.bf16.msra.mxu0 0
    %863 = vmatprep.subr.bf16.mxu0 0
    %864 = vmatpush1.bf16.msra.mxu0 0
    %865 = vmatprep.subr.bf16.mxu0 0
    %866 = vmatpush1.bf16.msra.mxu0 0
    %867 = vmatprep.subr.bf16.mxu0 0
    %868 = vmatpush1.bf16.msra.mxu0 0
    %869 = vmatprep.subr.bf16.mxu0 0
    %870 = vmatpush1.bf16.msra.mxu0 0
    %871 = vmatprep.subr.bf16.mxu0 0
    %872 = vmatpush1.bf16.msra.mxu0 0
    %873 = vmatprep.subr.bf16.mxu0 0
    %874 = vmatpush1.bf16.msra.mxu0 0
    %875 = vmatprep.subr.bf16.mxu0 0
    %876 = vmatpush1.bf16.msra.mxu0 0
    %877 = vmatprep.subr.bf16.mxu0 0
    %878 = vmatpush1.bf16.msra.mxu0 0
    %879 = vmatprep.subr.bf16.mxu0 0
    %880 = vmatpush1.bf16.msra.mxu0 0
    %881 = vmatprep.subr.bf16.mxu0 0
    %882 = vmatpush1.bf16.msra.mxu0 0
    %883 = vmatprep.subr.bf16.mxu0 0
    %884 = vmatpush1.bf16.msra.mxu0 0
    %885 = vmatprep.subr.bf16.mxu0 0
    %886 = vmatpush1.bf16.msra.mxu0 0
    %887 = vmatprep.subr.bf16.mxu0 0
    %888 = vmatpush1.bf16.msra.mxu0 0
    %889 = vmatprep.subr.bf16.mxu0 0
    %890 = vmatpush1.bf16.msra.mxu0 0
    %891 = vmatprep.mubr.bf16.mxu0 0
    %892 = vmatmul.mubr.bf16.gmra.mrb[0].mxu0 %v855
    %v893 = vpop.f32.mrb[0].mxu0
    %v894 = vadd.f32 %v757, %v893
    %v895 = vpop.f32.mrb[0].mxu0
    %v896 = vpop.f32.mrb[0].mxu0
    %v897 = vpop.f32.mrb[0].mxu0
    %898 = vdwg.mxu0
    %v900 = vsel %vm168, %v750, 0
    %v902 = vsel %vm766, %v163, 0
    %904 = vmatprep.subr.bf16.mxu0 0
    %905 = vmatpush1.bf16.msra.mxu0 %v902
    %906 = vmatprep.subr.bf16.mxu0 0
    %907 = vmatpush1.bf16.msra.mxu0 0
    %908 = vmatprep.subr.bf16.mxu0 0
    %909 = vmatpush1.bf16.msra.mxu0 0
    %910 = vmatprep.subr.bf16.mxu0 0
    %911 = vmatpush1.bf16.msra.mxu0 0
    %912 = vmatprep.subr.bf16.mxu0 0
    %913 = vmatpush1.bf16.msra.mxu0 0
    %914 = vmatprep.subr.bf16.mxu0 0
    %915 = vmatpush1.bf16.msra.mxu0 0
    %916 = vmatprep.subr.bf16.mxu0 0
    %917 = vmatpush1.bf16.msra.mxu0 0
    %918 = vmatprep.subr.bf16.mxu0 0
    %919 = vmatpush1.bf16.msra.mxu0 0
    %920 = vmatprep.subr.bf16.mxu0 0
    %921 = vmatpush1.bf16.msra.mxu0 0
    %922 = vmatprep.subr.bf16.mxu0 0
    %923 = vmatpush1.bf16.msra.mxu0 0
    %924 = vmatprep.subr.bf16.mxu0 0
    %925 = vmatpush1.bf16.msra.mxu0 0
    %926 = vmatprep.subr.bf16.mxu0 0
    %927 = vmatpush1.bf16.msra.mxu0 0
    %928 = vmatprep.subr.bf16.mxu0 0
    %929 = vmatpush1.bf16.msra.mxu0 0
    %930 = vmatprep.subr.bf16.mxu0 0
    %931 = vmatpush1.bf16.msra.mxu0 0
    %932 = vmatprep.subr.bf16.mxu0 0
    %933 = vmatpush1.bf16.msra.mxu0 0
    %934 = vmatprep.subr.bf16.mxu0 0
    %935 = vmatpush1.bf16.msra.mxu0 0
    %936 = vmatprep.mubr.bf16.mxu0 0
    %937 = vmatmul.mubr.bf16.gmra.mrb[0].mxu0 %v900
    %v938 = vpop.f32.mrb[0].mxu0
    %v939 = vadd.f32 %v758, %v938
    %v940 = vpop.f32.mrb[0].mxu0
    %v941 = vpop.f32.mrb[0].mxu0
    %v942 = vpop.f32.mrb[0].mxu0
    %943 = vdwg.mxu0
    %v945 = vsel %vm168, %v751, 0
    %v947 = vsel %vm766, %v164, 0
    %949 = vmatprep.subr.bf16.mxu0 0
    %950 = vmatpush1.bf16.msra.mxu0 %v947
    %951 = vmatprep.subr.bf16.mxu0 0
    %952 = vmatpush1.bf16.msra.mxu0 0
    %953 = vmatprep.subr.bf16.mxu0 0
    %954 = vmatpush1.bf16.msra.mxu0 0
    %955 = vmatprep.subr.bf16.mxu0 0
    %956 = vmatpush1.bf16.msra.mxu0 0
    %957 = vmatprep.subr.bf16.mxu0 0
    %958 = vmatpush1.bf16.msra.mxu0 0
    %959 = vmatprep.subr.bf16.mxu0 0
    %960 = vmatpush1.bf16.msra.mxu0 0
    %961 = vmatprep.subr.bf16.mxu0 0
    %962 = vmatpush1.bf16.msra.mxu0 0
    %963 = vmatprep.subr.bf16.mxu0 0
    %964 = vmatpush1.bf16.msra.mxu0 0
    %965 = vmatprep.subr.bf16.mxu0 0
    %966 = vmatpush1.bf16.msra.mxu0 0
    %967 = vmatprep.subr.bf16.mxu0 0
    %968 = vmatpush1.bf16.msra.mxu0 0
    %969 = vmatprep.subr.bf16.mxu0 0
    %970 = vmatpush1.bf16.msra.mxu0 0
    %971 = vmatprep.subr.bf16.mxu0 0
    %972 = vmatpush1.bf16.msra.mxu0 0
    %973 = vmatprep.subr.bf16.mxu0 0
    %974 = vmatpush1.bf16.msra.mxu0 0
    %975 = vmatprep.subr.bf16.mxu0 0
    %976 = vmatpush1.bf16.msra.mxu0 0
    %977 = vmatprep.subr.bf16.mxu0 0
    %978 = vmatpush1.bf16.msra.mxu0 0
    %979 = vmatprep.subr.bf16.mxu0 0
    %980 = vmatpush1.bf16.msra.mxu0 0
    %981 = vmatprep.mubr.bf16.mxu0 0
    %982 = vmatmul.mubr.bf16.gmra.mrb[0].mxu0 %v945
    %v983 = vpop.f32.mrb[0].mxu0
    %v984 = vadd.f32 %v759, %v983
    %v985 = vpop.f32.mrb[0].mxu0
    %v986 = vpop.f32.mrb[0].mxu0
    %v987 = vpop.f32.mrb[0].mxu0
    %988 = vdwg.mxu0
    %v990 = vsel %vm168, %v752, 0
    %v992 = vsel %vm766, %v165, 0
    %994 = vmatprep.subr.bf16.mxu0 0
    %995 = vmatpush1.bf16.msra.mxu0 %v992
    %996 = vmatprep.subr.bf16.mxu0 0
    %997 = vmatpush1.bf16.msra.mxu0 0
    %998 = vmatprep.subr.bf16.mxu0 0
    %999 = vmatpush1.bf16.msra.mxu0 0
    %1000 = vmatprep.subr.bf16.mxu0 0
    %1001 = vmatpush1.bf16.msra.mxu0 0
    %1002 = vmatprep.subr.bf16.mxu0 0
    %1003 = vmatpush1.bf16.msra.mxu0 0
    %1004 = vmatprep.subr.bf16.mxu0 0
    %1005 = vmatpush1.bf16.msra.mxu0 0
    %1006 = vmatprep.subr.bf16.mxu0 0
    %1007 = vmatpush1.bf16.msra.mxu0 0
    %1008 = vmatprep.subr.bf16.mxu0 0
    %1009 = vmatpush1.bf16.msra.mxu0 0
    %1010 = vmatprep.subr.bf16.mxu0 0
    %1011 = vmatpush1.bf16.msra.mxu0 0
    %1012 = vmatprep.subr.bf16.mxu0 0
    %1013 = vmatpush1.bf16.msra.mxu0 0
    %1014 = vmatprep.subr.bf16.mxu0 0
    %1015 = vmatpush1.bf16.msra.mxu0 0
    %1016 = vmatprep.subr.bf16.mxu0 0
    %1017 = vmatpush1.bf16.msra.mxu0 0
    %1018 = vmatprep.subr.bf16.mxu0 0
    %1019 = vmatpush1.bf16.msra.mxu0 0
    %1020 = vmatprep.subr.bf16.mxu0 0
    %1021 = vmatpush1.bf16.msra.mxu0 0
    %1022 = vmatprep.subr.bf16.mxu0 0
    %1023 = vmatpush1.bf16.msra.mxu0 0
    %1024 = vmatprep.subr.bf16.mxu0 0
    %1025 = vmatpush1.bf16.msra.mxu0 0
    %1026 = vmatprep.mubr.bf16.mxu0 0
    %1027 = vmatmul.mubr.bf16.gmra.mrb[0].mxu0 %v990
    %v1028 = vpop.f32.mrb[0].mxu0
    %v1029 = vadd.f32 %v760, %v1028
    %v1030 = vpop.f32.mrb[0].mxu0
    %v1031 = vpop.f32.mrb[0].mxu0
    %v1032 = vpop.f32.mrb[0].mxu0
    %1033 = vdwg.mxu0
    %v1035 = vsel %vm168, %v753, 0
    %v1037 = vsel %vm766, %v166, 0
    %1039 = vmatprep.subr.bf16.mxu0 0
    %1040 = vmatpush1.bf16.msra.mxu0 %v1037
    %1041 = vmatprep.subr.bf16.mxu0 0
    %1042 = vmatpush1.bf16.msra.mxu0 0
    %1043 = vmatprep.subr.bf16.mxu0 0
    %1044 = vmatpush1.bf16.msra.mxu0 0
    %1045 = vmatprep.subr.bf16.mxu0 0
    %1046 = vmatpush1.bf16.msra.mxu0 0
    %1047 = vmatprep.subr.bf16.mxu0 0
    %1048 = vmatpush1.bf16.msra.mxu0 0
    %1049 = vmatprep.subr.bf16.mxu0 0
    %1050 = vmatpush1.bf16.msra.mxu0 0
    %1051 = vmatprep.subr.bf16.mxu0 0
    %1052 = vmatpush1.bf16.msra.mxu0 0
    %1053 = vmatprep.subr.bf16.mxu0 0
    %1054 = vmatpush1.bf16.msra.mxu0 0
    %1055 = vmatprep.subr.bf16.mxu0 0
    %1056 = vmatpush1.bf16.msra.mxu0 0
    %1057 = vmatprep.subr.bf16.mxu0 0
    %1058 = vmatpush1.bf16.msra.mxu0 0
    %1059 = vmatprep.subr.bf16.mxu0 0
    %1060 = vmatpush1.bf16.msra.mxu0 0
    %1061 = vmatprep.subr.bf16.mxu0 0
    %1062 = vmatpush1.bf16.msra.mxu0 0
    %1063 = vmatprep.subr.bf16.mxu0 0
    %1064 = vmatpush1.bf16.msra.mxu0 0
    %1065 = vmatprep.subr.bf16.mxu0 0
    %1066 = vmatpush1.bf16.msra.mxu0 0
    %1067 = vmatprep.subr.bf16.mxu0 0
    %1068 = vmatpush1.bf16.msra.mxu0 0
    %1069 = vmatprep.subr.bf16.mxu0 0
    %1070 = vmatpush1.bf16.msra.mxu0 0
    %1071 = vmatprep.mubr.bf16.mxu0 0
    %1072 = vmatmul.mubr.bf16.gmra.mrb[0].mxu0 %v1035
    %v1073 = vpop.f32.mrb[0].mxu0
    %v1074 = vadd.f32 %v761, %v1073
    %v1075 = vpop.f32.mrb[0].mxu0
    %v1076 = vpop.f32.mrb[0].mxu0
    %v1077 = vpop.f32.mrb[0].mxu0
    %1078 = vdwg.mxu0
    %v1080 = vsel %vm168, %v754, 0
    %v1082 = vsel %vm766, %v167, 0
    %1084 = vmatprep.subr.bf16.mxu0 0
    %1085 = vmatpush1.bf16.msra.mxu0 %v1082
    %1086 = vmatprep.subr.bf16.mxu0 0
    %1087 = vmatpush1.bf16.msra.mxu0 0
    %1088 = vmatprep.subr.bf16.mxu0 0
    %1089 = vmatpush1.bf16.msra.mxu0 0
    %1090 = vmatprep.subr.bf16.mxu0 0
    %1091 = vmatpush1.bf16.msra.mxu0 0
    %1092 = vmatprep.subr.bf16.mxu0 0
    %1093 = vmatpush1.bf16.msra.mxu0 0
    %1094 = vmatprep.subr.bf16.mxu0 0
    %1095 = vmatpush1.bf16.msra.mxu0 0
    %1096 = vmatprep.subr.bf16.mxu0 0
    %1097 = vmatpush1.bf16.msra.mxu0 0
    %1098 = vmatprep.subr.bf16.mxu0 0
    %1099 = vmatpush1.bf16.msra.mxu0 0
    %1100 = vmatprep.subr.bf16.mxu0 0
    %1101 = vmatpush1.bf16.msra.mxu0 0
    %1102 = vmatprep.subr.bf16.mxu0 0
    %1103 = vmatpush1.bf16.msra.mxu0 0
    %1104 = vmatprep.subr.bf16.mxu0 0
    %1105 = vmatpush1.bf16.msra.mxu0 0
    %1106 = vmatprep.subr.bf16.mxu0 0
    %1107 = vmatpush1.bf16.msra.mxu0 0
    %1108 = vmatprep.subr.bf16.mxu0 0
    %1109 = vmatpush1.bf16.msra.mxu0 0
    %1110 = vmatprep.subr.bf16.mxu0 0
    %1111 = vmatpush1.bf16.msra.mxu0 0
    %1112 = vmatprep.subr.bf16.mxu0 0
    %1113 = vmatpush1.bf16.msra.mxu0 0
    %1114 = vmatprep.subr.bf16.mxu0 0
    %1115 = vmatpush1.bf16.msra.mxu0 0
    %1116 = vmatprep.mubr.bf16.mxu0 0
    %1117 = vmatmul.mubr.bf16.gmra.mrb[0].mxu0 %v1080
    %v1118 = vpop.f32.mrb[0].mxu0
    %v1119 = vadd.f32 %v762, %v1118
    %v1120 = vpop.f32.mrb[0].mxu0
    %v1121 = vpop.f32.mrb[0].mxu0
    %v1122 = vpop.f32.mrb[0].mxu0
    %1123 = vdwg.mxu0
    %v1124 = vrcp.pop %v739
    %v1125 = vrcp.pop %v740
    %v1126 = vrcp.pop %v741
    %v1127 = vrcp.pop %v742
    %v1128 = vrcp.pop %v743
    %v1129 = vrcp.pop %v744
    %v1130 = vrcp.pop %v745
    %v1131 = vrcp.pop %v746
    %v1132 = vmul.f32 %v804, %v1124
    %v1133 = vmul.f32 %v849, %v1125
    %v1134 = vmul.f32 %v894, %v1126
    %v1135 = vmul.f32 %v939, %v1127
    %v1136 = vmul.f32 %v984, %v1128
    %v1137 = vmul.f32 %v1029, %v1129
    %v1138 = vmul.f32 %v1074, %v1130
    %v1139 = vmul.f32 %v1119, %v1131
    %s1140 = scalar_lea.vmem %s3, 16
    %v1141 = vld [vmem:[%s1140] sm:$0xf]
    %v1142 = vld [vmem:[%s1140 + $0x4] sm:$0xf]
    %v1143 = vld [vmem:[%s1140 + $0x8] sm:$0xf]
    %v1144 = vld [vmem:[%s1140 + $0xc] sm:$0xf]
    %s1145 = scalar_lea.vmem %s4, 1
    %v1146 = vld [vmem:[%s1145] sm:$0x1]
    %v1148 = vlaneseq
    %v1149 = vshrl.u32 %v1148, 7
    %v1150 = vsub.s32 0, %v1149
    %v1151 = vrot.slane %v1146, %v1150
    %v1157 = vunpack.c.l.b16 %v1141
    %v1158 = vunpack.c.l.b16 %v1142
    %v1159 = vunpack.c.l.b16 %v1143
    %v1160 = vunpack.c.l.b16 %v1144
    %v1161 = vpack.c.b16 %v1158, %v1157
    %v1162 = vpack.c.b16 %v1160, %v1159
    %1165 = vmatprep.subr.bf16.mxu0 0
    %1166 = vmatpush1.bf16.msra.mxu0 %v1161
    %1167 = vmatprep.subr.bf16.mxu0 0
    %1168 = vmatpush1.bf16.msra.mxu0 %v1162
    %1169 = vmatprep.subr.bf16.mxu0 0
    %1170 = vmatpush1.bf16.msra.mxu0 0
    %1171 = vmatprep.subr.bf16.mxu0 0
    %1172 = vmatpush1.bf16.msra.mxu0 0
    %1173 = vmatprep.subr.bf16.mxu0 0
    %1174 = vmatpush1.bf16.msra.mxu0 0
    %1175 = vmatprep.subr.bf16.mxu0 0
    %1176 = vmatpush1.bf16.msra.mxu0 0
    %1177 = vmatprep.subr.bf16.mxu0 0
    %1178 = vmatpush1.bf16.msra.mxu0 0
    %1179 = vmatprep.subr.bf16.mxu0 0
    %1180 = vmatpush1.bf16.msra.mxu0 0
    %1181 = vmatprep.subr.bf16.mxu0 0
    %1182 = vmatpush1.bf16.msra.mxu0 0
    %1183 = vmatprep.subr.bf16.mxu0 0
    %1184 = vmatpush1.bf16.msra.mxu0 0
    %1185 = vmatprep.subr.bf16.mxu0 0
    %1186 = vmatpush1.bf16.msra.mxu0 0
    %1187 = vmatprep.subr.bf16.mxu0 0
    %1188 = vmatpush1.bf16.msra.mxu0 0
    %1189 = vmatprep.subr.bf16.mxu0 0
    %1190 = vmatpush1.bf16.msra.mxu0 0
    %1191 = vmatprep.subr.bf16.mxu0 0
    %1192 = vmatpush1.bf16.msra.mxu0 0
    %1193 = vmatprep.subr.bf16.mxu0 0
    %1194 = vmatpush1.bf16.msra.mxu0 0
    %1195 = vmatprep.subr.bf16.mxu0 0
    %1196 = vmatpush1.bf16.msra.mxu0 0
    %1197 = vmatprep.mubr.bf16.mxu0 0
    %1198 = vmatmul.mubr.bf16.gmra.mrb[0].mxu0 %v89
    %v1199 = vpop.f32.mrb[0].mxu0
    %v1200 = vadd.f32 %v1151, %v1199
    %v1201 = vpop.f32.mrb[0].mxu0
    %v1202 = vpop.f32.mrb[0].mxu0
    %v1203 = vadd.f32 %v1151, %v1202
    %v1204 = vpop.f32.mrb[0].mxu0
    %1205 = vdwg.mxu0
    %1208 = vrot.lane.b32.xlu0 %v1200, 120
    %v1209 = vpop.permute.xlu0 %1208
    %1210 = vrot.lane.b32.xlu0 %v1203, 120
    %v1211 = vpop.permute.xlu0 %1210
    %1214 = vrot.lane.b32.xlu0 %v1200, 112
    %v1215 = vpop.permute.xlu0 %1214
    %1216 = vrot.lane.b32.xlu0 %v1203, 112
    %v1217 = vpop.permute.xlu0 %1216
    %1220 = vrot.lane.b32.xlu0 %v1200, 104
    %v1221 = vpop.permute.xlu0 %1220
    %1222 = vrot.lane.b32.xlu0 %v1203, 104
    %v1223 = vpop.permute.xlu0 %1222
    %s1226 = scalar_lea.vmem %s5, 8
    %v1227 = vld [vmem:[%s1226] sm:$0x1]
    %v1228 = vld [vmem:[%s1226 + $0x1] sm:$0x1]
    %v1229 = vld [vmem:[%s1226 + $0x2] sm:$0x1]
    %v1230 = vld [vmem:[%s1226 + $0x3] sm:$0x1]
    %v1231 = vld [vmem:[%s1226 + $0x4] sm:$0x1]
    %v1232 = vld [vmem:[%s1226 + $0x5] sm:$0x1]
    %v1233 = vld [vmem:[%s1226 + $0x6] sm:$0x1]
    %v1234 = vld [vmem:[%s1226 + $0x7] sm:$0x1]
    %v1235 = vpack.c.bf16 %v1200, %v1200
    %v1236 = vpack.c.bf16 %v1203, %v1203
    %v1237 = vpack.c.bf16 %v1209, %v1209
    %v1238 = vpack.c.bf16 %v1211, %v1211
    %v1239 = vpack.c.bf16 %v1215, %v1215
    %v1240 = vpack.c.bf16 %v1217, %v1217
    %v1241 = vpack.c.bf16 %v1221, %v1221
    %v1242 = vpack.c.bf16 %v1223, %v1223
    %v1244 = vsel %vm168, %v1235, 0
    %1246 = vmatprep.subr.bf16.mxu0 0
    %1247 = vmatpush1.bf16.xpose.msra.mxu0 %v1244
    %1248 = vmatprep.subr.bf16.mxu0 0
    %1249 = vmatpush1.bf16.xpose.msra.mxu0 0
    %1250 = vmatprep.subr.bf16.mxu0 0
    %1251 = vmatpush1.bf16.xpose.msra.mxu0 0
    %1252 = vmatprep.subr.bf16.mxu0 0
    %1253 = vmatpush1.bf16.xpose.msra.mxu0 0
    %1254 = vmatprep.subr.bf16.mxu0 0
    %1255 = vmatpush1.bf16.xpose.msra.mxu0 0
    %1256 = vmatprep.subr.bf16.mxu0 0
    %1257 = vmatpush1.bf16.xpose.msra.mxu0 0
    %1258 = vmatprep.subr.bf16.mxu0 0
    %1259 = vmatpush1.bf16.xpose.msra.mxu0 0
    %1260 = vmatprep.subr.bf16.mxu0 0
    %1261 = vmatpush1.bf16.xpose.msra.mxu0 0
    %1262 = vmatprep.subr.bf16.mxu0 0
    %1263 = vmatpush1.bf16.xpose.msra.mxu0 0
    %1264 = vmatprep.subr.bf16.mxu0 0
    %1265 = vmatpush1.bf16.xpose.msra.mxu0 0
    %1266 = vmatprep.subr.bf16.mxu0 0
    %1267 = vmatpush1.bf16.xpose.msra.mxu0 0
    %1268 = vmatprep.subr.bf16.mxu0 0
    %1269 = vmatpush1.bf16.xpose.msra.mxu0 0
    %1270 = vmatprep.subr.bf16.mxu0 0
    %1271 = vmatpush1.bf16.xpose.msra.mxu0 0
    %1272 = vmatprep.subr.bf16.mxu0 0
    %1273 = vmatpush1.bf16.xpose.msra.mxu0 0
    %1274 = vmatprep.subr.bf16.mxu0 0
    %1275 = vmatpush1.bf16.xpose.msra.mxu0 0
    %1276 = vmatprep.subr.bf16.mxu0 0
    %1277 = vmatpush1.bf16.xpose.msra.mxu0 0
    %1278 = vmatprep.mubr.bf16.mxu0 0
    %1279 = vmatmul.mubr.bf16.gmra.mrb[0].mxu0 %v1244
    %v1280 = vpop.f32.mrb[0].mxu0
    %v1281 = vadd.f32 0.0, %v1280
    %v1282 = vpop.f32.mrb[0].mxu0
    %v1283 = vpop.f32.mrb[0].mxu0
    %v1284 = vpop.f32.mrb[0].mxu0
    %1285 = vdwg.mxu0
    %v1287 = vsel %vm168, %v1236, 0
    %1289 = vmatprep.subr.bf16.mxu0 0
    %1290 = vmatpush1.bf16.xpose.msra.mxu0 %v1287
    %1291 = vmatprep.subr.bf16.mxu0 0
    %1292 = vmatpush1.bf16.xpose.msra.mxu0 0
    %1293 = vmatprep.subr.bf16.mxu0 0
    %1294 = vmatpush1.bf16.xpose.msra.mxu0 0
    %1295 = vmatprep.subr.bf16.mxu0 0
    %1296 = vmatpush1.bf16.xpose.msra.mxu0 0
    %1297 = vmatprep.subr.bf16.mxu0 0
    %1298 = vmatpush1.bf16.xpose.msra.mxu0 0
    %1299 = vmatprep.subr.bf16.mxu0 0
    %1300 = vmatpush1.bf16.xpose.msra.mxu0 0
    %1301 = vmatprep.subr.bf16.mxu0 0
    %1302 = vmatpush1.bf16.xpose.msra.mxu0 0
    %1303 = vmatprep.subr.bf16.mxu0 0
    %1304 = vmatpush1.bf16.xpose.msra.mxu0 0
    %1305 = vmatprep.subr.bf16.mxu0 0
    %1306 = vmatpush1.bf16.xpose.msra.mxu0 0
    %1307 = vmatprep.subr.bf16.mxu0 0
    %1308 = vmatpush1.bf16.xpose.msra.mxu0 0
    %1309 = vmatprep.subr.bf16.mxu0 0
    %1310 = vmatpush1.bf16.xpose.msra.mxu0 0
    %1311 = vmatprep.subr.bf16.mxu0 0
    %1312 = vmatpush1.bf16.xpose.msra.mxu0 0
    %1313 = vmatprep.subr.bf16.mxu0 0
    %1314 = vmatpush1.bf16.xpose.msra.mxu0 0
    %1315 = vmatprep.subr.bf16.mxu0 0
    %1316 = vmatpush1.bf16.xpose.msra.mxu0 0
    %1317 = vmatprep.subr.bf16.mxu0 0
    %1318 = vmatpush1.bf16.xpose.msra.mxu0 0
    %1319 = vmatprep.subr.bf16.mxu0 0
    %1320 = vmatpush1.bf16.xpose.msra.mxu0 0
    %1321 = vmatprep.mubr.bf16.mxu0 0
    %1322 = vmatmul.mubr.bf16.gmra.mrb[0].mxu0 %v1287
    %v1323 = vpop.f32.mrb[0].mxu0
    %v1324 = vadd.f32 0.0, %v1323
    %v1325 = vpop.f32.mrb[0].mxu0
    %v1326 = vpop.f32.mrb[0].mxu0
    %v1327 = vpop.f32.mrb[0].mxu0
    %1328 = vdwg.mxu0
    %v1330 = vsel %vm168, %v1237, 0
    %1332 = vmatprep.subr.bf16.mxu0 0
    %1333 = vmatpush1.bf16.xpose.msra.mxu0 %v1330
    %1334 = vmatprep.subr.bf16.mxu0 0
    %1335 = vmatpush1.bf16.xpose.msra.mxu0 0
    %1336 = vmatprep.subr.bf16.mxu0 0
    %1337 = vmatpush1.bf16.xpose.msra.mxu0 0
    %1338 = vmatprep.subr.bf16.mxu0 0
    %1339 = vmatpush1.bf16.xpose.msra.mxu0 0
    %1340 = vmatprep.subr.bf16.mxu0 0
    %1341 = vmatpush1.bf16.xpose.msra.mxu0 0
    %1342 = vmatprep.subr.bf16.mxu0 0
    %1343 = vmatpush1.bf16.xpose.msra.mxu0 0
    %1344 = vmatprep.subr.bf16.mxu0 0
    %1345 = vmatpush1.bf16.xpose.msra.mxu0 0
    %1346 = vmatprep.subr.bf16.mxu0 0
    %1347 = vmatpush1.bf16.xpose.msra.mxu0 0
    %1348 = vmatprep.subr.bf16.mxu0 0
    %1349 = vmatpush1.bf16.xpose.msra.mxu0 0
    %1350 = vmatprep.subr.bf16.mxu0 0
    %1351 = vmatpush1.bf16.xpose.msra.mxu0 0
    %1352 = vmatprep.subr.bf16.mxu0 0
    %1353 = vmatpush1.bf16.xpose.msra.mxu0 0
    %1354 = vmatprep.subr.bf16.mxu0 0
    %1355 = vmatpush1.bf16.xpose.msra.mxu0 0
    %1356 = vmatprep.subr.bf16.mxu0 0
    %1357 = vmatpush1.bf16.xpose.msra.mxu0 0
    %1358 = vmatprep.subr.bf16.mxu0 0
    %1359 = vmatpush1.bf16.xpose.msra.mxu0 0
    %1360 = vmatprep.subr.bf16.mxu0 0
    %1361 = vmatpush1.bf16.xpose.msra.mxu0 0
    %1362 = vmatprep.subr.bf16.mxu0 0
    %1363 = vmatpush1.bf16.xpose.msra.mxu0 0
    %1364 = vmatprep.mubr.bf16.mxu0 0
    %1365 = vmatmul.mubr.bf16.gmra.mrb[0].mxu0 %v1330
    %v1366 = vpop.f32.mrb[0].mxu0
    %v1367 = vadd.f32 0.0, %v1366
    %v1368 = vpop.f32.mrb[0].mxu0
    %v1369 = vpop.f32.mrb[0].mxu0
    %v1370 = vpop.f32.mrb[0].mxu0
    %1371 = vdwg.mxu0
    %v1373 = vsel %vm168, %v1238, 0
    %1375 = vmatprep.subr.bf16.mxu0 0
    %1376 = vmatpush1.bf16.xpose.msra.mxu0 %v1373
    %1377 = vmatprep.subr.bf16.mxu0 0
    %1378 = vmatpush1.bf16.xpose.msra.mxu0 0
    %1379 = vmatprep.subr.bf16.mxu0 0
    %1380 = vmatpush1.bf16.xpose.msra.mxu0 0
    %1381 = vmatprep.subr.bf16.mxu0 0
    %1382 = vmatpush1.bf16.xpose.msra.mxu0 0
    %1383 = vmatprep.subr.bf16.mxu0 0
    %1384 = vmatpush1.bf16.xpose.msra.mxu0 0
    %1385 = vmatprep.subr.bf16.mxu0 0
    %1386 = vmatpush1.bf16.xpose.msra.mxu0 0
    %1387 = vmatprep.subr.bf16.mxu0 0
    %1388 = vmatpush1.bf16.xpose.msra.mxu0 0
    %1389 = vmatprep.subr.bf16.mxu0 0
    %1390 = vmatpush1.bf16.xpose.msra.mxu0 0
    %1391 = vmatprep.subr.bf16.mxu0 0
    %1392 = vmatpush1.bf16.xpose.msra.mxu0 0
    %1393 = vmatprep.subr.bf16.mxu0 0
    %1394 = vmatpush1.bf16.xpose.msra.mxu0 0
    %1395 = vmatprep.subr.bf16.mxu0 0
    %1396 = vmatpush1.bf16.xpose.msra.mxu0 0
    %1397 = vmatprep.subr.bf16.mxu0 0
    %1398 = vmatpush1.bf16.xpose.msra.mxu0 0
    %1399 = vmatprep.subr.bf16.mxu0 0
    %1400 = vmatpush1.bf16.xpose.msra.mxu0 0
    %1401 = vmatprep.subr.bf16.mxu0 0
    %1402 = vmatpush1.bf16.xpose.msra.mxu0 0
    %1403 = vmatprep.subr.bf16.mxu0 0
    %1404 = vmatpush1.bf16.xpose.msra.mxu0 0
    %1405 = vmatprep.subr.bf16.mxu0 0
    %1406 = vmatpush1.bf16.xpose.msra.mxu0 0
    %1407 = vmatprep.mubr.bf16.mxu0 0
    %1408 = vmatmul.mubr.bf16.gmra.mrb[0].mxu0 %v1373
    %v1409 = vpop.f32.mrb[0].mxu0
    %v1410 = vadd.f32 0.0, %v1409
    %v1411 = vpop.f32.mrb[0].mxu0
    %v1412 = vpop.f32.mrb[0].mxu0
    %v1413 = vpop.f32.mrb[0].mxu0
    %1414 = vdwg.mxu0
    %v1416 = vsel %vm168, %v1239, 0
    %1418 = vmatprep.subr.bf16.mxu0 0
    %1419 = vmatpush1.bf16.xpose.msra.mxu0 %v1416
    %1420 = vmatprep.subr.bf16.mxu0 0
    %1421 = vmatpush1.bf16.xpose.msra.mxu0 0
    %1422 = vmatprep.subr.bf16.mxu0 0
    %1423 = vmatpush1.bf16.xpose.msra.mxu0 0
    %1424 = vmatprep.subr.bf16.mxu0 0
    %1425 = vmatpush1.bf16.xpose.msra.mxu0 0
    %1426 = vmatprep.subr.bf16.mxu0 0
    %1427 = vmatpush1.bf16.xpose.msra.mxu0 0
    %1428 = vmatprep.subr.bf16.mxu0 0
    %1429 = vmatpush1.bf16.xpose.msra.mxu0 0
    %1430 = vmatprep.subr.bf16.mxu0 0
    %1431 = vmatpush1.bf16.xpose.msra.mxu0 0
    %1432 = vmatprep.subr.bf16.mxu0 0
    %1433 = vmatpush1.bf16.xpose.msra.mxu0 0
    %1434 = vmatprep.subr.bf16.mxu0 0
    %1435 = vmatpush1.bf16.xpose.msra.mxu0 0
    %1436 = vmatprep.subr.bf16.mxu0 0
    %1437 = vmatpush1.bf16.xpose.msra.mxu0 0
    %1438 = vmatprep.subr.bf16.mxu0 0
    %1439 = vmatpush1.bf16.xpose.msra.mxu0 0
    %1440 = vmatprep.subr.bf16.mxu0 0
    %1441 = vmatpush1.bf16.xpose.msra.mxu0 0
    %1442 = vmatprep.subr.bf16.mxu0 0
    %1443 = vmatpush1.bf16.xpose.msra.mxu0 0
    %1444 = vmatprep.subr.bf16.mxu0 0
    %1445 = vmatpush1.bf16.xpose.msra.mxu0 0
    %1446 = vmatprep.subr.bf16.mxu0 0
    %1447 = vmatpush1.bf16.xpose.msra.mxu0 0
    %1448 = vmatprep.subr.bf16.mxu0 0
    %1449 = vmatpush1.bf16.xpose.msra.mxu0 0
    %1450 = vmatprep.mubr.bf16.mxu0 0
    %1451 = vmatmul.mubr.bf16.gmra.mrb[0].mxu0 %v1416
    %v1452 = vpop.f32.mrb[0].mxu0
    %v1453 = vadd.f32 0.0, %v1452
    %v1454 = vpop.f32.mrb[0].mxu0
    %v1455 = vpop.f32.mrb[0].mxu0
    %v1456 = vpop.f32.mrb[0].mxu0
    %1457 = vdwg.mxu0
    %v1459 = vsel %vm168, %v1240, 0
    %1461 = vmatprep.subr.bf16.mxu0 0
    %1462 = vmatpush1.bf16.xpose.msra.mxu0 %v1459
    %1463 = vmatprep.subr.bf16.mxu0 0
    %1464 = vmatpush1.bf16.xpose.msra.mxu0 0
    %1465 = vmatprep.subr.bf16.mxu0 0
    %1466 = vmatpush1.bf16.xpose.msra.mxu0 0
    %1467 = vmatprep.subr.bf16.mxu0 0
    %1468 = vmatpush1.bf16.xpose.msra.mxu0 0
    %1469 = vmatprep.subr.bf16.mxu0 0
    %1470 = vmatpush1.bf16.xpose.msra.mxu0 0
    %1471 = vmatprep.subr.bf16.mxu0 0
    %1472 = vmatpush1.bf16.xpose.msra.mxu0 0
    %1473 = vmatprep.subr.bf16.mxu0 0
    %1474 = vmatpush1.bf16.xpose.msra.mxu0 0
    %1475 = vmatprep.subr.bf16.mxu0 0
    %1476 = vmatpush1.bf16.xpose.msra.mxu0 0
    %1477 = vmatprep.subr.bf16.mxu0 0
    %1478 = vmatpush1.bf16.xpose.msra.mxu0 0
    %1479 = vmatprep.subr.bf16.mxu0 0
    %1480 = vmatpush1.bf16.xpose.msra.mxu0 0
    %1481 = vmatprep.subr.bf16.mxu0 0
    %1482 = vmatpush1.bf16.xpose.msra.mxu0 0
    %1483 = vmatprep.subr.bf16.mxu0 0
    %1484 = vmatpush1.bf16.xpose.msra.mxu0 0
    %1485 = vmatprep.subr.bf16.mxu0 0
    %1486 = vmatpush1.bf16.xpose.msra.mxu0 0
    %1487 = vmatprep.subr.bf16.mxu0 0
    %1488 = vmatpush1.bf16.xpose.msra.mxu0 0
    %1489 = vmatprep.subr.bf16.mxu0 0
    %1490 = vmatpush1.bf16.xpose.msra.mxu0 0
    %1491 = vmatprep.subr.bf16.mxu0 0
    %1492 = vmatpush1.bf16.xpose.msra.mxu0 0
    %1493 = vmatprep.mubr.bf16.mxu0 0
    %1494 = vmatmul.mubr.bf16.gmra.mrb[0].mxu0 %v1459
    %v1495 = vpop.f32.mrb[0].mxu0
    %v1496 = vadd.f32 0.0, %v1495
    %v1497 = vpop.f32.mrb[0].mxu0
    %v1498 = vpop.f32.mrb[0].mxu0
    %v1499 = vpop.f32.mrb[0].mxu0
    %1500 = vdwg.mxu0
    %v1502 = vsel %vm168, %v1241, 0
    %1504 = vmatprep.subr.bf16.mxu0 0
    %1505 = vmatpush1.bf16.xpose.msra.mxu0 %v1502
    %1506 = vmatprep.subr.bf16.mxu0 0
    %1507 = vmatpush1.bf16.xpose.msra.mxu0 0
    %1508 = vmatprep.subr.bf16.mxu0 0
    %1509 = vmatpush1.bf16.xpose.msra.mxu0 0
    %1510 = vmatprep.subr.bf16.mxu0 0
    %1511 = vmatpush1.bf16.xpose.msra.mxu0 0
    %1512 = vmatprep.subr.bf16.mxu0 0
    %1513 = vmatpush1.bf16.xpose.msra.mxu0 0
    %1514 = vmatprep.subr.bf16.mxu0 0
    %1515 = vmatpush1.bf16.xpose.msra.mxu0 0
    %1516 = vmatprep.subr.bf16.mxu0 0
    %1517 = vmatpush1.bf16.xpose.msra.mxu0 0
    %1518 = vmatprep.subr.bf16.mxu0 0
    %1519 = vmatpush1.bf16.xpose.msra.mxu0 0
    %1520 = vmatprep.subr.bf16.mxu0 0
    %1521 = vmatpush1.bf16.xpose.msra.mxu0 0
    %1522 = vmatprep.subr.bf16.mxu0 0
    %1523 = vmatpush1.bf16.xpose.msra.mxu0 0
    %1524 = vmatprep.subr.bf16.mxu0 0
    %1525 = vmatpush1.bf16.xpose.msra.mxu0 0
    %1526 = vmatprep.subr.bf16.mxu0 0
    %1527 = vmatpush1.bf16.xpose.msra.mxu0 0
    %1528 = vmatprep.subr.bf16.mxu0 0
    %1529 = vmatpush1.bf16.xpose.msra.mxu0 0
    %1530 = vmatprep.subr.bf16.mxu0 0
    %1531 = vmatpush1.bf16.xpose.msra.mxu0 0
    %1532 = vmatprep.subr.bf16.mxu0 0
    %1533 = vmatpush1.bf16.xpose.msra.mxu0 0
    %1534 = vmatprep.subr.bf16.mxu0 0
    %1535 = vmatpush1.bf16.xpose.msra.mxu0 0
    %1536 = vmatprep.mubr.bf16.mxu0 0
    %1537 = vmatmul.mubr.bf16.gmra.mrb[0].mxu0 %v1502
    %v1538 = vpop.f32.mrb[0].mxu0
    %v1539 = vadd.f32 0.0, %v1538
    %v1540 = vpop.f32.mrb[0].mxu0
    %v1541 = vpop.f32.mrb[0].mxu0
    %v1542 = vpop.f32.mrb[0].mxu0
    %1543 = vdwg.mxu0
    %v1545 = vsel %vm168, %v1242, 0
    %1547 = vmatprep.subr.bf16.mxu0 0
    %1548 = vmatpush1.bf16.xpose.msra.mxu0 %v1545
    %1549 = vmatprep.subr.bf16.mxu0 0
    %1550 = vmatpush1.bf16.xpose.msra.mxu0 0
    %1551 = vmatprep.subr.bf16.mxu0 0
    %1552 = vmatpush1.bf16.xpose.msra.mxu0 0
    %1553 = vmatprep.subr.bf16.mxu0 0
    %1554 = vmatpush1.bf16.xpose.msra.mxu0 0
    %1555 = vmatprep.subr.bf16.mxu0 0
    %1556 = vmatpush1.bf16.xpose.msra.mxu0 0
    %1557 = vmatprep.subr.bf16.mxu0 0
    %1558 = vmatpush1.bf16.xpose.msra.mxu0 0
    %1559 = vmatprep.subr.bf16.mxu0 0
    %1560 = vmatpush1.bf16.xpose.msra.mxu0 0
    %1561 = vmatprep.subr.bf16.mxu0 0
    %1562 = vmatpush1.bf16.xpose.msra.mxu0 0
    %1563 = vmatprep.subr.bf16.mxu0 0
    %1564 = vmatpush1.bf16.xpose.msra.mxu0 0
    %1565 = vmatprep.subr.bf16.mxu0 0
    %1566 = vmatpush1.bf16.xpose.msra.mxu0 0
    %1567 = vmatprep.subr.bf16.mxu0 0
    %1568 = vmatpush1.bf16.xpose.msra.mxu0 0
    %1569 = vmatprep.subr.bf16.mxu0 0
    %1570 = vmatpush1.bf16.xpose.msra.mxu0 0
    %1571 = vmatprep.subr.bf16.mxu0 0
    %1572 = vmatpush1.bf16.xpose.msra.mxu0 0
    %1573 = vmatprep.subr.bf16.mxu0 0
    %1574 = vmatpush1.bf16.xpose.msra.mxu0 0
    %1575 = vmatprep.subr.bf16.mxu0 0
    %1576 = vmatpush1.bf16.xpose.msra.mxu0 0
    %1577 = vmatprep.subr.bf16.mxu0 0
    %1578 = vmatpush1.bf16.xpose.msra.mxu0 0
    %1579 = vmatprep.mubr.bf16.mxu0 0
    %1580 = vmatmul.mubr.bf16.gmra.mrb[0].mxu0 %v1545
    %v1581 = vpop.f32.mrb[0].mxu0
    %v1582 = vadd.f32 0.0, %v1581
    %v1583 = vpop.f32.mrb[0].mxu0
    %v1584 = vpop.f32.mrb[0].mxu0
    %v1585 = vpop.f32.mrb[0].mxu0
    %1586 = vdwg.mxu0
    %v1587 = vmul.f32 %v1281, 0.35355338
    %v1588 = vmul.f32 %v1324, 0.35355338
    %v1589 = vmul.f32 %v1367, 0.35355338
    %v1590 = vmul.f32 %v1410, 0.35355338
    %v1591 = vmul.f32 %v1453, 0.35355338
    %v1592 = vmul.f32 %v1496, 0.35355338
    %v1593 = vmul.f32 %v1539, 0.35355338
    %v1594 = vmul.f32 %v1582, 0.35355338
    %v1595 = vsel %vm522, %v1587, -1e+30
    %v1596 = vsel %vm522, %v1588, -1e+30
    %v1597 = vsel %vm522, %v1589, -1e+30
    %v1598 = vsel %vm522, %v1590, -1e+30
    %v1599 = vsel %vm522, %v1591, -1e+30
    %v1600 = vsel %vm522, %v1592, -1e+30
    %v1601 = vsel %vm522, %v1593, -1e+30
    %v1602 = vsel %vm522, %v1594, -1e+30
    %v1611 = vlaneseq
    %v1612 = vshrl.u32 %v1611, 7
    %v1613 = vsub.s32 0, %v1612
    %v1614 = vrot.slane %v1227, %v1613
    %v1615 = vlaneseq
    %v1616 = vshrl.u32 %v1615, 7
    %v1617 = vsub.s32 0, %v1616
    %v1618 = vrot.slane %v1228, %v1617
    %v1619 = vlaneseq
    %v1620 = vshrl.u32 %v1619, 7
    %v1621 = vsub.s32 0, %v1620
    %v1622 = vrot.slane %v1229, %v1621
    %v1623 = vlaneseq
    %v1624 = vshrl.u32 %v1623, 7
    %v1625 = vsub.s32 0, %v1624
    %v1626 = vrot.slane %v1230, %v1625
    %v1627 = vlaneseq
    %v1628 = vshrl.u32 %v1627, 7
    %v1629 = vsub.s32 0, %v1628
    %v1630 = vrot.slane %v1231, %v1629
    %v1631 = vlaneseq
    %v1632 = vshrl.u32 %v1631, 7
    %v1633 = vsub.s32 0, %v1632
    %v1634 = vrot.slane %v1232, %v1633
    %v1635 = vlaneseq
    %v1636 = vshrl.u32 %v1635, 7
    %v1637 = vsub.s32 0, %v1636
    %v1638 = vrot.slane %v1233, %v1637
    %v1639 = vlaneseq
    %v1640 = vshrl.u32 %v1639, 7
    %v1641 = vsub.s32 0, %v1640
    %v1642 = vrot.slane %v1234, %v1641
    %v1651 = vmul.f32 %v1200, %v1614
    %v1652 = vmul.f32 %v1203, %v1618
    %v1653 = vmul.f32 %v1209, %v1622
    %v1654 = vmul.f32 %v1211, %v1626
    %v1655 = vmul.f32 %v1215, %v1630
    %v1656 = vmul.f32 %v1217, %v1634
    %v1657 = vmul.f32 %v1221, %v1638
    %v1658 = vmul.f32 %v1223, %v1642
    %v1659 = vsel %vm168, %v1651, 0.0
    %1660 = vadd.xlane.f32.xlu0 %v1659
    %v1661 = vpop.xlane.xlu0 %1660
    %v1662 = vsel %vm168, %v1652, 0.0
    %1663 = vadd.xlane.f32.xlu0 %v1662
    %v1664 = vpop.xlane.xlu0 %1663
    %v1665 = vsel %vm168, %v1653, 0.0
    %1666 = vadd.xlane.f32.xlu0 %v1665
    %v1667 = vpop.xlane.xlu0 %1666
    %v1668 = vsel %vm168, %v1654, 0.0
    %1669 = vadd.xlane.f32.xlu0 %v1668
    %v1670 = vpop.xlane.xlu0 %1669
    %v1671 = vsel %vm168, %v1655, 0.0
    %1672 = vadd.xlane.f32.xlu0 %v1671
    %v1673 = vpop.xlane.xlu0 %1672
    %v1674 = vsel %vm168, %v1656, 0.0
    %1675 = vadd.xlane.f32.xlu0 %v1674
    %v1676 = vpop.xlane.xlu0 %1675
    %v1677 = vsel %vm168, %v1657, 0.0
    %1678 = vadd.xlane.f32.xlu0 %v1677
    %v1679 = vpop.xlane.xlu0 %1678
    %v1680 = vsel %vm168, %v1658, 0.0
    %1681 = vadd.xlane.f32.xlu0 %v1680
    %v1682 = vpop.xlane.xlu0 %1681
    %v1683 = vmul.f32 %v1661, 0.35355338
    %v1684 = vmul.f32 %v1664, 0.35355338
    %v1685 = vmul.f32 %v1667, 0.35355338
    %v1686 = vmul.f32 %v1670, 0.35355338
    %v1687 = vmul.f32 %v1673, 0.35355338
    %v1688 = vmul.f32 %v1676, 0.35355338
    %v1689 = vmul.f32 %v1679, 0.35355338
    %v1690 = vmul.f32 %v1682, 0.35355338
    %v1691 = vsel %vm168, %v1595, -inf
    %1692 = vmax.xlane.f32.xlu0 %v1691
    %v1693 = vpop.xlane.xlu0 %1692
    %v1694 = vsel %vm168, %v1596, -inf
    %1695 = vmax.xlane.f32.xlu0 %v1694
    %v1696 = vpop.xlane.xlu0 %1695
    %v1697 = vsel %vm168, %v1597, -inf
    %1698 = vmax.xlane.f32.xlu0 %v1697
    %v1699 = vpop.xlane.xlu0 %1698
    %v1700 = vsel %vm168, %v1598, -inf
    %1701 = vmax.xlane.f32.xlu0 %v1700
    %v1702 = vpop.xlane.xlu0 %1701
    %v1703 = vsel %vm168, %v1599, -inf
    %1704 = vmax.xlane.f32.xlu0 %v1703
    %v1705 = vpop.xlane.xlu0 %1704
    %v1706 = vsel %vm168, %v1600, -inf
    %1707 = vmax.xlane.f32.xlu0 %v1706
    %v1708 = vpop.xlane.xlu0 %1707
    %v1709 = vsel %vm168, %v1601, -inf
    %1710 = vmax.xlane.f32.xlu0 %v1709
    %v1711 = vpop.xlane.xlu0 %1710
    %v1712 = vsel %vm168, %v1602, -inf
    %1713 = vmax.xlane.f32.xlu0 %v1712
    %v1714 = vpop.xlane.xlu0 %1713
    %v1715 = vmax.f32 %v1693, %v1683
    %v1716 = vmax.f32 %v1696, %v1684
    %v1717 = vmax.f32 %v1699, %v1685
    %v1718 = vmax.f32 %v1702, %v1686
    %v1719 = vmax.f32 %v1705, %v1687
    %v1720 = vmax.f32 %v1708, %v1688
    %v1721 = vmax.f32 %v1711, %v1689
    %v1722 = vmax.f32 %v1714, %v1690
    %v1723 = vsub.f32 %v1595, %v1715
    %v1724 = vsub.f32 %v1596, %v1716
    %v1725 = vsub.f32 %v1597, %v1717
    %v1726 = vsub.f32 %v1598, %v1718
    %v1727 = vsub.f32 %v1599, %v1719
    %v1728 = vsub.f32 %v1600, %v1720
    %v1729 = vsub.f32 %v1601, %v1721
    %v1730 = vsub.f32 %v1602, %v1722
    %v1731 = vmul.f32 %v1723, 1.442695
    %v1732 = vpow.pop %v1731
    %v1733 = vmul.f32 %v1724, 1.442695
    %v1734 = vpow.pop %v1733
    %v1735 = vmul.f32 %v1725, 1.442695
    %v1736 = vpow.pop %v1735
    %v1737 = vmul.f32 %v1726, 1.442695
    %v1738 = vpow.pop %v1737
    %v1739 = vmul.f32 %v1727, 1.442695
    %v1740 = vpow.pop %v1739
    %v1741 = vmul.f32 %v1728, 1.442695
    %v1742 = vpow.pop %v1741
    %v1743 = vmul.f32 %v1729, 1.442695
    %v1744 = vpow.pop %v1743
    %v1745 = vmul.f32 %v1730, 1.442695
    %v1746 = vpow.pop %v1745
    %v1747 = vsel %vm522, %v1732, 0.0
    %v1748 = vsel %vm522, %v1734, 0.0
    %v1749 = vsel %vm522, %v1736, 0.0
    %v1750 = vsel %vm522, %v1738, 0.0
    %v1751 = vsel %vm522, %v1740, 0.0
    %v1752 = vsel %vm522, %v1742, 0.0
    %v1753 = vsel %vm522, %v1744, 0.0
    %v1754 = vsel %vm522, %v1746, 0.0
    %v1755 = vsub.f32 %v1683, %v1715
    %v1756 = vsub.f32 %v1684, %v1716
    %v1757 = vsub.f32 %v1685, %v1717
    %v1758 = vsub.f32 %v1686, %v1718
    %v1759 = vsub.f32 %v1687, %v1719
    %v1760 = vsub.f32 %v1688, %v1720
    %v1761 = vsub.f32 %v1689, %v1721
    %v1762 = vsub.f32 %v1690, %v1722
    %v1763 = vmul.f32 %v1755, 1.442695
    %v1764 = vpow.pop %v1763
    %v1765 = vmul.f32 %v1756, 1.442695
    %v1766 = vpow.pop %v1765
    %v1767 = vmul.f32 %v1757, 1.442695
    %v1768 = vpow.pop %v1767
    %v1769 = vmul.f32 %v1758, 1.442695
    %v1770 = vpow.pop %v1769
    %v1771 = vmul.f32 %v1759, 1.442695
    %v1772 = vpow.pop %v1771
    %v1773 = vmul.f32 %v1760, 1.442695
    %v1774 = vpow.pop %v1773
    %v1775 = vmul.f32 %v1761, 1.442695
    %v1776 = vpow.pop %v1775
    %v1777 = vmul.f32 %v1762, 1.442695
    %v1778 = vpow.pop %v1777
    %v1779 = vmul.f32 %v54, %v1764
    %v1780 = vmul.f32 %v54, %v1766
    %v1781 = vmul.f32 %v54, %v1768
    %v1782 = vmul.f32 %v54, %v1770
    %v1783 = vmul.f32 %v54, %v1772
    %v1784 = vmul.f32 %v54, %v1774
    %v1785 = vmul.f32 %v54, %v1776
    %v1786 = vmul.f32 %v54, %v1778
    %v1787 = vsel %vm168, %v1747, 0.0
    %1788 = vadd.xlane.f32.xlu0 %v1787
    %v1789 = vpop.xlane.xlu0 %1788
    %v1790 = vsel %vm168, %v1748, 0.0
    %1791 = vadd.xlane.f32.xlu0 %v1790
    %v1792 = vpop.xlane.xlu0 %1791
    %v1793 = vsel %vm168, %v1749, 0.0
    %1794 = vadd.xlane.f32.xlu0 %v1793
    %v1795 = vpop.xlane.xlu0 %1794
    %v1796 = vsel %vm168, %v1750, 0.0
    %1797 = vadd.xlane.f32.xlu0 %v1796
    %v1798 = vpop.xlane.xlu0 %1797
    %v1799 = vsel %vm168, %v1751, 0.0
    %1800 = vadd.xlane.f32.xlu0 %v1799
    %v1801 = vpop.xlane.xlu0 %1800
    %v1802 = vsel %vm168, %v1752, 0.0
    %1803 = vadd.xlane.f32.xlu0 %v1802
    %v1804 = vpop.xlane.xlu0 %1803
    %v1805 = vsel %vm168, %v1753, 0.0
    %1806 = vadd.xlane.f32.xlu0 %v1805
    %v1807 = vpop.xlane.xlu0 %1806
    %v1808 = vsel %vm168, %v1754, 0.0
    %1809 = vadd.xlane.f32.xlu0 %v1808
    %v1810 = vpop.xlane.xlu0 %1809
    %v1811 = vadd.f32 %v1789, %v1779
    %v1812 = vadd.f32 %v1792, %v1780
    %v1813 = vadd.f32 %v1795, %v1781
    %v1814 = vadd.f32 %v1798, %v1782
    %v1815 = vadd.f32 %v1801, %v1783
    %v1816 = vadd.f32 %v1804, %v1784
    %v1817 = vadd.f32 %v1807, %v1785
    %v1818 = vadd.f32 %v1810, %v1786
    %v1819 = vpack.c.bf16 %v1747, %v1747
    %v1820 = vpack.c.bf16 %v1748, %v1748
    %v1821 = vpack.c.bf16 %v1749, %v1749
    %v1822 = vpack.c.bf16 %v1750, %v1750
    %v1823 = vpack.c.bf16 %v1751, %v1751
    %v1824 = vpack.c.bf16 %v1752, %v1752
    %v1825 = vpack.c.bf16 %v1753, %v1753
    %v1826 = vpack.c.bf16 %v1754, %v1754
    %v1827 = vmul.f32 %v1779, %v1614
    %v1828 = vmul.f32 %v1780, %v1618
    %v1829 = vmul.f32 %v1781, %v1622
    %v1830 = vmul.f32 %v1782, %v1626
    %v1831 = vmul.f32 %v1783, %v1630
    %v1832 = vmul.f32 %v1784, %v1634
    %v1833 = vmul.f32 %v1785, %v1638
    %v1834 = vmul.f32 %v1786, %v1642
    %v1836 = vsel %vm168, %v1819, 0
    %v1838 = vsel %vm766, %v1235, 0
    %1840 = vmatprep.subr.bf16.mxu0 0
    %1841 = vmatpush1.bf16.msra.mxu0 %v1838
    %1842 = vmatprep.subr.bf16.mxu0 0
    %1843 = vmatpush1.bf16.msra.mxu0 0
    %1844 = vmatprep.subr.bf16.mxu0 0
    %1845 = vmatpush1.bf16.msra.mxu0 0
    %1846 = vmatprep.subr.bf16.mxu0 0
    %1847 = vmatpush1.bf16.msra.mxu0 0
    %1848 = vmatprep.subr.bf16.mxu0 0
    %1849 = vmatpush1.bf16.msra.mxu0 0
    %1850 = vmatprep.subr.bf16.mxu0 0
    %1851 = vmatpush1.bf16.msra.mxu0 0
    %1852 = vmatprep.subr.bf16.mxu0 0
    %1853 = vmatpush1.bf16.msra.mxu0 0
    %1854 = vmatprep.subr.bf16.mxu0 0
    %1855 = vmatpush1.bf16.msra.mxu0 0
    %1856 = vmatprep.subr.bf16.mxu0 0
    %1857 = vmatpush1.bf16.msra.mxu0 0
    %1858 = vmatprep.subr.bf16.mxu0 0
    %1859 = vmatpush1.bf16.msra.mxu0 0
    %1860 = vmatprep.subr.bf16.mxu0 0
    %1861 = vmatpush1.bf16.msra.mxu0 0
    %1862 = vmatprep.subr.bf16.mxu0 0
    %1863 = vmatpush1.bf16.msra.mxu0 0
    %1864 = vmatprep.subr.bf16.mxu0 0
    %1865 = vmatpush1.bf16.msra.mxu0 0
    %1866 = vmatprep.subr.bf16.mxu0 0
    %1867 = vmatpush1.bf16.msra.mxu0 0
    %1868 = vmatprep.subr.bf16.mxu0 0
    %1869 = vmatpush1.bf16.msra.mxu0 0
    %1870 = vmatprep.subr.bf16.mxu0 0
    %1871 = vmatpush1.bf16.msra.mxu0 0
    %1872 = vmatprep.mubr.bf16.mxu0 0
    %1873 = vmatmul.mubr.bf16.gmra.mrb[0].mxu0 %v1836
    %v1874 = vpop.f32.mrb[0].mxu0
    %v1875 = vadd.f32 %v1827, %v1874
    %v1876 = vpop.f32.mrb[0].mxu0
    %v1877 = vpop.f32.mrb[0].mxu0
    %v1878 = vpop.f32.mrb[0].mxu0
    %1879 = vdwg.mxu0
    %v1881 = vsel %vm168, %v1820, 0
    %v1883 = vsel %vm766, %v1236, 0
    %1885 = vmatprep.subr.bf16.mxu0 0
    %1886 = vmatpush1.bf16.msra.mxu0 %v1883
    %1887 = vmatprep.subr.bf16.mxu0 0
    %1888 = vmatpush1.bf16.msra.mxu0 0
    %1889 = vmatprep.subr.bf16.mxu0 0
    %1890 = vmatpush1.bf16.msra.mxu0 0
    %1891 = vmatprep.subr.bf16.mxu0 0
    %1892 = vmatpush1.bf16.msra.mxu0 0
    %1893 = vmatprep.subr.bf16.mxu0 0
    %1894 = vmatpush1.bf16.msra.mxu0 0
    %1895 = vmatprep.subr.bf16.mxu0 0
    %1896 = vmatpush1.bf16.msra.mxu0 0
    %1897 = vmatprep.subr.bf16.mxu0 0
    %1898 = vmatpush1.bf16.msra.mxu0 0
    %1899 = vmatprep.subr.bf16.mxu0 0
    %1900 = vmatpush1.bf16.msra.mxu0 0
    %1901 = vmatprep.subr.bf16.mxu0 0
    %1902 = vmatpush1.bf16.msra.mxu0 0
    %1903 = vmatprep.subr.bf16.mxu0 0
    %1904 = vmatpush1.bf16.msra.mxu0 0
    %1905 = vmatprep.subr.bf16.mxu0 0
    %1906 = vmatpush1.bf16.msra.mxu0 0
    %1907 = vmatprep.subr.bf16.mxu0 0
    %1908 = vmatpush1.bf16.msra.mxu0 0
    %1909 = vmatprep.subr.bf16.mxu0 0
    %1910 = vmatpush1.bf16.msra.mxu0 0
    %1911 = vmatprep.subr.bf16.mxu0 0
    %1912 = vmatpush1.bf16.msra.mxu0 0
    %1913 = vmatprep.subr.bf16.mxu0 0
    %1914 = vmatpush1.bf16.msra.mxu0 0
    %1915 = vmatprep.subr.bf16.mxu0 0
    %1916 = vmatpush1.bf16.msra.mxu0 0
    %1917 = vmatprep.mubr.bf16.mxu0 0
    %1918 = vmatmul.mubr.bf16.gmra.mrb[0].mxu0 %v1881
    %v1919 = vpop.f32.mrb[0].mxu0
    %v1920 = vadd.f32 %v1828, %v1919
    %v1921 = vpop.f32.mrb[0].mxu0
    %v1922 = vpop.f32.mrb[0].mxu0
    %v1923 = vpop.f32.mrb[0].mxu0
    %1924 = vdwg.mxu0
    %v1926 = vsel %vm168, %v1821, 0
    %v1928 = vsel %vm766, %v1237, 0
    %1930 = vmatprep.subr.bf16.mxu0 0
    %1931 = vmatpush1.bf16.msra.mxu0 %v1928
    %1932 = vmatprep.subr.bf16.mxu0 0
    %1933 = vmatpush1.bf16.msra.mxu0 0
    %1934 = vmatprep.subr.bf16.mxu0 0
    %1935 = vmatpush1.bf16.msra.mxu0 0
    %1936 = vmatprep.subr.bf16.mxu0 0
    %1937 = vmatpush1.bf16.msra.mxu0 0
    %1938 = vmatprep.subr.bf16.mxu0 0
    %1939 = vmatpush1.bf16.msra.mxu0 0
    %1940 = vmatprep.subr.bf16.mxu0 0
    %1941 = vmatpush1.bf16.msra.mxu0 0
    %1942 = vmatprep.subr.bf16.mxu0 0
    %1943 = vmatpush1.bf16.msra.mxu0 0
    %1944 = vmatprep.subr.bf16.mxu0 0
    %1945 = vmatpush1.bf16.msra.mxu0 0
    %1946 = vmatprep.subr.bf16.mxu0 0
    %1947 = vmatpush1.bf16.msra.mxu0 0
    %1948 = vmatprep.subr.bf16.mxu0 0
    %1949 = vmatpush1.bf16.msra.mxu0 0
    %1950 = vmatprep.subr.bf16.mxu0 0
    %1951 = vmatpush1.bf16.msra.mxu0 0
    %1952 = vmatprep.subr.bf16.mxu0 0
    %1953 = vmatpush1.bf16.msra.mxu0 0
    %1954 = vmatprep.subr.bf16.mxu0 0
    %1955 = vmatpush1.bf16.msra.mxu0 0
    %1956 = vmatprep.subr.bf16.mxu0 0
    %1957 = vmatpush1.bf16.msra.mxu0 0
    %1958 = vmatprep.subr.bf16.mxu0 0
    %1959 = vmatpush1.bf16.msra.mxu0 0
    %1960 = vmatprep.subr.bf16.mxu0 0
    %1961 = vmatpush1.bf16.msra.mxu0 0
    %1962 = vmatprep.mubr.bf16.mxu0 0
    %1963 = vmatmul.mubr.bf16.gmra.mrb[0].mxu0 %v1926
    %v1964 = vpop.f32.mrb[0].mxu0
    %v1965 = vadd.f32 %v1829, %v1964
    %v1966 = vpop.f32.mrb[0].mxu0
    %v1967 = vpop.f32.mrb[0].mxu0
    %v1968 = vpop.f32.mrb[0].mxu0
    %1969 = vdwg.mxu0
    %v1971 = vsel %vm168, %v1822, 0
    %v1973 = vsel %vm766, %v1238, 0
    %1975 = vmatprep.subr.bf16.mxu0 0
    %1976 = vmatpush1.bf16.msra.mxu0 %v1973
    %1977 = vmatprep.subr.bf16.mxu0 0
    %1978 = vmatpush1.bf16.msra.mxu0 0
    %1979 = vmatprep.subr.bf16.mxu0 0
    %1980 = vmatpush1.bf16.msra.mxu0 0
    %1981 = vmatprep.subr.bf16.mxu0 0
    %1982 = vmatpush1.bf16.msra.mxu0 0
    %1983 = vmatprep.subr.bf16.mxu0 0
    %1984 = vmatpush1.bf16.msra.mxu0 0
    %1985 = vmatprep.subr.bf16.mxu0 0
    %1986 = vmatpush1.bf16.msra.mxu0 0
    %1987 = vmatprep.subr.bf16.mxu0 0
    %1988 = vmatpush1.bf16.msra.mxu0 0
    %1989 = vmatprep.subr.bf16.mxu0 0
    %1990 = vmatpush1.bf16.msra.mxu0 0
    %1991 = vmatprep.subr.bf16.mxu0 0
    %1992 = vmatpush1.bf16.msra.mxu0 0
    %1993 = vmatprep.subr.bf16.mxu0 0
    %1994 = vmatpush1.bf16.msra.mxu0 0
    %1995 = vmatprep.subr.bf16.mxu0 0
    %1996 = vmatpush1.bf16.msra.mxu0 0
    %1997 = vmatprep.subr.bf16.mxu0 0
    %1998 = vmatpush1.bf16.msra.mxu0 0
    %1999 = vmatprep.subr.bf16.mxu0 0
    %2000 = vmatpush1.bf16.msra.mxu0 0
    %2001 = vmatprep.subr.bf16.mxu0 0
    %2002 = vmatpush1.bf16.msra.mxu0 0
    %2003 = vmatprep.subr.bf16.mxu0 0
    %2004 = vmatpush1.bf16.msra.mxu0 0
    %2005 = vmatprep.subr.bf16.mxu0 0
    %2006 = vmatpush1.bf16.msra.mxu0 0
    %2007 = vmatprep.mubr.bf16.mxu0 0
    %2008 = vmatmul.mubr.bf16.gmra.mrb[0].mxu0 %v1971
    %v2009 = vpop.f32.mrb[0].mxu0
    %v2010 = vadd.f32 %v1830, %v2009
    %v2011 = vpop.f32.mrb[0].mxu0
    %v2012 = vpop.f32.mrb[0].mxu0
    %v2013 = vpop.f32.mrb[0].mxu0
    %2014 = vdwg.mxu0
    %v2016 = vsel %vm168, %v1823, 0
    %v2018 = vsel %vm766, %v1239, 0
    %2020 = vmatprep.subr.bf16.mxu0 0
    %2021 = vmatpush1.bf16.msra.mxu0 %v2018
    %2022 = vmatprep.subr.bf16.mxu0 0
    %2023 = vmatpush1.bf16.msra.mxu0 0
    %2024 = vmatprep.subr.bf16.mxu0 0
    %2025 = vmatpush1.bf16.msra.mxu0 0
    %2026 = vmatprep.subr.bf16.mxu0 0
    %2027 = vmatpush1.bf16.msra.mxu0 0
    %2028 = vmatprep.subr.bf16.mxu0 0
    %2029 = vmatpush1.bf16.msra.mxu0 0
    %2030 = vmatprep.subr.bf16.mxu0 0
    %2031 = vmatpush1.bf16.msra.mxu0 0
    %2032 = vmatprep.subr.bf16.mxu0 0
    %2033 = vmatpush1.bf16.msra.mxu0 0
    %2034 = vmatprep.subr.bf16.mxu0 0
    %2035 = vmatpush1.bf16.msra.mxu0 0
    %2036 = vmatprep.subr.bf16.mxu0 0
    %2037 = vmatpush1.bf16.msra.mxu0 0
    %2038 = vmatprep.subr.bf16.mxu0 0
    %2039 = vmatpush1.bf16.msra.mxu0 0
    %2040 = vmatprep.subr.bf16.mxu0 0
    %2041 = vmatpush1.bf16.msra.mxu0 0
    %2042 = vmatprep.subr.bf16.mxu0 0
    %2043 = vmatpush1.bf16.msra.mxu0 0
    %2044 = vmatprep.subr.bf16.mxu0 0
    %2045 = vmatpush1.bf16.msra.mxu0 0
    %2046 = vmatprep.subr.bf16.mxu0 0
    %2047 = vmatpush1.bf16.msra.mxu0 0
    %2048 = vmatprep.subr.bf16.mxu0 0
    %2049 = vmatpush1.bf16.msra.mxu0 0
    %2050 = vmatprep.subr.bf16.mxu0 0
    %2051 = vmatpush1.bf16.msra.mxu0 0
    %2052 = vmatprep.mubr.bf16.mxu0 0
    %2053 = vmatmul.mubr.bf16.gmra.mrb[0].mxu0 %v2016
    %v2054 = vpop.f32.mrb[0].mxu0
    %v2055 = vadd.f32 %v1831, %v2054
    %v2056 = vpop.f32.mrb[0].mxu0
    %v2057 = vpop.f32.mrb[0].mxu0
    %v2058 = vpop.f32.mrb[0].mxu0
    %2059 = vdwg.mxu0
    %v2061 = vsel %vm168, %v1824, 0
    %v2063 = vsel %vm766, %v1240, 0
    %2065 = vmatprep.subr.bf16.mxu0 0
    %2066 = vmatpush1.bf16.msra.mxu0 %v2063
    %2067 = vmatprep.subr.bf16.mxu0 0
    %2068 = vmatpush1.bf16.msra.mxu0 0
    %2069 = vmatprep.subr.bf16.mxu0 0
    %2070 = vmatpush1.bf16.msra.mxu0 0
    %2071 = vmatprep.subr.bf16.mxu0 0
    %2072 = vmatpush1.bf16.msra.mxu0 0
    %2073 = vmatprep.subr.bf16.mxu0 0
    %2074 = vmatpush1.bf16.msra.mxu0 0
    %2075 = vmatprep.subr.bf16.mxu0 0
    %2076 = vmatpush1.bf16.msra.mxu0 0
    %2077 = vmatprep.subr.bf16.mxu0 0
    %2078 = vmatpush1.bf16.msra.mxu0 0
    %2079 = vmatprep.subr.bf16.mxu0 0
    %2080 = vmatpush1.bf16.msra.mxu0 0
    %2081 = vmatprep.subr.bf16.mxu0 0
    %2082 = vmatpush1.bf16.msra.mxu0 0
    %2083 = vmatprep.subr.bf16.mxu0 0
    %2084 = vmatpush1.bf16.msra.mxu0 0
    %2085 = vmatprep.subr.bf16.mxu0 0
    %2086 = vmatpush1.bf16.msra.mxu0 0
    %2087 = vmatprep.subr.bf16.mxu0 0
    %2088 = vmatpush1.bf16.msra.mxu0 0
    %2089 = vmatprep.subr.bf16.mxu0 0
    %2090 = vmatpush1.bf16.msra.mxu0 0
    %2091 = vmatprep.subr.bf16.mxu0 0
    %2092 = vmatpush1.bf16.msra.mxu0 0
    %2093 = vmatprep.subr.bf16.mxu0 0
    %2094 = vmatpush1.bf16.msra.mxu0 0
    %2095 = vmatprep.subr.bf16.mxu0 0
    %2096 = vmatpush1.bf16.msra.mxu0 0
    %2097 = vmatprep.mubr.bf16.mxu0 0
    %2098 = vmatmul.mubr.bf16.gmra.mrb[0].mxu0 %v2061
    %v2099 = vpop.f32.mrb[0].mxu0
    %v2100 = vadd.f32 %v1832, %v2099
    %v2101 = vpop.f32.mrb[0].mxu0
    %v2102 = vpop.f32.mrb[0].mxu0
    %v2103 = vpop.f32.mrb[0].mxu0
    %2104 = vdwg.mxu0
    %v2106 = vsel %vm168, %v1825, 0
    %v2108 = vsel %vm766, %v1241, 0
    %2110 = vmatprep.subr.bf16.mxu0 0
    %2111 = vmatpush1.bf16.msra.mxu0 %v2108
    %2112 = vmatprep.subr.bf16.mxu0 0
    %2113 = vmatpush1.bf16.msra.mxu0 0
    %2114 = vmatprep.subr.bf16.mxu0 0
    %2115 = vmatpush1.bf16.msra.mxu0 0
    %2116 = vmatprep.subr.bf16.mxu0 0
    %2117 = vmatpush1.bf16.msra.mxu0 0
    %2118 = vmatprep.subr.bf16.mxu0 0
    %2119 = vmatpush1.bf16.msra.mxu0 0
    %2120 = vmatprep.subr.bf16.mxu0 0
    %2121 = vmatpush1.bf16.msra.mxu0 0
    %2122 = vmatprep.subr.bf16.mxu0 0
    %2123 = vmatpush1.bf16.msra.mxu0 0
    %2124 = vmatprep.subr.bf16.mxu0 0
    %2125 = vmatpush1.bf16.msra.mxu0 0
    %2126 = vmatprep.subr.bf16.mxu0 0
    %2127 = vmatpush1.bf16.msra.mxu0 0
    %2128 = vmatprep.subr.bf16.mxu0 0
    %2129 = vmatpush1.bf16.msra.mxu0 0
    %2130 = vmatprep.subr.bf16.mxu0 0
    %2131 = vmatpush1.bf16.msra.mxu0 0
    %2132 = vmatprep.subr.bf16.mxu0 0
    %2133 = vmatpush1.bf16.msra.mxu0 0
    %2134 = vmatprep.subr.bf16.mxu0 0
    %2135 = vmatpush1.bf16.msra.mxu0 0
    %2136 = vmatprep.subr.bf16.mxu0 0
    %2137 = vmatpush1.bf16.msra.mxu0 0
    %2138 = vmatprep.subr.bf16.mxu0 0
    %2139 = vmatpush1.bf16.msra.mxu0 0
    %2140 = vmatprep.subr.bf16.mxu0 0
    %2141 = vmatpush1.bf16.msra.mxu0 0
    %2142 = vmatprep.mubr.bf16.mxu0 0
    %2143 = vmatmul.mubr.bf16.gmra.mrb[0].mxu0 %v2106
    %v2144 = vpop.f32.mrb[0].mxu0
    %v2145 = vadd.f32 %v1833, %v2144
    %v2146 = vpop.f32.mrb[0].mxu0
    %v2147 = vpop.f32.mrb[0].mxu0
    %v2148 = vpop.f32.mrb[0].mxu0
    %2149 = vdwg.mxu0
    %v2151 = vsel %vm168, %v1826, 0
    %v2153 = vsel %vm766, %v1242, 0
    %2155 = vmatprep.subr.bf16.mxu0 0
    %2156 = vmatpush1.bf16.msra.mxu0 %v2153
    %2157 = vmatprep.subr.bf16.mxu0 0
    %2158 = vmatpush1.bf16.msra.mxu0 0
    %2159 = vmatprep.subr.bf16.mxu0 0
    %2160 = vmatpush1.bf16.msra.mxu0 0
    %2161 = vmatprep.subr.bf16.mxu0 0
    %2162 = vmatpush1.bf16.msra.mxu0 0
    %2163 = vmatprep.subr.bf16.mxu0 0
    %2164 = vmatpush1.bf16.msra.mxu0 0
    %2165 = vmatprep.subr.bf16.mxu0 0
    %2166 = vmatpush1.bf16.msra.mxu0 0
    %2167 = vmatprep.subr.bf16.mxu0 0
    %2168 = vmatpush1.bf16.msra.mxu0 0
    %2169 = vmatprep.subr.bf16.mxu0 0
    %2170 = vmatpush1.bf16.msra.mxu0 0
    %2171 = vmatprep.subr.bf16.mxu0 0
    %2172 = vmatpush1.bf16.msra.mxu0 0
    %2173 = vmatprep.subr.bf16.mxu0 0
    %2174 = vmatpush1.bf16.msra.mxu0 0
    %2175 = vmatprep.subr.bf16.mxu0 0
    %2176 = vmatpush1.bf16.msra.mxu0 0
    %2177 = vmatprep.subr.bf16.mxu0 0
    %2178 = vmatpush1.bf16.msra.mxu0 0
    %2179 = vmatprep.subr.bf16.mxu0 0
    %2180 = vmatpush1.bf16.msra.mxu0 0
    %2181 = vmatprep.subr.bf16.mxu0 0
    %2182 = vmatpush1.bf16.msra.mxu0 0
    %2183 = vmatprep.subr.bf16.mxu0 0
    %2184 = vmatpush1.bf16.msra.mxu0 0
    %2185 = vmatprep.subr.bf16.mxu0 0
    %2186 = vmatpush1.bf16.msra.mxu0 0
    %2187 = vmatprep.mubr.bf16.mxu0 0
    %2188 = vmatmul.mubr.bf16.gmra.mrb[0].mxu0 %v2151
    %v2189 = vpop.f32.mrb[0].mxu0
    %v2190 = vadd.f32 %v1834, %v2189
    %v2191 = vpop.f32.mrb[0].mxu0
    %v2192 = vpop.f32.mrb[0].mxu0
    %v2193 = vpop.f32.mrb[0].mxu0
    %2194 = vdwg.mxu0
    %v2195 = vrcp.pop %v1811
    %v2196 = vrcp.pop %v1812
    %v2197 = vrcp.pop %v1813
    %v2198 = vrcp.pop %v1814
    %v2199 = vrcp.pop %v1815
    %v2200 = vrcp.pop %v1816
    %v2201 = vrcp.pop %v1817
    %v2202 = vrcp.pop %v1818
    %v2203 = vmul.f32 %v1875, %v2195
    %v2204 = vmul.f32 %v1920, %v2196
    %v2205 = vmul.f32 %v1965, %v2197
    %v2206 = vmul.f32 %v2010, %v2198
    %v2207 = vmul.f32 %v2055, %v2199
    %v2208 = vmul.f32 %v2100, %v2200
    %v2209 = vmul.f32 %v2145, %v2201
    %v2210 = vmul.f32 %v2190, %v2202
    %s2211 = scalar_lea.vmem %s3, 32
    %v2212 = vld [vmem:[%s2211] sm:$0xf]
    %v2213 = vld [vmem:[%s2211 + $0x4] sm:$0xf]
    %v2214 = vld [vmem:[%s2211 + $0x8] sm:$0xf]
    %v2215 = vld [vmem:[%s2211 + $0xc] sm:$0xf]
    %s2216 = scalar_lea.vmem %s4, 2
    %v2217 = vld [vmem:[%s2216] sm:$0x1]
    %v2219 = vlaneseq
    %v2220 = vshrl.u32 %v2219, 7
    %v2221 = vsub.s32 0, %v2220
    %v2222 = vrot.slane %v2217, %v2221
    %v2228 = vunpack.c.l.b16 %v2212
    %v2229 = vunpack.c.l.b16 %v2213
    %v2230 = vunpack.c.l.b16 %v2214
    %v2231 = vunpack.c.l.b16 %v2215
    %v2232 = vpack.c.b16 %v2229, %v2228
    %v2233 = vpack.c.b16 %v2231, %v2230
    %2236 = vmatprep.subr.bf16.mxu0 0
    %2237 = vmatpush1.bf16.msra.mxu0 %v2232
    %2238 = vmatprep.subr.bf16.mxu0 0
    %2239 = vmatpush1.bf16.msra.mxu0 %v2233
    %2240 = vmatprep.subr.bf16.mxu0 0
    %2241 = vmatpush1.bf16.msra.mxu0 0
    %2242 = vmatprep.subr.bf16.mxu0 0
    %2243 = vmatpush1.bf16.msra.mxu0 0
    %2244 = vmatprep.subr.bf16.mxu0 0
    %2245 = vmatpush1.bf16.msra.mxu0 0
    %2246 = vmatprep.subr.bf16.mxu0 0
    %2247 = vmatpush1.bf16.msra.mxu0 0
    %2248 = vmatprep.subr.bf16.mxu0 0
    %2249 = vmatpush1.bf16.msra.mxu0 0
    %2250 = vmatprep.subr.bf16.mxu0 0
    %2251 = vmatpush1.bf16.msra.mxu0 0
    %2252 = vmatprep.subr.bf16.mxu0 0
    %2253 = vmatpush1.bf16.msra.mxu0 0
    %2254 = vmatprep.subr.bf16.mxu0 0
    %2255 = vmatpush1.bf16.msra.mxu0 0
    %2256 = vmatprep.subr.bf16.mxu0 0
    %2257 = vmatpush1.bf16.msra.mxu0 0
    %2258 = vmatprep.subr.bf16.mxu0 0
    %2259 = vmatpush1.bf16.msra.mxu0 0
    %2260 = vmatprep.subr.bf16.mxu0 0
    %2261 = vmatpush1.bf16.msra.mxu0 0
    %2262 = vmatprep.subr.bf16.mxu0 0
    %2263 = vmatpush1.bf16.msra.mxu0 0
    %2264 = vmatprep.subr.bf16.mxu0 0
    %2265 = vmatpush1.bf16.msra.mxu0 0
    %2266 = vmatprep.subr.bf16.mxu0 0
    %2267 = vmatpush1.bf16.msra.mxu0 0
    %2268 = vmatprep.mubr.bf16.mxu0 0
    %2269 = vmatmul.mubr.bf16.gmra.mrb[0].mxu0 %v89
    %v2270 = vpop.f32.mrb[0].mxu0
    %v2271 = vadd.f32 %v2222, %v2270
    %v2272 = vpop.f32.mrb[0].mxu0
    %v2273 = vpop.f32.mrb[0].mxu0
    %v2274 = vadd.f32 %v2222, %v2273
    %v2275 = vpop.f32.mrb[0].mxu0
    %2276 = vdwg.mxu0
    %2279 = vrot.lane.b32.xlu0 %v2271, 120
    %v2280 = vpop.permute.xlu0 %2279
    %2281 = vrot.lane.b32.xlu0 %v2274, 120
    %v2282 = vpop.permute.xlu0 %2281
    %2285 = vrot.lane.b32.xlu0 %v2271, 112
    %v2286 = vpop.permute.xlu0 %2285
    %2287 = vrot.lane.b32.xlu0 %v2274, 112
    %v2288 = vpop.permute.xlu0 %2287
    %2291 = vrot.lane.b32.xlu0 %v2271, 104
    %v2292 = vpop.permute.xlu0 %2291
    %2293 = vrot.lane.b32.xlu0 %v2274, 104
    %v2294 = vpop.permute.xlu0 %2293
    %v2297 = vpack.c.bf16 %v1132, %v1132
    %v2298 = vpack.c.bf16 %v1133, %v1133
    %v2299 = vpack.c.bf16 %v1134, %v1134
    %v2300 = vpack.c.bf16 %v1135, %v1135
    %v2301 = vpack.c.bf16 %v1136, %v1136
    %v2302 = vpack.c.bf16 %v1137, %v1137
    %v2303 = vpack.c.bf16 %v1138, %v1138
    %v2304 = vpack.c.bf16 %v1139, %v1139
    %v2305 = vpack.c.bf16 %v2203, %v2203
    %v2306 = vpack.c.bf16 %v2204, %v2204
    %v2307 = vpack.c.bf16 %v2205, %v2205
    %v2308 = vpack.c.bf16 %v2206, %v2206
    %v2309 = vpack.c.bf16 %v2207, %v2207
    %v2310 = vpack.c.bf16 %v2208, %v2208
    %v2311 = vpack.c.bf16 %v2209, %v2209
    %v2312 = vpack.c.bf16 %v2210, %v2210
    %v2314 = vsel %vm168, %v2297, 0
    %v2317 = vsel %vm168, %v2305, 0
    %2319 = vmatprep.subr.bf16.mxu0 0
    %2320 = vmatpush1.bf16.xpose.msra.mxu0 %v2317
    %2321 = vmatprep.subr.bf16.mxu0 0
    %2322 = vmatpush1.bf16.xpose.msra.mxu0 0
    %2323 = vmatprep.subr.bf16.mxu0 0
    %2324 = vmatpush1.bf16.xpose.msra.mxu0 0
    %2325 = vmatprep.subr.bf16.mxu0 0
    %2326 = vmatpush1.bf16.xpose.msra.mxu0 0
    %2327 = vmatprep.subr.bf16.mxu0 0
    %2328 = vmatpush1.bf16.xpose.msra.mxu0 0
    %2329 = vmatprep.subr.bf16.mxu0 0
    %2330 = vmatpush1.bf16.xpose.msra.mxu0 0
    %2331 = vmatprep.subr.bf16.mxu0 0
    %2332 = vmatpush1.bf16.xpose.msra.mxu0 0
    %2333 = vmatprep.subr.bf16.mxu0 0
    %2334 = vmatpush1.bf16.xpose.msra.mxu0 0
    %2335 = vmatprep.subr.bf16.mxu0 0
    %2336 = vmatpush1.bf16.xpose.msra.mxu0 0
    %2337 = vmatprep.subr.bf16.mxu0 0
    %2338 = vmatpush1.bf16.xpose.msra.mxu0 0
    %2339 = vmatprep.subr.bf16.mxu0 0
    %2340 = vmatpush1.bf16.xpose.msra.mxu0 0
    %2341 = vmatprep.subr.bf16.mxu0 0
    %2342 = vmatpush1.bf16.xpose.msra.mxu0 0
    %2343 = vmatprep.subr.bf16.mxu0 0
    %2344 = vmatpush1.bf16.xpose.msra.mxu0 0
    %2345 = vmatprep.subr.bf16.mxu0 0
    %2346 = vmatpush1.bf16.xpose.msra.mxu0 0
    %2347 = vmatprep.subr.bf16.mxu0 0
    %2348 = vmatpush1.bf16.xpose.msra.mxu0 0
    %2349 = vmatprep.subr.bf16.mxu0 0
    %2350 = vmatpush1.bf16.xpose.msra.mxu0 0
    %2351 = vmatprep.mubr.bf16.mxu0 0
    %2352 = vmatmul.mubr.bf16.gmra.mrb[0].mxu0 %v2314
    %v2353 = vpop.f32.mrb[0].mxu0
    %v2354 = vadd.f32 0.0, %v2353
    %v2355 = vpop.f32.mrb[0].mxu0
    %v2356 = vpop.f32.mrb[0].mxu0
    %v2357 = vpop.f32.mrb[0].mxu0
    %2358 = vdwg.mxu0
    %v2360 = vsel %vm168, %v2298, 0
    %v2363 = vsel %vm168, %v2306, 0
    %2365 = vmatprep.subr.bf16.mxu0 0
    %2366 = vmatpush1.bf16.xpose.msra.mxu0 %v2363
    %2367 = vmatprep.subr.bf16.mxu0 0
    %2368 = vmatpush1.bf16.xpose.msra.mxu0 0
    %2369 = vmatprep.subr.bf16.mxu0 0
    %2370 = vmatpush1.bf16.xpose.msra.mxu0 0
    %2371 = vmatprep.subr.bf16.mxu0 0
    %2372 = vmatpush1.bf16.xpose.msra.mxu0 0
    %2373 = vmatprep.subr.bf16.mxu0 0
    %2374 = vmatpush1.bf16.xpose.msra.mxu0 0
    %2375 = vmatprep.subr.bf16.mxu0 0
    %2376 = vmatpush1.bf16.xpose.msra.mxu0 0
    %2377 = vmatprep.subr.bf16.mxu0 0
    %2378 = vmatpush1.bf16.xpose.msra.mxu0 0
    %2379 = vmatprep.subr.bf16.mxu0 0
    %2380 = vmatpush1.bf16.xpose.msra.mxu0 0
    %2381 = vmatprep.subr.bf16.mxu0 0
    %2382 = vmatpush1.bf16.xpose.msra.mxu0 0
    %2383 = vmatprep.subr.bf16.mxu0 0
    %2384 = vmatpush1.bf16.xpose.msra.mxu0 0
    %2385 = vmatprep.subr.bf16.mxu0 0
    %2386 = vmatpush1.bf16.xpose.msra.mxu0 0
    %2387 = vmatprep.subr.bf16.mxu0 0
    %2388 = vmatpush1.bf16.xpose.msra.mxu0 0
    %2389 = vmatprep.subr.bf16.mxu0 0
    %2390 = vmatpush1.bf16.xpose.msra.mxu0 0
    %2391 = vmatprep.subr.bf16.mxu0 0
    %2392 = vmatpush1.bf16.xpose.msra.mxu0 0
    %2393 = vmatprep.subr.bf16.mxu0 0
    %2394 = vmatpush1.bf16.xpose.msra.mxu0 0
    %2395 = vmatprep.subr.bf16.mxu0 0
    %2396 = vmatpush1.bf16.xpose.msra.mxu0 0
    %2397 = vmatprep.mubr.bf16.mxu0 0
    %2398 = vmatmul.mubr.bf16.gmra.mrb[0].mxu0 %v2360
    %v2399 = vpop.f32.mrb[0].mxu0
    %v2400 = vadd.f32 0.0, %v2399
    %v2401 = vpop.f32.mrb[0].mxu0
    %v2402 = vpop.f32.mrb[0].mxu0
    %v2403 = vpop.f32.mrb[0].mxu0
    %2404 = vdwg.mxu0
    %v2406 = vsel %vm168, %v2299, 0
    %v2409 = vsel %vm168, %v2307, 0
    %2411 = vmatprep.subr.bf16.mxu0 0
    %2412 = vmatpush1.bf16.xpose.msra.mxu0 %v2409
    %2413 = vmatprep.subr.bf16.mxu0 0
    %2414 = vmatpush1.bf16.xpose.msra.mxu0 0
    %2415 = vmatprep.subr.bf16.mxu0 0
    %2416 = vmatpush1.bf16.xpose.msra.mxu0 0
    %2417 = vmatprep.subr.bf16.mxu0 0
    %2418 = vmatpush1.bf16.xpose.msra.mxu0 0
    %2419 = vmatprep.subr.bf16.mxu0 0
    %2420 = vmatpush1.bf16.xpose.msra.mxu0 0
    %2421 = vmatprep.subr.bf16.mxu0 0
    %2422 = vmatpush1.bf16.xpose.msra.mxu0 0
    %2423 = vmatprep.subr.bf16.mxu0 0
    %2424 = vmatpush1.bf16.xpose.msra.mxu0 0
    %2425 = vmatprep.subr.bf16.mxu0 0
    %2426 = vmatpush1.bf16.xpose.msra.mxu0 0
    %2427 = vmatprep.subr.bf16.mxu0 0
    %2428 = vmatpush1.bf16.xpose.msra.mxu0 0
    %2429 = vmatprep.subr.bf16.mxu0 0
    %2430 = vmatpush1.bf16.xpose.msra.mxu0 0
    %2431 = vmatprep.subr.bf16.mxu0 0
    %2432 = vmatpush1.bf16.xpose.msra.mxu0 0
    %2433 = vmatprep.subr.bf16.mxu0 0
    %2434 = vmatpush1.bf16.xpose.msra.mxu0 0
    %2435 = vmatprep.subr.bf16.mxu0 0
    %2436 = vmatpush1.bf16.xpose.msra.mxu0 0
    %2437 = vmatprep.subr.bf16.mxu0 0
    %2438 = vmatpush1.bf16.xpose.msra.mxu0 0
    %2439 = vmatprep.subr.bf16.mxu0 0
    %2440 = vmatpush1.bf16.xpose.msra.mxu0 0
    %2441 = vmatprep.subr.bf16.mxu0 0
    %2442 = vmatpush1.bf16.xpose.msra.mxu0 0
    %2443 = vmatprep.mubr.bf16.mxu0 0
    %2444 = vmatmul.mubr.bf16.gmra.mrb[0].mxu0 %v2406
    %v2445 = vpop.f32.mrb[0].mxu0
    %v2446 = vadd.f32 0.0, %v2445
    %v2447 = vpop.f32.mrb[0].mxu0
    %v2448 = vpop.f32.mrb[0].mxu0
    %v2449 = vpop.f32.mrb[0].mxu0
    %2450 = vdwg.mxu0
    %v2452 = vsel %vm168, %v2300, 0
    %v2455 = vsel %vm168, %v2308, 0
    %2457 = vmatprep.subr.bf16.mxu0 0
    %2458 = vmatpush1.bf16.xpose.msra.mxu0 %v2455
    %2459 = vmatprep.subr.bf16.mxu0 0
    %2460 = vmatpush1.bf16.xpose.msra.mxu0 0
    %2461 = vmatprep.subr.bf16.mxu0 0
    %2462 = vmatpush1.bf16.xpose.msra.mxu0 0
    %2463 = vmatprep.subr.bf16.mxu0 0
    %2464 = vmatpush1.bf16.xpose.msra.mxu0 0
    %2465 = vmatprep.subr.bf16.mxu0 0
    %2466 = vmatpush1.bf16.xpose.msra.mxu0 0
    %2467 = vmatprep.subr.bf16.mxu0 0
    %2468 = vmatpush1.bf16.xpose.msra.mxu0 0
    %2469 = vmatprep.subr.bf16.mxu0 0
    %2470 = vmatpush1.bf16.xpose.msra.mxu0 0
    %2471 = vmatprep.subr.bf16.mxu0 0
    %2472 = vmatpush1.bf16.xpose.msra.mxu0 0
    %2473 = vmatprep.subr.bf16.mxu0 0
    %2474 = vmatpush1.bf16.xpose.msra.mxu0 0
    %2475 = vmatprep.subr.bf16.mxu0 0
    %2476 = vmatpush1.bf16.xpose.msra.mxu0 0
    %2477 = vmatprep.subr.bf16.mxu0 0
    %2478 = vmatpush1.bf16.xpose.msra.mxu0 0
    %2479 = vmatprep.subr.bf16.mxu0 0
    %2480 = vmatpush1.bf16.xpose.msra.mxu0 0
    %2481 = vmatprep.subr.bf16.mxu0 0
    %2482 = vmatpush1.bf16.xpose.msra.mxu0 0
    %2483 = vmatprep.subr.bf16.mxu0 0
    %2484 = vmatpush1.bf16.xpose.msra.mxu0 0
    %2485 = vmatprep.subr.bf16.mxu0 0
    %2486 = vmatpush1.bf16.xpose.msra.mxu0 0
    %2487 = vmatprep.subr.bf16.mxu0 0
    %2488 = vmatpush1.bf16.xpose.msra.mxu0 0
    %2489 = vmatprep.mubr.bf16.mxu0 0
    %2490 = vmatmul.mubr.bf16.gmra.mrb[0].mxu0 %v2452
    %v2491 = vpop.f32.mrb[0].mxu0
    %v2492 = vadd.f32 0.0, %v2491
    %v2493 = vpop.f32.mrb[0].mxu0
    %v2494 = vpop.f32.mrb[0].mxu0
    %v2495 = vpop.f32.mrb[0].mxu0
    %2496 = vdwg.mxu0
    %v2498 = vsel %vm168, %v2301, 0
    %v2501 = vsel %vm168, %v2309, 0
    %2503 = vmatprep.subr.bf16.mxu0 0
    %2504 = vmatpush1.bf16.xpose.msra.mxu0 %v2501
    %2505 = vmatprep.subr.bf16.mxu0 0
    %2506 = vmatpush1.bf16.xpose.msra.mxu0 0
    %2507 = vmatprep.subr.bf16.mxu0 0
    %2508 = vmatpush1.bf16.xpose.msra.mxu0 0
    %2509 = vmatprep.subr.bf16.mxu0 0
    %2510 = vmatpush1.bf16.xpose.msra.mxu0 0
    %2511 = vmatprep.subr.bf16.mxu0 0
    %2512 = vmatpush1.bf16.xpose.msra.mxu0 0
    %2513 = vmatprep.subr.bf16.mxu0 0
    %2514 = vmatpush1.bf16.xpose.msra.mxu0 0
    %2515 = vmatprep.subr.bf16.mxu0 0
    %2516 = vmatpush1.bf16.xpose.msra.mxu0 0
    %2517 = vmatprep.subr.bf16.mxu0 0
    %2518 = vmatpush1.bf16.xpose.msra.mxu0 0
    %2519 = vmatprep.subr.bf16.mxu0 0
    %2520 = vmatpush1.bf16.xpose.msra.mxu0 0
    %2521 = vmatprep.subr.bf16.mxu0 0
    %2522 = vmatpush1.bf16.xpose.msra.mxu0 0
    %2523 = vmatprep.subr.bf16.mxu0 0
    %2524 = vmatpush1.bf16.xpose.msra.mxu0 0
    %2525 = vmatprep.subr.bf16.mxu0 0
    %2526 = vmatpush1.bf16.xpose.msra.mxu0 0
    %2527 = vmatprep.subr.bf16.mxu0 0
    %2528 = vmatpush1.bf16.xpose.msra.mxu0 0
    %2529 = vmatprep.subr.bf16.mxu0 0
    %2530 = vmatpush1.bf16.xpose.msra.mxu0 0
    %2531 = vmatprep.subr.bf16.mxu0 0
    %2532 = vmatpush1.bf16.xpose.msra.mxu0 0
    %2533 = vmatprep.subr.bf16.mxu0 0
    %2534 = vmatpush1.bf16.xpose.msra.mxu0 0
    %2535 = vmatprep.mubr.bf16.mxu0 0
    %2536 = vmatmul.mubr.bf16.gmra.mrb[0].mxu0 %v2498
    %v2537 = vpop.f32.mrb[0].mxu0
    %v2538 = vadd.f32 0.0, %v2537
    %v2539 = vpop.f32.mrb[0].mxu0
    %v2540 = vpop.f32.mrb[0].mxu0
    %v2541 = vpop.f32.mrb[0].mxu0
    %2542 = vdwg.mxu0
    %v2544 = vsel %vm168, %v2302, 0
    %v2547 = vsel %vm168, %v2310, 0
    %2549 = vmatprep.subr.bf16.mxu0 0
    %2550 = vmatpush1.bf16.xpose.msra.mxu0 %v2547
    %2551 = vmatprep.subr.bf16.mxu0 0
    %2552 = vmatpush1.bf16.xpose.msra.mxu0 0
    %2553 = vmatprep.subr.bf16.mxu0 0
    %2554 = vmatpush1.bf16.xpose.msra.mxu0 0
    %2555 = vmatprep.subr.bf16.mxu0 0
    %2556 = vmatpush1.bf16.xpose.msra.mxu0 0
    %2557 = vmatprep.subr.bf16.mxu0 0
    %2558 = vmatpush1.bf16.xpose.msra.mxu0 0
    %2559 = vmatprep.subr.bf16.mxu0 0
    %2560 = vmatpush1.bf16.xpose.msra.mxu0 0
    %2561 = vmatprep.subr.bf16.mxu0 0
    %2562 = vmatpush1.bf16.xpose.msra.mxu0 0
    %2563 = vmatprep.subr.bf16.mxu0 0
    %2564 = vmatpush1.bf16.xpose.msra.mxu0 0
    %2565 = vmatprep.subr.bf16.mxu0 0
    %2566 = vmatpush1.bf16.xpose.msra.mxu0 0
    %2567 = vmatprep.subr.bf16.mxu0 0
    %2568 = vmatpush1.bf16.xpose.msra.mxu0 0
    %2569 = vmatprep.subr.bf16.mxu0 0
    %2570 = vmatpush1.bf16.xpose.msra.mxu0 0
    %2571 = vmatprep.subr.bf16.mxu0 0
    %2572 = vmatpush1.bf16.xpose.msra.mxu0 0
    %2573 = vmatprep.subr.bf16.mxu0 0
    %2574 = vmatpush1.bf16.xpose.msra.mxu0 0
    %2575 = vmatprep.subr.bf16.mxu0 0
    %2576 = vmatpush1.bf16.xpose.msra.mxu0 0
    %2577 = vmatprep.subr.bf16.mxu0 0
    %2578 = vmatpush1.bf16.xpose.msra.mxu0 0
    %2579 = vmatprep.subr.bf16.mxu0 0
    %2580 = vmatpush1.bf16.xpose.msra.mxu0 0
    %2581 = vmatprep.mubr.bf16.mxu0 0
    %2582 = vmatmul.mubr.bf16.gmra.mrb[0].mxu0 %v2544
    %v2583 = vpop.f32.mrb[0].mxu0
    %v2584 = vadd.f32 0.0, %v2583
    %v2585 = vpop.f32.mrb[0].mxu0
    %v2586 = vpop.f32.mrb[0].mxu0
    %v2587 = vpop.f32.mrb[0].mxu0
    %2588 = vdwg.mxu0
    %v2590 = vsel %vm168, %v2303, 0
    %v2593 = vsel %vm168, %v2311, 0
    %2595 = vmatprep.subr.bf16.mxu0 0
    %2596 = vmatpush1.bf16.xpose.msra.mxu0 %v2593
    %2597 = vmatprep.subr.bf16.mxu0 0
    %2598 = vmatpush1.bf16.xpose.msra.mxu0 0
    %2599 = vmatprep.subr.bf16.mxu0 0
    %2600 = vmatpush1.bf16.xpose.msra.mxu0 0
    %2601 = vmatprep.subr.bf16.mxu0 0
    %2602 = vmatpush1.bf16.xpose.msra.mxu0 0
    %2603 = vmatprep.subr.bf16.mxu0 0
    %2604 = vmatpush1.bf16.xpose.msra.mxu0 0
    %2605 = vmatprep.subr.bf16.mxu0 0
    %2606 = vmatpush1.bf16.xpose.msra.mxu0 0
    %2607 = vmatprep.subr.bf16.mxu0 0
    %2608 = vmatpush1.bf16.xpose.msra.mxu0 0
    %2609 = vmatprep.subr.bf16.mxu0 0
    %2610 = vmatpush1.bf16.xpose.msra.mxu0 0
    %2611 = vmatprep.subr.bf16.mxu0 0
    %2612 = vmatpush1.bf16.xpose.msra.mxu0 0
    %2613 = vmatprep.subr.bf16.mxu0 0
    %2614 = vmatpush1.bf16.xpose.msra.mxu0 0
    %2615 = vmatprep.subr.bf16.mxu0 0
    %2616 = vmatpush1.bf16.xpose.msra.mxu0 0
    %2617 = vmatprep.subr.bf16.mxu0 0
    %2618 = vmatpush1.bf16.xpose.msra.mxu0 0
    %2619 = vmatprep.subr.bf16.mxu0 0
    %2620 = vmatpush1.bf16.xpose.msra.mxu0 0
    %2621 = vmatprep.subr.bf16.mxu0 0
    %2622 = vmatpush1.bf16.xpose.msra.mxu0 0
    %2623 = vmatprep.subr.bf16.mxu0 0
    %2624 = vmatpush1.bf16.xpose.msra.mxu0 0
    %2625 = vmatprep.subr.bf16.mxu0 0
    %2626 = vmatpush1.bf16.xpose.msra.mxu0 0
    %2627 = vmatprep.mubr.bf16.mxu0 0
    %2628 = vmatmul.mubr.bf16.gmra.mrb[0].mxu0 %v2590
    %v2629 = vpop.f32.mrb[0].mxu0
    %v2630 = vadd.f32 0.0, %v2629
    %v2631 = vpop.f32.mrb[0].mxu0
    %v2632 = vpop.f32.mrb[0].mxu0
    %v2633 = vpop.f32.mrb[0].mxu0
    %2634 = vdwg.mxu0
    %v2636 = vsel %vm168, %v2304, 0
    %v2639 = vsel %vm168, %v2312, 0
    %2641 = vmatprep.subr.bf16.mxu0 0
    %2642 = vmatpush1.bf16.xpose.msra.mxu0 %v2639
    %2643 = vmatprep.subr.bf16.mxu0 0
    %2644 = vmatpush1.bf16.xpose.msra.mxu0 0
    %2645 = vmatprep.subr.bf16.mxu0 0
    %2646 = vmatpush1.bf16.xpose.msra.mxu0 0
    %2647 = vmatprep.subr.bf16.mxu0 0
    %2648 = vmatpush1.bf16.xpose.msra.mxu0 0
    %2649 = vmatprep.subr.bf16.mxu0 0
    %2650 = vmatpush1.bf16.xpose.msra.mxu0 0
    %2651 = vmatprep.subr.bf16.mxu0 0
    %2652 = vmatpush1.bf16.xpose.msra.mxu0 0
    %2653 = vmatprep.subr.bf16.mxu0 0
    %2654 = vmatpush1.bf16.xpose.msra.mxu0 0
    %2655 = vmatprep.subr.bf16.mxu0 0
    %2656 = vmatpush1.bf16.xpose.msra.mxu0 0
    %2657 = vmatprep.subr.bf16.mxu0 0
    %2658 = vmatpush1.bf16.xpose.msra.mxu0 0
    %2659 = vmatprep.subr.bf16.mxu0 0
    %2660 = vmatpush1.bf16.xpose.msra.mxu0 0
    %2661 = vmatprep.subr.bf16.mxu0 0
    %2662 = vmatpush1.bf16.xpose.msra.mxu0 0
    %2663 = vmatprep.subr.bf16.mxu0 0
    %2664 = vmatpush1.bf16.xpose.msra.mxu0 0
    %2665 = vmatprep.subr.bf16.mxu0 0
    %2666 = vmatpush1.bf16.xpose.msra.mxu0 0
    %2667 = vmatprep.subr.bf16.mxu0 0
    %2668 = vmatpush1.bf16.xpose.msra.mxu0 0
    %2669 = vmatprep.subr.bf16.mxu0 0
    %2670 = vmatpush1.bf16.xpose.msra.mxu0 0
    %2671 = vmatprep.subr.bf16.mxu0 0
    %2672 = vmatpush1.bf16.xpose.msra.mxu0 0
    %2673 = vmatprep.mubr.bf16.mxu0 0
    %2674 = vmatmul.mubr.bf16.gmra.mrb[0].mxu0 %v2636
    %v2675 = vpop.f32.mrb[0].mxu0
    %v2676 = vadd.f32 0.0, %v2675
    %v2677 = vpop.f32.mrb[0].mxu0
    %v2678 = vpop.f32.mrb[0].mxu0
    %v2679 = vpop.f32.mrb[0].mxu0
    %2680 = vdwg.mxu0
    %v2681 = vmul.f32 %v2354, 0.35355338
    %v2682 = vmul.f32 %v2400, 0.35355338
    %v2683 = vmul.f32 %v2446, 0.35355338
    %v2684 = vmul.f32 %v2492, 0.35355338
    %v2685 = vmul.f32 %v2538, 0.35355338
    %v2686 = vmul.f32 %v2584, 0.35355338
    %v2687 = vmul.f32 %v2630, 0.35355338
    %v2688 = vmul.f32 %v2676, 0.35355338
    %v2689 = vsel %vm168, %v2681, -inf
    %2690 = vmax.xlane.f32.xlu0 %v2689
    %v2691 = vpop.xlane.xlu0 %2690
    %v2692 = vsel %vm168, %v2682, -inf
    %2693 = vmax.xlane.f32.xlu0 %v2692
    %v2694 = vpop.xlane.xlu0 %2693
    %v2695 = vsel %vm168, %v2683, -inf
    %2696 = vmax.xlane.f32.xlu0 %v2695
    %v2697 = vpop.xlane.xlu0 %2696
    %v2698 = vsel %vm168, %v2684, -inf
    %2699 = vmax.xlane.f32.xlu0 %v2698
    %v2700 = vpop.xlane.xlu0 %2699
    %v2701 = vsel %vm168, %v2685, -inf
    %2702 = vmax.xlane.f32.xlu0 %v2701
    %v2703 = vpop.xlane.xlu0 %2702
    %v2704 = vsel %vm168, %v2686, -inf
    %2705 = vmax.xlane.f32.xlu0 %v2704
    %v2706 = vpop.xlane.xlu0 %2705
    %v2707 = vsel %vm168, %v2687, -inf
    %2708 = vmax.xlane.f32.xlu0 %v2707
    %v2709 = vpop.xlane.xlu0 %2708
    %v2710 = vsel %vm168, %v2688, -inf
    %2711 = vmax.xlane.f32.xlu0 %v2710
    %v2712 = vpop.xlane.xlu0 %2711
    %v2713 = vsub.f32 %v2681, %v2691
    %v2714 = vsub.f32 %v2682, %v2694
    %v2715 = vsub.f32 %v2683, %v2697
    %v2716 = vsub.f32 %v2684, %v2700
    %v2717 = vsub.f32 %v2685, %v2703
    %v2718 = vsub.f32 %v2686, %v2706
    %v2719 = vsub.f32 %v2687, %v2709
    %v2720 = vsub.f32 %v2688, %v2712
    %v2721 = vmul.f32 %v2713, 1.442695
    %v2722 = vpow.pop %v2721
    %v2723 = vmul.f32 %v2714, 1.442695
    %v2724 = vpow.pop %v2723
    %v2725 = vmul.f32 %v2715, 1.442695
    %v2726 = vpow.pop %v2725
    %v2727 = vmul.f32 %v2716, 1.442695
    %v2728 = vpow.pop %v2727
    %v2729 = vmul.f32 %v2717, 1.442695
    %v2730 = vpow.pop %v2729
    %v2731 = vmul.f32 %v2718, 1.442695
    %v2732 = vpow.pop %v2731
    %v2733 = vmul.f32 %v2719, 1.442695
    %v2734 = vpow.pop %v2733
    %v2735 = vmul.f32 %v2720, 1.442695
    %v2736 = vpow.pop %v2735
    %v2737 = vsel %vm168, %v2722, 0.0
    %2738 = vadd.xlane.f32.xlu0 %v2737
    %v2739 = vpop.xlane.xlu0 %2738
    %v2740 = vsel %vm168, %v2724, 0.0
    %2741 = vadd.xlane.f32.xlu0 %v2740
    %v2742 = vpop.xlane.xlu0 %2741
    %v2743 = vsel %vm168, %v2726, 0.0
    %2744 = vadd.xlane.f32.xlu0 %v2743
    %v2745 = vpop.xlane.xlu0 %2744
    %v2746 = vsel %vm168, %v2728, 0.0
    %2747 = vadd.xlane.f32.xlu0 %v2746
    %v2748 = vpop.xlane.xlu0 %2747
    %v2749 = vsel %vm168, %v2730, 0.0
    %2750 = vadd.xlane.f32.xlu0 %v2749
    %v2751 = vpop.xlane.xlu0 %2750
    %v2752 = vsel %vm168, %v2732, 0.0
    %2753 = vadd.xlane.f32.xlu0 %v2752
    %v2754 = vpop.xlane.xlu0 %2753
    %v2755 = vsel %vm168, %v2734, 0.0
    %2756 = vadd.xlane.f32.xlu0 %v2755
    %v2757 = vpop.xlane.xlu0 %2756
    %v2758 = vsel %vm168, %v2736, 0.0
    %2759 = vadd.xlane.f32.xlu0 %v2758
    %v2760 = vpop.xlane.xlu0 %2759
    %v2761 = vpack.c.bf16 %v2722, %v2722
    %v2762 = vpack.c.bf16 %v2724, %v2724
    %v2763 = vpack.c.bf16 %v2726, %v2726
    %v2764 = vpack.c.bf16 %v2728, %v2728
    %v2765 = vpack.c.bf16 %v2730, %v2730
    %v2766 = vpack.c.bf16 %v2732, %v2732
    %v2767 = vpack.c.bf16 %v2734, %v2734
    %v2768 = vpack.c.bf16 %v2736, %v2736
    %v2769 = vpack.c.bf16 %v2271, %v2271
    %v2770 = vpack.c.bf16 %v2274, %v2274
    %v2771 = vpack.c.bf16 %v2280, %v2280
    %v2772 = vpack.c.bf16 %v2282, %v2282
    %v2773 = vpack.c.bf16 %v2286, %v2286
    %v2774 = vpack.c.bf16 %v2288, %v2288
    %v2775 = vpack.c.bf16 %v2292, %v2292
    %v2776 = vpack.c.bf16 %v2294, %v2294
    %v2778 = vsel %vm168, %v2761, 0
    %v2781 = vsel %vm766, %v2769, 0
    %2783 = vmatprep.subr.bf16.mxu0 0
    %2784 = vmatpush1.bf16.msra.mxu0 %v2781
    %2785 = vmatprep.subr.bf16.mxu0 0
    %2786 = vmatpush1.bf16.msra.mxu0 0
    %2787 = vmatprep.subr.bf16.mxu0 0
    %2788 = vmatpush1.bf16.msra.mxu0 0
    %2789 = vmatprep.subr.bf16.mxu0 0
    %2790 = vmatpush1.bf16.msra.mxu0 0
    %2791 = vmatprep.subr.bf16.mxu0 0
    %2792 = vmatpush1.bf16.msra.mxu0 0
    %2793 = vmatprep.subr.bf16.mxu0 0
    %2794 = vmatpush1.bf16.msra.mxu0 0
    %2795 = vmatprep.subr.bf16.mxu0 0
    %2796 = vmatpush1.bf16.msra.mxu0 0
    %2797 = vmatprep.subr.bf16.mxu0 0
    %2798 = vmatpush1.bf16.msra.mxu0 0
    %2799 = vmatprep.subr.bf16.mxu0 0
    %2800 = vmatpush1.bf16.msra.mxu0 0
    %2801 = vmatprep.subr.bf16.mxu0 0
    %2802 = vmatpush1.bf16.msra.mxu0 0
    %2803 = vmatprep.subr.bf16.mxu0 0
    %2804 = vmatpush1.bf16.msra.mxu0 0
    %2805 = vmatprep.subr.bf16.mxu0 0
    %2806 = vmatpush1.bf16.msra.mxu0 0
    %2807 = vmatprep.subr.bf16.mxu0 0
    %2808 = vmatpush1.bf16.msra.mxu0 0
    %2809 = vmatprep.subr.bf16.mxu0 0
    %2810 = vmatpush1.bf16.msra.mxu0 0
    %2811 = vmatprep.subr.bf16.mxu0 0
    %2812 = vmatpush1.bf16.msra.mxu0 0
    %2813 = vmatprep.subr.bf16.mxu0 0
    %2814 = vmatpush1.bf16.msra.mxu0 0
    %2815 = vmatprep.mubr.bf16.mxu0 0
    %2816 = vmatmul.mubr.bf16.gmra.mrb[0].mxu0 %v2778
    %v2817 = vpop.f32.mrb[0].mxu0
    %v2818 = vadd.f32 0.0, %v2817
    %v2819 = vpop.f32.mrb[0].mxu0
    %v2820 = vpop.f32.mrb[0].mxu0
    %v2821 = vpop.f32.mrb[0].mxu0
    %2822 = vdwg.mxu0
    %v2824 = vsel %vm168, %v2762, 0
    %v2827 = vsel %vm766, %v2770, 0
    %2829 = vmatprep.subr.bf16.mxu0 0
    %2830 = vmatpush1.bf16.msra.mxu0 %v2827
    %2831 = vmatprep.subr.bf16.mxu0 0
    %2832 = vmatpush1.bf16.msra.mxu0 0
    %2833 = vmatprep.subr.bf16.mxu0 0
    %2834 = vmatpush1.bf16.msra.mxu0 0
    %2835 = vmatprep.subr.bf16.mxu0 0
    %2836 = vmatpush1.bf16.msra.mxu0 0
    %2837 = vmatprep.subr.bf16.mxu0 0
    %2838 = vmatpush1.bf16.msra.mxu0 0
    %2839 = vmatprep.subr.bf16.mxu0 0
    %2840 = vmatpush1.bf16.msra.mxu0 0
    %2841 = vmatprep.subr.bf16.mxu0 0
    %2842 = vmatpush1.bf16.msra.mxu0 0
    %2843 = vmatprep.subr.bf16.mxu0 0
    %2844 = vmatpush1.bf16.msra.mxu0 0
    %2845 = vmatprep.subr.bf16.mxu0 0
    %2846 = vmatpush1.bf16.msra.mxu0 0
    %2847 = vmatprep.subr.bf16.mxu0 0
    %2848 = vmatpush1.bf16.msra.mxu0 0
    %2849 = vmatprep.subr.bf16.mxu0 0
    %2850 = vmatpush1.bf16.msra.mxu0 0
    %2851 = vmatprep.subr.bf16.mxu0 0
    %2852 = vmatpush1.bf16.msra.mxu0 0
    %2853 = vmatprep.subr.bf16.mxu0 0
    %2854 = vmatpush1.bf16.msra.mxu0 0
    %2855 = vmatprep.subr.bf16.mxu0 0
    %2856 = vmatpush1.bf16.msra.mxu0 0
    %2857 = vmatprep.subr.bf16.mxu0 0
    %2858 = vmatpush1.bf16.msra.mxu0 0
    %2859 = vmatprep.subr.bf16.mxu0 0
    %2860 = vmatpush1.bf16.msra.mxu0 0
    %2861 = vmatprep.mubr.bf16.mxu0 0
    %2862 = vmatmul.mubr.bf16.gmra.mrb[0].mxu0 %v2824
    %v2863 = vpop.f32.mrb[0].mxu0
    %v2864 = vadd.f32 0.0, %v2863
    %v2865 = vpop.f32.mrb[0].mxu0
    %v2866 = vpop.f32.mrb[0].mxu0
    %v2867 = vpop.f32.mrb[0].mxu0
    %2868 = vdwg.mxu0
    %v2870 = vsel %vm168, %v2763, 0
    %v2873 = vsel %vm766, %v2771, 0
    %2875 = vmatprep.subr.bf16.mxu0 0
    %2876 = vmatpush1.bf16.msra.mxu0 %v2873
    %2877 = vmatprep.subr.bf16.mxu0 0
    %2878 = vmatpush1.bf16.msra.mxu0 0
    %2879 = vmatprep.subr.bf16.mxu0 0
    %2880 = vmatpush1.bf16.msra.mxu0 0
    %2881 = vmatprep.subr.bf16.mxu0 0
    %2882 = vmatpush1.bf16.msra.mxu0 0
    %2883 = vmatprep.subr.bf16.mxu0 0
    %2884 = vmatpush1.bf16.msra.mxu0 0
    %2885 = vmatprep.subr.bf16.mxu0 0
    %2886 = vmatpush1.bf16.msra.mxu0 0
    %2887 = vmatprep.subr.bf16.mxu0 0
    %2888 = vmatpush1.bf16.msra.mxu0 0
    %2889 = vmatprep.subr.bf16.mxu0 0
    %2890 = vmatpush1.bf16.msra.mxu0 0
    %2891 = vmatprep.subr.bf16.mxu0 0
    %2892 = vmatpush1.bf16.msra.mxu0 0
    %2893 = vmatprep.subr.bf16.mxu0 0
    %2894 = vmatpush1.bf16.msra.mxu0 0
    %2895 = vmatprep.subr.bf16.mxu0 0
    %2896 = vmatpush1.bf16.msra.mxu0 0
    %2897 = vmatprep.subr.bf16.mxu0 0
    %2898 = vmatpush1.bf16.msra.mxu0 0
    %2899 = vmatprep.subr.bf16.mxu0 0
    %2900 = vmatpush1.bf16.msra.mxu0 0
    %2901 = vmatprep.subr.bf16.mxu0 0
    %2902 = vmatpush1.bf16.msra.mxu0 0
    %2903 = vmatprep.subr.bf16.mxu0 0
    %2904 = vmatpush1.bf16.msra.mxu0 0
    %2905 = vmatprep.subr.bf16.mxu0 0
    %2906 = vmatpush1.bf16.msra.mxu0 0
    %2907 = vmatprep.mubr.bf16.mxu0 0
    %2908 = vmatmul.mubr.bf16.gmra.mrb[0].mxu0 %v2870
    %v2909 = vpop.f32.mrb[0].mxu0
    %v2910 = vadd.f32 0.0, %v2909
    %v2911 = vpop.f32.mrb[0].mxu0
    %v2912 = vpop.f32.mrb[0].mxu0
    %v2913 = vpop.f32.mrb[0].mxu0
    %2914 = vdwg.mxu0
    %v2916 = vsel %vm168, %v2764, 0
    %v2919 = vsel %vm766, %v2772, 0
    %2921 = vmatprep.subr.bf16.mxu0 0
    %2922 = vmatpush1.bf16.msra.mxu0 %v2919
    %2923 = vmatprep.subr.bf16.mxu0 0
    %2924 = vmatpush1.bf16.msra.mxu0 0
    %2925 = vmatprep.subr.bf16.mxu0 0
    %2926 = vmatpush1.bf16.msra.mxu0 0
    %2927 = vmatprep.subr.bf16.mxu0 0
    %2928 = vmatpush1.bf16.msra.mxu0 0
    %2929 = vmatprep.subr.bf16.mxu0 0
    %2930 = vmatpush1.bf16.msra.mxu0 0
    %2931 = vmatprep.subr.bf16.mxu0 0
    %2932 = vmatpush1.bf16.msra.mxu0 0
    %2933 = vmatprep.subr.bf16.mxu0 0
    %2934 = vmatpush1.bf16.msra.mxu0 0
    %2935 = vmatprep.subr.bf16.mxu0 0
    %2936 = vmatpush1.bf16.msra.mxu0 0
    %2937 = vmatprep.subr.bf16.mxu0 0
    %2938 = vmatpush1.bf16.msra.mxu0 0
    %2939 = vmatprep.subr.bf16.mxu0 0
    %2940 = vmatpush1.bf16.msra.mxu0 0
    %2941 = vmatprep.subr.bf16.mxu0 0
    %2942 = vmatpush1.bf16.msra.mxu0 0
    %2943 = vmatprep.subr.bf16.mxu0 0
    %2944 = vmatpush1.bf16.msra.mxu0 0
    %2945 = vmatprep.subr.bf16.mxu0 0
    %2946 = vmatpush1.bf16.msra.mxu0 0
    %2947 = vmatprep.subr.bf16.mxu0 0
    %2948 = vmatpush1.bf16.msra.mxu0 0
    %2949 = vmatprep.subr.bf16.mxu0 0
    %2950 = vmatpush1.bf16.msra.mxu0 0
    %2951 = vmatprep.subr.bf16.mxu0 0
    %2952 = vmatpush1.bf16.msra.mxu0 0
    %2953 = vmatprep.mubr.bf16.mxu0 0
    %2954 = vmatmul.mubr.bf16.gmra.mrb[0].mxu0 %v2916
    %v2955 = vpop.f32.mrb[0].mxu0
    %v2956 = vadd.f32 0.0, %v2955
    %v2957 = vpop.f32.mrb[0].mxu0
    %v2958 = vpop.f32.mrb[0].mxu0
    %v2959 = vpop.f32.mrb[0].mxu0
    %2960 = vdwg.mxu0
    %v2962 = vsel %vm168, %v2765, 0
    %v2965 = vsel %vm766, %v2773, 0
    %2967 = vmatprep.subr.bf16.mxu0 0
    %2968 = vmatpush1.bf16.msra.mxu0 %v2965
    %2969 = vmatprep.subr.bf16.mxu0 0
    %2970 = vmatpush1.bf16.msra.mxu0 0
    %2971 = vmatprep.subr.bf16.mxu0 0
    %2972 = vmatpush1.bf16.msra.mxu0 0
    %2973 = vmatprep.subr.bf16.mxu0 0
    %2974 = vmatpush1.bf16.msra.mxu0 0
    %2975 = vmatprep.subr.bf16.mxu0 0
    %2976 = vmatpush1.bf16.msra.mxu0 0
    %2977 = vmatprep.subr.bf16.mxu0 0
    %2978 = vmatpush1.bf16.msra.mxu0 0
    %2979 = vmatprep.subr.bf16.mxu0 0
    %2980 = vmatpush1.bf16.msra.mxu0 0
    %2981 = vmatprep.subr.bf16.mxu0 0
    %2982 = vmatpush1.bf16.msra.mxu0 0
    %2983 = vmatprep.subr.bf16.mxu0 0
    %2984 = vmatpush1.bf16.msra.mxu0 0
    %2985 = vmatprep.subr.bf16.mxu0 0
    %2986 = vmatpush1.bf16.msra.mxu0 0
    %2987 = vmatprep.subr.bf16.mxu0 0
    %2988 = vmatpush1.bf16.msra.mxu0 0
    %2989 = vmatprep.subr.bf16.mxu0 0
    %2990 = vmatpush1.bf16.msra.mxu0 0
    %2991 = vmatprep.subr.bf16.mxu0 0
    %2992 = vmatpush1.bf16.msra.mxu0 0
    %2993 = vmatprep.subr.bf16.mxu0 0
    %2994 = vmatpush1.bf16.msra.mxu0 0
    %2995 = vmatprep.subr.bf16.mxu0 0
    %2996 = vmatpush1.bf16.msra.mxu0 0
    %2997 = vmatprep.subr.bf16.mxu0 0
    %2998 = vmatpush1.bf16.msra.mxu0 0
    %2999 = vmatprep.mubr.bf16.mxu0 0
    %3000 = vmatmul.mubr.bf16.gmra.mrb[0].mxu0 %v2962
    %v3001 = vpop.f32.mrb[0].mxu0
    %v3002 = vadd.f32 0.0, %v3001
    %v3003 = vpop.f32.mrb[0].mxu0
    %v3004 = vpop.f32.mrb[0].mxu0
    %v3005 = vpop.f32.mrb[0].mxu0
    %3006 = vdwg.mxu0
    %v3008 = vsel %vm168, %v2766, 0
    %v3011 = vsel %vm766, %v2774, 0
    %3013 = vmatprep.subr.bf16.mxu0 0
    %3014 = vmatpush1.bf16.msra.mxu0 %v3011
    %3015 = vmatprep.subr.bf16.mxu0 0
    %3016 = vmatpush1.bf16.msra.mxu0 0
    %3017 = vmatprep.subr.bf16.mxu0 0
    %3018 = vmatpush1.bf16.msra.mxu0 0
    %3019 = vmatprep.subr.bf16.mxu0 0
    %3020 = vmatpush1.bf16.msra.mxu0 0
    %3021 = vmatprep.subr.bf16.mxu0 0
    %3022 = vmatpush1.bf16.msra.mxu0 0
    %3023 = vmatprep.subr.bf16.mxu0 0
    %3024 = vmatpush1.bf16.msra.mxu0 0
    %3025 = vmatprep.subr.bf16.mxu0 0
    %3026 = vmatpush1.bf16.msra.mxu0 0
    %3027 = vmatprep.subr.bf16.mxu0 0
    %3028 = vmatpush1.bf16.msra.mxu0 0
    %3029 = vmatprep.subr.bf16.mxu0 0
    %3030 = vmatpush1.bf16.msra.mxu0 0
    %3031 = vmatprep.subr.bf16.mxu0 0
    %3032 = vmatpush1.bf16.msra.mxu0 0
    %3033 = vmatprep.subr.bf16.mxu0 0
    %3034 = vmatpush1.bf16.msra.mxu0 0
    %3035 = vmatprep.subr.bf16.mxu0 0
    %3036 = vmatpush1.bf16.msra.mxu0 0
    %3037 = vmatprep.subr.bf16.mxu0 0
    %3038 = vmatpush1.bf16.msra.mxu0 0
    %3039 = vmatprep.subr.bf16.mxu0 0
    %3040 = vmatpush1.bf16.msra.mxu0 0
    %3041 = vmatprep.subr.bf16.mxu0 0
    %3042 = vmatpush1.bf16.msra.mxu0 0
    %3043 = vmatprep.subr.bf16.mxu0 0
    %3044 = vmatpush1.bf16.msra.mxu0 0
    %3045 = vmatprep.mubr.bf16.mxu0 0
    %3046 = vmatmul.mubr.bf16.gmra.mrb[0].mxu0 %v3008
    %v3047 = vpop.f32.mrb[0].mxu0
    %v3048 = vadd.f32 0.0, %v3047
    %v3049 = vpop.f32.mrb[0].mxu0
    %v3050 = vpop.f32.mrb[0].mxu0
    %v3051 = vpop.f32.mrb[0].mxu0
    %3052 = vdwg.mxu0
    %v3054 = vsel %vm168, %v2767, 0
    %v3057 = vsel %vm766, %v2775, 0
    %3059 = vmatprep.subr.bf16.mxu0 0
    %3060 = vmatpush1.bf16.msra.mxu0 %v3057
    %3061 = vmatprep.subr.bf16.mxu0 0
    %3062 = vmatpush1.bf16.msra.mxu0 0
    %3063 = vmatprep.subr.bf16.mxu0 0
    %3064 = vmatpush1.bf16.msra.mxu0 0
    %3065 = vmatprep.subr.bf16.mxu0 0
    %3066 = vmatpush1.bf16.msra.mxu0 0
    %3067 = vmatprep.subr.bf16.mxu0 0
    %3068 = vmatpush1.bf16.msra.mxu0 0
    %3069 = vmatprep.subr.bf16.mxu0 0
    %3070 = vmatpush1.bf16.msra.mxu0 0
    %3071 = vmatprep.subr.bf16.mxu0 0
    %3072 = vmatpush1.bf16.msra.mxu0 0
    %3073 = vmatprep.subr.bf16.mxu0 0
    %3074 = vmatpush1.bf16.msra.mxu0 0
    %3075 = vmatprep.subr.bf16.mxu0 0
    %3076 = vmatpush1.bf16.msra.mxu0 0
    %3077 = vmatprep.subr.bf16.mxu0 0
    %3078 = vmatpush1.bf16.msra.mxu0 0
    %3079 = vmatprep.subr.bf16.mxu0 0
    %3080 = vmatpush1.bf16.msra.mxu0 0
    %3081 = vmatprep.subr.bf16.mxu0 0
    %3082 = vmatpush1.bf16.msra.mxu0 0
    %3083 = vmatprep.subr.bf16.mxu0 0
    %3084 = vmatpush1.bf16.msra.mxu0 0
    %3085 = vmatprep.subr.bf16.mxu0 0
    %3086 = vmatpush1.bf16.msra.mxu0 0
    %3087 = vmatprep.subr.bf16.mxu0 0
    %3088 = vmatpush1.bf16.msra.mxu0 0
    %3089 = vmatprep.subr.bf16.mxu0 0
    %3090 = vmatpush1.bf16.msra.mxu0 0
    %3091 = vmatprep.mubr.bf16.mxu0 0
    %3092 = vmatmul.mubr.bf16.gmra.mrb[0].mxu0 %v3054
    %v3093 = vpop.f32.mrb[0].mxu0
    %v3094 = vadd.f32 0.0, %v3093
    %v3095 = vpop.f32.mrb[0].mxu0
    %v3096 = vpop.f32.mrb[0].mxu0
    %v3097 = vpop.f32.mrb[0].mxu0
    %3098 = vdwg.mxu0
    %v3100 = vsel %vm168, %v2768, 0
    %v3103 = vsel %vm766, %v2776, 0
    %3105 = vmatprep.subr.bf16.mxu0 0
    %3106 = vmatpush1.bf16.msra.mxu0 %v3103
    %3107 = vmatprep.subr.bf16.mxu0 0
    %3108 = vmatpush1.bf16.msra.mxu0 0
    %3109 = vmatprep.subr.bf16.mxu0 0
    %3110 = vmatpush1.bf16.msra.mxu0 0
    %3111 = vmatprep.subr.bf16.mxu0 0
    %3112 = vmatpush1.bf16.msra.mxu0 0
    %3113 = vmatprep.subr.bf16.mxu0 0
    %3114 = vmatpush1.bf16.msra.mxu0 0
    %3115 = vmatprep.subr.bf16.mxu0 0
    %3116 = vmatpush1.bf16.msra.mxu0 0
    %3117 = vmatprep.subr.bf16.mxu0 0
    %3118 = vmatpush1.bf16.msra.mxu0 0
    %3119 = vmatprep.subr.bf16.mxu0 0
    %3120 = vmatpush1.bf16.msra.mxu0 0
    %3121 = vmatprep.subr.bf16.mxu0 0
    %3122 = vmatpush1.bf16.msra.mxu0 0
    %3123 = vmatprep.subr.bf16.mxu0 0
    %3124 = vmatpush1.bf16.msra.mxu0 0
    %3125 = vmatprep.subr.bf16.mxu0 0
    %3126 = vmatpush1.bf16.msra.mxu0 0
    %3127 = vmatprep.subr.bf16.mxu0 0
    %3128 = vmatpush1.bf16.msra.mxu0 0
    %3129 = vmatprep.subr.bf16.mxu0 0
    %3130 = vmatpush1.bf16.msra.mxu0 0
    %3131 = vmatprep.subr.bf16.mxu0 0
    %3132 = vmatpush1.bf16.msra.mxu0 0
    %3133 = vmatprep.subr.bf16.mxu0 0
    %3134 = vmatpush1.bf16.msra.mxu0 0
    %3135 = vmatprep.subr.bf16.mxu0 0
    %3136 = vmatpush1.bf16.msra.mxu0 0
    %3137 = vmatprep.mubr.bf16.mxu0 0
    %3138 = vmatmul.mubr.bf16.gmra.mrb[0].mxu0 %v3100
    %v3139 = vpop.f32.mrb[0].mxu0
    %v3140 = vadd.f32 0.0, %v3139
    %v3141 = vpop.f32.mrb[0].mxu0
    %v3142 = vpop.f32.mrb[0].mxu0
    %v3143 = vpop.f32.mrb[0].mxu0
    %3144 = vdwg.mxu0
    %v3145 = vrcp.pop %v2739
    %v3146 = vrcp.pop %v2742
    %v3147 = vrcp.pop %v2745
    %v3148 = vrcp.pop %v2748
    %v3149 = vrcp.pop %v2751
    %v3150 = vrcp.pop %v2754
    %v3151 = vrcp.pop %v2757
    %v3152 = vrcp.pop %v2760
    %v3153 = vmul.f32 %v2818, %v3145
    %v3154 = vmul.f32 %v2864, %v3146
    %v3155 = vmul.f32 %v2910, %v3147
    %v3156 = vmul.f32 %v2956, %v3148
    %v3157 = vmul.f32 %v3002, %v3149
    %v3158 = vmul.f32 %v3048, %v3150
    %v3159 = vmul.f32 %v3094, %v3151
    %v3160 = vmul.f32 %v3140, %v3152
    %3161 = vst.msk [vmem:[#allocation2] sm:$0xff] %vm168, %v3153
    %3162 = vst.msk [vmem:[#allocation2 + $0x8] sm:$0xff] %vm168, %v3154
    %3165 = vrot.lane.b32.xlu0 %v3155, 8
    %v3166 = vpop.permute.xlu0 %3165
    %3167 = vrot.lane.b32.xlu0 %v3156, 8
    %v3168 = vpop.permute.xlu0 %3167
    %vm3171 = vcmask 130112
    %3172 = vst.msk [vmem:[#allocation2] sm:$0xff] %vm3171, %v3166
    %3173 = vst.msk [vmem:[#allocation2 + $0x8] sm:$0xff] %vm3171, %v3168
    %3176 = vrot.lane.b32.xlu0 %v3157, 16
    %v3177 = vpop.permute.xlu0 %3176
    %3178 = vrot.lane.b32.xlu0 %v3158, 16
    %v3179 = vpop.permute.xlu0 %3178
    %vm3182 = vcmask 195712
    %3183 = vst.msk [vmem:[#allocation2] sm:$0xff] %vm3182, %v3177
    %3184 = vst.msk [vmem:[#allocation2 + $0x8] sm:$0xff] %vm3182, %v3179
    %3187 = vrot.lane.b32.xlu0 %v3159, 24
    %v3188 = vpop.permute.xlu0 %3187
    %3189 = vrot.lane.b32.xlu0 %v3160, 24
    %v3190 = vpop.permute.xlu0 %3189
    %vm3193 = vcmask 261312
    %3194 = vst.msk [vmem:[#allocation2] sm:$0xff] %vm3193, %v3188
    %3195 = vst.msk [vmem:[#allocation2 + $0x8] sm:$0xff] %vm3193, %v3190
    %v3196 = vld [vmem:[#allocation2] sm:$0xff]
    %v3197 = vld [vmem:[#allocation2 + $0x8] sm:$0xff]
    %v3198 = vpack.c.bf16 %v3197, %v3196
    %s3199 = scalar_lea.vmem %s3, 48
    %v3200 = vld [vmem:[%s3199] sm:$0xf]
    %v3201 = vld [vmem:[%s3199 + $0x4] sm:$0xf]
    %v3202 = vld [vmem:[%s3199 + $0x8] sm:$0xf]
    %v3203 = vld [vmem:[%s3199 + $0xc] sm:$0xf]
    %s3204 = scalar_lea.vmem %s4, 3
    %v3205 = vld [vmem:[%s3204] sm:$0x1]
    %v3207 = vlaneseq
    %v3208 = vshrl.u32 %v3207, 7
    %v3209 = vsub.s32 0, %v3208
    %v3210 = vrot.slane %v3205, %v3209
    %v3216 = vunpack.c.l.b16 %v3200
    %v3217 = vunpack.c.l.b16 %v3201
    %v3218 = vunpack.c.l.b16 %v3202
    %v3219 = vunpack.c.l.b16 %v3203
    %v3220 = vpack.c.b16 %v3217, %v3216
    %v3221 = vpack.c.b16 %v3219, %v3218
    %v3225 = vsel %vm87, %v3198, 0
    %3227 = vmatprep.subr.bf16.mxu0 0
    %3228 = vmatpush1.bf16.msra.mxu0 %v3220
    %3229 = vmatprep.subr.bf16.mxu0 0
    %3230 = vmatpush1.bf16.msra.mxu0 %v3221
    %3231 = vmatprep.subr.bf16.mxu0 0
    %3232 = vmatpush1.bf16.msra.mxu0 0
    %3233 = vmatprep.subr.bf16.mxu0 0
    %3234 = vmatpush1.bf16.msra.mxu0 0
    %3235 = vmatprep.subr.bf16.mxu0 0
    %3236 = vmatpush1.bf16.msra.mxu0 0
    %3237 = vmatprep.subr.bf16.mxu0 0
    %3238 = vmatpush1.bf16.msra.mxu0 0
    %3239 = vmatprep.subr.bf16.mxu0 0
    %3240 = vmatpush1.bf16.msra.mxu0 0
    %3241 = vmatprep.subr.bf16.mxu0 0
    %3242 = vmatpush1.bf16.msra.mxu0 0
    %3243 = vmatprep.subr.bf16.mxu0 0
    %3244 = vmatpush1.bf16.msra.mxu0 0
    %3245 = vmatprep.subr.bf16.mxu0 0
    %3246 = vmatpush1.bf16.msra.mxu0 0
    %3247 = vmatprep.subr.bf16.mxu0 0
    %3248 = vmatpush1.bf16.msra.mxu0 0
    %3249 = vmatprep.subr.bf16.mxu0 0
    %3250 = vmatpush1.bf16.msra.mxu0 0
    %3251 = vmatprep.subr.bf16.mxu0 0
    %3252 = vmatpush1.bf16.msra.mxu0 0
    %3253 = vmatprep.subr.bf16.mxu0 0
    %3254 = vmatpush1.bf16.msra.mxu0 0
    %3255 = vmatprep.subr.bf16.mxu0 0
    %3256 = vmatpush1.bf16.msra.mxu0 0
    %3257 = vmatprep.subr.bf16.mxu0 0
    %3258 = vmatpush1.bf16.msra.mxu0 0
    %3259 = vmatprep.mubr.bf16.mxu0 0
    %3260 = vmatmul.mubr.bf16.gmra.mrb[0].mxu0 %v3225
    %v3261 = vpop.f32.mrb[0].mxu0
    %v3262 = vadd.f32 %v3210, %v3261
    %v3263 = vpop.f32.mrb[0].mxu0
    %v3264 = vpop.f32.mrb[0].mxu0
    %v3265 = vadd.f32 %v3210, %v3264
    %v3266 = vpop.f32.mrb[0].mxu0
    %3267 = vdwg.mxu0
    %3270 = vrot.lane.b32.xlu0 %v3262, 120
    %v3271 = vpop.permute.xlu0 %3270
    %3272 = vrot.lane.b32.xlu0 %v3265, 120
    %v3273 = vpop.permute.xlu0 %3272
    %3276 = vrot.lane.b32.xlu0 %v3262, 112
    %v3277 = vpop.permute.xlu0 %3276
    %3278 = vrot.lane.b32.xlu0 %v3265, 112
    %v3279 = vpop.permute.xlu0 %3278
    %3282 = vrot.lane.b32.xlu0 %v3262, 104
    %v3283 = vpop.permute.xlu0 %3282
    %3284 = vrot.lane.b32.xlu0 %v3265, 104
    %v3285 = vpop.permute.xlu0 %3284
    %s3288 = scalar_lea.vmem %s3, 64
    %v3289 = vld [vmem:[%s3288] sm:$0xf]
    %v3290 = vld [vmem:[%s3288 + $0x4] sm:$0xf]
    %v3291 = vld [vmem:[%s3288 + $0x8] sm:$0xf]
    %v3292 = vld [vmem:[%s3288 + $0xc] sm:$0xf]
    %s3293 = scalar_lea.vmem %s4, 4
    %v3294 = vld [vmem:[%s3293] sm:$0x1]
    %v3296 = vlaneseq
    %v3297 = vshrl.u32 %v3296, 7
    %v3298 = vsub.s32 0, %v3297
    %v3299 = vrot.slane %v3294, %v3298
    %v3305 = vunpack.c.l.b16 %v3289
    %v3306 = vunpack.c.l.b16 %v3290
    %v3307 = vunpack.c.l.b16 %v3291
    %v3308 = vunpack.c.l.b16 %v3292
    %v3309 = vpack.c.b16 %v3306, %v3305
    %v3310 = vpack.c.b16 %v3308, %v3307
    %3313 = vmatprep.subr.bf16.mxu0 0
    %3314 = vmatpush1.bf16.msra.mxu0 %v3309
    %3315 = vmatprep.subr.bf16.mxu0 0
    %3316 = vmatpush1.bf16.msra.mxu0 %v3310
    %3317 = vmatprep.subr.bf16.mxu0 0
    %3318 = vmatpush1.bf16.msra.mxu0 0
    %3319 = vmatprep.subr.bf16.mxu0 0
    %3320 = vmatpush1.bf16.msra.mxu0 0
    %3321 = vmatprep.subr.bf16.mxu0 0
    %3322 = vmatpush1.bf16.msra.mxu0 0
    %3323 = vmatprep.subr.bf16.mxu0 0
    %3324 = vmatpush1.bf16.msra.mxu0 0
    %3325 = vmatprep.subr.bf16.mxu0 0
    %3326 = vmatpush1.bf16.msra.mxu0 0
    %3327 = vmatprep.subr.bf16.mxu0 0
    %3328 = vmatpush1.bf16.msra.mxu0 0
    %3329 = vmatprep.subr.bf16.mxu0 0
    %3330 = vmatpush1.bf16.msra.mxu0 0
    %3331 = vmatprep.subr.bf16.mxu0 0
    %3332 = vmatpush1.bf16.msra.mxu0 0
    %3333 = vmatprep.subr.bf16.mxu0 0
    %3334 = vmatpush1.bf16.msra.mxu0 0
    %3335 = vmatprep.subr.bf16.mxu0 0
    %3336 = vmatpush1.bf16.msra.mxu0 0
    %3337 = vmatprep.subr.bf16.mxu0 0
    %3338 = vmatpush1.bf16.msra.mxu0 0
    %3339 = vmatprep.subr.bf16.mxu0 0
    %3340 = vmatpush1.bf16.msra.mxu0 0
    %3341 = vmatprep.subr.bf16.mxu0 0
    %3342 = vmatpush1.bf16.msra.mxu0 0
    %3343 = vmatprep.subr.bf16.mxu0 0
    %3344 = vmatpush1.bf16.msra.mxu0 0
    %3345 = vmatprep.mubr.bf16.mxu0 0
    %3346 = vmatmul.mubr.bf16.gmra.mrb[0].mxu0 %v3225
    %v3347 = vpop.f32.mrb[0].mxu0
    %v3348 = vadd.f32 %v3299, %v3347
    %v3349 = vpop.f32.mrb[0].mxu0
    %v3350 = vpop.f32.mrb[0].mxu0
    %v3351 = vadd.f32 %v3299, %v3350
    %v3352 = vpop.f32.mrb[0].mxu0
    %3353 = vdwg.mxu0
    %3356 = vrot.lane.b32.xlu0 %v3348, 120
    %v3357 = vpop.permute.xlu0 %3356
    %3358 = vrot.lane.b32.xlu0 %v3351, 120
    %v3359 = vpop.permute.xlu0 %3358
    %3362 = vrot.lane.b32.xlu0 %v3348, 112
    %v3363 = vpop.permute.xlu0 %3362
    %3364 = vrot.lane.b32.xlu0 %v3351, 112
    %v3365 = vpop.permute.xlu0 %3364
    %3368 = vrot.lane.b32.xlu0 %v3348, 104
    %v3369 = vpop.permute.xlu0 %3368
    %3370 = vrot.lane.b32.xlu0 %v3351, 104
    %v3371 = vpop.permute.xlu0 %3370
    %s3374 = scalar_lea.vmem %s3, 80
    %v3375 = vld [vmem:[%s3374] sm:$0xf]
    %v3376 = vld [vmem:[%s3374 + $0x4] sm:$0xf]
    %v3377 = vld [vmem:[%s3374 + $0x8] sm:$0xf]
    %v3378 = vld [vmem:[%s3374 + $0xc] sm:$0xf]
    %s3379 = scalar_lea.vmem %s4, 5
    %v3380 = vld [vmem:[%s3379] sm:$0x1]
    %v3382 = vlaneseq
    %v3383 = vshrl.u32 %v3382, 7
    %v3384 = vsub.s32 0, %v3383
    %v3385 = vrot.slane %v3380, %v3384
    %v3391 = vunpack.c.l.b16 %v3375
    %v3392 = vunpack.c.l.b16 %v3376
    %v3393 = vunpack.c.l.b16 %v3377
    %v3394 = vunpack.c.l.b16 %v3378
    %v3395 = vpack.c.b16 %v3392, %v3391
    %v3396 = vpack.c.b16 %v3394, %v3393
    %3399 = vmatprep.subr.bf16.mxu0 0
    %3400 = vmatpush1.bf16.msra.mxu0 %v3395
    %3401 = vmatprep.subr.bf16.mxu0 0
    %3402 = vmatpush1.bf16.msra.mxu0 %v3396
    %3403 = vmatprep.subr.bf16.mxu0 0
    %3404 = vmatpush1.bf16.msra.mxu0 0
    %3405 = vmatprep.subr.bf16.mxu0 0
    %3406 = vmatpush1.bf16.msra.mxu0 0
    %3407 = vmatprep.subr.bf16.mxu0 0
    %3408 = vmatpush1.bf16.msra.mxu0 0
    %3409 = vmatprep.subr.bf16.mxu0 0
    %3410 = vmatpush1.bf16.msra.mxu0 0
    %3411 = vmatprep.subr.bf16.mxu0 0
    %3412 = vmatpush1.bf16.msra.mxu0 0
    %3413 = vmatprep.subr.bf16.mxu0 0
    %3414 = vmatpush1.bf16.msra.mxu0 0
    %3415 = vmatprep.subr.bf16.mxu0 0
    %3416 = vmatpush1.bf16.msra.mxu0 0
    %3417 = vmatprep.subr.bf16.mxu0 0
    %3418 = vmatpush1.bf16.msra.mxu0 0
    %3419 = vmatprep.subr.bf16.mxu0 0
    %3420 = vmatpush1.bf16.msra.mxu0 0
    %3421 = vmatprep.subr.bf16.mxu0 0
    %3422 = vmatpush1.bf16.msra.mxu0 0
    %3423 = vmatprep.subr.bf16.mxu0 0
    %3424 = vmatpush1.bf16.msra.mxu0 0
    %3425 = vmatprep.subr.bf16.mxu0 0
    %3426 = vmatpush1.bf16.msra.mxu0 0
    %3427 = vmatprep.subr.bf16.mxu0 0
    %3428 = vmatpush1.bf16.msra.mxu0 0
    %3429 = vmatprep.subr.bf16.mxu0 0
    %3430 = vmatpush1.bf16.msra.mxu0 0
    %3431 = vmatprep.mubr.bf16.mxu0 0
    %3432 = vmatmul.mubr.bf16.gmra.mrb[0].mxu0 %v3225
    %v3433 = vpop.f32.mrb[0].mxu0
    %v3434 = vadd.f32 %v3385, %v3433
    %v3435 = vpop.f32.mrb[0].mxu0
    %v3436 = vpop.f32.mrb[0].mxu0
    %v3437 = vadd.f32 %v3385, %v3436
    %v3438 = vpop.f32.mrb[0].mxu0
    %3439 = vdwg.mxu0
    %3442 = vrot.lane.b32.xlu0 %v3434, 120
    %v3443 = vpop.permute.xlu0 %3442
    %3444 = vrot.lane.b32.xlu0 %v3437, 120
    %v3445 = vpop.permute.xlu0 %3444
    %3448 = vrot.lane.b32.xlu0 %v3434, 112
    %v3449 = vpop.permute.xlu0 %3448
    %3450 = vrot.lane.b32.xlu0 %v3437, 112
    %v3451 = vpop.permute.xlu0 %3450
    %3454 = vrot.lane.b32.xlu0 %v3434, 104
    %v3455 = vpop.permute.xlu0 %3454
    %3456 = vrot.lane.b32.xlu0 %v3437, 104
    %v3457 = vpop.permute.xlu0 %3456
    %v3460 = vpack.c.bf16 %v3262, %v3262
    %v3461 = vpack.c.bf16 %v3265, %v3265
    %v3462 = vpack.c.bf16 %v3271, %v3271
    %v3463 = vpack.c.bf16 %v3273, %v3273
    %v3464 = vpack.c.bf16 %v3277, %v3277
    %v3465 = vpack.c.bf16 %v3279, %v3279
    %v3466 = vpack.c.bf16 %v3283, %v3283
    %v3467 = vpack.c.bf16 %v3285, %v3285
    %v3468 = vpack.c.bf16 %v3348, %v3348
    %v3469 = vpack.c.bf16 %v3351, %v3351
    %v3470 = vpack.c.bf16 %v3357, %v3357
    %v3471 = vpack.c.bf16 %v3359, %v3359
    %v3472 = vpack.c.bf16 %v3363, %v3363
    %v3473 = vpack.c.bf16 %v3365, %v3365
    %v3474 = vpack.c.bf16 %v3369, %v3369
    %v3475 = vpack.c.bf16 %v3371, %v3371
    %v3477 = vsel %vm168, %v3460, 0
    %v3480 = vsel %vm168, %v3468, 0
    %3482 = vmatprep.subr.bf16.mxu0 0
    %3483 = vmatpush1.bf16.xpose.msra.mxu0 %v3480
    %3484 = vmatprep.subr.bf16.mxu0 0
    %3485 = vmatpush1.bf16.xpose.msra.mxu0 0
    %3486 = vmatprep.subr.bf16.mxu0 0
    %3487 = vmatpush1.bf16.xpose.msra.mxu0 0
    %3488 = vmatprep.subr.bf16.mxu0 0
    %3489 = vmatpush1.bf16.xpose.msra.mxu0 0
    %3490 = vmatprep.subr.bf16.mxu0 0
    %3491 = vmatpush1.bf16.xpose.msra.mxu0 0
    %3492 = vmatprep.subr.bf16.mxu0 0
    %3493 = vmatpush1.bf16.xpose.msra.mxu0 0
    %3494 = vmatprep.subr.bf16.mxu0 0
    %3495 = vmatpush1.bf16.xpose.msra.mxu0 0
    %3496 = vmatprep.subr.bf16.mxu0 0
    %3497 = vmatpush1.bf16.xpose.msra.mxu0 0
    %3498 = vmatprep.subr.bf16.mxu0 0
    %3499 = vmatpush1.bf16.xpose.msra.mxu0 0
    %3500 = vmatprep.subr.bf16.mxu0 0
    %3501 = vmatpush1.bf16.xpose.msra.mxu0 0
    %3502 = vmatprep.subr.bf16.mxu0 0
    %3503 = vmatpush1.bf16.xpose.msra.mxu0 0
    %3504 = vmatprep.subr.bf16.mxu0 0
    %3505 = vmatpush1.bf16.xpose.msra.mxu0 0
    %3506 = vmatprep.subr.bf16.mxu0 0
    %3507 = vmatpush1.bf16.xpose.msra.mxu0 0
    %3508 = vmatprep.subr.bf16.mxu0 0
    %3509 = vmatpush1.bf16.xpose.msra.mxu0 0
    %3510 = vmatprep.subr.bf16.mxu0 0
    %3511 = vmatpush1.bf16.xpose.msra.mxu0 0
    %3512 = vmatprep.subr.bf16.mxu0 0
    %3513 = vmatpush1.bf16.xpose.msra.mxu0 0
    %3514 = vmatprep.mubr.bf16.mxu0 0
    %3515 = vmatmul.mubr.bf16.gmra.mrb[0].mxu0 %v3477
    %v3516 = vpop.f32.mrb[0].mxu0
    %v3517 = vadd.f32 0.0, %v3516
    %v3518 = vpop.f32.mrb[0].mxu0
    %v3519 = vpop.f32.mrb[0].mxu0
    %v3520 = vpop.f32.mrb[0].mxu0
    %3521 = vdwg.mxu0
    %v3523 = vsel %vm168, %v3461, 0
    %v3526 = vsel %vm168, %v3469, 0
    %3528 = vmatprep.subr.bf16.mxu0 0
    %3529 = vmatpush1.bf16.xpose.msra.mxu0 %v3526
    %3530 = vmatprep.subr.bf16.mxu0 0
    %3531 = vmatpush1.bf16.xpose.msra.mxu0 0
    %3532 = vmatprep.subr.bf16.mxu0 0
    %3533 = vmatpush1.bf16.xpose.msra.mxu0 0
    %3534 = vmatprep.subr.bf16.mxu0 0
    %3535 = vmatpush1.bf16.xpose.msra.mxu0 0
    %3536 = vmatprep.subr.bf16.mxu0 0
    %3537 = vmatpush1.bf16.xpose.msra.mxu0 0
    %3538 = vmatprep.subr.bf16.mxu0 0
    %3539 = vmatpush1.bf16.xpose.msra.mxu0 0
    %3540 = vmatprep.subr.bf16.mxu0 0
    %3541 = vmatpush1.bf16.xpose.msra.mxu0 0
    %3542 = vmatprep.subr.bf16.mxu0 0
    %3543 = vmatpush1.bf16.xpose.msra.mxu0 0
    %3544 = vmatprep.subr.bf16.mxu0 0
    %3545 = vmatpush1.bf16.xpose.msra.mxu0 0
    %3546 = vmatprep.subr.bf16.mxu0 0
    %3547 = vmatpush1.bf16.xpose.msra.mxu0 0
    %3548 = vmatprep.subr.bf16.mxu0 0
    %3549 = vmatpush1.bf16.xpose.msra.mxu0 0
    %3550 = vmatprep.subr.bf16.mxu0 0
    %3551 = vmatpush1.bf16.xpose.msra.mxu0 0
    %3552 = vmatprep.subr.bf16.mxu0 0
    %3553 = vmatpush1.bf16.xpose.msra.mxu0 0
    %3554 = vmatprep.subr.bf16.mxu0 0
    %3555 = vmatpush1.bf16.xpose.msra.mxu0 0
    %3556 = vmatprep.subr.bf16.mxu0 0
    %3557 = vmatpush1.bf16.xpose.msra.mxu0 0
    %3558 = vmatprep.subr.bf16.mxu0 0
    %3559 = vmatpush1.bf16.xpose.msra.mxu0 0
    %3560 = vmatprep.mubr.bf16.mxu0 0
    %3561 = vmatmul.mubr.bf16.gmra.mrb[0].mxu0 %v3523
    %v3562 = vpop.f32.mrb[0].mxu0
    %v3563 = vadd.f32 0.0, %v3562
    %v3564 = vpop.f32.mrb[0].mxu0
    %v3565 = vpop.f32.mrb[0].mxu0
    %v3566 = vpop.f32.mrb[0].mxu0
    %3567 = vdwg.mxu0
    %v3569 = vsel %vm168, %v3462, 0
    %v3572 = vsel %vm168, %v3470, 0
    %3574 = vmatprep.subr.bf16.mxu0 0
    %3575 = vmatpush1.bf16.xpose.msra.mxu0 %v3572
    %3576 = vmatprep.subr.bf16.mxu0 0
    %3577 = vmatpush1.bf16.xpose.msra.mxu0 0
    %3578 = vmatprep.subr.bf16.mxu0 0
    %3579 = vmatpush1.bf16.xpose.msra.mxu0 0
    %3580 = vmatprep.subr.bf16.mxu0 0
    %3581 = vmatpush1.bf16.xpose.msra.mxu0 0
    %3582 = vmatprep.subr.bf16.mxu0 0
    %3583 = vmatpush1.bf16.xpose.msra.mxu0 0
    %3584 = vmatprep.subr.bf16.mxu0 0
    %3585 = vmatpush1.bf16.xpose.msra.mxu0 0
    %3586 = vmatprep.subr.bf16.mxu0 0
    %3587 = vmatpush1.bf16.xpose.msra.mxu0 0
    %3588 = vmatprep.subr.bf16.mxu0 0
    %3589 = vmatpush1.bf16.xpose.msra.mxu0 0
    %3590 = vmatprep.subr.bf16.mxu0 0
    %3591 = vmatpush1.bf16.xpose.msra.mxu0 0
    %3592 = vmatprep.subr.bf16.mxu0 0
    %3593 = vmatpush1.bf16.xpose.msra.mxu0 0
    %3594 = vmatprep.subr.bf16.mxu0 0
    %3595 = vmatpush1.bf16.xpose.msra.mxu0 0
    %3596 = vmatprep.subr.bf16.mxu0 0
    %3597 = vmatpush1.bf16.xpose.msra.mxu0 0
    %3598 = vmatprep.subr.bf16.mxu0 0
    %3599 = vmatpush1.bf16.xpose.msra.mxu0 0
    %3600 = vmatprep.subr.bf16.mxu0 0
    %3601 = vmatpush1.bf16.xpose.msra.mxu0 0
    %3602 = vmatprep.subr.bf16.mxu0 0
    %3603 = vmatpush1.bf16.xpose.msra.mxu0 0
    %3604 = vmatprep.subr.bf16.mxu0 0
    %3605 = vmatpush1.bf16.xpose.msra.mxu0 0
    %3606 = vmatprep.mubr.bf16.mxu0 0
    %3607 = vmatmul.mubr.bf16.gmra.mrb[0].mxu0 %v3569
    %v3608 = vpop.f32.mrb[0].mxu0
    %v3609 = vadd.f32 0.0, %v3608
    %v3610 = vpop.f32.mrb[0].mxu0
    %v3611 = vpop.f32.mrb[0].mxu0
    %v3612 = vpop.f32.mrb[0].mxu0
    %3613 = vdwg.mxu0
    %v3615 = vsel %vm168, %v3463, 0
    %v3618 = vsel %vm168, %v3471, 0
    %3620 = vmatprep.subr.bf16.mxu0 0
    %3621 = vmatpush1.bf16.xpose.msra.mxu0 %v3618
    %3622 = vmatprep.subr.bf16.mxu0 0
    %3623 = vmatpush1.bf16.xpose.msra.mxu0 0
    %3624 = vmatprep.subr.bf16.mxu0 0
    %3625 = vmatpush1.bf16.xpose.msra.mxu0 0
    %3626 = vmatprep.subr.bf16.mxu0 0
    %3627 = vmatpush1.bf16.xpose.msra.mxu0 0
    %3628 = vmatprep.subr.bf16.mxu0 0
    %3629 = vmatpush1.bf16.xpose.msra.mxu0 0
    %3630 = vmatprep.subr.bf16.mxu0 0
    %3631 = vmatpush1.bf16.xpose.msra.mxu0 0
    %3632 = vmatprep.subr.bf16.mxu0 0
    %3633 = vmatpush1.bf16.xpose.msra.mxu0 0
    %3634 = vmatprep.subr.bf16.mxu0 0
    %3635 = vmatpush1.bf16.xpose.msra.mxu0 0
    %3636 = vmatprep.subr.bf16.mxu0 0
    %3637 = vmatpush1.bf16.xpose.msra.mxu0 0
    %3638 = vmatprep.subr.bf16.mxu0 0
    %3639 = vmatpush1.bf16.xpose.msra.mxu0 0
    %3640 = vmatprep.subr.bf16.mxu0 0
    %3641 = vmatpush1.bf16.xpose.msra.mxu0 0
    %3642 = vmatprep.subr.bf16.mxu0 0
    %3643 = vmatpush1.bf16.xpose.msra.mxu0 0
    %3644 = vmatprep.subr.bf16.mxu0 0
    %3645 = vmatpush1.bf16.xpose.msra.mxu0 0
    %3646 = vmatprep.subr.bf16.mxu0 0
    %3647 = vmatpush1.bf16.xpose.msra.mxu0 0
    %3648 = vmatprep.subr.bf16.mxu0 0
    %3649 = vmatpush1.bf16.xpose.msra.mxu0 0
    %3650 = vmatprep.subr.bf16.mxu0 0
    %3651 = vmatpush1.bf16.xpose.msra.mxu0 0
    %3652 = vmatprep.mubr.bf16.mxu0 0
    %3653 = vmatmul.mubr.bf16.gmra.mrb[0].mxu0 %v3615
    %v3654 = vpop.f32.mrb[0].mxu0
    %v3655 = vadd.f32 0.0, %v3654
    %v3656 = vpop.f32.mrb[0].mxu0
    %v3657 = vpop.f32.mrb[0].mxu0
    %v3658 = vpop.f32.mrb[0].mxu0
    %3659 = vdwg.mxu0
    %v3661 = vsel %vm168, %v3464, 0
    %v3664 = vsel %vm168, %v3472, 0
    %3666 = vmatprep.subr.bf16.mxu0 0
    %3667 = vmatpush1.bf16.xpose.msra.mxu0 %v3664
    %3668 = vmatprep.subr.bf16.mxu0 0
    %3669 = vmatpush1.bf16.xpose.msra.mxu0 0
    %3670 = vmatprep.subr.bf16.mxu0 0
    %3671 = vmatpush1.bf16.xpose.msra.mxu0 0
    %3672 = vmatprep.subr.bf16.mxu0 0
    %3673 = vmatpush1.bf16.xpose.msra.mxu0 0
    %3674 = vmatprep.subr.bf16.mxu0 0
    %3675 = vmatpush1.bf16.xpose.msra.mxu0 0
    %3676 = vmatprep.subr.bf16.mxu0 0
    %3677 = vmatpush1.bf16.xpose.msra.mxu0 0
    %3678 = vmatprep.subr.bf16.mxu0 0
    %3679 = vmatpush1.bf16.xpose.msra.mxu0 0
    %3680 = vmatprep.subr.bf16.mxu0 0
    %3681 = vmatpush1.bf16.xpose.msra.mxu0 0
    %3682 = vmatprep.subr.bf16.mxu0 0
    %3683 = vmatpush1.bf16.xpose.msra.mxu0 0
    %3684 = vmatprep.subr.bf16.mxu0 0
    %3685 = vmatpush1.bf16.xpose.msra.mxu0 0
    %3686 = vmatprep.subr.bf16.mxu0 0
    %3687 = vmatpush1.bf16.xpose.msra.mxu0 0
    %3688 = vmatprep.subr.bf16.mxu0 0
    %3689 = vmatpush1.bf16.xpose.msra.mxu0 0
    %3690 = vmatprep.subr.bf16.mxu0 0
    %3691 = vmatpush1.bf16.xpose.msra.mxu0 0
    %3692 = vmatprep.subr.bf16.mxu0 0
    %3693 = vmatpush1.bf16.xpose.msra.mxu0 0
    %3694 = vmatprep.subr.bf16.mxu0 0
    %3695 = vmatpush1.bf16.xpose.msra.mxu0 0
    %3696 = vmatprep.subr.bf16.mxu0 0
    %3697 = vmatpush1.bf16.xpose.msra.mxu0 0
    %3698 = vmatprep.mubr.bf16.mxu0 0
    %3699 = vmatmul.mubr.bf16.gmra.mrb[0].mxu0 %v3661
    %v3700 = vpop.f32.mrb[0].mxu0
    %v3701 = vadd.f32 0.0, %v3700
    %v3702 = vpop.f32.mrb[0].mxu0
    %v3703 = vpop.f32.mrb[0].mxu0
    %v3704 = vpop.f32.mrb[0].mxu0
    %3705 = vdwg.mxu0
    %v3707 = vsel %vm168, %v3465, 0
    %v3710 = vsel %vm168, %v3473, 0
    %3712 = vmatprep.subr.bf16.mxu0 0
    %3713 = vmatpush1.bf16.xpose.msra.mxu0 %v3710
    %3714 = vmatprep.subr.bf16.mxu0 0
    %3715 = vmatpush1.bf16.xpose.msra.mxu0 0
    %3716 = vmatprep.subr.bf16.mxu0 0
    %3717 = vmatpush1.bf16.xpose.msra.mxu0 0
    %3718 = vmatprep.subr.bf16.mxu0 0
    %3719 = vmatpush1.bf16.xpose.msra.mxu0 0
    %3720 = vmatprep.subr.bf16.mxu0 0
    %3721 = vmatpush1.bf16.xpose.msra.mxu0 0
    %3722 = vmatprep.subr.bf16.mxu0 0
    %3723 = vmatpush1.bf16.xpose.msra.mxu0 0
    %3724 = vmatprep.subr.bf16.mxu0 0
    %3725 = vmatpush1.bf16.xpose.msra.mxu0 0
    %3726 = vmatprep.subr.bf16.mxu0 0
    %3727 = vmatpush1.bf16.xpose.msra.mxu0 0
    %3728 = vmatprep.subr.bf16.mxu0 0
    %3729 = vmatpush1.bf16.xpose.msra.mxu0 0
    %3730 = vmatprep.subr.bf16.mxu0 0
    %3731 = vmatpush1.bf16.xpose.msra.mxu0 0
    %3732 = vmatprep.subr.bf16.mxu0 0
    %3733 = vmatpush1.bf16.xpose.msra.mxu0 0
    %3734 = vmatprep.subr.bf16.mxu0 0
    %3735 = vmatpush1.bf16.xpose.msra.mxu0 0
    %3736 = vmatprep.subr.bf16.mxu0 0
    %3737 = vmatpush1.bf16.xpose.msra.mxu0 0
    %3738 = vmatprep.subr.bf16.mxu0 0
    %3739 = vmatpush1.bf16.xpose.msra.mxu0 0
    %3740 = vmatprep.subr.bf16.mxu0 0
    %3741 = vmatpush1.bf16.xpose.msra.mxu0 0
    %3742 = vmatprep.subr.bf16.mxu0 0
    %3743 = vmatpush1.bf16.xpose.msra.mxu0 0
    %3744 = vmatprep.mubr.bf16.mxu0 0
    %3745 = vmatmul.mubr.bf16.gmra.mrb[0].mxu0 %v3707
    %v3746 = vpop.f32.mrb[0].mxu0
    %v3747 = vadd.f32 0.0, %v3746
    %v3748 = vpop.f32.mrb[0].mxu0
    %v3749 = vpop.f32.mrb[0].mxu0
    %v3750 = vpop.f32.mrb[0].mxu0
    %3751 = vdwg.mxu0
    %v3753 = vsel %vm168, %v3466, 0
    %v3756 = vsel %vm168, %v3474, 0
    %3758 = vmatprep.subr.bf16.mxu0 0
    %3759 = vmatpush1.bf16.xpose.msra.mxu0 %v3756
    %3760 = vmatprep.subr.bf16.mxu0 0
    %3761 = vmatpush1.bf16.xpose.msra.mxu0 0
    %3762 = vmatprep.subr.bf16.mxu0 0
    %3763 = vmatpush1.bf16.xpose.msra.mxu0 0
    %3764 = vmatprep.subr.bf16.mxu0 0
    %3765 = vmatpush1.bf16.xpose.msra.mxu0 0
    %3766 = vmatprep.subr.bf16.mxu0 0
    %3767 = vmatpush1.bf16.xpose.msra.mxu0 0
    %3768 = vmatprep.subr.bf16.mxu0 0
    %3769 = vmatpush1.bf16.xpose.msra.mxu0 0
    %3770 = vmatprep.subr.bf16.mxu0 0
    %3771 = vmatpush1.bf16.xpose.msra.mxu0 0
    %3772 = vmatprep.subr.bf16.mxu0 0
    %3773 = vmatpush1.bf16.xpose.msra.mxu0 0
    %3774 = vmatprep.subr.bf16.mxu0 0
    %3775 = vmatpush1.bf16.xpose.msra.mxu0 0
    %3776 = vmatprep.subr.bf16.mxu0 0
    %3777 = vmatpush1.bf16.xpose.msra.mxu0 0
    %3778 = vmatprep.subr.bf16.mxu0 0
    %3779 = vmatpush1.bf16.xpose.msra.mxu0 0
    %3780 = vmatprep.subr.bf16.mxu0 0
    %3781 = vmatpush1.bf16.xpose.msra.mxu0 0
    %3782 = vmatprep.subr.bf16.mxu0 0
    %3783 = vmatpush1.bf16.xpose.msra.mxu0 0
    %3784 = vmatprep.subr.bf16.mxu0 0
    %3785 = vmatpush1.bf16.xpose.msra.mxu0 0
    %3786 = vmatprep.subr.bf16.mxu0 0
    %3787 = vmatpush1.bf16.xpose.msra.mxu0 0
    %3788 = vmatprep.subr.bf16.mxu0 0
    %3789 = vmatpush1.bf16.xpose.msra.mxu0 0
    %3790 = vmatprep.mubr.bf16.mxu0 0
    %3791 = vmatmul.mubr.bf16.gmra.mrb[0].mxu0 %v3753
    %v3792 = vpop.f32.mrb[0].mxu0
    %v3793 = vadd.f32 0.0, %v3792
    %v3794 = vpop.f32.mrb[0].mxu0
    %v3795 = vpop.f32.mrb[0].mxu0
    %v3796 = vpop.f32.mrb[0].mxu0
    %3797 = vdwg.mxu0
    %v3799 = vsel %vm168, %v3467, 0
    %v3802 = vsel %vm168, %v3475, 0
    %3804 = vmatprep.subr.bf16.mxu0 0
    %3805 = vmatpush1.bf16.xpose.msra.mxu0 %v3802
    %3806 = vmatprep.subr.bf16.mxu0 0
    %3807 = vmatpush1.bf16.xpose.msra.mxu0 0
    %3808 = vmatprep.subr.bf16.mxu0 0
    %3809 = vmatpush1.bf16.xpose.msra.mxu0 0
    %3810 = vmatprep.subr.bf16.mxu0 0
    %3811 = vmatpush1.bf16.xpose.msra.mxu0 0
    %3812 = vmatprep.subr.bf16.mxu0 0
    %3813 = vmatpush1.bf16.xpose.msra.mxu0 0
    %3814 = vmatprep.subr.bf16.mxu0 0
    %3815 = vmatpush1.bf16.xpose.msra.mxu0 0
    %3816 = vmatprep.subr.bf16.mxu0 0
    %3817 = vmatpush1.bf16.xpose.msra.mxu0 0
    %3818 = vmatprep.subr.bf16.mxu0 0
    %3819 = vmatpush1.bf16.xpose.msra.mxu0 0
    %3820 = vmatprep.subr.bf16.mxu0 0
    %3821 = vmatpush1.bf16.xpose.msra.mxu0 0
    %3822 = vmatprep.subr.bf16.mxu0 0
    %3823 = vmatpush1.bf16.xpose.msra.mxu0 0
    %3824 = vmatprep.subr.bf16.mxu0 0
    %3825 = vmatpush1.bf16.xpose.msra.mxu0 0
    %3826 = vmatprep.subr.bf16.mxu0 0
    %3827 = vmatpush1.bf16.xpose.msra.mxu0 0
    %3828 = vmatprep.subr.bf16.mxu0 0
    %3829 = vmatpush1.bf16.xpose.msra.mxu0 0
    %3830 = vmatprep.subr.bf16.mxu0 0
    %3831 = vmatpush1.bf16.xpose.msra.mxu0 0
    %3832 = vmatprep.subr.bf16.mxu0 0
    %3833 = vmatpush1.bf16.xpose.msra.mxu0 0
    %3834 = vmatprep.subr.bf16.mxu0 0
    %3835 = vmatpush1.bf16.xpose.msra.mxu0 0
    %3836 = vmatprep.mubr.bf16.mxu0 0
    %3837 = vmatmul.mubr.bf16.gmra.mrb[0].mxu0 %v3799
    %v3838 = vpop.f32.mrb[0].mxu0
    %v3839 = vadd.f32 0.0, %v3838
    %v3840 = vpop.f32.mrb[0].mxu0
    %v3841 = vpop.f32.mrb[0].mxu0
    %v3842 = vpop.f32.mrb[0].mxu0
    %3843 = vdwg.mxu0
    %v3844 = vmul.f32 %v3517, 0.35355338
    %v3845 = vmul.f32 %v3563, 0.35355338
    %v3846 = vmul.f32 %v3609, 0.35355338
    %v3847 = vmul.f32 %v3655, 0.35355338
    %v3848 = vmul.f32 %v3701, 0.35355338
    %v3849 = vmul.f32 %v3747, 0.35355338
    %v3850 = vmul.f32 %v3793, 0.35355338
    %v3851 = vmul.f32 %v3839, 0.35355338
    %v3852 = vsel %vm168, %v3844, -inf
    %3853 = vmax.xlane.f32.xlu0 %v3852
    %v3854 = vpop.xlane.xlu0 %3853
    %v3855 = vsel %vm168, %v3845, -inf
    %3856 = vmax.xlane.f32.xlu0 %v3855
    %v3857 = vpop.xlane.xlu0 %3856
    %v3858 = vsel %vm168, %v3846, -inf
    %3859 = vmax.xlane.f32.xlu0 %v3858
    %v3860 = vpop.xlane.xlu0 %3859
    %v3861 = vsel %vm168, %v3847, -inf
    %3862 = vmax.xlane.f32.xlu0 %v3861
    %v3863 = vpop.xlane.xlu0 %3862
    %v3864 = vsel %vm168, %v3848, -inf
    %3865 = vmax.xlane.f32.xlu0 %v3864
    %v3866 = vpop.xlane.xlu0 %3865
    %v3867 = vsel %vm168, %v3849, -inf
    %3868 = vmax.xlane.f32.xlu0 %v3867
    %v3869 = vpop.xlane.xlu0 %3868
    %v3870 = vsel %vm168, %v3850, -inf
    %3871 = vmax.xlane.f32.xlu0 %v3870
    %v3872 = vpop.xlane.xlu0 %3871
    %v3873 = vsel %vm168, %v3851, -inf
    %3874 = vmax.xlane.f32.xlu0 %v3873
    %v3875 = vpop.xlane.xlu0 %3874
    %v3876 = vsub.f32 %v3844, %v3854
    %v3877 = vsub.f32 %v3845, %v3857
    %v3878 = vsub.f32 %v3846, %v3860
    %v3879 = vsub.f32 %v3847, %v3863
    %v3880 = vsub.f32 %v3848, %v3866
    %v3881 = vsub.f32 %v3849, %v3869
    %v3882 = vsub.f32 %v3850, %v3872
    %v3883 = vsub.f32 %v3851, %v3875
    %v3884 = vmul.f32 %v3876, 1.442695
    %v3885 = vpow.pop %v3884
    %v3886 = vmul.f32 %v3877, 1.442695
    %v3887 = vpow.pop %v3886
    %v3888 = vmul.f32 %v3878, 1.442695
    %v3889 = vpow.pop %v3888
    %v3890 = vmul.f32 %v3879, 1.442695
    %v3891 = vpow.pop %v3890
    %v3892 = vmul.f32 %v3880, 1.442695
    %v3893 = vpow.pop %v3892
    %v3894 = vmul.f32 %v3881, 1.442695
    %v3895 = vpow.pop %v3894
    %v3896 = vmul.f32 %v3882, 1.442695
    %v3897 = vpow.pop %v3896
    %v3898 = vmul.f32 %v3883, 1.442695
    %v3899 = vpow.pop %v3898
    %v3900 = vsel %vm168, %v3885, 0.0
    %3901 = vadd.xlane.f32.xlu0 %v3900
    %v3902 = vpop.xlane.xlu0 %3901
    %v3903 = vsel %vm168, %v3887, 0.0
    %3904 = vadd.xlane.f32.xlu0 %v3903
    %v3905 = vpop.xlane.xlu0 %3904
    %v3906 = vsel %vm168, %v3889, 0.0
    %3907 = vadd.xlane.f32.xlu0 %v3906
    %v3908 = vpop.xlane.xlu0 %3907
    %v3909 = vsel %vm168, %v3891, 0.0
    %3910 = vadd.xlane.f32.xlu0 %v3909
    %v3911 = vpop.xlane.xlu0 %3910
    %v3912 = vsel %vm168, %v3893, 0.0
    %3913 = vadd.xlane.f32.xlu0 %v3912
    %v3914 = vpop.xlane.xlu0 %3913
    %v3915 = vsel %vm168, %v3895, 0.0
    %3916 = vadd.xlane.f32.xlu0 %v3915
    %v3917 = vpop.xlane.xlu0 %3916
    %v3918 = vsel %vm168, %v3897, 0.0
    %3919 = vadd.xlane.f32.xlu0 %v3918
    %v3920 = vpop.xlane.xlu0 %3919
    %v3921 = vsel %vm168, %v3899, 0.0
    %3922 = vadd.xlane.f32.xlu0 %v3921
    %v3923 = vpop.xlane.xlu0 %3922
    %v3924 = vpack.c.bf16 %v3885, %v3885
    %v3925 = vpack.c.bf16 %v3887, %v3887
    %v3926 = vpack.c.bf16 %v3889, %v3889
    %v3927 = vpack.c.bf16 %v3891, %v3891
    %v3928 = vpack.c.bf16 %v3893, %v3893
    %v3929 = vpack.c.bf16 %v3895, %v3895
    %v3930 = vpack.c.bf16 %v3897, %v3897
    %v3931 = vpack.c.bf16 %v3899, %v3899
    %v3932 = vpack.c.bf16 %v3434, %v3434
    %v3933 = vpack.c.bf16 %v3437, %v3437
    %v3934 = vpack.c.bf16 %v3443, %v3443
    %v3935 = vpack.c.bf16 %v3445, %v3445
    %v3936 = vpack.c.bf16 %v3449, %v3449
    %v3937 = vpack.c.bf16 %v3451, %v3451
    %v3938 = vpack.c.bf16 %v3455, %v3455
    %v3939 = vpack.c.bf16 %v3457, %v3457
    %v3941 = vsel %vm168, %v3924, 0
    %v3944 = vsel %vm766, %v3932, 0
    %3946 = vmatprep.subr.bf16.mxu0 0
    %3947 = vmatpush1.bf16.msra.mxu0 %v3944
    %3948 = vmatprep.subr.bf16.mxu0 0
    %3949 = vmatpush1.bf16.msra.mxu0 0
    %3950 = vmatprep.subr.bf16.mxu0 0
    %3951 = vmatpush1.bf16.msra.mxu0 0
    %3952 = vmatprep.subr.bf16.mxu0 0
    %3953 = vmatpush1.bf16.msra.mxu0 0
    %3954 = vmatprep.subr.bf16.mxu0 0
    %3955 = vmatpush1.bf16.msra.mxu0 0
    %3956 = vmatprep.subr.bf16.mxu0 0
    %3957 = vmatpush1.bf16.msra.mxu0 0
    %3958 = vmatprep.subr.bf16.mxu0 0
    %3959 = vmatpush1.bf16.msra.mxu0 0
    %3960 = vmatprep.subr.bf16.mxu0 0
    %3961 = vmatpush1.bf16.msra.mxu0 0
    %3962 = vmatprep.subr.bf16.mxu0 0
    %3963 = vmatpush1.bf16.msra.mxu0 0
    %3964 = vmatprep.subr.bf16.mxu0 0
    %3965 = vmatpush1.bf16.msra.mxu0 0
    %3966 = vmatprep.subr.bf16.mxu0 0
    %3967 = vmatpush1.bf16.msra.mxu0 0
    %3968 = vmatprep.subr.bf16.mxu0 0
    %3969 = vmatpush1.bf16.msra.mxu0 0
    %3970 = vmatprep.subr.bf16.mxu0 0
    %3971 = vmatpush1.bf16.msra.mxu0 0
    %3972 = vmatprep.subr.bf16.mxu0 0
    %3973 = vmatpush1.bf16.msra.mxu0 0
    %3974 = vmatprep.subr.bf16.mxu0 0
    %3975 = vmatpush1.bf16.msra.mxu0 0
    %3976 = vmatprep.subr.bf16.mxu0 0
    %3977 = vmatpush1.bf16.msra.mxu0 0
    %3978 = vmatprep.mubr.bf16.mxu0 0
    %3979 = vmatmul.mubr.bf16.gmra.mrb[0].mxu0 %v3941
    %v3980 = vpop.f32.mrb[0].mxu0
    %v3981 = vadd.f32 0.0, %v3980
    %v3982 = vpop.f32.mrb[0].mxu0
    %v3983 = vpop.f32.mrb[0].mxu0
    %v3984 = vpop.f32.mrb[0].mxu0
    %3985 = vdwg.mxu0
    %v3987 = vsel %vm168, %v3925, 0
    %v3990 = vsel %vm766, %v3933, 0
    %3992 = vmatprep.subr.bf16.mxu0 0
    %3993 = vmatpush1.bf16.msra.mxu0 %v3990
    %3994 = vmatprep.subr.bf16.mxu0 0
    %3995 = vmatpush1.bf16.msra.mxu0 0
    %3996 = vmatprep.subr.bf16.mxu0 0
    %3997 = vmatpush1.bf16.msra.mxu0 0
    %3998 = vmatprep.subr.bf16.mxu0 0
    %3999 = vmatpush1.bf16.msra.mxu0 0
    %4000 = vmatprep.subr.bf16.mxu0 0
    %4001 = vmatpush1.bf16.msra.mxu0 0
    %4002 = vmatprep.subr.bf16.mxu0 0
    %4003 = vmatpush1.bf16.msra.mxu0 0
    %4004 = vmatprep.subr.bf16.mxu0 0
    %4005 = vmatpush1.bf16.msra.mxu0 0
    %4006 = vmatprep.subr.bf16.mxu0 0
    %4007 = vmatpush1.bf16.msra.mxu0 0
    %4008 = vmatprep.subr.bf16.mxu0 0
    %4009 = vmatpush1.bf16.msra.mxu0 0
    %4010 = vmatprep.subr.bf16.mxu0 0
    %4011 = vmatpush1.bf16.msra.mxu0 0
    %4012 = vmatprep.subr.bf16.mxu0 0
    %4013 = vmatpush1.bf16.msra.mxu0 0
    %4014 = vmatprep.subr.bf16.mxu0 0
    %4015 = vmatpush1.bf16.msra.mxu0 0
    %4016 = vmatprep.subr.bf16.mxu0 0
    %4017 = vmatpush1.bf16.msra.mxu0 0
    %4018 = vmatprep.subr.bf16.mxu0 0
    %4019 = vmatpush1.bf16.msra.mxu0 0
    %4020 = vmatprep.subr.bf16.mxu0 0
    %4021 = vmatpush1.bf16.msra.mxu0 0
    %4022 = vmatprep.subr.bf16.mxu0 0
    %4023 = vmatpush1.bf16.msra.mxu0 0
    %4024 = vmatprep.mubr.bf16.mxu0 0
    %4025 = vmatmul.mubr.bf16.gmra.mrb[0].mxu0 %v3987
    %v4026 = vpop.f32.mrb[0].mxu0
    %v4027 = vadd.f32 0.0, %v4026
    %v4028 = vpop.f32.mrb[0].mxu0
    %v4029 = vpop.f32.mrb[0].mxu0
    %v4030 = vpop.f32.mrb[0].mxu0
    %4031 = vdwg.mxu0
    %v4033 = vsel %vm168, %v3926, 0
    %v4036 = vsel %vm766, %v3934, 0
    %4038 = vmatprep.subr.bf16.mxu0 0
    %4039 = vmatpush1.bf16.msra.mxu0 %v4036
    %4040 = vmatprep.subr.bf16.mxu0 0
    %4041 = vmatpush1.bf16.msra.mxu0 0
    %4042 = vmatprep.subr.bf16.mxu0 0
    %4043 = vmatpush1.bf16.msra.mxu0 0
    %4044 = vmatprep.subr.bf16.mxu0 0
    %4045 = vmatpush1.bf16.msra.mxu0 0
    %4046 = vmatprep.subr.bf16.mxu0 0
    %4047 = vmatpush1.bf16.msra.mxu0 0
    %4048 = vmatprep.subr.bf16.mxu0 0
    %4049 = vmatpush1.bf16.msra.mxu0 0
    %4050 = vmatprep.subr.bf16.mxu0 0
    %4051 = vmatpush1.bf16.msra.mxu0 0
    %4052 = vmatprep.subr.bf16.mxu0 0
    %4053 = vmatpush1.bf16.msra.mxu0 0
    %4054 = vmatprep.subr.bf16.mxu0 0
    %4055 = vmatpush1.bf16.msra.mxu0 0
    %4056 = vmatprep.subr.bf16.mxu0 0
    %4057 = vmatpush1.bf16.msra.mxu0 0
    %4058 = vmatprep.subr.bf16.mxu0 0
    %4059 = vmatpush1.bf16.msra.mxu0 0
    %4060 = vmatprep.subr.bf16.mxu0 0
    %4061 = vmatpush1.bf16.msra.mxu0 0
    %4062 = vmatprep.subr.bf16.mxu0 0
    %4063 = vmatpush1.bf16.msra.mxu0 0
    %4064 = vmatprep.subr.bf16.mxu0 0
    %4065 = vmatpush1.bf16.msra.mxu0 0
    %4066 = vmatprep.subr.bf16.mxu0 0
    %4067 = vmatpush1.bf16.msra.mxu0 0
    %4068 = vmatprep.subr.bf16.mxu0 0
    %4069 = vmatpush1.bf16.msra.mxu0 0
    %4070 = vmatprep.mubr.bf16.mxu0 0
    %4071 = vmatmul.mubr.bf16.gmra.mrb[0].mxu0 %v4033
    %v4072 = vpop.f32.mrb[0].mxu0
    %v4073 = vadd.f32 0.0, %v4072
    %v4074 = vpop.f32.mrb[0].mxu0
    %v4075 = vpop.f32.mrb[0].mxu0
    %v4076 = vpop.f32.mrb[0].mxu0
    %4077 = vdwg.mxu0
    %v4079 = vsel %vm168, %v3927, 0
    %v4082 = vsel %vm766, %v3935, 0
    %4084 = vmatprep.subr.bf16.mxu0 0
    %4085 = vmatpush1.bf16.msra.mxu0 %v4082
    %4086 = vmatprep.subr.bf16.mxu0 0
    %4087 = vmatpush1.bf16.msra.mxu0 0
    %4088 = vmatprep.subr.bf16.mxu0 0
    %4089 = vmatpush1.bf16.msra.mxu0 0
    %4090 = vmatprep.subr.bf16.mxu0 0
    %4091 = vmatpush1.bf16.msra.mxu0 0
    %4092 = vmatprep.subr.bf16.mxu0 0
    %4093 = vmatpush1.bf16.msra.mxu0 0
    %4094 = vmatprep.subr.bf16.mxu0 0
    %4095 = vmatpush1.bf16.msra.mxu0 0
    %4096 = vmatprep.subr.bf16.mxu0 0
    %4097 = vmatpush1.bf16.msra.mxu0 0
    %4098 = vmatprep.subr.bf16.mxu0 0
    %4099 = vmatpush1.bf16.msra.mxu0 0
    %4100 = vmatprep.subr.bf16.mxu0 0
    %4101 = vmatpush1.bf16.msra.mxu0 0
    %4102 = vmatprep.subr.bf16.mxu0 0
    %4103 = vmatpush1.bf16.msra.mxu0 0
    %4104 = vmatprep.subr.bf16.mxu0 0
    %4105 = vmatpush1.bf16.msra.mxu0 0
    %4106 = vmatprep.subr.bf16.mxu0 0
    %4107 = vmatpush1.bf16.msra.mxu0 0
    %4108 = vmatprep.subr.bf16.mxu0 0
    %4109 = vmatpush1.bf16.msra.mxu0 0
    %4110 = vmatprep.subr.bf16.mxu0 0
    %4111 = vmatpush1.bf16.msra.mxu0 0
    %4112 = vmatprep.subr.bf16.mxu0 0
    %4113 = vmatpush1.bf16.msra.mxu0 0
    %4114 = vmatprep.subr.bf16.mxu0 0
    %4115 = vmatpush1.bf16.msra.mxu0 0
    %4116 = vmatprep.mubr.bf16.mxu0 0
    %4117 = vmatmul.mubr.bf16.gmra.mrb[0].mxu0 %v4079
    %v4118 = vpop.f32.mrb[0].mxu0
    %v4119 = vadd.f32 0.0, %v4118
    %v4120 = vpop.f32.mrb[0].mxu0
    %v4121 = vpop.f32.mrb[0].mxu0
    %v4122 = vpop.f32.mrb[0].mxu0
    %4123 = vdwg.mxu0
    %v4125 = vsel %vm168, %v3928, 0
    %v4128 = vsel %vm766, %v3936, 0
    %4130 = vmatprep.subr.bf16.mxu0 0
    %4131 = vmatpush1.bf16.msra.mxu0 %v4128
    %4132 = vmatprep.subr.bf16.mxu0 0
    %4133 = vmatpush1.bf16.msra.mxu0 0
    %4134 = vmatprep.subr.bf16.mxu0 0
    %4135 = vmatpush1.bf16.msra.mxu0 0
    %4136 = vmatprep.subr.bf16.mxu0 0
    %4137 = vmatpush1.bf16.msra.mxu0 0
    %4138 = vmatprep.subr.bf16.mxu0 0
    %4139 = vmatpush1.bf16.msra.mxu0 0
    %4140 = vmatprep.subr.bf16.mxu0 0
    %4141 = vmatpush1.bf16.msra.mxu0 0
    %4142 = vmatprep.subr.bf16.mxu0 0
    %4143 = vmatpush1.bf16.msra.mxu0 0
    %4144 = vmatprep.subr.bf16.mxu0 0
    %4145 = vmatpush1.bf16.msra.mxu0 0
    %4146 = vmatprep.subr.bf16.mxu0 0
    %4147 = vmatpush1.bf16.msra.mxu0 0
    %4148 = vmatprep.subr.bf16.mxu0 0
    %4149 = vmatpush1.bf16.msra.mxu0 0
    %4150 = vmatprep.subr.bf16.mxu0 0
    %4151 = vmatpush1.bf16.msra.mxu0 0
    %4152 = vmatprep.subr.bf16.mxu0 0
    %4153 = vmatpush1.bf16.msra.mxu0 0
    %4154 = vmatprep.subr.bf16.mxu0 0
    %4155 = vmatpush1.bf16.msra.mxu0 0
    %4156 = vmatprep.subr.bf16.mxu0 0
    %4157 = vmatpush1.bf16.msra.mxu0 0
    %4158 = vmatprep.subr.bf16.mxu0 0
    %4159 = vmatpush1.bf16.msra.mxu0 0
    %4160 = vmatprep.subr.bf16.mxu0 0
    %4161 = vmatpush1.bf16.msra.mxu0 0
    %4162 = vmatprep.mubr.bf16.mxu0 0
    %4163 = vmatmul.mubr.bf16.gmra.mrb[0].mxu0 %v4125
    %v4164 = vpop.f32.mrb[0].mxu0
    %v4165 = vadd.f32 0.0, %v4164
    %v4166 = vpop.f32.mrb[0].mxu0
    %v4167 = vpop.f32.mrb[0].mxu0
    %v4168 = vpop.f32.mrb[0].mxu0
    %4169 = vdwg.mxu0
    %v4171 = vsel %vm168, %v3929, 0
    %v4174 = vsel %vm766, %v3937, 0
    %4176 = vmatprep.subr.bf16.mxu0 0
    %4177 = vmatpush1.bf16.msra.mxu0 %v4174
    %4178 = vmatprep.subr.bf16.mxu0 0
    %4179 = vmatpush1.bf16.msra.mxu0 0
    %4180 = vmatprep.subr.bf16.mxu0 0
    %4181 = vmatpush1.bf16.msra.mxu0 0
    %4182 = vmatprep.subr.bf16.mxu0 0
    %4183 = vmatpush1.bf16.msra.mxu0 0
    %4184 = vmatprep.subr.bf16.mxu0 0
    %4185 = vmatpush1.bf16.msra.mxu0 0
    %4186 = vmatprep.subr.bf16.mxu0 0
    %4187 = vmatpush1.bf16.msra.mxu0 0
    %4188 = vmatprep.subr.bf16.mxu0 0
    %4189 = vmatpush1.bf16.msra.mxu0 0
    %4190 = vmatprep.subr.bf16.mxu0 0
    %4191 = vmatpush1.bf16.msra.mxu0 0
    %4192 = vmatprep.subr.bf16.mxu0 0
    %4193 = vmatpush1.bf16.msra.mxu0 0
    %4194 = vmatprep.subr.bf16.mxu0 0
    %4195 = vmatpush1.bf16.msra.mxu0 0
    %4196 = vmatprep.subr.bf16.mxu0 0
    %4197 = vmatpush1.bf16.msra.mxu0 0
    %4198 = vmatprep.subr.bf16.mxu0 0
    %4199 = vmatpush1.bf16.msra.mxu0 0
    %4200 = vmatprep.subr.bf16.mxu0 0
    %4201 = vmatpush1.bf16.msra.mxu0 0
    %4202 = vmatprep.subr.bf16.mxu0 0
    %4203 = vmatpush1.bf16.msra.mxu0 0
    %4204 = vmatprep.subr.bf16.mxu0 0
    %4205 = vmatpush1.bf16.msra.mxu0 0
    %4206 = vmatprep.subr.bf16.mxu0 0
    %4207 = vmatpush1.bf16.msra.mxu0 0
    %4208 = vmatprep.mubr.bf16.mxu0 0
    %4209 = vmatmul.mubr.bf16.gmra.mrb[0].mxu0 %v4171
    %v4210 = vpop.f32.mrb[0].mxu0
    %v4211 = vadd.f32 0.0, %v4210
    %v4212 = vpop.f32.mrb[0].mxu0
    %v4213 = vpop.f32.mrb[0].mxu0
    %v4214 = vpop.f32.mrb[0].mxu0
    %4215 = vdwg.mxu0
    %v4217 = vsel %vm168, %v3930, 0
    %v4220 = vsel %vm766, %v3938, 0
    %4222 = vmatprep.subr.bf16.mxu0 0
    %4223 = vmatpush1.bf16.msra.mxu0 %v4220
    %4224 = vmatprep.subr.bf16.mxu0 0
    %4225 = vmatpush1.bf16.msra.mxu0 0
    %4226 = vmatprep.subr.bf16.mxu0 0
    %4227 = vmatpush1.bf16.msra.mxu0 0
    %4228 = vmatprep.subr.bf16.mxu0 0
    %4229 = vmatpush1.bf16.msra.mxu0 0
    %4230 = vmatprep.subr.bf16.mxu0 0
    %4231 = vmatpush1.bf16.msra.mxu0 0
    %4232 = vmatprep.subr.bf16.mxu0 0
    %4233 = vmatpush1.bf16.msra.mxu0 0
    %4234 = vmatprep.subr.bf16.mxu0 0
    %4235 = vmatpush1.bf16.msra.mxu0 0
    %4236 = vmatprep.subr.bf16.mxu0 0
    %4237 = vmatpush1.bf16.msra.mxu0 0
    %4238 = vmatprep.subr.bf16.mxu0 0
    %4239 = vmatpush1.bf16.msra.mxu0 0
    %4240 = vmatprep.subr.bf16.mxu0 0
    %4241 = vmatpush1.bf16.msra.mxu0 0
    %4242 = vmatprep.subr.bf16.mxu0 0
    %4243 = vmatpush1.bf16.msra.mxu0 0
    %4244 = vmatprep.subr.bf16.mxu0 0
    %4245 = vmatpush1.bf16.msra.mxu0 0
    %4246 = vmatprep.subr.bf16.mxu0 0
    %4247 = vmatpush1.bf16.msra.mxu0 0
    %4248 = vmatprep.subr.bf16.mxu0 0
    %4249 = vmatpush1.bf16.msra.mxu0 0
    %4250 = vmatprep.subr.bf16.mxu0 0
    %4251 = vmatpush1.bf16.msra.mxu0 0
    %4252 = vmatprep.subr.bf16.mxu0 0
    %4253 = vmatpush1.bf16.msra.mxu0 0
    %4254 = vmatprep.mubr.bf16.mxu0 0
    %4255 = vmatmul.mubr.bf16.gmra.mrb[0].mxu0 %v4217
    %v4256 = vpop.f32.mrb[0].mxu0
    %v4257 = vadd.f32 0.0, %v4256
    %v4258 = vpop.f32.mrb[0].mxu0
    %v4259 = vpop.f32.mrb[0].mxu0
    %v4260 = vpop.f32.mrb[0].mxu0
    %4261 = vdwg.mxu0
    %v4263 = vsel %vm168, %v3931, 0
    %v4266 = vsel %vm766, %v3939, 0
    %4268 = vmatprep.subr.bf16.mxu0 0
    %4269 = vmatpush1.bf16.msra.mxu0 %v4266
    %4270 = vmatprep.subr.bf16.mxu0 0
    %4271 = vmatpush1.bf16.msra.mxu0 0
    %4272 = vmatprep.subr.bf16.mxu0 0
    %4273 = vmatpush1.bf16.msra.mxu0 0
    %4274 = vmatprep.subr.bf16.mxu0 0
    %4275 = vmatpush1.bf16.msra.mxu0 0
    %4276 = vmatprep.subr.bf16.mxu0 0
    %4277 = vmatpush1.bf16.msra.mxu0 0
    %4278 = vmatprep.subr.bf16.mxu0 0
    %4279 = vmatpush1.bf16.msra.mxu0 0
    %4280 = vmatprep.subr.bf16.mxu0 0
    %4281 = vmatpush1.bf16.msra.mxu0 0
    %4282 = vmatprep.subr.bf16.mxu0 0
    %4283 = vmatpush1.bf16.msra.mxu0 0
    %4284 = vmatprep.subr.bf16.mxu0 0
    %4285 = vmatpush1.bf16.msra.mxu0 0
    %4286 = vmatprep.subr.bf16.mxu0 0
    %4287 = vmatpush1.bf16.msra.mxu0 0
    %4288 = vmatprep.subr.bf16.mxu0 0
    %4289 = vmatpush1.bf16.msra.mxu0 0
    %4290 = vmatprep.subr.bf16.mxu0 0
    %4291 = vmatpush1.bf16.msra.mxu0 0
    %4292 = vmatprep.subr.bf16.mxu0 0
    %4293 = vmatpush1.bf16.msra.mxu0 0
    %4294 = vmatprep.subr.bf16.mxu0 0
    %4295 = vmatpush1.bf16.msra.mxu0 0
    %4296 = vmatprep.subr.bf16.mxu0 0
    %4297 = vmatpush1.bf16.msra.mxu0 0
    %4298 = vmatprep.subr.bf16.mxu0 0
    %4299 = vmatpush1.bf16.msra.mxu0 0
    %4300 = vmatprep.mubr.bf16.mxu0 0
    %4301 = vmatmul.mubr.bf16.gmra.mrb[0].mxu0 %v4263
    %v4302 = vpop.f32.mrb[0].mxu0
    %v4303 = vadd.f32 0.0, %v4302
    %v4304 = vpop.f32.mrb[0].mxu0
    %v4305 = vpop.f32.mrb[0].mxu0
    %v4306 = vpop.f32.mrb[0].mxu0
    %4307 = vdwg.mxu0
    %v4308 = vrcp.pop %v3902
    %v4309 = vrcp.pop %v3905
    %v4310 = vrcp.pop %v3908
    %v4311 = vrcp.pop %v3911
    %v4312 = vrcp.pop %v3914
    %v4313 = vrcp.pop %v3917
    %v4314 = vrcp.pop %v3920
    %v4315 = vrcp.pop %v3923
    %v4316 = vmul.f32 %v3981, %v4308
    %v4317 = vmul.f32 %v4027, %v4309
    %v4318 = vmul.f32 %v4073, %v4310
    %v4319 = vmul.f32 %v4119, %v4311
    %v4320 = vmul.f32 %v4165, %v4312
    %v4321 = vmul.f32 %v4211, %v4313
    %v4322 = vmul.f32 %v4257, %v4314
    %v4323 = vmul.f32 %v4303, %v4315
    %4324 = vst.msk [vmem:[#allocation2] sm:$0xff] %vm168, %v4316
    %4325 = vst.msk [vmem:[#allocation2 + $0x8] sm:$0xff] %vm168, %v4317
    %4328 = vrot.lane.b32.xlu0 %v4318, 8
    %v4329 = vpop.permute.xlu0 %4328
    %4330 = vrot.lane.b32.xlu0 %v4319, 8
    %v4331 = vpop.permute.xlu0 %4330
    %4334 = vst.msk [vmem:[#allocation2] sm:$0xff] %vm3171, %v4329
    %4335 = vst.msk [vmem:[#allocation2 + $0x8] sm:$0xff] %vm3171, %v4331
    %4338 = vrot.lane.b32.xlu0 %v4320, 16
    %v4339 = vpop.permute.xlu0 %4338
    %4340 = vrot.lane.b32.xlu0 %v4321, 16
    %v4341 = vpop.permute.xlu0 %4340
    %4344 = vst.msk [vmem:[#allocation2] sm:$0xff] %vm3182, %v4339
    %4345 = vst.msk [vmem:[#allocation2 + $0x8] sm:$0xff] %vm3182, %v4341
    %4348 = vrot.lane.b32.xlu0 %v4322, 24
    %v4349 = vpop.permute.xlu0 %4348
    %4350 = vrot.lane.b32.xlu0 %v4323, 24
    %v4351 = vpop.permute.xlu0 %4350
    %4354 = vst.msk [vmem:[#allocation2] sm:$0xff] %vm3193, %v4349
    %4355 = vst.msk [vmem:[#allocation2 + $0x8] sm:$0xff] %vm3193, %v4351
    %v4356 = vld [vmem:[#allocation2] sm:$0xff]
    %v4357 = vld [vmem:[#allocation2 + $0x8] sm:$0xff]
    %v4358 = vpack.c.bf16 %v4357, %v4356
    %s4359 = scalar_lea.vmem %s3, 96
    %v4360 = vld [vmem:[%s4359] sm:$0xf]
    %v4361 = vld [vmem:[%s4359 + $0x4] sm:$0xf]
    %v4362 = vld [vmem:[%s4359 + $0x8] sm:$0xf]
    %v4363 = vld [vmem:[%s4359 + $0xc] sm:$0xf]
    %s4364 = scalar_lea.vmem %s4, 6
    %v4365 = vld [vmem:[%s4364] sm:$0x1]
    %v4367 = vlaneseq
    %v4368 = vshrl.u32 %v4367, 7
    %v4369 = vsub.s32 0, %v4368
    %v4370 = vrot.slane %v4365, %v4369
    %v4376 = vunpack.c.l.b16 %v4360
    %v4377 = vunpack.c.l.b16 %v4361
    %v4378 = vunpack.c.l.b16 %v4362
    %v4379 = vunpack.c.l.b16 %v4363
    %v4380 = vpack.c.b16 %v4377, %v4376
    %v4381 = vpack.c.b16 %v4379, %v4378
    %v4385 = vsel %vm87, %v4358, 0
    %4387 = vmatprep.subr.bf16.mxu0 0
    %4388 = vmatpush1.bf16.msra.mxu0 %v4380
    %4389 = vmatprep.subr.bf16.mxu0 0
    %4390 = vmatpush1.bf16.msra.mxu0 %v4381
    %4391 = vmatprep.subr.bf16.mxu0 0
    %4392 = vmatpush1.bf16.msra.mxu0 0
    %4393 = vmatprep.subr.bf16.mxu0 0
    %4394 = vmatpush1.bf16.msra.mxu0 0
    %4395 = vmatprep.subr.bf16.mxu0 0
    %4396 = vmatpush1.bf16.msra.mxu0 0
    %4397 = vmatprep.subr.bf16.mxu0 0
    %4398 = vmatpush1.bf16.msra.mxu0 0
    %4399 = vmatprep.subr.bf16.mxu0 0
    %4400 = vmatpush1.bf16.msra.mxu0 0
    %4401 = vmatprep.subr.bf16.mxu0 0
    %4402 = vmatpush1.bf16.msra.mxu0 0
    %4403 = vmatprep.subr.bf16.mxu0 0
    %4404 = vmatpush1.bf16.msra.mxu0 0
    %4405 = vmatprep.subr.bf16.mxu0 0
    %4406 = vmatpush1.bf16.msra.mxu0 0
    %4407 = vmatprep.subr.bf16.mxu0 0
    %4408 = vmatpush1.bf16.msra.mxu0 0
    %4409 = vmatprep.subr.bf16.mxu0 0
    %4410 = vmatpush1.bf16.msra.mxu0 0
    %4411 = vmatprep.subr.bf16.mxu0 0
    %4412 = vmatpush1.bf16.msra.mxu0 0
    %4413 = vmatprep.subr.bf16.mxu0 0
    %4414 = vmatpush1.bf16.msra.mxu0 0
    %4415 = vmatprep.subr.bf16.mxu0 0
    %4416 = vmatpush1.bf16.msra.mxu0 0
    %4417 = vmatprep.subr.bf16.mxu0 0
    %4418 = vmatpush1.bf16.msra.mxu0 0
    %4419 = vmatprep.mubr.bf16.mxu0 0
    %4420 = vmatmul.mubr.bf16.gmra.mrb[0].mxu0 %v4385
    %v4421 = vpop.f32.mrb[0].mxu0
    %v4422 = vadd.f32 %v4370, %v4421
    %v4423 = vpop.f32.mrb[0].mxu0
    %v4424 = vpop.f32.mrb[0].mxu0
    %v4425 = vadd.f32 %v4370, %v4424
    %v4426 = vpop.f32.mrb[0].mxu0
    %4427 = vdwg.mxu0
    %v4428 = vadd.f32 %v59, %v4422
    %v4429 = vadd.f32 %v60, %v4425
    %v4430 = vsel %vm87, %v4428, 0.0
    %4431 = vadd.xlane.f32.xlu0 %v4430
    %v4432 = vpop.xlane.xlu0 %4431
    %v4433 = vsel %vm87, %v4429, 0.0
    %4434 = vadd.xlane.f32.xlu0 %v4433
    %v4435 = vpop.xlane.xlu0 %4434
    %v4436 = vrcp.pop 32.0
    %v4437 = vmul.f32 %v4432, %v4436
    %v4438 = vmul.f32 %v4435, %v4436
    %v4439 = vsub.f32 %v4428, %v4437
    %v4440 = vsub.f32 %v4429, %v4438
    %v4441 = vmul.f32 %v4439, %v4439
    %v4442 = vmul.f32 %v4440, %v4440
    %v4443 = vsel %vm87, %v4441, 0.0
    %4444 = vadd.xlane.f32.xlu0 %v4443
    %v4445 = vpop.xlane.xlu0 %4444
    %v4446 = vsel %vm87, %v4442, 0.0
    %4447 = vadd.xlane.f32.xlu0 %v4446
    %v4448 = vpop.xlane.xlu0 %4447
    %v4449 = vmul.f32 %v4445, %v4436
    %v4450 = vmul.f32 %v4448, %v4436
    %v4451 = vadd.f32 %v4449, 1e-05
    %v4452 = vadd.f32 %v4450, 1e-05
    %v4453 = vrsqrt.pop %v4451
    %v4454 = vrsqrt.pop %v4452
    %v4455 = vmul.f32 %v4439, %v4453
    %v4456 = vmul.f32 %v4440, %v4454
    %v4457 = vld [vmem:[%s6] sm:$0x1]
    %v4459 = vlaneseq
    %v4460 = vshrl.u32 %v4459, 7
    %v4461 = vsub.s32 0, %v4460
    %v4462 = vrot.slane %v4457, %v4461
    %v4464 = vmul.f32 %v4455, %v4462
    %v4465 = vmul.f32 %v4456, %v4462
    %v4466 = vld [vmem:[%s7] sm:$0x1]
    %v4468 = vlaneseq
    %v4469 = vshrl.u32 %v4468, 7
    %v4470 = vsub.s32 0, %v4469
    %v4471 = vrot.slane %v4466, %v4470
    %v4473 = vadd.f32 %v4464, %v4471
    %v4474 = vadd.f32 %v4465, %v4471
    %v4475 = vpack.c.bf16 %v4474, %v4473
    %s4476 = scalar_lea.vmem %s3, 112
    %v4477 = vld [vmem:[%s4476] sm:$0xf]
    %v4478 = vld [vmem:[%s4476 + $0x4] sm:$0xf]
    %v4479 = vld [vmem:[%s4476 + $0x8] sm:$0xf]
    %v4480 = vld [vmem:[%s4476 + $0xc] sm:$0xf]
    %s4481 = scalar_lea.vmem %s4, 7
    %v4482 = vld [vmem:[%s4481] sm:$0x1]
    %v4484 = vlaneseq
    %v4485 = vshrl.u32 %v4484, 7
    %v4486 = vsub.s32 0, %v4485
    %v4487 = vrot.slane %v4482, %v4486
    %v4493 = vunpack.c.l.b16 %v4477
    %v4494 = vunpack.c.l.b16 %v4478
    %v4495 = vunpack.c.l.b16 %v4479
    %v4496 = vunpack.c.l.b16 %v4480
    %v4497 = vpack.c.b16 %v4494, %v4493
    %v4498 = vpack.c.b16 %v4496, %v4495
    %v4502 = vsel %vm87, %v4475, 0
    %4504 = vmatprep.subr.bf16.mxu0 0
    %4505 = vmatpush1.bf16.msra.mxu0 %v4497
    %4506 = vmatprep.subr.bf16.mxu0 0
    %4507 = vmatpush1.bf16.msra.mxu0 %v4498
    %4508 = vmatprep.subr.bf16.mxu0 0
    %4509 = vmatpush1.bf16.msra.mxu0 0
    %4510 = vmatprep.subr.bf16.mxu0 0
    %4511 = vmatpush1.bf16.msra.mxu0 0
    %4512 = vmatprep.subr.bf16.mxu0 0
    %4513 = vmatpush1.bf16.msra.mxu0 0
    %4514 = vmatprep.subr.bf16.mxu0 0
    %4515 = vmatpush1.bf16.msra.mxu0 0
    %4516 = vmatprep.subr.bf16.mxu0 0
    %4517 = vmatpush1.bf16.msra.mxu0 0
    %4518 = vmatprep.subr.bf16.mxu0 0
    %4519 = vmatpush1.bf16.msra.mxu0 0
    %4520 = vmatprep.subr.bf16.mxu0 0
    %4521 = vmatpush1.bf16.msra.mxu0 0
    %4522 = vmatprep.subr.bf16.mxu0 0
    %4523 = vmatpush1.bf16.msra.mxu0 0
    %4524 = vmatprep.subr.bf16.mxu0 0
    %4525 = vmatpush1.bf16.msra.mxu0 0
    %4526 = vmatprep.subr.bf16.mxu0 0
    %4527 = vmatpush1.bf16.msra.mxu0 0
    %4528 = vmatprep.subr.bf16.mxu0 0
    %4529 = vmatpush1.bf16.msra.mxu0 0
    %4530 = vmatprep.subr.bf16.mxu0 0
    %4531 = vmatpush1.bf16.msra.mxu0 0
    %4532 = vmatprep.subr.bf16.mxu0 0
    %4533 = vmatpush1.bf16.msra.mxu0 0
    %4534 = vmatprep.subr.bf16.mxu0 0
    %4535 = vmatpush1.bf16.msra.mxu0 0
    %4536 = vmatprep.mubr.bf16.mxu0 0
    %4537 = vmatmul.mubr.bf16.gmra.mrb[0].mxu0 %v4502
    %v4538 = vpop.f32.mrb[0].mxu0
    %v4539 = vadd.f32 %v4487, %v4538
    %v4540 = vpop.f32.mrb[0].mxu0
    %v4541 = vpop.f32.mrb[0].mxu0
    %v4542 = vadd.f32 %v4487, %v4541
    %v4543 = vpop.f32.mrb[0].mxu0
    %4544 = vdwg.mxu0
    %v4545 = vpack.c.bf16 %v62, %v61
    %v4547 = vsel %vm87, %v4545, 0
    %4549 = vmatprep.subr.bf16.mxu0 0
    %4550 = vmatpush1.bf16.msra.mxu0 %v4497
    %4551 = vmatprep.subr.bf16.mxu0 0
    %4552 = vmatpush1.bf16.msra.mxu0 %v4498
    %4553 = vmatprep.subr.bf16.mxu0 0
    %4554 = vmatpush1.bf16.msra.mxu0 0
    %4555 = vmatprep.subr.bf16.mxu0 0
    %4556 = vmatpush1.bf16.msra.mxu0 0
    %4557 = vmatprep.subr.bf16.mxu0 0
    %4558 = vmatpush1.bf16.msra.mxu0 0
    %4559 = vmatprep.subr.bf16.mxu0 0
    %4560 = vmatpush1.bf16.msra.mxu0 0
    %4561 = vmatprep.subr.bf16.mxu0 0
    %4562 = vmatpush1.bf16.msra.mxu0 0
    %4563 = vmatprep.subr.bf16.mxu0 0
    %4564 = vmatpush1.bf16.msra.mxu0 0
    %4565 = vmatprep.subr.bf16.mxu0 0
    %4566 = vmatpush1.bf16.msra.mxu0 0
    %4567 = vmatprep.subr.bf16.mxu0 0
    %4568 = vmatpush1.bf16.msra.mxu0 0
    %4569 = vmatprep.subr.bf16.mxu0 0
    %4570 = vmatpush1.bf16.msra.mxu0 0
    %4571 = vmatprep.subr.bf16.mxu0 0
    %4572 = vmatpush1.bf16.msra.mxu0 0
    %4573 = vmatprep.subr.bf16.mxu0 0
    %4574 = vmatpush1.bf16.msra.mxu0 0
    %4575 = vmatprep.subr.bf16.mxu0 0
    %4576 = vmatpush1.bf16.msra.mxu0 0
    %4577 = vmatprep.subr.bf16.mxu0 0
    %4578 = vmatpush1.bf16.msra.mxu0 0
    %4579 = vmatprep.subr.bf16.mxu0 0
    %4580 = vmatpush1.bf16.msra.mxu0 0
    %4581 = vmatprep.mubr.bf16.mxu0 0
    %4582 = vmatmul.mubr.bf16.gmra.mrb[0].mxu0 %v4547
    %v4583 = vpop.f32.mrb[0].mxu0
    %v4584 = vadd.f32 %v4487, %v4583
    %v4585 = vpop.f32.mrb[0].mxu0
    %v4586 = vpop.f32.mrb[0].mxu0
    %v4587 = vadd.f32 %v4487, %v4586
    %v4588 = vpop.f32.mrb[0].mxu0
    %4589 = vdwg.mxu0
    %4592 = vrot.lane.b32.xlu0 %v4539, 120
    %v4593 = vpop.permute.xlu0 %4592
    %4594 = vrot.lane.b32.xlu0 %v4542, 120
    %v4595 = vpop.permute.xlu0 %4594
    %4598 = vrot.lane.b32.xlu0 %v4539, 112
    %v4599 = vpop.permute.xlu0 %4598
    %4600 = vrot.lane.b32.xlu0 %v4542, 112
    %v4601 = vpop.permute.xlu0 %4600
    %4604 = vrot.lane.b32.xlu0 %v4539, 104
    %v4605 = vpop.permute.xlu0 %4604
    %4606 = vrot.lane.b32.xlu0 %v4542, 104
    %v4607 = vpop.permute.xlu0 %4606
    %4612 = vrot.lane.b32.xlu0 %v4584, 120
    %v4613 = vpop.permute.xlu0 %4612
    %4614 = vrot.lane.b32.xlu0 %v4587, 120
    %v4615 = vpop.permute.xlu0 %4614
    %4618 = vrot.lane.b32.xlu0 %v4584, 112
    %v4619 = vpop.permute.xlu0 %4618
    %4620 = vrot.lane.b32.xlu0 %v4587, 112
    %v4621 = vpop.permute.xlu0 %4620
    %4624 = vrot.lane.b32.xlu0 %v4584, 104
    %v4625 = vpop.permute.xlu0 %4624
    %4626 = vrot.lane.b32.xlu0 %v4587, 104
    %v4627 = vpop.permute.xlu0 %4626
    %s4630 = scalar_lea.vmem %s5, 56
    %v4631 = vld [vmem:[%s4630] sm:$0x1]
    %v4632 = vld [vmem:[%s4630 + $0x1] sm:$0x1]
    %v4633 = vld [vmem:[%s4630 + $0x2] sm:$0x1]
    %v4634 = vld [vmem:[%s4630 + $0x3] sm:$0x1]
    %v4635 = vld [vmem:[%s4630 + $0x4] sm:$0x1]
    %v4636 = vld [vmem:[%s4630 + $0x5] sm:$0x1]
    %v4637 = vld [vmem:[%s4630 + $0x6] sm:$0x1]
    %v4638 = vld [vmem:[%s4630 + $0x7] sm:$0x1]
    %v4639 = vpack.c.bf16 %v4539, %v4539
    %v4640 = vpack.c.bf16 %v4542, %v4542
    %v4641 = vpack.c.bf16 %v4593, %v4593
    %v4642 = vpack.c.bf16 %v4595, %v4595
    %v4643 = vpack.c.bf16 %v4599, %v4599
    %v4644 = vpack.c.bf16 %v4601, %v4601
    %v4645 = vpack.c.bf16 %v4605, %v4605
    %v4646 = vpack.c.bf16 %v4607, %v4607
    %v4647 = vpack.c.bf16 %v4584, %v4584
    %v4648 = vpack.c.bf16 %v4587, %v4587
    %v4649 = vpack.c.bf16 %v4613, %v4613
    %v4650 = vpack.c.bf16 %v4615, %v4615
    %v4651 = vpack.c.bf16 %v4619, %v4619
    %v4652 = vpack.c.bf16 %v4621, %v4621
    %v4653 = vpack.c.bf16 %v4625, %v4625
    %v4654 = vpack.c.bf16 %v4627, %v4627
    %v4656 = vsel %vm168, %v4639, 0
    %v4659 = vsel %vm168, %v4647, 0
    %4661 = vmatprep.subr.bf16.mxu0 0
    %4662 = vmatpush1.bf16.xpose.msra.mxu0 %v4659
    %4663 = vmatprep.subr.bf16.mxu0 0
    %4664 = vmatpush1.bf16.xpose.msra.mxu0 0
    %4665 = vmatprep.subr.bf16.mxu0 0
    %4666 = vmatpush1.bf16.xpose.msra.mxu0 0
    %4667 = vmatprep.subr.bf16.mxu0 0
    %4668 = vmatpush1.bf16.xpose.msra.mxu0 0
    %4669 = vmatprep.subr.bf16.mxu0 0
    %4670 = vmatpush1.bf16.xpose.msra.mxu0 0
    %4671 = vmatprep.subr.bf16.mxu0 0
    %4672 = vmatpush1.bf16.xpose.msra.mxu0 0
    %4673 = vmatprep.subr.bf16.mxu0 0
    %4674 = vmatpush1.bf16.xpose.msra.mxu0 0
    %4675 = vmatprep.subr.bf16.mxu0 0
    %4676 = vmatpush1.bf16.xpose.msra.mxu0 0
    %4677 = vmatprep.subr.bf16.mxu0 0
    %4678 = vmatpush1.bf16.xpose.msra.mxu0 0
    %4679 = vmatprep.subr.bf16.mxu0 0
    %4680 = vmatpush1.bf16.xpose.msra.mxu0 0
    %4681 = vmatprep.subr.bf16.mxu0 0
    %4682 = vmatpush1.bf16.xpose.msra.mxu0 0
    %4683 = vmatprep.subr.bf16.mxu0 0
    %4684 = vmatpush1.bf16.xpose.msra.mxu0 0
    %4685 = vmatprep.subr.bf16.mxu0 0
    %4686 = vmatpush1.bf16.xpose.msra.mxu0 0
    %4687 = vmatprep.subr.bf16.mxu0 0
    %4688 = vmatpush1.bf16.xpose.msra.mxu0 0
    %4689 = vmatprep.subr.bf16.mxu0 0
    %4690 = vmatpush1.bf16.xpose.msra.mxu0 0
    %4691 = vmatprep.subr.bf16.mxu0 0
    %4692 = vmatpush1.bf16.xpose.msra.mxu0 0
    %4693 = vmatprep.mubr.bf16.mxu0 0
    %4694 = vmatmul.mubr.bf16.gmra.mrb[0].mxu0 %v4656
    %v4695 = vpop.f32.mrb[0].mxu0
    %v4696 = vadd.f32 0.0, %v4695
    %v4697 = vpop.f32.mrb[0].mxu0
    %v4698 = vpop.f32.mrb[0].mxu0
    %v4699 = vpop.f32.mrb[0].mxu0
    %4700 = vdwg.mxu0
    %v4702 = vsel %vm168, %v4640, 0
    %v4705 = vsel %vm168, %v4648, 0
    %4707 = vmatprep.subr.bf16.mxu0 0
    %4708 = vmatpush1.bf16.xpose.msra.mxu0 %v4705
    %4709 = vmatprep.subr.bf16.mxu0 0
    %4710 = vmatpush1.bf16.xpose.msra.mxu0 0
    %4711 = vmatprep.subr.bf16.mxu0 0
    %4712 = vmatpush1.bf16.xpose.msra.mxu0 0
    %4713 = vmatprep.subr.bf16.mxu0 0
    %4714 = vmatpush1.bf16.xpose.msra.mxu0 0
    %4715 = vmatprep.subr.bf16.mxu0 0
    %4716 = vmatpush1.bf16.xpose.msra.mxu0 0
    %4717 = vmatprep.subr.bf16.mxu0 0
    %4718 = vmatpush1.bf16.xpose.msra.mxu0 0
    %4719 = vmatprep.subr.bf16.mxu0 0
    %4720 = vmatpush1.bf16.xpose.msra.mxu0 0
    %4721 = vmatprep.subr.bf16.mxu0 0
    %4722 = vmatpush1.bf16.xpose.msra.mxu0 0
    %4723 = vmatprep.subr.bf16.mxu0 0
    %4724 = vmatpush1.bf16.xpose.msra.mxu0 0
    %4725 = vmatprep.subr.bf16.mxu0 0
    %4726 = vmatpush1.bf16.xpose.msra.mxu0 0
    %4727 = vmatprep.subr.bf16.mxu0 0
    %4728 = vmatpush1.bf16.xpose.msra.mxu0 0
    %4729 = vmatprep.subr.bf16.mxu0 0
    %4730 = vmatpush1.bf16.xpose.msra.mxu0 0
    %4731 = vmatprep.subr.bf16.mxu0 0
    %4732 = vmatpush1.bf16.xpose.msra.mxu0 0
    %4733 = vmatprep.subr.bf16.mxu0 0
    %4734 = vmatpush1.bf16.xpose.msra.mxu0 0
    %4735 = vmatprep.subr.bf16.mxu0 0
    %4736 = vmatpush1.bf16.xpose.msra.mxu0 0
    %4737 = vmatprep.subr.bf16.mxu0 0
    %4738 = vmatpush1.bf16.xpose.msra.mxu0 0
    %4739 = vmatprep.mubr.bf16.mxu0 0
    %4740 = vmatmul.mubr.bf16.gmra.mrb[0].mxu0 %v4702
    %v4741 = vpop.f32.mrb[0].mxu0
    %v4742 = vadd.f32 0.0, %v4741
    %v4743 = vpop.f32.mrb[0].mxu0
    %v4744 = vpop.f32.mrb[0].mxu0
    %v4745 = vpop.f32.mrb[0].mxu0
    %4746 = vdwg.mxu0
    %v4748 = vsel %vm168, %v4641, 0
    %v4751 = vsel %vm168, %v4649, 0
    %4753 = vmatprep.subr.bf16.mxu0 0
    %4754 = vmatpush1.bf16.xpose.msra.mxu0 %v4751
    %4755 = vmatprep.subr.bf16.mxu0 0
    %4756 = vmatpush1.bf16.xpose.msra.mxu0 0
    %4757 = vmatprep.subr.bf16.mxu0 0
    %4758 = vmatpush1.bf16.xpose.msra.mxu0 0
    %4759 = vmatprep.subr.bf16.mxu0 0
    %4760 = vmatpush1.bf16.xpose.msra.mxu0 0
    %4761 = vmatprep.subr.bf16.mxu0 0
    %4762 = vmatpush1.bf16.xpose.msra.mxu0 0
    %4763 = vmatprep.subr.bf16.mxu0 0
    %4764 = vmatpush1.bf16.xpose.msra.mxu0 0
    %4765 = vmatprep.subr.bf16.mxu0 0
    %4766 = vmatpush1.bf16.xpose.msra.mxu0 0
    %4767 = vmatprep.subr.bf16.mxu0 0
    %4768 = vmatpush1.bf16.xpose.msra.mxu0 0
    %4769 = vmatprep.subr.bf16.mxu0 0
    %4770 = vmatpush1.bf16.xpose.msra.mxu0 0
    %4771 = vmatprep.subr.bf16.mxu0 0
    %4772 = vmatpush1.bf16.xpose.msra.mxu0 0
    %4773 = vmatprep.subr.bf16.mxu0 0
    %4774 = vmatpush1.bf16.xpose.msra.mxu0 0
    %4775 = vmatprep.subr.bf16.mxu0 0
    %4776 = vmatpush1.bf16.xpose.msra.mxu0 0
    %4777 = vmatprep.subr.bf16.mxu0 0
    %4778 = vmatpush1.bf16.xpose.msra.mxu0 0
    %4779 = vmatprep.subr.bf16.mxu0 0
    %4780 = vmatpush1.bf16.xpose.msra.mxu0 0
    %4781 = vmatprep.subr.bf16.mxu0 0
    %4782 = vmatpush1.bf16.xpose.msra.mxu0 0
    %4783 = vmatprep.subr.bf16.mxu0 0
    %4784 = vmatpush1.bf16.xpose.msra.mxu0 0
    %4785 = vmatprep.mubr.bf16.mxu0 0
    %4786 = vmatmul.mubr.bf16.gmra.mrb[0].mxu0 %v4748
    %v4787 = vpop.f32.mrb[0].mxu0
    %v4788 = vadd.f32 0.0, %v4787
    %v4789 = vpop.f32.mrb[0].mxu0
    %v4790 = vpop.f32.mrb[0].mxu0
    %v4791 = vpop.f32.mrb[0].mxu0
    %4792 = vdwg.mxu0
    %v4794 = vsel %vm168, %v4642, 0
    %v4797 = vsel %vm168, %v4650, 0
    %4799 = vmatprep.subr.bf16.mxu0 0
    %4800 = vmatpush1.bf16.xpose.msra.mxu0 %v4797
    %4801 = vmatprep.subr.bf16.mxu0 0
    %4802 = vmatpush1.bf16.xpose.msra.mxu0 0
    %4803 = vmatprep.subr.bf16.mxu0 0
    %4804 = vmatpush1.bf16.xpose.msra.mxu0 0
    %4805 = vmatprep.subr.bf16.mxu0 0
    %4806 = vmatpush1.bf16.xpose.msra.mxu0 0
    %4807 = vmatprep.subr.bf16.mxu0 0
    %4808 = vmatpush1.bf16.xpose.msra.mxu0 0
    %4809 = vmatprep.subr.bf16.mxu0 0
    %4810 = vmatpush1.bf16.xpose.msra.mxu0 0
    %4811 = vmatprep.subr.bf16.mxu0 0
    %4812 = vmatpush1.bf16.xpose.msra.mxu0 0
    %4813 = vmatprep.subr.bf16.mxu0 0
    %4814 = vmatpush1.bf16.xpose.msra.mxu0 0
    %4815 = vmatprep.subr.bf16.mxu0 0
    %4816 = vmatpush1.bf16.xpose.msra.mxu0 0
    %4817 = vmatprep.subr.bf16.mxu0 0
    %4818 = vmatpush1.bf16.xpose.msra.mxu0 0
    %4819 = vmatprep.subr.bf16.mxu0 0
    %4820 = vmatpush1.bf16.xpose.msra.mxu0 0
    %4821 = vmatprep.subr.bf16.mxu0 0
    %4822 = vmatpush1.bf16.xpose.msra.mxu0 0
    %4823 = vmatprep.subr.bf16.mxu0 0
    %4824 = vmatpush1.bf16.xpose.msra.mxu0 0
    %4825 = vmatprep.subr.bf16.mxu0 0
    %4826 = vmatpush1.bf16.xpose.msra.mxu0 0
    %4827 = vmatprep.subr.bf16.mxu0 0
    %4828 = vmatpush1.bf16.xpose.msra.mxu0 0
    %4829 = vmatprep.subr.bf16.mxu0 0
    %4830 = vmatpush1.bf16.xpose.msra.mxu0 0
    %4831 = vmatprep.mubr.bf16.mxu0 0
    %4832 = vmatmul.mubr.bf16.gmra.mrb[0].mxu0 %v4794
    %v4833 = vpop.f32.mrb[0].mxu0
    %v4834 = vadd.f32 0.0, %v4833
    %v4835 = vpop.f32.mrb[0].mxu0
    %v4836 = vpop.f32.mrb[0].mxu0
    %v4837 = vpop.f32.mrb[0].mxu0
    %4838 = vdwg.mxu0
    %v4840 = vsel %vm168, %v4643, 0
    %v4843 = vsel %vm168, %v4651, 0
    %4845 = vmatprep.subr.bf16.mxu0 0
    %4846 = vmatpush1.bf16.xpose.msra.mxu0 %v4843
    %4847 = vmatprep.subr.bf16.mxu0 0
    %4848 = vmatpush1.bf16.xpose.msra.mxu0 0
    %4849 = vmatprep.subr.bf16.mxu0 0
    %4850 = vmatpush1.bf16.xpose.msra.mxu0 0
    %4851 = vmatprep.subr.bf16.mxu0 0
    %4852 = vmatpush1.bf16.xpose.msra.mxu0 0
    %4853 = vmatprep.subr.bf16.mxu0 0
    %4854 = vmatpush1.bf16.xpose.msra.mxu0 0
    %4855 = vmatprep.subr.bf16.mxu0 0
    %4856 = vmatpush1.bf16.xpose.msra.mxu0 0
    %4857 = vmatprep.subr.bf16.mxu0 0
    %4858 = vmatpush1.bf16.xpose.msra.mxu0 0
    %4859 = vmatprep.subr.bf16.mxu0 0
    %4860 = vmatpush1.bf16.xpose.msra.mxu0 0
    %4861 = vmatprep.subr.bf16.mxu0 0
    %4862 = vmatpush1.bf16.xpose.msra.mxu0 0
    %4863 = vmatprep.subr.bf16.mxu0 0
    %4864 = vmatpush1.bf16.xpose.msra.mxu0 0
    %4865 = vmatprep.subr.bf16.mxu0 0
    %4866 = vmatpush1.bf16.xpose.msra.mxu0 0
    %4867 = vmatprep.subr.bf16.mxu0 0
    %4868 = vmatpush1.bf16.xpose.msra.mxu0 0
    %4869 = vmatprep.subr.bf16.mxu0 0
    %4870 = vmatpush1.bf16.xpose.msra.mxu0 0
    %4871 = vmatprep.subr.bf16.mxu0 0
    %4872 = vmatpush1.bf16.xpose.msra.mxu0 0
    %4873 = vmatprep.subr.bf16.mxu0 0
    %4874 = vmatpush1.bf16.xpose.msra.mxu0 0
    %4875 = vmatprep.subr.bf16.mxu0 0
    %4876 = vmatpush1.bf16.xpose.msra.mxu0 0
    %4877 = vmatprep.mubr.bf16.mxu0 0
    %4878 = vmatmul.mubr.bf16.gmra.mrb[0].mxu0 %v4840
    %v4879 = vpop.f32.mrb[0].mxu0
    %v4880 = vadd.f32 0.0, %v4879
    %v4881 = vpop.f32.mrb[0].mxu0
    %v4882 = vpop.f32.mrb[0].mxu0
    %v4883 = vpop.f32.mrb[0].mxu0
    %4884 = vdwg.mxu0
    %v4886 = vsel %vm168, %v4644, 0
    %v4889 = vsel %vm168, %v4652, 0
    %4891 = vmatprep.subr.bf16.mxu0 0
    %4892 = vmatpush1.bf16.xpose.msra.mxu0 %v4889
    %4893 = vmatprep.subr.bf16.mxu0 0
    %4894 = vmatpush1.bf16.xpose.msra.mxu0 0
    %4895 = vmatprep.subr.bf16.mxu0 0
    %4896 = vmatpush1.bf16.xpose.msra.mxu0 0
    %4897 = vmatprep.subr.bf16.mxu0 0
    %4898 = vmatpush1.bf16.xpose.msra.mxu0 0
    %4899 = vmatprep.subr.bf16.mxu0 0
    %4900 = vmatpush1.bf16.xpose.msra.mxu0 0
    %4901 = vmatprep.subr.bf16.mxu0 0
    %4902 = vmatpush1.bf16.xpose.msra.mxu0 0
    %4903 = vmatprep.subr.bf16.mxu0 0
    %4904 = vmatpush1.bf16.xpose.msra.mxu0 0
    %4905 = vmatprep.subr.bf16.mxu0 0
    %4906 = vmatpush1.bf16.xpose.msra.mxu0 0
    %4907 = vmatprep.subr.bf16.mxu0 0
    %4908 = vmatpush1.bf16.xpose.msra.mxu0 0
    %4909 = vmatprep.subr.bf16.mxu0 0
    %4910 = vmatpush1.bf16.xpose.msra.mxu0 0
    %4911 = vmatprep.subr.bf16.mxu0 0
    %4912 = vmatpush1.bf16.xpose.msra.mxu0 0
    %4913 = vmatprep.subr.bf16.mxu0 0
    %4914 = vmatpush1.bf16.xpose.msra.mxu0 0
    %4915 = vmatprep.subr.bf16.mxu0 0
    %4916 = vmatpush1.bf16.xpose.msra.mxu0 0
    %4917 = vmatprep.subr.bf16.mxu0 0
    %4918 = vmatpush1.bf16.xpose.msra.mxu0 0
    %4919 = vmatprep.subr.bf16.mxu0 0
    %4920 = vmatpush1.bf16.xpose.msra.mxu0 0
    %4921 = vmatprep.subr.bf16.mxu0 0
    %4922 = vmatpush1.bf16.xpose.msra.mxu0 0
    %4923 = vmatprep.mubr.bf16.mxu0 0
    %4924 = vmatmul.mubr.bf16.gmra.mrb[0].mxu0 %v4886
    %v4925 = vpop.f32.mrb[0].mxu0
    %v4926 = vadd.f32 0.0, %v4925
    %v4927 = vpop.f32.mrb[0].mxu0
    %v4928 = vpop.f32.mrb[0].mxu0
    %v4929 = vpop.f32.mrb[0].mxu0
    %4930 = vdwg.mxu0
    %v4932 = vsel %vm168, %v4645, 0
    %v4935 = vsel %vm168, %v4653, 0
    %4937 = vmatprep.subr.bf16.mxu0 0
    %4938 = vmatpush1.bf16.xpose.msra.mxu0 %v4935
    %4939 = vmatprep.subr.bf16.mxu0 0
    %4940 = vmatpush1.bf16.xpose.msra.mxu0 0
    %4941 = vmatprep.subr.bf16.mxu0 0
    %4942 = vmatpush1.bf16.xpose.msra.mxu0 0
    %4943 = vmatprep.subr.bf16.mxu0 0
    %4944 = vmatpush1.bf16.xpose.msra.mxu0 0
    %4945 = vmatprep.subr.bf16.mxu0 0
    %4946 = vmatpush1.bf16.xpose.msra.mxu0 0
    %4947 = vmatprep.subr.bf16.mxu0 0
    %4948 = vmatpush1.bf16.xpose.msra.mxu0 0
    %4949 = vmatprep.subr.bf16.mxu0 0
    %4950 = vmatpush1.bf16.xpose.msra.mxu0 0
    %4951 = vmatprep.subr.bf16.mxu0 0
    %4952 = vmatpush1.bf16.xpose.msra.mxu0 0
    %4953 = vmatprep.subr.bf16.mxu0 0
    %4954 = vmatpush1.bf16.xpose.msra.mxu0 0
    %4955 = vmatprep.subr.bf16.mxu0 0
    %4956 = vmatpush1.bf16.xpose.msra.mxu0 0
    %4957 = vmatprep.subr.bf16.mxu0 0
    %4958 = vmatpush1.bf16.xpose.msra.mxu0 0
    %4959 = vmatprep.subr.bf16.mxu0 0
    %4960 = vmatpush1.bf16.xpose.msra.mxu0 0
    %4961 = vmatprep.subr.bf16.mxu0 0
    %4962 = vmatpush1.bf16.xpose.msra.mxu0 0
    %4963 = vmatprep.subr.bf16.mxu0 0
    %4964 = vmatpush1.bf16.xpose.msra.mxu0 0
    %4965 = vmatprep.subr.bf16.mxu0 0
    %4966 = vmatpush1.bf16.xpose.msra.mxu0 0
    %4967 = vmatprep.subr.bf16.mxu0 0
    %4968 = vmatpush1.bf16.xpose.msra.mxu0 0
    %4969 = vmatprep.mubr.bf16.mxu0 0
    %4970 = vmatmul.mubr.bf16.gmra.mrb[0].mxu0 %v4932
    %v4971 = vpop.f32.mrb[0].mxu0
    %v4972 = vadd.f32 0.0, %v4971
    %v4973 = vpop.f32.mrb[0].mxu0
    %v4974 = vpop.f32.mrb[0].mxu0
    %v4975 = vpop.f32.mrb[0].mxu0
    %4976 = vdwg.mxu0
    %v4978 = vsel %vm168, %v4646, 0
    %v4981 = vsel %vm168, %v4654, 0
    %4983 = vmatprep.subr.bf16.mxu0 0
    %4984 = vmatpush1.bf16.xpose.msra.mxu0 %v4981
    %4985 = vmatprep.subr.bf16.mxu0 0
    %4986 = vmatpush1.bf16.xpose.msra.mxu0 0
    %4987 = vmatprep.subr.bf16.mxu0 0
    %4988 = vmatpush1.bf16.xpose.msra.mxu0 0
    %4989 = vmatprep.subr.bf16.mxu0 0
    %4990 = vmatpush1.bf16.xpose.msra.mxu0 0
    %4991 = vmatprep.subr.bf16.mxu0 0
    %4992 = vmatpush1.bf16.xpose.msra.mxu0 0
    %4993 = vmatprep.subr.bf16.mxu0 0
    %4994 = vmatpush1.bf16.xpose.msra.mxu0 0
    %4995 = vmatprep.subr.bf16.mxu0 0
    %4996 = vmatpush1.bf16.xpose.msra.mxu0 0
    %4997 = vmatprep.subr.bf16.mxu0 0
    %4998 = vmatpush1.bf16.xpose.msra.mxu0 0
    %4999 = vmatprep.subr.bf16.mxu0 0
    %5000 = vmatpush1.bf16.xpose.msra.mxu0 0
    %5001 = vmatprep.subr.bf16.mxu0 0
    %5002 = vmatpush1.bf16.xpose.msra.mxu0 0
    %5003 = vmatprep.subr.bf16.mxu0 0
    %5004 = vmatpush1.bf16.xpose.msra.mxu0 0
    %5005 = vmatprep.subr.bf16.mxu0 0
    %5006 = vmatpush1.bf16.xpose.msra.mxu0 0
    %5007 = vmatprep.subr.bf16.mxu0 0
    %5008 = vmatpush1.bf16.xpose.msra.mxu0 0
    %5009 = vmatprep.subr.bf16.mxu0 0
    %5010 = vmatpush1.bf16.xpose.msra.mxu0 0
    %5011 = vmatprep.subr.bf16.mxu0 0
    %5012 = vmatpush1.bf16.xpose.msra.mxu0 0
    %5013 = vmatprep.subr.bf16.mxu0 0
    %5014 = vmatpush1.bf16.xpose.msra.mxu0 0
    %5015 = vmatprep.mubr.bf16.mxu0 0
    %5016 = vmatmul.mubr.bf16.gmra.mrb[0].mxu0 %v4978
    %v5017 = vpop.f32.mrb[0].mxu0
    %v5018 = vadd.f32 0.0, %v5017
    %v5019 = vpop.f32.mrb[0].mxu0
    %v5020 = vpop.f32.mrb[0].mxu0
    %v5021 = vpop.f32.mrb[0].mxu0
    %5022 = vdwg.mxu0
    %v5023 = vmul.f32 %v4696, 0.35355338
    %v5024 = vmul.f32 %v4742, 0.35355338
    %v5025 = vmul.f32 %v4788, 0.35355338
    %v5026 = vmul.f32 %v4834, 0.35355338
    %v5027 = vmul.f32 %v4880, 0.35355338
    %v5028 = vmul.f32 %v4926, 0.35355338
    %v5029 = vmul.f32 %v4972, 0.35355338
    %v5030 = vmul.f32 %v5018, 0.35355338
    %v5031 = vsel %vm522, %v5023, -1e+30
    %v5032 = vsel %vm522, %v5024, -1e+30
    %v5033 = vsel %vm522, %v5025, -1e+30
    %v5034 = vsel %vm522, %v5026, -1e+30
    %v5035 = vsel %vm522, %v5027, -1e+30
    %v5036 = vsel %vm522, %v5028, -1e+30
    %v5037 = vsel %vm522, %v5029, -1e+30
    %v5038 = vsel %vm522, %v5030, -1e+30
    %v5047 = vlaneseq
    %v5048 = vshrl.u32 %v5047, 7
    %v5049 = vsub.s32 0, %v5048
    %v5050 = vrot.slane %v4631, %v5049
    %v5051 = vlaneseq
    %v5052 = vshrl.u32 %v5051, 7
    %v5053 = vsub.s32 0, %v5052
    %v5054 = vrot.slane %v4632, %v5053
    %v5055 = vlaneseq
    %v5056 = vshrl.u32 %v5055, 7
    %v5057 = vsub.s32 0, %v5056
    %v5058 = vrot.slane %v4633, %v5057
    %v5059 = vlaneseq
    %v5060 = vshrl.u32 %v5059, 7
    %v5061 = vsub.s32 0, %v5060
    %v5062 = vrot.slane %v4634, %v5061
    %v5063 = vlaneseq
    %v5064 = vshrl.u32 %v5063, 7
    %v5065 = vsub.s32 0, %v5064
    %v5066 = vrot.slane %v4635, %v5065
    %v5067 = vlaneseq
    %v5068 = vshrl.u32 %v5067, 7
    %v5069 = vsub.s32 0, %v5068
    %v5070 = vrot.slane %v4636, %v5069
    %v5071 = vlaneseq
    %v5072 = vshrl.u32 %v5071, 7
    %v5073 = vsub.s32 0, %v5072
    %v5074 = vrot.slane %v4637, %v5073
    %v5075 = vlaneseq
    %v5076 = vshrl.u32 %v5075, 7
    %v5077 = vsub.s32 0, %v5076
    %v5078 = vrot.slane %v4638, %v5077
    %v5087 = vmul.f32 %v4539, %v5050
    %v5088 = vmul.f32 %v4542, %v5054
    %v5089 = vmul.f32 %v4593, %v5058
    %v5090 = vmul.f32 %v4595, %v5062
    %v5091 = vmul.f32 %v4599, %v5066
    %v5092 = vmul.f32 %v4601, %v5070
    %v5093 = vmul.f32 %v4605, %v5074
    %v5094 = vmul.f32 %v4607, %v5078
    %v5095 = vsel %vm168, %v5087, 0.0
    %5096 = vadd.xlane.f32.xlu0 %v5095
    %v5097 = vpop.xlane.xlu0 %5096
    %v5098 = vsel %vm168, %v5088, 0.0
    %5099 = vadd.xlane.f32.xlu0 %v5098
    %v5100 = vpop.xlane.xlu0 %5099
    %v5101 = vsel %vm168, %v5089, 0.0
    %5102 = vadd.xlane.f32.xlu0 %v5101
    %v5103 = vpop.xlane.xlu0 %5102
    %v5104 = vsel %vm168, %v5090, 0.0
    %5105 = vadd.xlane.f32.xlu0 %v5104
    %v5106 = vpop.xlane.xlu0 %5105
    %v5107 = vsel %vm168, %v5091, 0.0
    %5108 = vadd.xlane.f32.xlu0 %v5107
    %v5109 = vpop.xlane.xlu0 %5108
    %v5110 = vsel %vm168, %v5092, 0.0
    %5111 = vadd.xlane.f32.xlu0 %v5110
    %v5112 = vpop.xlane.xlu0 %5111
    %v5113 = vsel %vm168, %v5093, 0.0
    %5114 = vadd.xlane.f32.xlu0 %v5113
    %v5115 = vpop.xlane.xlu0 %5114
    %v5116 = vsel %vm168, %v5094, 0.0
    %5117 = vadd.xlane.f32.xlu0 %v5116
    %v5118 = vpop.xlane.xlu0 %5117
    %v5119 = vmul.f32 %v5097, 0.35355338
    %v5120 = vmul.f32 %v5100, 0.35355338
    %v5121 = vmul.f32 %v5103, 0.35355338
    %v5122 = vmul.f32 %v5106, 0.35355338
    %v5123 = vmul.f32 %v5109, 0.35355338
    %v5124 = vmul.f32 %v5112, 0.35355338
    %v5125 = vmul.f32 %v5115, 0.35355338
    %v5126 = vmul.f32 %v5118, 0.35355338
    %v5127 = vsel %vm168, %v5031, -inf
    %5128 = vmax.xlane.f32.xlu0 %v5127
    %v5129 = vpop.xlane.xlu0 %5128
    %v5130 = vsel %vm168, %v5032, -inf
    %5131 = vmax.xlane.f32.xlu0 %v5130
    %v5132 = vpop.xlane.xlu0 %5131
    %v5133 = vsel %vm168, %v5033, -inf
    %5134 = vmax.xlane.f32.xlu0 %v5133
    %v5135 = vpop.xlane.xlu0 %5134
    %v5136 = vsel %vm168, %v5034, -inf
    %5137 = vmax.xlane.f32.xlu0 %v5136
    %v5138 = vpop.xlane.xlu0 %5137
    %v5139 = vsel %vm168, %v5035, -inf
    %5140 = vmax.xlane.f32.xlu0 %v5139
    %v5141 = vpop.xlane.xlu0 %5140
    %v5142 = vsel %vm168, %v5036, -inf
    %5143 = vmax.xlane.f32.xlu0 %v5142
    %v5144 = vpop.xlane.xlu0 %5143
    %v5145 = vsel %vm168, %v5037, -inf
    %5146 = vmax.xlane.f32.xlu0 %v5145
    %v5147 = vpop.xlane.xlu0 %5146
    %v5148 = vsel %vm168, %v5038, -inf
    %5149 = vmax.xlane.f32.xlu0 %v5148
    %v5150 = vpop.xlane.xlu0 %5149
    %v5151 = vmax.f32 %v5129, %v5119
    %v5152 = vmax.f32 %v5132, %v5120
    %v5153 = vmax.f32 %v5135, %v5121
    %v5154 = vmax.f32 %v5138, %v5122
    %v5155 = vmax.f32 %v5141, %v5123
    %v5156 = vmax.f32 %v5144, %v5124
    %v5157 = vmax.f32 %v5147, %v5125
    %v5158 = vmax.f32 %v5150, %v5126
    %v5159 = vsub.f32 %v5031, %v5151
    %v5160 = vsub.f32 %v5032, %v5152
    %v5161 = vsub.f32 %v5033, %v5153
    %v5162 = vsub.f32 %v5034, %v5154
    %v5163 = vsub.f32 %v5035, %v5155
    %v5164 = vsub.f32 %v5036, %v5156
    %v5165 = vsub.f32 %v5037, %v5157
    %v5166 = vsub.f32 %v5038, %v5158
    %v5167 = vmul.f32 %v5159, 1.442695
    %v5168 = vpow.pop %v5167
    %v5169 = vmul.f32 %v5160, 1.442695
    %v5170 = vpow.pop %v5169
    %v5171 = vmul.f32 %v5161, 1.442695
    %v5172 = vpow.pop %v5171
    %v5173 = vmul.f32 %v5162, 1.442695
    %v5174 = vpow.pop %v5173
    %v5175 = vmul.f32 %v5163, 1.442695
    %v5176 = vpow.pop %v5175
    %v5177 = vmul.f32 %v5164, 1.442695
    %v5178 = vpow.pop %v5177
    %v5179 = vmul.f32 %v5165, 1.442695
    %v5180 = vpow.pop %v5179
    %v5181 = vmul.f32 %v5166, 1.442695
    %v5182 = vpow.pop %v5181
    %v5183 = vsel %vm522, %v5168, 0.0
    %v5184 = vsel %vm522, %v5170, 0.0
    %v5185 = vsel %vm522, %v5172, 0.0
    %v5186 = vsel %vm522, %v5174, 0.0
    %v5187 = vsel %vm522, %v5176, 0.0
    %v5188 = vsel %vm522, %v5178, 0.0
    %v5189 = vsel %vm522, %v5180, 0.0
    %v5190 = vsel %vm522, %v5182, 0.0
    %v5191 = vsub.f32 %v5119, %v5151
    %v5192 = vsub.f32 %v5120, %v5152
    %v5193 = vsub.f32 %v5121, %v5153
    %v5194 = vsub.f32 %v5122, %v5154
    %v5195 = vsub.f32 %v5123, %v5155
    %v5196 = vsub.f32 %v5124, %v5156
    %v5197 = vsub.f32 %v5125, %v5157
    %v5198 = vsub.f32 %v5126, %v5158
    %v5199 = vmul.f32 %v5191, 1.442695
    %v5200 = vpow.pop %v5199
    %v5201 = vmul.f32 %v5192, 1.442695
    %v5202 = vpow.pop %v5201
    %v5203 = vmul.f32 %v5193, 1.442695
    %v5204 = vpow.pop %v5203
    %v5205 = vmul.f32 %v5194, 1.442695
    %v5206 = vpow.pop %v5205
    %v5207 = vmul.f32 %v5195, 1.442695
    %v5208 = vpow.pop %v5207
    %v5209 = vmul.f32 %v5196, 1.442695
    %v5210 = vpow.pop %v5209
    %v5211 = vmul.f32 %v5197, 1.442695
    %v5212 = vpow.pop %v5211
    %v5213 = vmul.f32 %v5198, 1.442695
    %v5214 = vpow.pop %v5213
    %v5215 = vmul.f32 %v54, %v5200
    %v5216 = vmul.f32 %v54, %v5202
    %v5217 = vmul.f32 %v54, %v5204
    %v5218 = vmul.f32 %v54, %v5206
    %v5219 = vmul.f32 %v54, %v5208
    %v5220 = vmul.f32 %v54, %v5210
    %v5221 = vmul.f32 %v54, %v5212
    %v5222 = vmul.f32 %v54, %v5214
    %v5223 = vsel %vm168, %v5183, 0.0
    %5224 = vadd.xlane.f32.xlu0 %v5223
    %v5225 = vpop.xlane.xlu0 %5224
    %v5226 = vsel %vm168, %v5184, 0.0
    %5227 = vadd.xlane.f32.xlu0 %v5226
    %v5228 = vpop.xlane.xlu0 %5227
    %v5229 = vsel %vm168, %v5185, 0.0
    %5230 = vadd.xlane.f32.xlu0 %v5229
    %v5231 = vpop.xlane.xlu0 %5230
    %v5232 = vsel %vm168, %v5186, 0.0
    %5233 = vadd.xlane.f32.xlu0 %v5232
    %v5234 = vpop.xlane.xlu0 %5233
    %v5235 = vsel %vm168, %v5187, 0.0
    %5236 = vadd.xlane.f32.xlu0 %v5235
    %v5237 = vpop.xlane.xlu0 %5236
    %v5238 = vsel %vm168, %v5188, 0.0
    %5239 = vadd.xlane.f32.xlu0 %v5238
    %v5240 = vpop.xlane.xlu0 %5239
    %v5241 = vsel %vm168, %v5189, 0.0
    %5242 = vadd.xlane.f32.xlu0 %v5241
    %v5243 = vpop.xlane.xlu0 %5242
    %v5244 = vsel %vm168, %v5190, 0.0
    %5245 = vadd.xlane.f32.xlu0 %v5244
    %v5246 = vpop.xlane.xlu0 %5245
    %v5247 = vadd.f32 %v5225, %v5215
    %v5248 = vadd.f32 %v5228, %v5216
    %v5249 = vadd.f32 %v5231, %v5217
    %v5250 = vadd.f32 %v5234, %v5218
    %v5251 = vadd.f32 %v5237, %v5219
    %v5252 = vadd.f32 %v5240, %v5220
    %v5253 = vadd.f32 %v5243, %v5221
    %v5254 = vadd.f32 %v5246, %v5222
    %v5255 = vpack.c.bf16 %v5183, %v5183
    %v5256 = vpack.c.bf16 %v5184, %v5184
    %v5257 = vpack.c.bf16 %v5185, %v5185
    %v5258 = vpack.c.bf16 %v5186, %v5186
    %v5259 = vpack.c.bf16 %v5187, %v5187
    %v5260 = vpack.c.bf16 %v5188, %v5188
    %v5261 = vpack.c.bf16 %v5189, %v5189
    %v5262 = vpack.c.bf16 %v5190, %v5190
    %v5263 = vmul.f32 %v5215, %v5050
    %v5264 = vmul.f32 %v5216, %v5054
    %v5265 = vmul.f32 %v5217, %v5058
    %v5266 = vmul.f32 %v5218, %v5062
    %v5267 = vmul.f32 %v5219, %v5066
    %v5268 = vmul.f32 %v5220, %v5070
    %v5269 = vmul.f32 %v5221, %v5074
    %v5270 = vmul.f32 %v5222, %v5078
    %v5272 = vsel %vm168, %v5255, 0
    %v5274 = vsel %vm766, %v4647, 0
    %5276 = vmatprep.subr.bf16.mxu0 0
    %5277 = vmatpush1.bf16.msra.mxu0 %v5274
    %5278 = vmatprep.subr.bf16.mxu0 0
    %5279 = vmatpush1.bf16.msra.mxu0 0
    %5280 = vmatprep.subr.bf16.mxu0 0
    %5281 = vmatpush1.bf16.msra.mxu0 0
    %5282 = vmatprep.subr.bf16.mxu0 0
    %5283 = vmatpush1.bf16.msra.mxu0 0
    %5284 = vmatprep.subr.bf16.mxu0 0
    %5285 = vmatpush1.bf16.msra.mxu0 0
    %5286 = vmatprep.subr.bf16.mxu0 0
    %5287 = vmatpush1.bf16.msra.mxu0 0
    %5288 = vmatprep.subr.bf16.mxu0 0
    %5289 = vmatpush1.bf16.msra.mxu0 0
    %5290 = vmatprep.subr.bf16.mxu0 0
    %5291 = vmatpush1.bf16.msra.mxu0 0
    %5292 = vmatprep.subr.bf16.mxu0 0
    %5293 = vmatpush1.bf16.msra.mxu0 0
    %5294 = vmatprep.subr.bf16.mxu0 0
    %5295 = vmatpush1.bf16.msra.mxu0 0
    %5296 = vmatprep.subr.bf16.mxu0 0
    %5297 = vmatpush1.bf16.msra.mxu0 0
    %5298 = vmatprep.subr.bf16.mxu0 0
    %5299 = vmatpush1.bf16.msra.mxu0 0
    %5300 = vmatprep.subr.bf16.mxu0 0
    %5301 = vmatpush1.bf16.msra.mxu0 0
    %5302 = vmatprep.subr.bf16.mxu0 0
    %5303 = vmatpush1.bf16.msra.mxu0 0
    %5304 = vmatprep.subr.bf16.mxu0 0
    %5305 = vmatpush1.bf16.msra.mxu0 0
    %5306 = vmatprep.subr.bf16.mxu0 0
    %5307 = vmatpush1.bf16.msra.mxu0 0
    %5308 = vmatprep.mubr.bf16.mxu0 0
    %5309 = vmatmul.mubr.bf16.gmra.mrb[0].mxu0 %v5272
    %v5310 = vpop.f32.mrb[0].mxu0
    %v5311 = vadd.f32 %v5263, %v5310
    %v5312 = vpop.f32.mrb[0].mxu0
    %v5313 = vpop.f32.mrb[0].mxu0
    %v5314 = vpop.f32.mrb[0].mxu0
    %5315 = vdwg.mxu0
    %v5317 = vsel %vm168, %v5256, 0
    %v5319 = vsel %vm766, %v4648, 0
    %5321 = vmatprep.subr.bf16.mxu0 0
    %5322 = vmatpush1.bf16.msra.mxu0 %v5319
    %5323 = vmatprep.subr.bf16.mxu0 0
    %5324 = vmatpush1.bf16.msra.mxu0 0
    %5325 = vmatprep.subr.bf16.mxu0 0
    %5326 = vmatpush1.bf16.msra.mxu0 0
    %5327 = vmatprep.subr.bf16.mxu0 0
    %5328 = vmatpush1.bf16.msra.mxu0 0
    %5329 = vmatprep.subr.bf16.mxu0 0
    %5330 = vmatpush1.bf16.msra.mxu0 0
    %5331 = vmatprep.subr.bf16.mxu0 0
    %5332 = vmatpush1.bf16.msra.mxu0 0
    %5333 = vmatprep.subr.bf16.mxu0 0
    %5334 = vmatpush1.bf16.msra.mxu0 0
    %5335 = vmatprep.subr.bf16.mxu0 0
    %5336 = vmatpush1.bf16.msra.mxu0 0
    %5337 = vmatprep.subr.bf16.mxu0 0
    %5338 = vmatpush1.bf16.msra.mxu0 0
    %5339 = vmatprep.subr.bf16.mxu0 0
    %5340 = vmatpush1.bf16.msra.mxu0 0
    %5341 = vmatprep.subr.bf16.mxu0 0
    %5342 = vmatpush1.bf16.msra.mxu0 0
    %5343 = vmatprep.subr.bf16.mxu0 0
    %5344 = vmatpush1.bf16.msra.mxu0 0
    %5345 = vmatprep.subr.bf16.mxu0 0
    %5346 = vmatpush1.bf16.msra.mxu0 0
    %5347 = vmatprep.subr.bf16.mxu0 0
    %5348 = vmatpush1.bf16.msra.mxu0 0
    %5349 = vmatprep.subr.bf16.mxu0 0
    %5350 = vmatpush1.bf16.msra.mxu0 0
    %5351 = vmatprep.subr.bf16.mxu0 0
    %5352 = vmatpush1.bf16.msra.mxu0 0
    %5353 = vmatprep.mubr.bf16.mxu0 0
    %5354 = vmatmul.mubr.bf16.gmra.mrb[0].mxu0 %v5317
    %v5355 = vpop.f32.mrb[0].mxu0
    %v5356 = vadd.f32 %v5264, %v5355
    %v5357 = vpop.f32.mrb[0].mxu0
    %v5358 = vpop.f32.mrb[0].mxu0
    %v5359 = vpop.f32.mrb[0].mxu0
    %5360 = vdwg.mxu0
    %v5362 = vsel %vm168, %v5257, 0
    %v5364 = vsel %vm766, %v4649, 0
    %5366 = vmatprep.subr.bf16.mxu0 0
    %5367 = vmatpush1.bf16.msra.mxu0 %v5364
    %5368 = vmatprep.subr.bf16.mxu0 0
    %5369 = vmatpush1.bf16.msra.mxu0 0
    %5370 = vmatprep.subr.bf16.mxu0 0
    %5371 = vmatpush1.bf16.msra.mxu0 0
    %5372 = vmatprep.subr.bf16.mxu0 0
    %5373 = vmatpush1.bf16.msra.mxu0 0
    %5374 = vmatprep.subr.bf16.mxu0 0
    %5375 = vmatpush1.bf16.msra.mxu0 0
    %5376 = vmatprep.subr.bf16.mxu0 0
    %5377 = vmatpush1.bf16.msra.mxu0 0
    %5378 = vmatprep.subr.bf16.mxu0 0
    %5379 = vmatpush1.bf16.msra.mxu0 0
    %5380 = vmatprep.subr.bf16.mxu0 0
    %5381 = vmatpush1.bf16.msra.mxu0 0
    %5382 = vmatprep.subr.bf16.mxu0 0
    %5383 = vmatpush1.bf16.msra.mxu0 0
    %5384 = vmatprep.subr.bf16.mxu0 0
    %5385 = vmatpush1.bf16.msra.mxu0 0
    %5386 = vmatprep.subr.bf16.mxu0 0
    %5387 = vmatpush1.bf16.msra.mxu0 0
    %5388 = vmatprep.subr.bf16.mxu0 0
    %5389 = vmatpush1.bf16.msra.mxu0 0
    %5390 = vmatprep.subr.bf16.mxu0 0
    %5391 = vmatpush1.bf16.msra.mxu0 0
    %5392 = vmatprep.subr.bf16.mxu0 0
    %5393 = vmatpush1.bf16.msra.mxu0 0
    %5394 = vmatprep.subr.bf16.mxu0 0
    %5395 = vmatpush1.bf16.msra.mxu0 0
    %5396 = vmatprep.subr.bf16.mxu0 0
    %5397 = vmatpush1.bf16.msra.mxu0 0
    %5398 = vmatprep.mubr.bf16.mxu0 0
    %5399 = vmatmul.mubr.bf16.gmra.mrb[0].mxu0 %v5362
    %v5400 = vpop.f32.mrb[0].mxu0
    %v5401 = vadd.f32 %v5265, %v5400
    %v5402 = vpop.f32.mrb[0].mxu0
    %v5403 = vpop.f32.mrb[0].mxu0
    %v5404 = vpop.f32.mrb[0].mxu0
    %5405 = vdwg.mxu0
    %v5407 = vsel %vm168, %v5258, 0
    %v5409 = vsel %vm766, %v4650, 0
    %5411 = vmatprep.subr.bf16.mxu0 0
    %5412 = vmatpush1.bf16.msra.mxu0 %v5409
    %5413 = vmatprep.subr.bf16.mxu0 0
    %5414 = vmatpush1.bf16.msra.mxu0 0
    %5415 = vmatprep.subr.bf16.mxu0 0
    %5416 = vmatpush1.bf16.msra.mxu0 0
    %5417 = vmatprep.subr.bf16.mxu0 0
    %5418 = vmatpush1.bf16.msra.mxu0 0
    %5419 = vmatprep.subr.bf16.mxu0 0
    %5420 = vmatpush1.bf16.msra.mxu0 0
    %5421 = vmatprep.subr.bf16.mxu0 0
    %5422 = vmatpush1.bf16.msra.mxu0 0
    %5423 = vmatprep.subr.bf16.mxu0 0
    %5424 = vmatpush1.bf16.msra.mxu0 0
    %5425 = vmatprep.subr.bf16.mxu0 0
    %5426 = vmatpush1.bf16.msra.mxu0 0
    %5427 = vmatprep.subr.bf16.mxu0 0
    %5428 = vmatpush1.bf16.msra.mxu0 0
    %5429 = vmatprep.subr.bf16.mxu0 0
    %5430 = vmatpush1.bf16.msra.mxu0 0
    %5431 = vmatprep.subr.bf16.mxu0 0
    %5432 = vmatpush1.bf16.msra.mxu0 0
    %5433 = vmatprep.subr.bf16.mxu0 0
    %5434 = vmatpush1.bf16.msra.mxu0 0
    %5435 = vmatprep.subr.bf16.mxu0 0
    %5436 = vmatpush1.bf16.msra.mxu0 0
    %5437 = vmatprep.subr.bf16.mxu0 0
    %5438 = vmatpush1.bf16.msra.mxu0 0
    %5439 = vmatprep.subr.bf16.mxu0 0
    %5440 = vmatpush1.bf16.msra.mxu0 0
    %5441 = vmatprep.subr.bf16.mxu0 0
    %5442 = vmatpush1.bf16.msra.mxu0 0
    %5443 = vmatprep.mubr.bf16.mxu0 0
    %5444 = vmatmul.mubr.bf16.gmra.mrb[0].mxu0 %v5407
    %v5445 = vpop.f32.mrb[0].mxu0
    %v5446 = vadd.f32 %v5266, %v5445
    %v5447 = vpop.f32.mrb[0].mxu0
    %v5448 = vpop.f32.mrb[0].mxu0
    %v5449 = vpop.f32.mrb[0].mxu0
    %5450 = vdwg.mxu0
    %v5452 = vsel %vm168, %v5259, 0
    %v5454 = vsel %vm766, %v4651, 0
    %5456 = vmatprep.subr.bf16.mxu0 0
    %5457 = vmatpush1.bf16.msra.mxu0 %v5454
    %5458 = vmatprep.subr.bf16.mxu0 0
    %5459 = vmatpush1.bf16.msra.mxu0 0
    %5460 = vmatprep.subr.bf16.mxu0 0
    %5461 = vmatpush1.bf16.msra.mxu0 0
    %5462 = vmatprep.subr.bf16.mxu0 0
    %5463 = vmatpush1.bf16.msra.mxu0 0
    %5464 = vmatprep.subr.bf16.mxu0 0
    %5465 = vmatpush1.bf16.msra.mxu0 0
    %5466 = vmatprep.subr.bf16.mxu0 0
    %5467 = vmatpush1.bf16.msra.mxu0 0
    %5468 = vmatprep.subr.bf16.mxu0 0
    %5469 = vmatpush1.bf16.msra.mxu0 0
    %5470 = vmatprep.subr.bf16.mxu0 0
    %5471 = vmatpush1.bf16.msra.mxu0 0
    %5472 = vmatprep.subr.bf16.mxu0 0
    %5473 = vmatpush1.bf16.msra.mxu0 0
    %5474 = vmatprep.subr.bf16.mxu0 0
    %5475 = vmatpush1.bf16.msra.mxu0 0
    %5476 = vmatprep.subr.bf16.mxu0 0
    %5477 = vmatpush1.bf16.msra.mxu0 0
    %5478 = vmatprep.subr.bf16.mxu0 0
    %5479 = vmatpush1.bf16.msra.mxu0 0
    %5480 = vmatprep.subr.bf16.mxu0 0
    %5481 = vmatpush1.bf16.msra.mxu0 0
    %5482 = vmatprep.subr.bf16.mxu0 0
    %5483 = vmatpush1.bf16.msra.mxu0 0
    %5484 = vmatprep.subr.bf16.mxu0 0
    %5485 = vmatpush1.bf16.msra.mxu0 0
    %5486 = vmatprep.subr.bf16.mxu0 0
    %5487 = vmatpush1.bf16.msra.mxu0 0
    %5488 = vmatprep.mubr.bf16.mxu0 0
    %5489 = vmatmul.mubr.bf16.gmra.mrb[0].mxu0 %v5452
    %v5490 = vpop.f32.mrb[0].mxu0
    %v5491 = vadd.f32 %v5267, %v5490
    %v5492 = vpop.f32.mrb[0].mxu0
    %v5493 = vpop.f32.mrb[0].mxu0
    %v5494 = vpop.f32.mrb[0].mxu0
    %5495 = vdwg.mxu0
    %v5497 = vsel %vm168, %v5260, 0
    %v5499 = vsel %vm766, %v4652, 0
    %5501 = vmatprep.subr.bf16.mxu0 0
    %5502 = vmatpush1.bf16.msra.mxu0 %v5499
    %5503 = vmatprep.subr.bf16.mxu0 0
    %5504 = vmatpush1.bf16.msra.mxu0 0
    %5505 = vmatprep.subr.bf16.mxu0 0
    %5506 = vmatpush1.bf16.msra.mxu0 0
    %5507 = vmatprep.subr.bf16.mxu0 0
    %5508 = vmatpush1.bf16.msra.mxu0 0
    %5509 = vmatprep.subr.bf16.mxu0 0
    %5510 = vmatpush1.bf16.msra.mxu0 0
    %5511 = vmatprep.subr.bf16.mxu0 0
    %5512 = vmatpush1.bf16.msra.mxu0 0
    %5513 = vmatprep.subr.bf16.mxu0 0
    %5514 = vmatpush1.bf16.msra.mxu0 0
    %5515 = vmatprep.subr.bf16.mxu0 0
    %5516 = vmatpush1.bf16.msra.mxu0 0
    %5517 = vmatprep.subr.bf16.mxu0 0
    %5518 = vmatpush1.bf16.msra.mxu0 0
    %5519 = vmatprep.subr.bf16.mxu0 0
    %5520 = vmatpush1.bf16.msra.mxu0 0
    %5521 = vmatprep.subr.bf16.mxu0 0
    %5522 = vmatpush1.bf16.msra.mxu0 0
    %5523 = vmatprep.subr.bf16.mxu0 0
    %5524 = vmatpush1.bf16.msra.mxu0 0
    %5525 = vmatprep.subr.bf16.mxu0 0
    %5526 = vmatpush1.bf16.msra.mxu0 0
    %5527 = vmatprep.subr.bf16.mxu0 0
    %5528 = vmatpush1.bf16.msra.mxu0 0
    %5529 = vmatprep.subr.bf16.mxu0 0
    %5530 = vmatpush1.bf16.msra.mxu0 0
    %5531 = vmatprep.subr.bf16.mxu0 0
    %5532 = vmatpush1.bf16.msra.mxu0 0
    %5533 = vmatprep.mubr.bf16.mxu0 0
    %5534 = vmatmul.mubr.bf16.gmra.mrb[0].mxu0 %v5497
    %v5535 = vpop.f32.mrb[0].mxu0
    %v5536 = vadd.f32 %v5268, %v5535
    %v5537 = vpop.f32.mrb[0].mxu0
    %v5538 = vpop.f32.mrb[0].mxu0
    %v5539 = vpop.f32.mrb[0].mxu0
    %5540 = vdwg.mxu0
    %v5542 = vsel %vm168, %v5261, 0
    %v5544 = vsel %vm766, %v4653, 0
    %5546 = vmatprep.subr.bf16.mxu0 0
    %5547 = vmatpush1.bf16.msra.mxu0 %v5544
    %5548 = vmatprep.subr.bf16.mxu0 0
    %5549 = vmatpush1.bf16.msra.mxu0 0
    %5550 = vmatprep.subr.bf16.mxu0 0
    %5551 = vmatpush1.bf16.msra.mxu0 0
    %5552 = vmatprep.subr.bf16.mxu0 0
    %5553 = vmatpush1.bf16.msra.mxu0 0
    %5554 = vmatprep.subr.bf16.mxu0 0
    %5555 = vmatpush1.bf16.msra.mxu0 0
    %5556 = vmatprep.subr.bf16.mxu0 0
    %5557 = vmatpush1.bf16.msra.mxu0 0
    %5558 = vmatprep.subr.bf16.mxu0 0
    %5559 = vmatpush1.bf16.msra.mxu0 0
    %5560 = vmatprep.subr.bf16.mxu0 0
    %5561 = vmatpush1.bf16.msra.mxu0 0
    %5562 = vmatprep.subr.bf16.mxu0 0
    %5563 = vmatpush1.bf16.msra.mxu0 0
    %5564 = vmatprep.subr.bf16.mxu0 0
    %5565 = vmatpush1.bf16.msra.mxu0 0
    %5566 = vmatprep.subr.bf16.mxu0 0
    %5567 = vmatpush1.bf16.msra.mxu0 0
    %5568 = vmatprep.subr.bf16.mxu0 0
    %5569 = vmatpush1.bf16.msra.mxu0 0
    %5570 = vmatprep.subr.bf16.mxu0 0
    %5571 = vmatpush1.bf16.msra.mxu0 0
    %5572 = vmatprep.subr.bf16.mxu0 0
    %5573 = vmatpush1.bf16.msra.mxu0 0
    %5574 = vmatprep.subr.bf16.mxu0 0
    %5575 = vmatpush1.bf16.msra.mxu0 0
    %5576 = vmatprep.subr.bf16.mxu0 0
    %5577 = vmatpush1.bf16.msra.mxu0 0
    %5578 = vmatprep.mubr.bf16.mxu0 0
    %5579 = vmatmul.mubr.bf16.gmra.mrb[0].mxu0 %v5542
    %v5580 = vpop.f32.mrb[0].mxu0
    %v5581 = vadd.f32 %v5269, %v5580
    %v5582 = vpop.f32.mrb[0].mxu0
    %v5583 = vpop.f32.mrb[0].mxu0
    %v5584 = vpop.f32.mrb[0].mxu0
    %5585 = vdwg.mxu0
    %v5587 = vsel %vm168, %v5262, 0
    %v5589 = vsel %vm766, %v4654, 0
    %5591 = vmatprep.subr.bf16.mxu0 0
    %5592 = vmatpush1.bf16.msra.mxu0 %v5589
    %5593 = vmatprep.subr.bf16.mxu0 0
    %5594 = vmatpush1.bf16.msra.mxu0 0
    %5595 = vmatprep.subr.bf16.mxu0 0
    %5596 = vmatpush1.bf16.msra.mxu0 0
    %5597 = vmatprep.subr.bf16.mxu0 0
    %5598 = vmatpush1.bf16.msra.mxu0 0
    %5599 = vmatprep.subr.bf16.mxu0 0
    %5600 = vmatpush1.bf16.msra.mxu0 0
    %5601 = vmatprep.subr.bf16.mxu0 0
    %5602 = vmatpush1.bf16.msra.mxu0 0
    %5603 = vmatprep.subr.bf16.mxu0 0
    %5604 = vmatpush1.bf16.msra.mxu0 0
    %5605 = vmatprep.subr.bf16.mxu0 0
    %5606 = vmatpush1.bf16.msra.mxu0 0
    %5607 = vmatprep.subr.bf16.mxu0 0
    %5608 = vmatpush1.bf16.msra.mxu0 0
    %5609 = vmatprep.subr.bf16.mxu0 0
    %5610 = vmatpush1.bf16.msra.mxu0 0
    %5611 = vmatprep.subr.bf16.mxu0 0
    %5612 = vmatpush1.bf16.msra.mxu0 0
    %5613 = vmatprep.subr.bf16.mxu0 0
    %5614 = vmatpush1.bf16.msra.mxu0 0
    %5615 = vmatprep.subr.bf16.mxu0 0
    %5616 = vmatpush1.bf16.msra.mxu0 0
    %5617 = vmatprep.subr.bf16.mxu0 0
    %5618 = vmatpush1.bf16.msra.mxu0 0
    %5619 = vmatprep.subr.bf16.mxu0 0
    %5620 = vmatpush1.bf16.msra.mxu0 0
    %5621 = vmatprep.subr.bf16.mxu0 0
    %5622 = vmatpush1.bf16.msra.mxu0 0
    %5623 = vmatprep.mubr.bf16.mxu0 0
    %5624 = vmatmul.mubr.bf16.gmra.mrb[0].mxu0 %v5587
    %v5625 = vpop.f32.mrb[0].mxu0
    %v5626 = vadd.f32 %v5270, %v5625
    %v5627 = vpop.f32.mrb[0].mxu0
    %v5628 = vpop.f32.mrb[0].mxu0
    %v5629 = vpop.f32.mrb[0].mxu0
    %5630 = vdwg.mxu0
    %v5631 = vrcp.pop %v5247
    %v5632 = vrcp.pop %v5248
    %v5633 = vrcp.pop %v5249
    %v5634 = vrcp.pop %v5250
    %v5635 = vrcp.pop %v5251
    %v5636 = vrcp.pop %v5252
    %v5637 = vrcp.pop %v5253
    %v5638 = vrcp.pop %v5254
    %v5639 = vmul.f32 %v5311, %v5631
    %v5640 = vmul.f32 %v5356, %v5632
    %v5641 = vmul.f32 %v5401, %v5633
    %v5642 = vmul.f32 %v5446, %v5634
    %v5643 = vmul.f32 %v5491, %v5635
    %v5644 = vmul.f32 %v5536, %v5636
    %v5645 = vmul.f32 %v5581, %v5637
    %v5646 = vmul.f32 %v5626, %v5638
    %s5647 = scalar_lea.vmem %s3, 128
    %v5648 = vld [vmem:[%s5647] sm:$0xf]
    %v5649 = vld [vmem:[%s5647 + $0x4] sm:$0xf]
    %v5650 = vld [vmem:[%s5647 + $0x8] sm:$0xf]
    %v5651 = vld [vmem:[%s5647 + $0xc] sm:$0xf]
    %s5652 = scalar_lea.vmem %s4, 8
    %v5653 = vld [vmem:[%s5652] sm:$0x1]
    %v5655 = vlaneseq
    %v5656 = vshrl.u32 %v5655, 7
    %v5657 = vsub.s32 0, %v5656
    %v5658 = vrot.slane %v5653, %v5657
    %v5664 = vunpack.c.l.b16 %v5648
    %v5665 = vunpack.c.l.b16 %v5649
    %v5666 = vunpack.c.l.b16 %v5650
    %v5667 = vunpack.c.l.b16 %v5651
    %v5668 = vpack.c.b16 %v5665, %v5664
    %v5669 = vpack.c.b16 %v5667, %v5666
    %5672 = vmatprep.subr.bf16.mxu0 0
    %5673 = vmatpush1.bf16.msra.mxu0 %v5668
    %5674 = vmatprep.subr.bf16.mxu0 0
    %5675 = vmatpush1.bf16.msra.mxu0 %v5669
    %5676 = vmatprep.subr.bf16.mxu0 0
    %5677 = vmatpush1.bf16.msra.mxu0 0
    %5678 = vmatprep.subr.bf16.mxu0 0
    %5679 = vmatpush1.bf16.msra.mxu0 0
    %5680 = vmatprep.subr.bf16.mxu0 0
    %5681 = vmatpush1.bf16.msra.mxu0 0
    %5682 = vmatprep.subr.bf16.mxu0 0
    %5683 = vmatpush1.bf16.msra.mxu0 0
    %5684 = vmatprep.subr.bf16.mxu0 0
    %5685 = vmatpush1.bf16.msra.mxu0 0
    %5686 = vmatprep.subr.bf16.mxu0 0
    %5687 = vmatpush1.bf16.msra.mxu0 0
    %5688 = vmatprep.subr.bf16.mxu0 0
    %5689 = vmatpush1.bf16.msra.mxu0 0
    %5690 = vmatprep.subr.bf16.mxu0 0
    %5691 = vmatpush1.bf16.msra.mxu0 0
    %5692 = vmatprep.subr.bf16.mxu0 0
    %5693 = vmatpush1.bf16.msra.mxu0 0
    %5694 = vmatprep.subr.bf16.mxu0 0
    %5695 = vmatpush1.bf16.msra.mxu0 0
    %5696 = vmatprep.subr.bf16.mxu0 0
    %5697 = vmatpush1.bf16.msra.mxu0 0
    %5698 = vmatprep.subr.bf16.mxu0 0
    %5699 = vmatpush1.bf16.msra.mxu0 0
    %5700 = vmatprep.subr.bf16.mxu0 0
    %5701 = vmatpush1.bf16.msra.mxu0 0
    %5702 = vmatprep.subr.bf16.mxu0 0
    %5703 = vmatpush1.bf16.msra.mxu0 0
    %5704 = vmatprep.mubr.bf16.mxu0 0
    %5705 = vmatmul.mubr.bf16.gmra.mrb[0].mxu0 %v4547
    %v5706 = vpop.f32.mrb[0].mxu0
    %v5707 = vadd.f32 %v5658, %v5706
    %v5708 = vpop.f32.mrb[0].mxu0
    %v5709 = vpop.f32.mrb[0].mxu0
    %v5710 = vadd.f32 %v5658, %v5709
    %v5711 = vpop.f32.mrb[0].mxu0
    %5712 = vdwg.mxu0
    %5713 = vmatprep.subr.bf16.mxu0 0
    %5714 = vmatpush1.bf16.msra.mxu0 %v5668
    %5715 = vmatprep.subr.bf16.mxu0 0
    %5716 = vmatpush1.bf16.msra.mxu0 %v5669
    %5717 = vmatprep.subr.bf16.mxu0 0
    %5718 = vmatpush1.bf16.msra.mxu0 0
    %5719 = vmatprep.subr.bf16.mxu0 0
    %5720 = vmatpush1.bf16.msra.mxu0 0
    %5721 = vmatprep.subr.bf16.mxu0 0
    %5722 = vmatpush1.bf16.msra.mxu0 0
    %5723 = vmatprep.subr.bf16.mxu0 0
    %5724 = vmatpush1.bf16.msra.mxu0 0
    %5725 = vmatprep.subr.bf16.mxu0 0
    %5726 = vmatpush1.bf16.msra.mxu0 0
    %5727 = vmatprep.subr.bf16.mxu0 0
    %5728 = vmatpush1.bf16.msra.mxu0 0
    %5729 = vmatprep.subr.bf16.mxu0 0
    %5730 = vmatpush1.bf16.msra.mxu0 0
    %5731 = vmatprep.subr.bf16.mxu0 0
    %5732 = vmatpush1.bf16.msra.mxu0 0
    %5733 = vmatprep.subr.bf16.mxu0 0
    %5734 = vmatpush1.bf16.msra.mxu0 0
    %5735 = vmatprep.subr.bf16.mxu0 0
    %5736 = vmatpush1.bf16.msra.mxu0 0
    %5737 = vmatprep.subr.bf16.mxu0 0
    %5738 = vmatpush1.bf16.msra.mxu0 0
    %5739 = vmatprep.subr.bf16.mxu0 0
    %5740 = vmatpush1.bf16.msra.mxu0 0
    %5741 = vmatprep.subr.bf16.mxu0 0
    %5742 = vmatpush1.bf16.msra.mxu0 0
    %5743 = vmatprep.subr.bf16.mxu0 0
    %5744 = vmatpush1.bf16.msra.mxu0 0
    %5745 = vmatprep.mubr.bf16.mxu0 0
    %5746 = vmatmul.mubr.bf16.gmra.mrb[0].mxu0 %v4502
    %v5747 = vpop.f32.mrb[0].mxu0
    %v5748 = vadd.f32 %v5658, %v5747
    %v5749 = vpop.f32.mrb[0].mxu0
    %v5750 = vpop.f32.mrb[0].mxu0
    %v5751 = vadd.f32 %v5658, %v5750
    %v5752 = vpop.f32.mrb[0].mxu0
    %5753 = vdwg.mxu0
    %5756 = vrot.lane.b32.xlu0 %v5707, 120
    %v5757 = vpop.permute.xlu0 %5756
    %5758 = vrot.lane.b32.xlu0 %v5710, 120
    %v5759 = vpop.permute.xlu0 %5758
    %5762 = vrot.lane.b32.xlu0 %v5707, 112
    %v5763 = vpop.permute.xlu0 %5762
    %5764 = vrot.lane.b32.xlu0 %v5710, 112
    %v5765 = vpop.permute.xlu0 %5764
    %5768 = vrot.lane.b32.xlu0 %v5707, 104
    %v5769 = vpop.permute.xlu0 %5768
    %5770 = vrot.lane.b32.xlu0 %v5710, 104
    %v5771 = vpop.permute.xlu0 %5770
    %5776 = vrot.lane.b32.xlu0 %v5748, 120
    %v5777 = vpop.permute.xlu0 %5776
    %5778 = vrot.lane.b32.xlu0 %v5751, 120
    %v5779 = vpop.permute.xlu0 %5778
    %5782 = vrot.lane.b32.xlu0 %v5748, 112
    %v5783 = vpop.permute.xlu0 %5782
    %5784 = vrot.lane.b32.xlu0 %v5751, 112
    %v5785 = vpop.permute.xlu0 %5784
    %5788 = vrot.lane.b32.xlu0 %v5748, 104
    %v5789 = vpop.permute.xlu0 %5788
    %5790 = vrot.lane.b32.xlu0 %v5751, 104
    %v5791 = vpop.permute.xlu0 %5790
    %s5794 = scalar_lea.vmem %s5, 64
    %v5795 = vld [vmem:[%s5794] sm:$0x1]
    %v5796 = vld [vmem:[%s5794 + $0x1] sm:$0x1]
    %v5797 = vld [vmem:[%s5794 + $0x2] sm:$0x1]
    %v5798 = vld [vmem:[%s5794 + $0x3] sm:$0x1]
    %v5799 = vld [vmem:[%s5794 + $0x4] sm:$0x1]
    %v5800 = vld [vmem:[%s5794 + $0x5] sm:$0x1]
    %v5801 = vld [vmem:[%s5794 + $0x6] sm:$0x1]
    %v5802 = vld [vmem:[%s5794 + $0x7] sm:$0x1]
    %v5803 = vpack.c.bf16 %v5707, %v5707
    %v5804 = vpack.c.bf16 %v5710, %v5710
    %v5805 = vpack.c.bf16 %v5757, %v5757
    %v5806 = vpack.c.bf16 %v5759, %v5759
    %v5807 = vpack.c.bf16 %v5763, %v5763
    %v5808 = vpack.c.bf16 %v5765, %v5765
    %v5809 = vpack.c.bf16 %v5769, %v5769
    %v5810 = vpack.c.bf16 %v5771, %v5771
    %v5811 = vpack.c.bf16 %v5748, %v5748
    %v5812 = vpack.c.bf16 %v5751, %v5751
    %v5813 = vpack.c.bf16 %v5777, %v5777
    %v5814 = vpack.c.bf16 %v5779, %v5779
    %v5815 = vpack.c.bf16 %v5783, %v5783
    %v5816 = vpack.c.bf16 %v5785, %v5785
    %v5817 = vpack.c.bf16 %v5789, %v5789
    %v5818 = vpack.c.bf16 %v5791, %v5791
    %v5820 = vsel %vm168, %v5803, 0
    %v5823 = vsel %vm168, %v5811, 0
    %5825 = vmatprep.subr.bf16.mxu0 0
    %5826 = vmatpush1.bf16.xpose.msra.mxu0 %v5823
    %5827 = vmatprep.subr.bf16.mxu0 0
    %5828 = vmatpush1.bf16.xpose.msra.mxu0 0
    %5829 = vmatprep.subr.bf16.mxu0 0
    %5830 = vmatpush1.bf16.xpose.msra.mxu0 0
    %5831 = vmatprep.subr.bf16.mxu0 0
    %5832 = vmatpush1.bf16.xpose.msra.mxu0 0
    %5833 = vmatprep.subr.bf16.mxu0 0
    %5834 = vmatpush1.bf16.xpose.msra.mxu0 0
    %5835 = vmatprep.subr.bf16.mxu0 0
    %5836 = vmatpush1.bf16.xpose.msra.mxu0 0
    %5837 = vmatprep.subr.bf16.mxu0 0
    %5838 = vmatpush1.bf16.xpose.msra.mxu0 0
    %5839 = vmatprep.subr.bf16.mxu0 0
    %5840 = vmatpush1.bf16.xpose.msra.mxu0 0
    %5841 = vmatprep.subr.bf16.mxu0 0
    %5842 = vmatpush1.bf16.xpose.msra.mxu0 0
    %5843 = vmatprep.subr.bf16.mxu0 0
    %5844 = vmatpush1.bf16.xpose.msra.mxu0 0
    %5845 = vmatprep.subr.bf16.mxu0 0
    %5846 = vmatpush1.bf16.xpose.msra.mxu0 0
    %5847 = vmatprep.subr.bf16.mxu0 0
    %5848 = vmatpush1.bf16.xpose.msra.mxu0 0
    %5849 = vmatprep.subr.bf16.mxu0 0
    %5850 = vmatpush1.bf16.xpose.msra.mxu0 0
    %5851 = vmatprep.subr.bf16.mxu0 0
    %5852 = vmatpush1.bf16.xpose.msra.mxu0 0
    %5853 = vmatprep.subr.bf16.mxu0 0
    %5854 = vmatpush1.bf16.xpose.msra.mxu0 0
    %5855 = vmatprep.subr.bf16.mxu0 0
    %5856 = vmatpush1.bf16.xpose.msra.mxu0 0
    %5857 = vmatprep.mubr.bf16.mxu0 0
    %5858 = vmatmul.mubr.bf16.gmra.mrb[0].mxu0 %v5820
    %v5859 = vpop.f32.mrb[0].mxu0
    %v5860 = vadd.f32 0.0, %v5859
    %v5861 = vpop.f32.mrb[0].mxu0
    %v5862 = vpop.f32.mrb[0].mxu0
    %v5863 = vpop.f32.mrb[0].mxu0
    %5864 = vdwg.mxu0
    %v5866 = vsel %vm168, %v5804, 0
    %v5869 = vsel %vm168, %v5812, 0
    %5871 = vmatprep.subr.bf16.mxu0 0
    %5872 = vmatpush1.bf16.xpose.msra.mxu0 %v5869
    %5873 = vmatprep.subr.bf16.mxu0 0
    %5874 = vmatpush1.bf16.xpose.msra.mxu0 0
    %5875 = vmatprep.subr.bf16.mxu0 0
    %5876 = vmatpush1.bf16.xpose.msra.mxu0 0
    %5877 = vmatprep.subr.bf16.mxu0 0
    %5878 = vmatpush1.bf16.xpose.msra.mxu0 0
    %5879 = vmatprep.subr.bf16.mxu0 0
    %5880 = vmatpush1.bf16.xpose.msra.mxu0 0
    %5881 = vmatprep.subr.bf16.mxu0 0
    %5882 = vmatpush1.bf16.xpose.msra.mxu0 0
    %5883 = vmatprep.subr.bf16.mxu0 0
    %5884 = vmatpush1.bf16.xpose.msra.mxu0 0
    %5885 = vmatprep.subr.bf16.mxu0 0
    %5886 = vmatpush1.bf16.xpose.msra.mxu0 0
    %5887 = vmatprep.subr.bf16.mxu0 0
    %5888 = vmatpush1.bf16.xpose.msra.mxu0 0
    %5889 = vmatprep.subr.bf16.mxu0 0
    %5890 = vmatpush1.bf16.xpose.msra.mxu0 0
    %5891 = vmatprep.subr.bf16.mxu0 0
    %5892 = vmatpush1.bf16.xpose.msra.mxu0 0
    %5893 = vmatprep.subr.bf16.mxu0 0
    %5894 = vmatpush1.bf16.xpose.msra.mxu0 0
    %5895 = vmatprep.subr.bf16.mxu0 0
    %5896 = vmatpush1.bf16.xpose.msra.mxu0 0
    %5897 = vmatprep.subr.bf16.mxu0 0
    %5898 = vmatpush1.bf16.xpose.msra.mxu0 0
    %5899 = vmatprep.subr.bf16.mxu0 0
    %5900 = vmatpush1.bf16.xpose.msra.mxu0 0
    %5901 = vmatprep.subr.bf16.mxu0 0
    %5902 = vmatpush1.bf16.xpose.msra.mxu0 0
    %5903 = vmatprep.mubr.bf16.mxu0 0
    %5904 = vmatmul.mubr.bf16.gmra.mrb[0].mxu0 %v5866
    %v5905 = vpop.f32.mrb[0].mxu0
    %v5906 = vadd.f32 0.0, %v5905
    %v5907 = vpop.f32.mrb[0].mxu0
    %v5908 = vpop.f32.mrb[0].mxu0
    %v5909 = vpop.f32.mrb[0].mxu0
    %5910 = vdwg.mxu0
    %v5912 = vsel %vm168, %v5805, 0
    %v5915 = vsel %vm168, %v5813, 0
    %5917 = vmatprep.subr.bf16.mxu0 0
    %5918 = vmatpush1.bf16.xpose.msra.mxu0 %v5915
    %5919 = vmatprep.subr.bf16.mxu0 0
    %5920 = vmatpush1.bf16.xpose.msra.mxu0 0
    %5921 = vmatprep.subr.bf16.mxu0 0
    %5922 = vmatpush1.bf16.xpose.msra.mxu0 0
    %5923 = vmatprep.subr.bf16.mxu0 0
    %5924 = vmatpush1.bf16.xpose.msra.mxu0 0
    %5925 = vmatprep.subr.bf16.mxu0 0
    %5926 = vmatpush1.bf16.xpose.msra.mxu0 0
    %5927 = vmatprep.subr.bf16.mxu0 0
    %5928 = vmatpush1.bf16.xpose.msra.mxu0 0
    %5929 = vmatprep.subr.bf16.mxu0 0
    %5930 = vmatpush1.bf16.xpose.msra.mxu0 0
    %5931 = vmatprep.subr.bf16.mxu0 0
    %5932 = vmatpush1.bf16.xpose.msra.mxu0 0
    %5933 = vmatprep.subr.bf16.mxu0 0
    %5934 = vmatpush1.bf16.xpose.msra.mxu0 0
    %5935 = vmatprep.subr.bf16.mxu0 0
    %5936 = vmatpush1.bf16.xpose.msra.mxu0 0
    %5937 = vmatprep.subr.bf16.mxu0 0
    %5938 = vmatpush1.bf16.xpose.msra.mxu0 0
    %5939 = vmatprep.subr.bf16.mxu0 0
    %5940 = vmatpush1.bf16.xpose.msra.mxu0 0
    %5941 = vmatprep.subr.bf16.mxu0 0
    %5942 = vmatpush1.bf16.xpose.msra.mxu0 0
    %5943 = vmatprep.subr.bf16.mxu0 0
    %5944 = vmatpush1.bf16.xpose.msra.mxu0 0
    %5945 = vmatprep.subr.bf16.mxu0 0
    %5946 = vmatpush1.bf16.xpose.msra.mxu0 0
    %5947 = vmatprep.subr.bf16.mxu0 0
    %5948 = vmatpush1.bf16.xpose.msra.mxu0 0
    %5949 = vmatprep.mubr.bf16.mxu0 0
    %5950 = vmatmul.mubr.bf16.gmra.mrb[0].mxu0 %v5912
    %v5951 = vpop.f32.mrb[0].mxu0
    %v5952 = vadd.f32 0.0, %v5951
    %v5953 = vpop.f32.mrb[0].mxu0
    %v5954 = vpop.f32.mrb[0].mxu0
    %v5955 = vpop.f32.mrb[0].mxu0
    %5956 = vdwg.mxu0
    %v5958 = vsel %vm168, %v5806, 0
    %v5961 = vsel %vm168, %v5814, 0
    %5963 = vmatprep.subr.bf16.mxu0 0
    %5964 = vmatpush1.bf16.xpose.msra.mxu0 %v5961
    %5965 = vmatprep.subr.bf16.mxu0 0
    %5966 = vmatpush1.bf16.xpose.msra.mxu0 0
    %5967 = vmatprep.subr.bf16.mxu0 0
    %5968 = vmatpush1.bf16.xpose.msra.mxu0 0
    %5969 = vmatprep.subr.bf16.mxu0 0
    %5970 = vmatpush1.bf16.xpose.msra.mxu0 0
    %5971 = vmatprep.subr.bf16.mxu0 0
    %5972 = vmatpush1.bf16.xpose.msra.mxu0 0
    %5973 = vmatprep.subr.bf16.mxu0 0
    %5974 = vmatpush1.bf16.xpose.msra.mxu0 0
    %5975 = vmatprep.subr.bf16.mxu0 0
    %5976 = vmatpush1.bf16.xpose.msra.mxu0 0
    %5977 = vmatprep.subr.bf16.mxu0 0
    %5978 = vmatpush1.bf16.xpose.msra.mxu0 0
    %5979 = vmatprep.subr.bf16.mxu0 0
    %5980 = vmatpush1.bf16.xpose.msra.mxu0 0
    %5981 = vmatprep.subr.bf16.mxu0 0
    %5982 = vmatpush1.bf16.xpose.msra.mxu0 0
    %5983 = vmatprep.subr.bf16.mxu0 0
    %5984 = vmatpush1.bf16.xpose.msra.mxu0 0
    %5985 = vmatprep.subr.bf16.mxu0 0
    %5986 = vmatpush1.bf16.xpose.msra.mxu0 0
    %5987 = vmatprep.subr.bf16.mxu0 0
    %5988 = vmatpush1.bf16.xpose.msra.mxu0 0
    %5989 = vmatprep.subr.bf16.mxu0 0
    %5990 = vmatpush1.bf16.xpose.msra.mxu0 0
    %5991 = vmatprep.subr.bf16.mxu0 0
    %5992 = vmatpush1.bf16.xpose.msra.mxu0 0
    %5993 = vmatprep.subr.bf16.mxu0 0
    %5994 = vmatpush1.bf16.xpose.msra.mxu0 0
    %5995 = vmatprep.mubr.bf16.mxu0 0
    %5996 = vmatmul.mubr.bf16.gmra.mrb[0].mxu0 %v5958
    %v5997 = vpop.f32.mrb[0].mxu0
    %v5998 = vadd.f32 0.0, %v5997
    %v5999 = vpop.f32.mrb[0].mxu0
    %v6000 = vpop.f32.mrb[0].mxu0
    %v6001 = vpop.f32.mrb[0].mxu0
    %6002 = vdwg.mxu0
    %v6004 = vsel %vm168, %v5807, 0
    %v6007 = vsel %vm168, %v5815, 0
    %6009 = vmatprep.subr.bf16.mxu0 0
    %6010 = vmatpush1.bf16.xpose.msra.mxu0 %v6007
    %6011 = vmatprep.subr.bf16.mxu0 0
    %6012 = vmatpush1.bf16.xpose.msra.mxu0 0
    %6013 = vmatprep.subr.bf16.mxu0 0
    %6014 = vmatpush1.bf16.xpose.msra.mxu0 0
    %6015 = vmatprep.subr.bf16.mxu0 0
    %6016 = vmatpush1.bf16.xpose.msra.mxu0 0
    %6017 = vmatprep.subr.bf16.mxu0 0
    %6018 = vmatpush1.bf16.xpose.msra.mxu0 0
    %6019 = vmatprep.subr.bf16.mxu0 0
    %6020 = vmatpush1.bf16.xpose.msra.mxu0 0
    %6021 = vmatprep.subr.bf16.mxu0 0
    %6022 = vmatpush1.bf16.xpose.msra.mxu0 0
    %6023 = vmatprep.subr.bf16.mxu0 0
    %6024 = vmatpush1.bf16.xpose.msra.mxu0 0
    %6025 = vmatprep.subr.bf16.mxu0 0
    %6026 = vmatpush1.bf16.xpose.msra.mxu0 0
    %6027 = vmatprep.subr.bf16.mxu0 0
    %6028 = vmatpush1.bf16.xpose.msra.mxu0 0
    %6029 = vmatprep.subr.bf16.mxu0 0
    %6030 = vmatpush1.bf16.xpose.msra.mxu0 0
    %6031 = vmatprep.subr.bf16.mxu0 0
    %6032 = vmatpush1.bf16.xpose.msra.mxu0 0
    %6033 = vmatprep.subr.bf16.mxu0 0
    %6034 = vmatpush1.bf16.xpose.msra.mxu0 0
    %6035 = vmatprep.subr.bf16.mxu0 0
    %6036 = vmatpush1.bf16.xpose.msra.mxu0 0
    %6037 = vmatprep.subr.bf16.mxu0 0
    %6038 = vmatpush1.bf16.xpose.msra.mxu0 0
    %6039 = vmatprep.subr.bf16.mxu0 0
    %6040 = vmatpush1.bf16.xpose.msra.mxu0 0
    %6041 = vmatprep.mubr.bf16.mxu0 0
    %6042 = vmatmul.mubr.bf16.gmra.mrb[0].mxu0 %v6004
    %v6043 = vpop.f32.mrb[0].mxu0
    %v6044 = vadd.f32 0.0, %v6043
    %v6045 = vpop.f32.mrb[0].mxu0
    %v6046 = vpop.f32.mrb[0].mxu0
    %v6047 = vpop.f32.mrb[0].mxu0
    %6048 = vdwg.mxu0
    %v6050 = vsel %vm168, %v5808, 0
    %v6053 = vsel %vm168, %v5816, 0
    %6055 = vmatprep.subr.bf16.mxu0 0
    %6056 = vmatpush1.bf16.xpose.msra.mxu0 %v6053
    %6057 = vmatprep.subr.bf16.mxu0 0
    %6058 = vmatpush1.bf16.xpose.msra.mxu0 0
    %6059 = vmatprep.subr.bf16.mxu0 0
    %6060 = vmatpush1.bf16.xpose.msra.mxu0 0
    %6061 = vmatprep.subr.bf16.mxu0 0
    %6062 = vmatpush1.bf16.xpose.msra.mxu0 0
    %6063 = vmatprep.subr.bf16.mxu0 0
    %6064 = vmatpush1.bf16.xpose.msra.mxu0 0
    %6065 = vmatprep.subr.bf16.mxu0 0
    %6066 = vmatpush1.bf16.xpose.msra.mxu0 0
    %6067 = vmatprep.subr.bf16.mxu0 0
    %6068 = vmatpush1.bf16.xpose.msra.mxu0 0
    %6069 = vmatprep.subr.bf16.mxu0 0
    %6070 = vmatpush1.bf16.xpose.msra.mxu0 0
    %6071 = vmatprep.subr.bf16.mxu0 0
    %6072 = vmatpush1.bf16.xpose.msra.mxu0 0
    %6073 = vmatprep.subr.bf16.mxu0 0
    %6074 = vmatpush1.bf16.xpose.msra.mxu0 0
    %6075 = vmatprep.subr.bf16.mxu0 0
    %6076 = vmatpush1.bf16.xpose.msra.mxu0 0
    %6077 = vmatprep.subr.bf16.mxu0 0
    %6078 = vmatpush1.bf16.xpose.msra.mxu0 0
    %6079 = vmatprep.subr.bf16.mxu0 0
    %6080 = vmatpush1.bf16.xpose.msra.mxu0 0
    %6081 = vmatprep.subr.bf16.mxu0 0
    %6082 = vmatpush1.bf16.xpose.msra.mxu0 0
    %6083 = vmatprep.subr.bf16.mxu0 0
    %6084 = vmatpush1.bf16.xpose.msra.mxu0 0
    %6085 = vmatprep.subr.bf16.mxu0 0
    %6086 = vmatpush1.bf16.xpose.msra.mxu0 0
    %6087 = vmatprep.mubr.bf16.mxu0 0
    %6088 = vmatmul.mubr.bf16.gmra.mrb[0].mxu0 %v6050
    %v6089 = vpop.f32.mrb[0].mxu0
    %v6090 = vadd.f32 0.0, %v6089
    %v6091 = vpop.f32.mrb[0].mxu0
    %v6092 = vpop.f32.mrb[0].mxu0
    %v6093 = vpop.f32.mrb[0].mxu0
    %6094 = vdwg.mxu0
    %v6096 = vsel %vm168, %v5809, 0
    %v6099 = vsel %vm168, %v5817, 0
    %6101 = vmatprep.subr.bf16.mxu0 0
    %6102 = vmatpush1.bf16.xpose.msra.mxu0 %v6099
    %6103 = vmatprep.subr.bf16.mxu0 0
    %6104 = vmatpush1.bf16.xpose.msra.mxu0 0
    %6105 = vmatprep.subr.bf16.mxu0 0
    %6106 = vmatpush1.bf16.xpose.msra.mxu0 0
    %6107 = vmatprep.subr.bf16.mxu0 0
    %6108 = vmatpush1.bf16.xpose.msra.mxu0 0
    %6109 = vmatprep.subr.bf16.mxu0 0
    %6110 = vmatpush1.bf16.xpose.msra.mxu0 0
    %6111 = vmatprep.subr.bf16.mxu0 0
    %6112 = vmatpush1.bf16.xpose.msra.mxu0 0
    %6113 = vmatprep.subr.bf16.mxu0 0
    %6114 = vmatpush1.bf16.xpose.msra.mxu0 0
    %6115 = vmatprep.subr.bf16.mxu0 0
    %6116 = vmatpush1.bf16.xpose.msra.mxu0 0
    %6117 = vmatprep.subr.bf16.mxu0 0
    %6118 = vmatpush1.bf16.xpose.msra.mxu0 0
    %6119 = vmatprep.subr.bf16.mxu0 0
    %6120 = vmatpush1.bf16.xpose.msra.mxu0 0
    %6121 = vmatprep.subr.bf16.mxu0 0
    %6122 = vmatpush1.bf16.xpose.msra.mxu0 0
    %6123 = vmatprep.subr.bf16.mxu0 0
    %6124 = vmatpush1.bf16.xpose.msra.mxu0 0
    %6125 = vmatprep.subr.bf16.mxu0 0
    %6126 = vmatpush1.bf16.xpose.msra.mxu0 0
    %6127 = vmatprep.subr.bf16.mxu0 0
    %6128 = vmatpush1.bf16.xpose.msra.mxu0 0
    %6129 = vmatprep.subr.bf16.mxu0 0
    %6130 = vmatpush1.bf16.xpose.msra.mxu0 0
    %6131 = vmatprep.subr.bf16.mxu0 0
    %6132 = vmatpush1.bf16.xpose.msra.mxu0 0
    %6133 = vmatprep.mubr.bf16.mxu0 0
    %6134 = vmatmul.mubr.bf16.gmra.mrb[0].mxu0 %v6096
    %v6135 = vpop.f32.mrb[0].mxu0
    %v6136 = vadd.f32 0.0, %v6135
    %v6137 = vpop.f32.mrb[0].mxu0
    %v6138 = vpop.f32.mrb[0].mxu0
    %v6139 = vpop.f32.mrb[0].mxu0
    %6140 = vdwg.mxu0
    %v6142 = vsel %vm168, %v5810, 0
    %v6145 = vsel %vm168, %v5818, 0
    %6147 = vmatprep.subr.bf16.mxu0 0
    %6148 = vmatpush1.bf16.xpose.msra.mxu0 %v6145
    %6149 = vmatprep.subr.bf16.mxu0 0
    %6150 = vmatpush1.bf16.xpose.msra.mxu0 0
    %6151 = vmatprep.subr.bf16.mxu0 0
    %6152 = vmatpush1.bf16.xpose.msra.mxu0 0
    %6153 = vmatprep.subr.bf16.mxu0 0
    %6154 = vmatpush1.bf16.xpose.msra.mxu0 0
    %6155 = vmatprep.subr.bf16.mxu0 0
    %6156 = vmatpush1.bf16.xpose.msra.mxu0 0
    %6157 = vmatprep.subr.bf16.mxu0 0
    %6158 = vmatpush1.bf16.xpose.msra.mxu0 0
    %6159 = vmatprep.subr.bf16.mxu0 0
    %6160 = vmatpush1.bf16.xpose.msra.mxu0 0
    %6161 = vmatprep.subr.bf16.mxu0 0
    %6162 = vmatpush1.bf16.xpose.msra.mxu0 0
    %6163 = vmatprep.subr.bf16.mxu0 0
    %6164 = vmatpush1.bf16.xpose.msra.mxu0 0
    %6165 = vmatprep.subr.bf16.mxu0 0
    %6166 = vmatpush1.bf16.xpose.msra.mxu0 0
    %6167 = vmatprep.subr.bf16.mxu0 0
    %6168 = vmatpush1.bf16.xpose.msra.mxu0 0
    %6169 = vmatprep.subr.bf16.mxu0 0
    %6170 = vmatpush1.bf16.xpose.msra.mxu0 0
    %6171 = vmatprep.subr.bf16.mxu0 0
    %6172 = vmatpush1.bf16.xpose.msra.mxu0 0
    %6173 = vmatprep.subr.bf16.mxu0 0
    %6174 = vmatpush1.bf16.xpose.msra.mxu0 0
    %6175 = vmatprep.subr.bf16.mxu0 0
    %6176 = vmatpush1.bf16.xpose.msra.mxu0 0
    %6177 = vmatprep.subr.bf16.mxu0 0
    %6178 = vmatpush1.bf16.xpose.msra.mxu0 0
    %6179 = vmatprep.mubr.bf16.mxu0 0
    %6180 = vmatmul.mubr.bf16.gmra.mrb[0].mxu0 %v6142
    %v6181 = vpop.f32.mrb[0].mxu0
    %v6182 = vadd.f32 0.0, %v6181
    %v6183 = vpop.f32.mrb[0].mxu0
    %v6184 = vpop.f32.mrb[0].mxu0
    %v6185 = vpop.f32.mrb[0].mxu0
    %6186 = vdwg.mxu0
    %v6187 = vmul.f32 %v5860, 0.35355338
    %v6188 = vmul.f32 %v5906, 0.35355338
    %v6189 = vmul.f32 %v5952, 0.35355338
    %v6190 = vmul.f32 %v5998, 0.35355338
    %v6191 = vmul.f32 %v6044, 0.35355338
    %v6192 = vmul.f32 %v6090, 0.35355338
    %v6193 = vmul.f32 %v6136, 0.35355338
    %v6194 = vmul.f32 %v6182, 0.35355338
    %v6195 = vsel %vm522, %v6187, -1e+30
    %v6196 = vsel %vm522, %v6188, -1e+30
    %v6197 = vsel %vm522, %v6189, -1e+30
    %v6198 = vsel %vm522, %v6190, -1e+30
    %v6199 = vsel %vm522, %v6191, -1e+30
    %v6200 = vsel %vm522, %v6192, -1e+30
    %v6201 = vsel %vm522, %v6193, -1e+30
    %v6202 = vsel %vm522, %v6194, -1e+30
    %v6211 = vlaneseq
    %v6212 = vshrl.u32 %v6211, 7
    %v6213 = vsub.s32 0, %v6212
    %v6214 = vrot.slane %v5795, %v6213
    %v6215 = vlaneseq
    %v6216 = vshrl.u32 %v6215, 7
    %v6217 = vsub.s32 0, %v6216
    %v6218 = vrot.slane %v5796, %v6217
    %v6219 = vlaneseq
    %v6220 = vshrl.u32 %v6219, 7
    %v6221 = vsub.s32 0, %v6220
    %v6222 = vrot.slane %v5797, %v6221
    %v6223 = vlaneseq
    %v6224 = vshrl.u32 %v6223, 7
    %v6225 = vsub.s32 0, %v6224
    %v6226 = vrot.slane %v5798, %v6225
    %v6227 = vlaneseq
    %v6228 = vshrl.u32 %v6227, 7
    %v6229 = vsub.s32 0, %v6228
    %v6230 = vrot.slane %v5799, %v6229
    %v6231 = vlaneseq
    %v6232 = vshrl.u32 %v6231, 7
    %v6233 = vsub.s32 0, %v6232
    %v6234 = vrot.slane %v5800, %v6233
    %v6235 = vlaneseq
    %v6236 = vshrl.u32 %v6235, 7
    %v6237 = vsub.s32 0, %v6236
    %v6238 = vrot.slane %v5801, %v6237
    %v6239 = vlaneseq
    %v6240 = vshrl.u32 %v6239, 7
    %v6241 = vsub.s32 0, %v6240
    %v6242 = vrot.slane %v5802, %v6241
    %v6251 = vmul.f32 %v5707, %v6214
    %v6252 = vmul.f32 %v5710, %v6218
    %v6253 = vmul.f32 %v5757, %v6222
    %v6254 = vmul.f32 %v5759, %v6226
    %v6255 = vmul.f32 %v5763, %v6230
    %v6256 = vmul.f32 %v5765, %v6234
    %v6257 = vmul.f32 %v5769, %v6238
    %v6258 = vmul.f32 %v5771, %v6242
    %v6259 = vsel %vm168, %v6251, 0.0
    %6260 = vadd.xlane.f32.xlu0 %v6259
    %v6261 = vpop.xlane.xlu0 %6260
    %v6262 = vsel %vm168, %v6252, 0.0
    %6263 = vadd.xlane.f32.xlu0 %v6262
    %v6264 = vpop.xlane.xlu0 %6263
    %v6265 = vsel %vm168, %v6253, 0.0
    %6266 = vadd.xlane.f32.xlu0 %v6265
    %v6267 = vpop.xlane.xlu0 %6266
    %v6268 = vsel %vm168, %v6254, 0.0
    %6269 = vadd.xlane.f32.xlu0 %v6268
    %v6270 = vpop.xlane.xlu0 %6269
    %v6271 = vsel %vm168, %v6255, 0.0
    %6272 = vadd.xlane.f32.xlu0 %v6271
    %v6273 = vpop.xlane.xlu0 %6272
    %v6274 = vsel %vm168, %v6256, 0.0
    %6275 = vadd.xlane.f32.xlu0 %v6274
    %v6276 = vpop.xlane.xlu0 %6275
    %v6277 = vsel %vm168, %v6257, 0.0
    %6278 = vadd.xlane.f32.xlu0 %v6277
    %v6279 = vpop.xlane.xlu0 %6278
    %v6280 = vsel %vm168, %v6258, 0.0
    %6281 = vadd.xlane.f32.xlu0 %v6280
    %v6282 = vpop.xlane.xlu0 %6281
    %v6283 = vmul.f32 %v6261, 0.35355338
    %v6284 = vmul.f32 %v6264, 0.35355338
    %v6285 = vmul.f32 %v6267, 0.35355338
    %v6286 = vmul.f32 %v6270, 0.35355338
    %v6287 = vmul.f32 %v6273, 0.35355338
    %v6288 = vmul.f32 %v6276, 0.35355338
    %v6289 = vmul.f32 %v6279, 0.35355338
    %v6290 = vmul.f32 %v6282, 0.35355338
    %v6291 = vsel %vm168, %v6195, -inf
    %6292 = vmax.xlane.f32.xlu0 %v6291
    %v6293 = vpop.xlane.xlu0 %6292
    %v6294 = vsel %vm168, %v6196, -inf
    %6295 = vmax.xlane.f32.xlu0 %v6294
    %v6296 = vpop.xlane.xlu0 %6295
    %v6297 = vsel %vm168, %v6197, -inf
    %6298 = vmax.xlane.f32.xlu0 %v6297
    %v6299 = vpop.xlane.xlu0 %6298
    %v6300 = vsel %vm168, %v6198, -inf
    %6301 = vmax.xlane.f32.xlu0 %v6300
    %v6302 = vpop.xlane.xlu0 %6301
    %v6303 = vsel %vm168, %v6199, -inf
    %6304 = vmax.xlane.f32.xlu0 %v6303
    %v6305 = vpop.xlane.xlu0 %6304
    %v6306 = vsel %vm168, %v6200, -inf
    %6307 = vmax.xlane.f32.xlu0 %v6306
    %v6308 = vpop.xlane.xlu0 %6307
    %v6309 = vsel %vm168, %v6201, -inf
    %6310 = vmax.xlane.f32.xlu0 %v6309
    %v6311 = vpop.xlane.xlu0 %6310
    %v6312 = vsel %vm168, %v6202, -inf
    %6313 = vmax.xlane.f32.xlu0 %v6312
    %v6314 = vpop.xlane.xlu0 %6313
    %v6315 = vmax.f32 %v6293, %v6283
    %v6316 = vmax.f32 %v6296, %v6284
    %v6317 = vmax.f32 %v6299, %v6285
    %v6318 = vmax.f32 %v6302, %v6286
    %v6319 = vmax.f32 %v6305, %v6287
    %v6320 = vmax.f32 %v6308, %v6288
    %v6321 = vmax.f32 %v6311, %v6289
    %v6322 = vmax.f32 %v6314, %v6290
    %v6323 = vsub.f32 %v6195, %v6315
    %v6324 = vsub.f32 %v6196, %v6316
    %v6325 = vsub.f32 %v6197, %v6317
    %v6326 = vsub.f32 %v6198, %v6318
    %v6327 = vsub.f32 %v6199, %v6319
    %v6328 = vsub.f32 %v6200, %v6320
    %v6329 = vsub.f32 %v6201, %v6321
    %v6330 = vsub.f32 %v6202, %v6322
    %v6331 = vmul.f32 %v6323, 1.442695
    %v6332 = vpow.pop %v6331
    %v6333 = vmul.f32 %v6324, 1.442695
    %v6334 = vpow.pop %v6333
    %v6335 = vmul.f32 %v6325, 1.442695
    %v6336 = vpow.pop %v6335
    %v6337 = vmul.f32 %v6326, 1.442695
    %v6338 = vpow.pop %v6337
    %v6339 = vmul.f32 %v6327, 1.442695
    %v6340 = vpow.pop %v6339
    %v6341 = vmul.f32 %v6328, 1.442695
    %v6342 = vpow.pop %v6341
    %v6343 = vmul.f32 %v6329, 1.442695
    %v6344 = vpow.pop %v6343
    %v6345 = vmul.f32 %v6330, 1.442695
    %v6346 = vpow.pop %v6345
    %v6347 = vsel %vm522, %v6332, 0.0
    %v6348 = vsel %vm522, %v6334, 0.0
    %v6349 = vsel %vm522, %v6336, 0.0
    %v6350 = vsel %vm522, %v6338, 0.0
    %v6351 = vsel %vm522, %v6340, 0.0
    %v6352 = vsel %vm522, %v6342, 0.0
    %v6353 = vsel %vm522, %v6344, 0.0
    %v6354 = vsel %vm522, %v6346, 0.0
    %v6355 = vsub.f32 %v6283, %v6315
    %v6356 = vsub.f32 %v6284, %v6316
    %v6357 = vsub.f32 %v6285, %v6317
    %v6358 = vsub.f32 %v6286, %v6318
    %v6359 = vsub.f32 %v6287, %v6319
    %v6360 = vsub.f32 %v6288, %v6320
    %v6361 = vsub.f32 %v6289, %v6321
    %v6362 = vsub.f32 %v6290, %v6322
    %v6363 = vmul.f32 %v6355, 1.442695
    %v6364 = vpow.pop %v6363
    %v6365 = vmul.f32 %v6356, 1.442695
    %v6366 = vpow.pop %v6365
    %v6367 = vmul.f32 %v6357, 1.442695
    %v6368 = vpow.pop %v6367
    %v6369 = vmul.f32 %v6358, 1.442695
    %v6370 = vpow.pop %v6369
    %v6371 = vmul.f32 %v6359, 1.442695
    %v6372 = vpow.pop %v6371
    %v6373 = vmul.f32 %v6360, 1.442695
    %v6374 = vpow.pop %v6373
    %v6375 = vmul.f32 %v6361, 1.442695
    %v6376 = vpow.pop %v6375
    %v6377 = vmul.f32 %v6362, 1.442695
    %v6378 = vpow.pop %v6377
    %v6379 = vmul.f32 %v54, %v6364
    %v6380 = vmul.f32 %v54, %v6366
    %v6381 = vmul.f32 %v54, %v6368
    %v6382 = vmul.f32 %v54, %v6370
    %v6383 = vmul.f32 %v54, %v6372
    %v6384 = vmul.f32 %v54, %v6374
    %v6385 = vmul.f32 %v54, %v6376
    %v6386 = vmul.f32 %v54, %v6378
    %v6387 = vsel %vm168, %v6347, 0.0
    %6388 = vadd.xlane.f32.xlu0 %v6387
    %v6389 = vpop.xlane.xlu0 %6388
    %v6390 = vsel %vm168, %v6348, 0.0
    %6391 = vadd.xlane.f32.xlu0 %v6390
    %v6392 = vpop.xlane.xlu0 %6391
    %v6393 = vsel %vm168, %v6349, 0.0
    %6394 = vadd.xlane.f32.xlu0 %v6393
    %v6395 = vpop.xlane.xlu0 %6394
    %v6396 = vsel %vm168, %v6350, 0.0
    %6397 = vadd.xlane.f32.xlu0 %v6396
    %v6398 = vpop.xlane.xlu0 %6397
    %v6399 = vsel %vm168, %v6351, 0.0
    %6400 = vadd.xlane.f32.xlu0 %v6399
    %v6401 = vpop.xlane.xlu0 %6400
    %v6402 = vsel %vm168, %v6352, 0.0
    %6403 = vadd.xlane.f32.xlu0 %v6402
    %v6404 = vpop.xlane.xlu0 %6403
    %v6405 = vsel %vm168, %v6353, 0.0
    %6406 = vadd.xlane.f32.xlu0 %v6405
    %v6407 = vpop.xlane.xlu0 %6406
    %v6408 = vsel %vm168, %v6354, 0.0
    %6409 = vadd.xlane.f32.xlu0 %v6408
    %v6410 = vpop.xlane.xlu0 %6409
    %v6411 = vadd.f32 %v6389, %v6379
    %v6412 = vadd.f32 %v6392, %v6380
    %v6413 = vadd.f32 %v6395, %v6381
    %v6414 = vadd.f32 %v6398, %v6382
    %v6415 = vadd.f32 %v6401, %v6383
    %v6416 = vadd.f32 %v6404, %v6384
    %v6417 = vadd.f32 %v6407, %v6385
    %v6418 = vadd.f32 %v6410, %v6386
    %v6419 = vpack.c.bf16 %v6347, %v6347
    %v6420 = vpack.c.bf16 %v6348, %v6348
    %v6421 = vpack.c.bf16 %v6349, %v6349
    %v6422 = vpack.c.bf16 %v6350, %v6350
    %v6423 = vpack.c.bf16 %v6351, %v6351
    %v6424 = vpack.c.bf16 %v6352, %v6352
    %v6425 = vpack.c.bf16 %v6353, %v6353
    %v6426 = vpack.c.bf16 %v6354, %v6354
    %v6427 = vmul.f32 %v6379, %v6214
    %v6428 = vmul.f32 %v6380, %v6218
    %v6429 = vmul.f32 %v6381, %v6222
    %v6430 = vmul.f32 %v6382, %v6226
    %v6431 = vmul.f32 %v6383, %v6230
    %v6432 = vmul.f32 %v6384, %v6234
    %v6433 = vmul.f32 %v6385, %v6238
    %v6434 = vmul.f32 %v6386, %v6242
    %v6436 = vsel %vm168, %v6419, 0
    %v6438 = vsel %vm766, %v5803, 0
    %6440 = vmatprep.subr.bf16.mxu0 0
    %6441 = vmatpush1.bf16.msra.mxu0 %v6438
    %6442 = vmatprep.subr.bf16.mxu0 0
    %6443 = vmatpush1.bf16.msra.mxu0 0
    %6444 = vmatprep.subr.bf16.mxu0 0
    %6445 = vmatpush1.bf16.msra.mxu0 0
    %6446 = vmatprep.subr.bf16.mxu0 0
    %6447 = vmatpush1.bf16.msra.mxu0 0
    %6448 = vmatprep.subr.bf16.mxu0 0
    %6449 = vmatpush1.bf16.msra.mxu0 0
    %6450 = vmatprep.subr.bf16.mxu0 0
    %6451 = vmatpush1.bf16.msra.mxu0 0
    %6452 = vmatprep.subr.bf16.mxu0 0
    %6453 = vmatpush1.bf16.msra.mxu0 0
    %6454 = vmatprep.subr.bf16.mxu0 0
    %6455 = vmatpush1.bf16.msra.mxu0 0
    %6456 = vmatprep.subr.bf16.mxu0 0
    %6457 = vmatpush1.bf16.msra.mxu0 0
    %6458 = vmatprep.subr.bf16.mxu0 0
    %6459 = vmatpush1.bf16.msra.mxu0 0
    %6460 = vmatprep.subr.bf16.mxu0 0
    %6461 = vmatpush1.bf16.msra.mxu0 0
    %6462 = vmatprep.subr.bf16.mxu0 0
    %6463 = vmatpush1.bf16.msra.mxu0 0
    %6464 = vmatprep.subr.bf16.mxu0 0
    %6465 = vmatpush1.bf16.msra.mxu0 0
    %6466 = vmatprep.subr.bf16.mxu0 0
    %6467 = vmatpush1.bf16.msra.mxu0 0
    %6468 = vmatprep.subr.bf16.mxu0 0
    %6469 = vmatpush1.bf16.msra.mxu0 0
    %6470 = vmatprep.subr.bf16.mxu0 0
    %6471 = vmatpush1.bf16.msra.mxu0 0
    %6472 = vmatprep.mubr.bf16.mxu0 0
    %6473 = vmatmul.mubr.bf16.gmra.mrb[0].mxu0 %v6436
    %v6474 = vpop.f32.mrb[0].mxu0
    %v6475 = vadd.f32 %v6427, %v6474
    %v6476 = vpop.f32.mrb[0].mxu0
    %v6477 = vpop.f32.mrb[0].mxu0
    %v6478 = vpop.f32.mrb[0].mxu0
    %6479 = vdwg.mxu0
    %v6481 = vsel %vm168, %v6420, 0
    %v6483 = vsel %vm766, %v5804, 0
    %6485 = vmatprep.subr.bf16.mxu0 0
    %6486 = vmatpush1.bf16.msra.mxu0 %v6483
    %6487 = vmatprep.subr.bf16.mxu0 0
    %6488 = vmatpush1.bf16.msra.mxu0 0
    %6489 = vmatprep.subr.bf16.mxu0 0
    %6490 = vmatpush1.bf16.msra.mxu0 0
    %6491 = vmatprep.subr.bf16.mxu0 0
    %6492 = vmatpush1.bf16.msra.mxu0 0
    %6493 = vmatprep.subr.bf16.mxu0 0
    %6494 = vmatpush1.bf16.msra.mxu0 0
    %6495 = vmatprep.subr.bf16.mxu0 0
    %6496 = vmatpush1.bf16.msra.mxu0 0
    %6497 = vmatprep.subr.bf16.mxu0 0
    %6498 = vmatpush1.bf16.msra.mxu0 0
    %6499 = vmatprep.subr.bf16.mxu0 0
    %6500 = vmatpush1.bf16.msra.mxu0 0
    %6501 = vmatprep.subr.bf16.mxu0 0
    %6502 = vmatpush1.bf16.msra.mxu0 0
    %6503 = vmatprep.subr.bf16.mxu0 0
    %6504 = vmatpush1.bf16.msra.mxu0 0
    %6505 = vmatprep.subr.bf16.mxu0 0
    %6506 = vmatpush1.bf16.msra.mxu0 0
    %6507 = vmatprep.subr.bf16.mxu0 0
    %6508 = vmatpush1.bf16.msra.mxu0 0
    %6509 = vmatprep.subr.bf16.mxu0 0
    %6510 = vmatpush1.bf16.msra.mxu0 0
    %6511 = vmatprep.subr.bf16.mxu0 0
    %6512 = vmatpush1.bf16.msra.mxu0 0
    %6513 = vmatprep.subr.bf16.mxu0 0
    %6514 = vmatpush1.bf16.msra.mxu0 0
    %6515 = vmatprep.subr.bf16.mxu0 0
    %6516 = vmatpush1.bf16.msra.mxu0 0
    %6517 = vmatprep.mubr.bf16.mxu0 0
    %6518 = vmatmul.mubr.bf16.gmra.mrb[0].mxu0 %v6481
    %v6519 = vpop.f32.mrb[0].mxu0
    %v6520 = vadd.f32 %v6428, %v6519
    %v6521 = vpop.f32.mrb[0].mxu0
    %v6522 = vpop.f32.mrb[0].mxu0
    %v6523 = vpop.f32.mrb[0].mxu0
    %6524 = vdwg.mxu0
    %v6526 = vsel %vm168, %v6421, 0
    %v6528 = vsel %vm766, %v5805, 0
    %6530 = vmatprep.subr.bf16.mxu0 0
    %6531 = vmatpush1.bf16.msra.mxu0 %v6528
    %6532 = vmatprep.subr.bf16.mxu0 0
    %6533 = vmatpush1.bf16.msra.mxu0 0
    %6534 = vmatprep.subr.bf16.mxu0 0
    %6535 = vmatpush1.bf16.msra.mxu0 0
    %6536 = vmatprep.subr.bf16.mxu0 0
    %6537 = vmatpush1.bf16.msra.mxu0 0
    %6538 = vmatprep.subr.bf16.mxu0 0
    %6539 = vmatpush1.bf16.msra.mxu0 0
    %6540 = vmatprep.subr.bf16.mxu0 0
    %6541 = vmatpush1.bf16.msra.mxu0 0
    %6542 = vmatprep.subr.bf16.mxu0 0
    %6543 = vmatpush1.bf16.msra.mxu0 0
    %6544 = vmatprep.subr.bf16.mxu0 0
    %6545 = vmatpush1.bf16.msra.mxu0 0
    %6546 = vmatprep.subr.bf16.mxu0 0
    %6547 = vmatpush1.bf16.msra.mxu0 0
    %6548 = vmatprep.subr.bf16.mxu0 0
    %6549 = vmatpush1.bf16.msra.mxu0 0
    %6550 = vmatprep.subr.bf16.mxu0 0
    %6551 = vmatpush1.bf16.msra.mxu0 0
    %6552 = vmatprep.subr.bf16.mxu0 0
    %6553 = vmatpush1.bf16.msra.mxu0 0
    %6554 = vmatprep.subr.bf16.mxu0 0
    %6555 = vmatpush1.bf16.msra.mxu0 0
    %6556 = vmatprep.subr.bf16.mxu0 0
    %6557 = vmatpush1.bf16.msra.mxu0 0
    %6558 = vmatprep.subr.bf16.mxu0 0
    %6559 = vmatpush1.bf16.msra.mxu0 0
    %6560 = vmatprep.subr.bf16.mxu0 0
    %6561 = vmatpush1.bf16.msra.mxu0 0
    %6562 = vmatprep.mubr.bf16.mxu0 0
    %6563 = vmatmul.mubr.bf16.gmra.mrb[0].mxu0 %v6526
    %v6564 = vpop.f32.mrb[0].mxu0
    %v6565 = vadd.f32 %v6429, %v6564
    %v6566 = vpop.f32.mrb[0].mxu0
    %v6567 = vpop.f32.mrb[0].mxu0
    %v6568 = vpop.f32.mrb[0].mxu0
    %6569 = vdwg.mxu0
    %v6571 = vsel %vm168, %v6422, 0
    %v6573 = vsel %vm766, %v5806, 0
    %6575 = vmatprep.subr.bf16.mxu0 0
    %6576 = vmatpush1.bf16.msra.mxu0 %v6573
    %6577 = vmatprep.subr.bf16.mxu0 0
    %6578 = vmatpush1.bf16.msra.mxu0 0
    %6579 = vmatprep.subr.bf16.mxu0 0
    %6580 = vmatpush1.bf16.msra.mxu0 0
    %6581 = vmatprep.subr.bf16.mxu0 0
    %6582 = vmatpush1.bf16.msra.mxu0 0
    %6583 = vmatprep.subr.bf16.mxu0 0
    %6584 = vmatpush1.bf16.msra.mxu0 0
    %6585 = vmatprep.subr.bf16.mxu0 0
    %6586 = vmatpush1.bf16.msra.mxu0 0
    %6587 = vmatprep.subr.bf16.mxu0 0
    %6588 = vmatpush1.bf16.msra.mxu0 0
    %6589 = vmatprep.subr.bf16.mxu0 0
    %6590 = vmatpush1.bf16.msra.mxu0 0
    %6591 = vmatprep.subr.bf16.mxu0 0
    %6592 = vmatpush1.bf16.msra.mxu0 0
    %6593 = vmatprep.subr.bf16.mxu0 0
    %6594 = vmatpush1.bf16.msra.mxu0 0
    %6595 = vmatprep.subr.bf16.mxu0 0
    %6596 = vmatpush1.bf16.msra.mxu0 0
    %6597 = vmatprep.subr.bf16.mxu0 0
    %6598 = vmatpush1.bf16.msra.mxu0 0
    %6599 = vmatprep.subr.bf16.mxu0 0
    %6600 = vmatpush1.bf16.msra.mxu0 0
    %6601 = vmatprep.subr.bf16.mxu0 0
    %6602 = vmatpush1.bf16.msra.mxu0 0
    %6603 = vmatprep.subr.bf16.mxu0 0
    %6604 = vmatpush1.bf16.msra.mxu0 0
    %6605 = vmatprep.subr.bf16.mxu0 0
    %6606 = vmatpush1.bf16.msra.mxu0 0
    %6607 = vmatprep.mubr.bf16.mxu0 0
    %6608 = vmatmul.mubr.bf16.gmra.mrb[0].mxu0 %v6571
    %v6609 = vpop.f32.mrb[0].mxu0
    %v6610 = vadd.f32 %v6430, %v6609
    %v6611 = vpop.f32.mrb[0].mxu0
    %v6612 = vpop.f32.mrb[0].mxu0
    %v6613 = vpop.f32.mrb[0].mxu0
    %6614 = vdwg.mxu0
    %v6616 = vsel %vm168, %v6423, 0
    %v6618 = vsel %vm766, %v5807, 0
    %6620 = vmatprep.subr.bf16.mxu0 0
    %6621 = vmatpush1.bf16.msra.mxu0 %v6618
    %6622 = vmatprep.subr.bf16.mxu0 0
    %6623 = vmatpush1.bf16.msra.mxu0 0
    %6624 = vmatprep.subr.bf16.mxu0 0
    %6625 = vmatpush1.bf16.msra.mxu0 0
    %6626 = vmatprep.subr.bf16.mxu0 0
    %6627 = vmatpush1.bf16.msra.mxu0 0
    %6628 = vmatprep.subr.bf16.mxu0 0
    %6629 = vmatpush1.bf16.msra.mxu0 0
    %6630 = vmatprep.subr.bf16.mxu0 0
    %6631 = vmatpush1.bf16.msra.mxu0 0
    %6632 = vmatprep.subr.bf16.mxu0 0
    %6633 = vmatpush1.bf16.msra.mxu0 0
    %6634 = vmatprep.subr.bf16.mxu0 0
    %6635 = vmatpush1.bf16.msra.mxu0 0
    %6636 = vmatprep.subr.bf16.mxu0 0
    %6637 = vmatpush1.bf16.msra.mxu0 0
    %6638 = vmatprep.subr.bf16.mxu0 0
    %6639 = vmatpush1.bf16.msra.mxu0 0
    %6640 = vmatprep.subr.bf16.mxu0 0
    %6641 = vmatpush1.bf16.msra.mxu0 0
    %6642 = vmatprep.subr.bf16.mxu0 0
    %6643 = vmatpush1.bf16.msra.mxu0 0
    %6644 = vmatprep.subr.bf16.mxu0 0
    %6645 = vmatpush1.bf16.msra.mxu0 0
    %6646 = vmatprep.subr.bf16.mxu0 0
    %6647 = vmatpush1.bf16.msra.mxu0 0
    %6648 = vmatprep.subr.bf16.mxu0 0
    %6649 = vmatpush1.bf16.msra.mxu0 0
    %6650 = vmatprep.subr.bf16.mxu0 0
    %6651 = vmatpush1.bf16.msra.mxu0 0
    %6652 = vmatprep.mubr.bf16.mxu0 0
    %6653 = vmatmul.mubr.bf16.gmra.mrb[0].mxu0 %v6616
    %v6654 = vpop.f32.mrb[0].mxu0
    %v6655 = vadd.f32 %v6431, %v6654
    %v6656 = vpop.f32.mrb[0].mxu0
    %v6657 = vpop.f32.mrb[0].mxu0
    %v6658 = vpop.f32.mrb[0].mxu0
    %6659 = vdwg.mxu0
    %v6661 = vsel %vm168, %v6424, 0
    %v6663 = vsel %vm766, %v5808, 0
    %6665 = vmatprep.subr.bf16.mxu0 0
    %6666 = vmatpush1.bf16.msra.mxu0 %v6663
    %6667 = vmatprep.subr.bf16.mxu0 0
    %6668 = vmatpush1.bf16.msra.mxu0 0
    %6669 = vmatprep.subr.bf16.mxu0 0
    %6670 = vmatpush1.bf16.msra.mxu0 0
    %6671 = vmatprep.subr.bf16.mxu0 0
    %6672 = vmatpush1.bf16.msra.mxu0 0
    %6673 = vmatprep.subr.bf16.mxu0 0
    %6674 = vmatpush1.bf16.msra.mxu0 0
    %6675 = vmatprep.subr.bf16.mxu0 0
    %6676 = vmatpush1.bf16.msra.mxu0 0
    %6677 = vmatprep.subr.bf16.mxu0 0
    %6678 = vmatpush1.bf16.msra.mxu0 0
    %6679 = vmatprep.subr.bf16.mxu0 0
    %6680 = vmatpush1.bf16.msra.mxu0 0
    %6681 = vmatprep.subr.bf16.mxu0 0
    %6682 = vmatpush1.bf16.msra.mxu0 0
    %6683 = vmatprep.subr.bf16.mxu0 0
    %6684 = vmatpush1.bf16.msra.mxu0 0
    %6685 = vmatprep.subr.bf16.mxu0 0
    %6686 = vmatpush1.bf16.msra.mxu0 0
    %6687 = vmatprep.subr.bf16.mxu0 0
    %6688 = vmatpush1.bf16.msra.mxu0 0
    %6689 = vmatprep.subr.bf16.mxu0 0
    %6690 = vmatpush1.bf16.msra.mxu0 0
    %6691 = vmatprep.subr.bf16.mxu0 0
    %6692 = vmatpush1.bf16.msra.mxu0 0
    %6693 = vmatprep.subr.bf16.mxu0 0
    %6694 = vmatpush1.bf16.msra.mxu0 0
    %6695 = vmatprep.subr.bf16.mxu0 0
    %6696 = vmatpush1.bf16.msra.mxu0 0
    %6697 = vmatprep.mubr.bf16.mxu0 0
    %6698 = vmatmul.mubr.bf16.gmra.mrb[0].mxu0 %v6661
    %v6699 = vpop.f32.mrb[0].mxu0
    %v6700 = vadd.f32 %v6432, %v6699
    %v6701 = vpop.f32.mrb[0].mxu0
    %v6702 = vpop.f32.mrb[0].mxu0
    %v6703 = vpop.f32.mrb[0].mxu0
    %6704 = vdwg.mxu0
    %v6706 = vsel %vm168, %v6425, 0
    %v6708 = vsel %vm766, %v5809, 0
    %6710 = vmatprep.subr.bf16.mxu0 0
    %6711 = vmatpush1.bf16.msra.mxu0 %v6708
    %6712 = vmatprep.subr.bf16.mxu0 0
    %6713 = vmatpush1.bf16.msra.mxu0 0
    %6714 = vmatprep.subr.bf16.mxu0 0
    %6715 = vmatpush1.bf16.msra.mxu0 0
    %6716 = vmatprep.subr.bf16.mxu0 0
    %6717 = vmatpush1.bf16.msra.mxu0 0
    %6718 = vmatprep.subr.bf16.mxu0 0
    %6719 = vmatpush1.bf16.msra.mxu0 0
    %6720 = vmatprep.subr.bf16.mxu0 0
    %6721 = vmatpush1.bf16.msra.mxu0 0
    %6722 = vmatprep.subr.bf16.mxu0 0
    %6723 = vmatpush1.bf16.msra.mxu0 0
    %6724 = vmatprep.subr.bf16.mxu0 0
    %6725 = vmatpush1.bf16.msra.mxu0 0
    %6726 = vmatprep.subr.bf16.mxu0 0
    %6727 = vmatpush1.bf16.msra.mxu0 0
    %6728 = vmatprep.subr.bf16.mxu0 0
    %6729 = vmatpush1.bf16.msra.mxu0 0
    %6730 = vmatprep.subr.bf16.mxu0 0
    %6731 = vmatpush1.bf16.msra.mxu0 0
    %6732 = vmatprep.subr.bf16.mxu0 0
    %6733 = vmatpush1.bf16.msra.mxu0 0
    %6734 = vmatprep.subr.bf16.mxu0 0
    %6735 = vmatpush1.bf16.msra.mxu0 0
    %6736 = vmatprep.subr.bf16.mxu0 0
    %6737 = vmatpush1.bf16.msra.mxu0 0
    %6738 = vmatprep.subr.bf16.mxu0 0
    %6739 = vmatpush1.bf16.msra.mxu0 0
    %6740 = vmatprep.subr.bf16.mxu0 0
    %6741 = vmatpush1.bf16.msra.mxu0 0
    %6742 = vmatprep.mubr.bf16.mxu0 0
    %6743 = vmatmul.mubr.bf16.gmra.mrb[0].mxu0 %v6706
    %v6744 = vpop.f32.mrb[0].mxu0
    %v6745 = vadd.f32 %v6433, %v6744
    %v6746 = vpop.f32.mrb[0].mxu0
    %v6747 = vpop.f32.mrb[0].mxu0
    %v6748 = vpop.f32.mrb[0].mxu0
    %6749 = vdwg.mxu0
    %v6751 = vsel %vm168, %v6426, 0
    %v6753 = vsel %vm766, %v5810, 0
    %6755 = vmatprep.subr.bf16.mxu0 0
    %6756 = vmatpush1.bf16.msra.mxu0 %v6753
    %6757 = vmatprep.subr.bf16.mxu0 0
    %6758 = vmatpush1.bf16.msra.mxu0 0
    %6759 = vmatprep.subr.bf16.mxu0 0
    %6760 = vmatpush1.bf16.msra.mxu0 0
    %6761 = vmatprep.subr.bf16.mxu0 0
    %6762 = vmatpush1.bf16.msra.mxu0 0
    %6763 = vmatprep.subr.bf16.mxu0 0
    %6764 = vmatpush1.bf16.msra.mxu0 0
    %6765 = vmatprep.subr.bf16.mxu0 0
    %6766 = vmatpush1.bf16.msra.mxu0 0
    %6767 = vmatprep.subr.bf16.mxu0 0
    %6768 = vmatpush1.bf16.msra.mxu0 0
    %6769 = vmatprep.subr.bf16.mxu0 0
    %6770 = vmatpush1.bf16.msra.mxu0 0
    %6771 = vmatprep.subr.bf16.mxu0 0
    %6772 = vmatpush1.bf16.msra.mxu0 0
    %6773 = vmatprep.subr.bf16.mxu0 0
    %6774 = vmatpush1.bf16.msra.mxu0 0
    %6775 = vmatprep.subr.bf16.mxu0 0
    %6776 = vmatpush1.bf16.msra.mxu0 0
    %6777 = vmatprep.subr.bf16.mxu0 0
    %6778 = vmatpush1.bf16.msra.mxu0 0
    %6779 = vmatprep.subr.bf16.mxu0 0
    %6780 = vmatpush1.bf16.msra.mxu0 0
    %6781 = vmatprep.subr.bf16.mxu0 0
    %6782 = vmatpush1.bf16.msra.mxu0 0
    %6783 = vmatprep.subr.bf16.mxu0 0
    %6784 = vmatpush1.bf16.msra.mxu0 0
    %6785 = vmatprep.subr.bf16.mxu0 0
    %6786 = vmatpush1.bf16.msra.mxu0 0
    %6787 = vmatprep.mubr.bf16.mxu0 0
    %6788 = vmatmul.mubr.bf16.gmra.mrb[0].mxu0 %v6751
    %v6789 = vpop.f32.mrb[0].mxu0
    %v6790 = vadd.f32 %v6434, %v6789
    %v6791 = vpop.f32.mrb[0].mxu0
    %v6792 = vpop.f32.mrb[0].mxu0
    %v6793 = vpop.f32.mrb[0].mxu0
    %6794 = vdwg.mxu0
    %v6795 = vrcp.pop %v6411
    %v6796 = vrcp.pop %v6412
    %v6797 = vrcp.pop %v6413
    %v6798 = vrcp.pop %v6414
    %v6799 = vrcp.pop %v6415
    %v6800 = vrcp.pop %v6416
    %v6801 = vrcp.pop %v6417
    %v6802 = vrcp.pop %v6418
    %v6803 = vmul.f32 %v6475, %v6795
    %v6804 = vmul.f32 %v6520, %v6796
    %v6805 = vmul.f32 %v6565, %v6797
    %v6806 = vmul.f32 %v6610, %v6798
    %v6807 = vmul.f32 %v6655, %v6799
    %v6808 = vmul.f32 %v6700, %v6800
    %v6809 = vmul.f32 %v6745, %v6801
    %v6810 = vmul.f32 %v6790, %v6802
    %s6811 = scalar_lea.vmem %s3, 144
    %v6812 = vld [vmem:[%s6811] sm:$0xf]
    %v6813 = vld [vmem:[%s6811 + $0x4] sm:$0xf]
    %v6814 = vld [vmem:[%s6811 + $0x8] sm:$0xf]
    %v6815 = vld [vmem:[%s6811 + $0xc] sm:$0xf]
    %s6816 = scalar_lea.vmem %s4, 9
    %v6817 = vld [vmem:[%s6816] sm:$0x1]
    %v6819 = vlaneseq
    %v6820 = vshrl.u32 %v6819, 7
    %v6821 = vsub.s32 0, %v6820
    %v6822 = vrot.slane %v6817, %v6821
    %v6828 = vunpack.c.l.b16 %v6812
    %v6829 = vunpack.c.l.b16 %v6813
    %v6830 = vunpack.c.l.b16 %v6814
    %v6831 = vunpack.c.l.b16 %v6815
    %v6832 = vpack.c.b16 %v6829, %v6828
    %v6833 = vpack.c.b16 %v6831, %v6830
    %6836 = vmatprep.subr.bf16.mxu0 0
    %6837 = vmatpush1.bf16.msra.mxu0 %v6832
    %6838 = vmatprep.subr.bf16.mxu0 0
    %6839 = vmatpush1.bf16.msra.mxu0 %v6833
    %6840 = vmatprep.subr.bf16.mxu0 0
    %6841 = vmatpush1.bf16.msra.mxu0 0
    %6842 = vmatprep.subr.bf16.mxu0 0
    %6843 = vmatpush1.bf16.msra.mxu0 0
    %6844 = vmatprep.subr.bf16.mxu0 0
    %6845 = vmatpush1.bf16.msra.mxu0 0
    %6846 = vmatprep.subr.bf16.mxu0 0
    %6847 = vmatpush1.bf16.msra.mxu0 0
    %6848 = vmatprep.subr.bf16.mxu0 0
    %6849 = vmatpush1.bf16.msra.mxu0 0
    %6850 = vmatprep.subr.bf16.mxu0 0
    %6851 = vmatpush1.bf16.msra.mxu0 0
    %6852 = vmatprep.subr.bf16.mxu0 0
    %6853 = vmatpush1.bf16.msra.mxu0 0
    %6854 = vmatprep.subr.bf16.mxu0 0
    %6855 = vmatpush1.bf16.msra.mxu0 0
    %6856 = vmatprep.subr.bf16.mxu0 0
    %6857 = vmatpush1.bf16.msra.mxu0 0
    %6858 = vmatprep.subr.bf16.mxu0 0
    %6859 = vmatpush1.bf16.msra.mxu0 0
    %6860 = vmatprep.subr.bf16.mxu0 0
    %6861 = vmatpush1.bf16.msra.mxu0 0
    %6862 = vmatprep.subr.bf16.mxu0 0
    %6863 = vmatpush1.bf16.msra.mxu0 0
    %6864 = vmatprep.subr.bf16.mxu0 0
    %6865 = vmatpush1.bf16.msra.mxu0 0
    %6866 = vmatprep.subr.bf16.mxu0 0
    %6867 = vmatpush1.bf16.msra.mxu0 0
    %6868 = vmatprep.mubr.bf16.mxu0 0
    %6869 = vmatmul.mubr.bf16.gmra.mrb[0].mxu0 %v4547
    %v6870 = vpop.f32.mrb[0].mxu0
    %v6871 = vadd.f32 %v6822, %v6870
    %v6872 = vpop.f32.mrb[0].mxu0
    %v6873 = vpop.f32.mrb[0].mxu0
    %v6874 = vadd.f32 %v6822, %v6873
    %v6875 = vpop.f32.mrb[0].mxu0
    %6876 = vdwg.mxu0
    %6879 = vrot.lane.b32.xlu0 %v6871, 120
    %v6880 = vpop.permute.xlu0 %6879
    %6881 = vrot.lane.b32.xlu0 %v6874, 120
    %v6882 = vpop.permute.xlu0 %6881
    %6885 = vrot.lane.b32.xlu0 %v6871, 112
    %v6886 = vpop.permute.xlu0 %6885
    %6887 = vrot.lane.b32.xlu0 %v6874, 112
    %v6888 = vpop.permute.xlu0 %6887
    %6891 = vrot.lane.b32.xlu0 %v6871, 104
    %v6892 = vpop.permute.xlu0 %6891
    %6893 = vrot.lane.b32.xlu0 %v6874, 104
    %v6894 = vpop.permute.xlu0 %6893
    %v6897 = vpack.c.bf16 %v5639, %v5639
    %v6898 = vpack.c.bf16 %v5640, %v5640
    %v6899 = vpack.c.bf16 %v5641, %v5641
    %v6900 = vpack.c.bf16 %v5642, %v5642
    %v6901 = vpack.c.bf16 %v5643, %v5643
    %v6902 = vpack.c.bf16 %v5644, %v5644
    %v6903 = vpack.c.bf16 %v5645, %v5645
    %v6904 = vpack.c.bf16 %v5646, %v5646
    %v6905 = vpack.c.bf16 %v6803, %v6803
    %v6906 = vpack.c.bf16 %v6804, %v6804
    %v6907 = vpack.c.bf16 %v6805, %v6805
    %v6908 = vpack.c.bf16 %v6806, %v6806
    %v6909 = vpack.c.bf16 %v6807, %v6807
    %v6910 = vpack.c.bf16 %v6808, %v6808
    %v6911 = vpack.c.bf16 %v6809, %v6809
    %v6912 = vpack.c.bf16 %v6810, %v6810
    %v6914 = vsel %vm168, %v6897, 0
    %v6917 = vsel %vm168, %v6905, 0
    %6919 = vmatprep.subr.bf16.mxu0 0
    %6920 = vmatpush1.bf16.xpose.msra.mxu0 %v6917
    %6921 = vmatprep.subr.bf16.mxu0 0
    %6922 = vmatpush1.bf16.xpose.msra.mxu0 0
    %6923 = vmatprep.subr.bf16.mxu0 0
    %6924 = vmatpush1.bf16.xpose.msra.mxu0 0
    %6925 = vmatprep.subr.bf16.mxu0 0
    %6926 = vmatpush1.bf16.xpose.msra.mxu0 0
    %6927 = vmatprep.subr.bf16.mxu0 0
    %6928 = vmatpush1.bf16.xpose.msra.mxu0 0
    %6929 = vmatprep.subr.bf16.mxu0 0
    %6930 = vmatpush1.bf16.xpose.msra.mxu0 0
    %6931 = vmatprep.subr.bf16.mxu0 0
    %6932 = vmatpush1.bf16.xpose.msra.mxu0 0
    %6933 = vmatprep.subr.bf16.mxu0 0
    %6934 = vmatpush1.bf16.xpose.msra.mxu0 0
    %6935 = vmatprep.subr.bf16.mxu0 0
    %6936 = vmatpush1.bf16.xpose.msra.mxu0 0
    %6937 = vmatprep.subr.bf16.mxu0 0
    %6938 = vmatpush1.bf16.xpose.msra.mxu0 0
    %6939 = vmatprep.subr.bf16.mxu0 0
    %6940 = vmatpush1.bf16.xpose.msra.mxu0 0
    %6941 = vmatprep.subr.bf16.mxu0 0
    %6942 = vmatpush1.bf16.xpose.msra.mxu0 0
    %6943 = vmatprep.subr.bf16.mxu0 0
    %6944 = vmatpush1.bf16.xpose.msra.mxu0 0
    %6945 = vmatprep.subr.bf16.mxu0 0
    %6946 = vmatpush1.bf16.xpose.msra.mxu0 0
    %6947 = vmatprep.subr.bf16.mxu0 0
    %6948 = vmatpush1.bf16.xpose.msra.mxu0 0
    %6949 = vmatprep.subr.bf16.mxu0 0
    %6950 = vmatpush1.bf16.xpose.msra.mxu0 0
    %6951 = vmatprep.mubr.bf16.mxu0 0
    %6952 = vmatmul.mubr.bf16.gmra.mrb[0].mxu0 %v6914
    %v6953 = vpop.f32.mrb[0].mxu0
    %v6954 = vadd.f32 0.0, %v6953
    %v6955 = vpop.f32.mrb[0].mxu0
    %v6956 = vpop.f32.mrb[0].mxu0
    %v6957 = vpop.f32.mrb[0].mxu0
    %6958 = vdwg.mxu0
    %v6960 = vsel %vm168, %v6898, 0
    %v6963 = vsel %vm168, %v6906, 0
    %6965 = vmatprep.subr.bf16.mxu0 0
    %6966 = vmatpush1.bf16.xpose.msra.mxu0 %v6963
    %6967 = vmatprep.subr.bf16.mxu0 0
    %6968 = vmatpush1.bf16.xpose.msra.mxu0 0
    %6969 = vmatprep.subr.bf16.mxu0 0
    %6970 = vmatpush1.bf16.xpose.msra.mxu0 0
    %6971 = vmatprep.subr.bf16.mxu0 0
    %6972 = vmatpush1.bf16.xpose.msra.mxu0 0
    %6973 = vmatprep.subr.bf16.mxu0 0
    %6974 = vmatpush1.bf16.xpose.msra.mxu0 0
    %6975 = vmatprep.subr.bf16.mxu0 0
    %6976 = vmatpush1.bf16.xpose.msra.mxu0 0
    %6977 = vmatprep.subr.bf16.mxu0 0
    %6978 = vmatpush1.bf16.xpose.msra.mxu0 0
    %6979 = vmatprep.subr.bf16.mxu0 0
    %6980 = vmatpush1.bf16.xpose.msra.mxu0 0
    %6981 = vmatprep.subr.bf16.mxu0 0
    %6982 = vmatpush1.bf16.xpose.msra.mxu0 0
    %6983 = vmatprep.subr.bf16.mxu0 0
    %6984 = vmatpush1.bf16.xpose.msra.mxu0 0
    %6985 = vmatprep.subr.bf16.mxu0 0
    %6986 = vmatpush1.bf16.xpose.msra.mxu0 0
    %6987 = vmatprep.subr.bf16.mxu0 0
    %6988 = vmatpush1.bf16.xpose.msra.mxu0 0
    %6989 = vmatprep.subr.bf16.mxu0 0
    %6990 = vmatpush1.bf16.xpose.msra.mxu0 0
    %6991 = vmatprep.subr.bf16.mxu0 0
    %6992 = vmatpush1.bf16.xpose.msra.mxu0 0
    %6993 = vmatprep.subr.bf16.mxu0 0
    %6994 = vmatpush1.bf16.xpose.msra.mxu0 0
    %6995 = vmatprep.subr.bf16.mxu0 0
    %6996 = vmatpush1.bf16.xpose.msra.mxu0 0
    %6997 = vmatprep.mubr.bf16.mxu0 0
    %6998 = vmatmul.mubr.bf16.gmra.mrb[0].mxu0 %v6960
    %v6999 = vpop.f32.mrb[0].mxu0
    %v7000 = vadd.f32 0.0, %v6999
    %v7001 = vpop.f32.mrb[0].mxu0
    %v7002 = vpop.f32.mrb[0].mxu0
    %v7003 = vpop.f32.mrb[0].mxu0
    %7004 = vdwg.mxu0
    %v7006 = vsel %vm168, %v6899, 0
    %v7009 = vsel %vm168, %v6907, 0
    %7011 = vmatprep.subr.bf16.mxu0 0
    %7012 = vmatpush1.bf16.xpose.msra.mxu0 %v7009
    %7013 = vmatprep.subr.bf16.mxu0 0
    %7014 = vmatpush1.bf16.xpose.msra.mxu0 0
    %7015 = vmatprep.subr.bf16.mxu0 0
    %7016 = vmatpush1.bf16.xpose.msra.mxu0 0
    %7017 = vmatprep.subr.bf16.mxu0 0
    %7018 = vmatpush1.bf16.xpose.msra.mxu0 0
    %7019 = vmatprep.subr.bf16.mxu0 0
    %7020 = vmatpush1.bf16.xpose.msra.mxu0 0
    %7021 = vmatprep.subr.bf16.mxu0 0
    %7022 = vmatpush1.bf16.xpose.msra.mxu0 0
    %7023 = vmatprep.subr.bf16.mxu0 0
    %7024 = vmatpush1.bf16.xpose.msra.mxu0 0
    %7025 = vmatprep.subr.bf16.mxu0 0
    %7026 = vmatpush1.bf16.xpose.msra.mxu0 0
    %7027 = vmatprep.subr.bf16.mxu0 0
    %7028 = vmatpush1.bf16.xpose.msra.mxu0 0
    %7029 = vmatprep.subr.bf16.mxu0 0
    %7030 = vmatpush1.bf16.xpose.msra.mxu0 0
    %7031 = vmatprep.subr.bf16.mxu0 0
    %7032 = vmatpush1.bf16.xpose.msra.mxu0 0
    %7033 = vmatprep.subr.bf16.mxu0 0
    %7034 = vmatpush1.bf16.xpose.msra.mxu0 0
    %7035 = vmatprep.subr.bf16.mxu0 0
    %7036 = vmatpush1.bf16.xpose.msra.mxu0 0
    %7037 = vmatprep.subr.bf16.mxu0 0
    %7038 = vmatpush1.bf16.xpose.msra.mxu0 0
    %7039 = vmatprep.subr.bf16.mxu0 0
    %7040 = vmatpush1.bf16.xpose.msra.mxu0 0
    %7041 = vmatprep.subr.bf16.mxu0 0
    %7042 = vmatpush1.bf16.xpose.msra.mxu0 0
    %7043 = vmatprep.mubr.bf16.mxu0 0
    %7044 = vmatmul.mubr.bf16.gmra.mrb[0].mxu0 %v7006
    %v7045 = vpop.f32.mrb[0].mxu0
    %v7046 = vadd.f32 0.0, %v7045
    %v7047 = vpop.f32.mrb[0].mxu0
    %v7048 = vpop.f32.mrb[0].mxu0
    %v7049 = vpop.f32.mrb[0].mxu0
    %7050 = vdwg.mxu0
    %v7052 = vsel %vm168, %v6900, 0
    %v7055 = vsel %vm168, %v6908, 0
    %7057 = vmatprep.subr.bf16.mxu0 0
    %7058 = vmatpush1.bf16.xpose.msra.mxu0 %v7055
    %7059 = vmatprep.subr.bf16.mxu0 0
    %7060 = vmatpush1.bf16.xpose.msra.mxu0 0
    %7061 = vmatprep.subr.bf16.mxu0 0
    %7062 = vmatpush1.bf16.xpose.msra.mxu0 0
    %7063 = vmatprep.subr.bf16.mxu0 0
    %7064 = vmatpush1.bf16.xpose.msra.mxu0 0
    %7065 = vmatprep.subr.bf16.mxu0 0
    %7066 = vmatpush1.bf16.xpose.msra.mxu0 0
    %7067 = vmatprep.subr.bf16.mxu0 0
    %7068 = vmatpush1.bf16.xpose.msra.mxu0 0
    %7069 = vmatprep.subr.bf16.mxu0 0
    %7070 = vmatpush1.bf16.xpose.msra.mxu0 0
    %7071 = vmatprep.subr.bf16.mxu0 0
    %7072 = vmatpush1.bf16.xpose.msra.mxu0 0
    %7073 = vmatprep.subr.bf16.mxu0 0
    %7074 = vmatpush1.bf16.xpose.msra.mxu0 0
    %7075 = vmatprep.subr.bf16.mxu0 0
    %7076 = vmatpush1.bf16.xpose.msra.mxu0 0
    %7077 = vmatprep.subr.bf16.mxu0 0
    %7078 = vmatpush1.bf16.xpose.msra.mxu0 0
    %7079 = vmatprep.subr.bf16.mxu0 0
    %7080 = vmatpush1.bf16.xpose.msra.mxu0 0
    %7081 = vmatprep.subr.bf16.mxu0 0
    %7082 = vmatpush1.bf16.xpose.msra.mxu0 0
    %7083 = vmatprep.subr.bf16.mxu0 0
    %7084 = vmatpush1.bf16.xpose.msra.mxu0 0
    %7085 = vmatprep.subr.bf16.mxu0 0
    %7086 = vmatpush1.bf16.xpose.msra.mxu0 0
    %7087 = vmatprep.subr.bf16.mxu0 0
    %7088 = vmatpush1.bf16.xpose.msra.mxu0 0
    %7089 = vmatprep.mubr.bf16.mxu0 0
    %7090 = vmatmul.mubr.bf16.gmra.mrb[0].mxu0 %v7052
    %v7091 = vpop.f32.mrb[0].mxu0
    %v7092 = vadd.f32 0.0, %v7091
    %v7093 = vpop.f32.mrb[0].mxu0
    %v7094 = vpop.f32.mrb[0].mxu0
    %v7095 = vpop.f32.mrb[0].mxu0
    %7096 = vdwg.mxu0
    %v7098 = vsel %vm168, %v6901, 0
    %v7101 = vsel %vm168, %v6909, 0
    %7103 = vmatprep.subr.bf16.mxu0 0
    %7104 = vmatpush1.bf16.xpose.msra.mxu0 %v7101
    %7105 = vmatprep.subr.bf16.mxu0 0
    %7106 = vmatpush1.bf16.xpose.msra.mxu0 0
    %7107 = vmatprep.subr.bf16.mxu0 0
    %7108 = vmatpush1.bf16.xpose.msra.mxu0 0
    %7109 = vmatprep.subr.bf16.mxu0 0
    %7110 = vmatpush1.bf16.xpose.msra.mxu0 0
    %7111 = vmatprep.subr.bf16.mxu0 0
    %7112 = vmatpush1.bf16.xpose.msra.mxu0 0
    %7113 = vmatprep.subr.bf16.mxu0 0
    %7114 = vmatpush1.bf16.xpose.msra.mxu0 0
    %7115 = vmatprep.subr.bf16.mxu0 0
    %7116 = vmatpush1.bf16.xpose.msra.mxu0 0
    %7117 = vmatprep.subr.bf16.mxu0 0
    %7118 = vmatpush1.bf16.xpose.msra.mxu0 0
    %7119 = vmatprep.subr.bf16.mxu0 0
    %7120 = vmatpush1.bf16.xpose.msra.mxu0 0
    %7121 = vmatprep.subr.bf16.mxu0 0
    %7122 = vmatpush1.bf16.xpose.msra.mxu0 0
    %7123 = vmatprep.subr.bf16.mxu0 0
    %7124 = vmatpush1.bf16.xpose.msra.mxu0 0
    %7125 = vmatprep.subr.bf16.mxu0 0
    %7126 = vmatpush1.bf16.xpose.msra.mxu0 0
    %7127 = vmatprep.subr.bf16.mxu0 0
    %7128 = vmatpush1.bf16.xpose.msra.mxu0 0
    %7129 = vmatprep.subr.bf16.mxu0 0
    %7130 = vmatpush1.bf16.xpose.msra.mxu0 0
    %7131 = vmatprep.subr.bf16.mxu0 0
    %7132 = vmatpush1.bf16.xpose.msra.mxu0 0
    %7133 = vmatprep.subr.bf16.mxu0 0
    %7134 = vmatpush1.bf16.xpose.msra.mxu0 0
    %7135 = vmatprep.mubr.bf16.mxu0 0
    %7136 = vmatmul.mubr.bf16.gmra.mrb[0].mxu0 %v7098
    %v7137 = vpop.f32.mrb[0].mxu0
    %v7138 = vadd.f32 0.0, %v7137
    %v7139 = vpop.f32.mrb[0].mxu0
    %v7140 = vpop.f32.mrb[0].mxu0
    %v7141 = vpop.f32.mrb[0].mxu0
    %7142 = vdwg.mxu0
    %v7144 = vsel %vm168, %v6902, 0
    %v7147 = vsel %vm168, %v6910, 0
    %7149 = vmatprep.subr.bf16.mxu0 0
    %7150 = vmatpush1.bf16.xpose.msra.mxu0 %v7147
    %7151 = vmatprep.subr.bf16.mxu0 0
    %7152 = vmatpush1.bf16.xpose.msra.mxu0 0
    %7153 = vmatprep.subr.bf16.mxu0 0
    %7154 = vmatpush1.bf16.xpose.msra.mxu0 0
    %7155 = vmatprep.subr.bf16.mxu0 0
    %7156 = vmatpush1.bf16.xpose.msra.mxu0 0
    %7157 = vmatprep.subr.bf16.mxu0 0
    %7158 = vmatpush1.bf16.xpose.msra.mxu0 0
    %7159 = vmatprep.subr.bf16.mxu0 0
    %7160 = vmatpush1.bf16.xpose.msra.mxu0 0
    %7161 = vmatprep.subr.bf16.mxu0 0
    %7162 = vmatpush1.bf16.xpose.msra.mxu0 0
    %7163 = vmatprep.subr.bf16.mxu0 0
    %7164 = vmatpush1.bf16.xpose.msra.mxu0 0
    %7165 = vmatprep.subr.bf16.mxu0 0
    %7166 = vmatpush1.bf16.xpose.msra.mxu0 0
    %7167 = vmatprep.subr.bf16.mxu0 0
    %7168 = vmatpush1.bf16.xpose.msra.mxu0 0
    %7169 = vmatprep.subr.bf16.mxu0 0
    %7170 = vmatpush1.bf16.xpose.msra.mxu0 0
    %7171 = vmatprep.subr.bf16.mxu0 0
    %7172 = vmatpush1.bf16.xpose.msra.mxu0 0
    %7173 = vmatprep.subr.bf16.mxu0 0
    %7174 = vmatpush1.bf16.xpose.msra.mxu0 0
    %7175 = vmatprep.subr.bf16.mxu0 0
    %7176 = vmatpush1.bf16.xpose.msra.mxu0 0
    %7177 = vmatprep.subr.bf16.mxu0 0
    %7178 = vmatpush1.bf16.xpose.msra.mxu0 0
    %7179 = vmatprep.subr.bf16.mxu0 0
    %7180 = vmatpush1.bf16.xpose.msra.mxu0 0
    %7181 = vmatprep.mubr.bf16.mxu0 0
    %7182 = vmatmul.mubr.bf16.gmra.mrb[0].mxu0 %v7144
    %v7183 = vpop.f32.mrb[0].mxu0
    %v7184 = vadd.f32 0.0, %v7183
    %v7185 = vpop.f32.mrb[0].mxu0
    %v7186 = vpop.f32.mrb[0].mxu0
    %v7187 = vpop.f32.mrb[0].mxu0
    %7188 = vdwg.mxu0
    %v7190 = vsel %vm168, %v6903, 0
    %v7193 = vsel %vm168, %v6911, 0
    %7195 = vmatprep.subr.bf16.mxu0 0
    %7196 = vmatpush1.bf16.xpose.msra.mxu0 %v7193
    %7197 = vmatprep.subr.bf16.mxu0 0
    %7198 = vmatpush1.bf16.xpose.msra.mxu0 0
    %7199 = vmatprep.subr.bf16.mxu0 0
    %7200 = vmatpush1.bf16.xpose.msra.mxu0 0
    %7201 = vmatprep.subr.bf16.mxu0 0
    %7202 = vmatpush1.bf16.xpose.msra.mxu0 0
    %7203 = vmatprep.subr.bf16.mxu0 0
    %7204 = vmatpush1.bf16.xpose.msra.mxu0 0
    %7205 = vmatprep.subr.bf16.mxu0 0
    %7206 = vmatpush1.bf16.xpose.msra.mxu0 0
    %7207 = vmatprep.subr.bf16.mxu0 0
    %7208 = vmatpush1.bf16.xpose.msra.mxu0 0
    %7209 = vmatprep.subr.bf16.mxu0 0
    %7210 = vmatpush1.bf16.xpose.msra.mxu0 0
    %7211 = vmatprep.subr.bf16.mxu0 0
    %7212 = vmatpush1.bf16.xpose.msra.mxu0 0
    %7213 = vmatprep.subr.bf16.mxu0 0
    %7214 = vmatpush1.bf16.xpose.msra.mxu0 0
    %7215 = vmatprep.subr.bf16.mxu0 0
    %7216 = vmatpush1.bf16.xpose.msra.mxu0 0
    %7217 = vmatprep.subr.bf16.mxu0 0
    %7218 = vmatpush1.bf16.xpose.msra.mxu0 0
    %7219 = vmatprep.subr.bf16.mxu0 0
    %7220 = vmatpush1.bf16.xpose.msra.mxu0 0
    %7221 = vmatprep.subr.bf16.mxu0 0
    %7222 = vmatpush1.bf16.xpose.msra.mxu0 0
    %7223 = vmatprep.subr.bf16.mxu0 0
    %7224 = vmatpush1.bf16.xpose.msra.mxu0 0
    %7225 = vmatprep.subr.bf16.mxu0 0
    %7226 = vmatpush1.bf16.xpose.msra.mxu0 0
    %7227 = vmatprep.mubr.bf16.mxu0 0
    %7228 = vmatmul.mubr.bf16.gmra.mrb[0].mxu0 %v7190
    %v7229 = vpop.f32.mrb[0].mxu0
    %v7230 = vadd.f32 0.0, %v7229
    %v7231 = vpop.f32.mrb[0].mxu0
    %v7232 = vpop.f32.mrb[0].mxu0
    %v7233 = vpop.f32.mrb[0].mxu0
    %7234 = vdwg.mxu0
    %v7236 = vsel %vm168, %v6904, 0
    %v7239 = vsel %vm168, %v6912, 0
    %7241 = vmatprep.subr.bf16.mxu0 0
    %7242 = vmatpush1.bf16.xpose.msra.mxu0 %v7239
    %7243 = vmatprep.subr.bf16.mxu0 0
    %7244 = vmatpush1.bf16.xpose.msra.mxu0 0
    %7245 = vmatprep.subr.bf16.mxu0 0
    %7246 = vmatpush1.bf16.xpose.msra.mxu0 0
    %7247 = vmatprep.subr.bf16.mxu0 0
    %7248 = vmatpush1.bf16.xpose.msra.mxu0 0
    %7249 = vmatprep.subr.bf16.mxu0 0
    %7250 = vmatpush1.bf16.xpose.msra.mxu0 0
    %7251 = vmatprep.subr.bf16.mxu0 0
    %7252 = vmatpush1.bf16.xpose.msra.mxu0 0
    %7253 = vmatprep.subr.bf16.mxu0 0
    %7254 = vmatpush1.bf16.xpose.msra.mxu0 0
    %7255 = vmatprep.subr.bf16.mxu0 0
    %7256 = vmatpush1.bf16.xpose.msra.mxu0 0
    %7257 = vmatprep.subr.bf16.mxu0 0
    %7258 = vmatpush1.bf16.xpose.msra.mxu0 0
    %7259 = vmatprep.subr.bf16.mxu0 0
    %7260 = vmatpush1.bf16.xpose.msra.mxu0 0
    %7261 = vmatprep.subr.bf16.mxu0 0
    %7262 = vmatpush1.bf16.xpose.msra.mxu0 0
    %7263 = vmatprep.subr.bf16.mxu0 0
    %7264 = vmatpush1.bf16.xpose.msra.mxu0 0
    %7265 = vmatprep.subr.bf16.mxu0 0
    %7266 = vmatpush1.bf16.xpose.msra.mxu0 0
    %7267 = vmatprep.subr.bf16.mxu0 0
    %7268 = vmatpush1.bf16.xpose.msra.mxu0 0
    %7269 = vmatprep.subr.bf16.mxu0 0
    %7270 = vmatpush1.bf16.xpose.msra.mxu0 0
    %7271 = vmatprep.subr.bf16.mxu0 0
    %7272 = vmatpush1.bf16.xpose.msra.mxu0 0
    %7273 = vmatprep.mubr.bf16.mxu0 0
    %7274 = vmatmul.mubr.bf16.gmra.mrb[0].mxu0 %v7236
    %v7275 = vpop.f32.mrb[0].mxu0
    %v7276 = vadd.f32 0.0, %v7275
    %v7277 = vpop.f32.mrb[0].mxu0
    %v7278 = vpop.f32.mrb[0].mxu0
    %v7279 = vpop.f32.mrb[0].mxu0
    %7280 = vdwg.mxu0
    %v7281 = vmul.f32 %v6954, 0.35355338
    %v7282 = vmul.f32 %v7000, 0.35355338
    %v7283 = vmul.f32 %v7046, 0.35355338
    %v7284 = vmul.f32 %v7092, 0.35355338
    %v7285 = vmul.f32 %v7138, 0.35355338
    %v7286 = vmul.f32 %v7184, 0.35355338
    %v7287 = vmul.f32 %v7230, 0.35355338
    %v7288 = vmul.f32 %v7276, 0.35355338
    %v7289 = vsel %vm168, %v7281, -inf
    %7290 = vmax.xlane.f32.xlu0 %v7289
    %v7291 = vpop.xlane.xlu0 %7290
    %v7292 = vsel %vm168, %v7282, -inf
    %7293 = vmax.xlane.f32.xlu0 %v7292
    %v7294 = vpop.xlane.xlu0 %7293
    %v7295 = vsel %vm168, %v7283, -inf
    %7296 = vmax.xlane.f32.xlu0 %v7295
    %v7297 = vpop.xlane.xlu0 %7296
    %v7298 = vsel %vm168, %v7284, -inf
    %7299 = vmax.xlane.f32.xlu0 %v7298
    %v7300 = vpop.xlane.xlu0 %7299
    %v7301 = vsel %vm168, %v7285, -inf
    %7302 = vmax.xlane.f32.xlu0 %v7301
    %v7303 = vpop.xlane.xlu0 %7302
    %v7304 = vsel %vm168, %v7286, -inf
    %7305 = vmax.xlane.f32.xlu0 %v7304
    %v7306 = vpop.xlane.xlu0 %7305
    %v7307 = vsel %vm168, %v7287, -inf
    %7308 = vmax.xlane.f32.xlu0 %v7307
    %v7309 = vpop.xlane.xlu0 %7308
    %v7310 = vsel %vm168, %v7288, -inf
    %7311 = vmax.xlane.f32.xlu0 %v7310
    %v7312 = vpop.xlane.xlu0 %7311
    %v7313 = vsub.f32 %v7281, %v7291
    %v7314 = vsub.f32 %v7282, %v7294
    %v7315 = vsub.f32 %v7283, %v7297
    %v7316 = vsub.f32 %v7284, %v7300
    %v7317 = vsub.f32 %v7285, %v7303
    %v7318 = vsub.f32 %v7286, %v7306
    %v7319 = vsub.f32 %v7287, %v7309
    %v7320 = vsub.f32 %v7288, %v7312
    %v7321 = vmul.f32 %v7313, 1.442695
    %v7322 = vpow.pop %v7321
    %v7323 = vmul.f32 %v7314, 1.442695
    %v7324 = vpow.pop %v7323
    %v7325 = vmul.f32 %v7315, 1.442695
    %v7326 = vpow.pop %v7325
    %v7327 = vmul.f32 %v7316, 1.442695
    %v7328 = vpow.pop %v7327
    %v7329 = vmul.f32 %v7317, 1.442695
    %v7330 = vpow.pop %v7329
    %v7331 = vmul.f32 %v7318, 1.442695
    %v7332 = vpow.pop %v7331
    %v7333 = vmul.f32 %v7319, 1.442695
    %v7334 = vpow.pop %v7333
    %v7335 = vmul.f32 %v7320, 1.442695
    %v7336 = vpow.pop %v7335
    %v7337 = vsel %vm168, %v7322, 0.0
    %7338 = vadd.xlane.f32.xlu0 %v7337
    %v7339 = vpop.xlane.xlu0 %7338
    %v7340 = vsel %vm168, %v7324, 0.0
    %7341 = vadd.xlane.f32.xlu0 %v7340
    %v7342 = vpop.xlane.xlu0 %7341
    %v7343 = vsel %vm168, %v7326, 0.0
    %7344 = vadd.xlane.f32.xlu0 %v7343
    %v7345 = vpop.xlane.xlu0 %7344
    %v7346 = vsel %vm168, %v7328, 0.0
    %7347 = vadd.xlane.f32.xlu0 %v7346
    %v7348 = vpop.xlane.xlu0 %7347
    %v7349 = vsel %vm168, %v7330, 0.0
    %7350 = vadd.xlane.f32.xlu0 %v7349
    %v7351 = vpop.xlane.xlu0 %7350
    %v7352 = vsel %vm168, %v7332, 0.0
    %7353 = vadd.xlane.f32.xlu0 %v7352
    %v7354 = vpop.xlane.xlu0 %7353
    %v7355 = vsel %vm168, %v7334, 0.0
    %7356 = vadd.xlane.f32.xlu0 %v7355
    %v7357 = vpop.xlane.xlu0 %7356
    %v7358 = vsel %vm168, %v7336, 0.0
    %7359 = vadd.xlane.f32.xlu0 %v7358
    %v7360 = vpop.xlane.xlu0 %7359
    %v7361 = vpack.c.bf16 %v7322, %v7322
    %v7362 = vpack.c.bf16 %v7324, %v7324
    %v7363 = vpack.c.bf16 %v7326, %v7326
    %v7364 = vpack.c.bf16 %v7328, %v7328
    %v7365 = vpack.c.bf16 %v7330, %v7330
    %v7366 = vpack.c.bf16 %v7332, %v7332
    %v7367 = vpack.c.bf16 %v7334, %v7334
    %v7368 = vpack.c.bf16 %v7336, %v7336
    %v7369 = vpack.c.bf16 %v6871, %v6871
    %v7370 = vpack.c.bf16 %v6874, %v6874
    %v7371 = vpack.c.bf16 %v6880, %v6880
    %v7372 = vpack.c.bf16 %v6882, %v6882
    %v7373 = vpack.c.bf16 %v6886, %v6886
    %v7374 = vpack.c.bf16 %v6888, %v6888
    %v7375 = vpack.c.bf16 %v6892, %v6892
    %v7376 = vpack.c.bf16 %v6894, %v6894
    %v7378 = vsel %vm168, %v7361, 0
    %v7381 = vsel %vm766, %v7369, 0
    %7383 = vmatprep.subr.bf16.mxu0 0
    %7384 = vmatpush1.bf16.msra.mxu0 %v7381
    %7385 = vmatprep.subr.bf16.mxu0 0
    %7386 = vmatpush1.bf16.msra.mxu0 0
    %7387 = vmatprep.subr.bf16.mxu0 0
    %7388 = vmatpush1.bf16.msra.mxu0 0
    %7389 = vmatprep.subr.bf16.mxu0 0
    %7390 = vmatpush1.bf16.msra.mxu0 0
    %7391 = vmatprep.subr.bf16.mxu0 0
    %7392 = vmatpush1.bf16.msra.mxu0 0
    %7393 = vmatprep.subr.bf16.mxu0 0
    %7394 = vmatpush1.bf16.msra.mxu0 0
    %7395 = vmatprep.subr.bf16.mxu0 0
    %7396 = vmatpush1.bf16.msra.mxu0 0
    %7397 = vmatprep.subr.bf16.mxu0 0
    %7398 = vmatpush1.bf16.msra.mxu0 0
    %7399 = vmatprep.subr.bf16.mxu0 0
    %7400 = vmatpush1.bf16.msra.mxu0 0
    %7401 = vmatprep.subr.bf16.mxu0 0
    %7402 = vmatpush1.bf16.msra.mxu0 0
    %7403 = vmatprep.subr.bf16.mxu0 0
    %7404 = vmatpush1.bf16.msra.mxu0 0
    %7405 = vmatprep.subr.bf16.mxu0 0
    %7406 = vmatpush1.bf16.msra.mxu0 0
    %7407 = vmatprep.subr.bf16.mxu0 0
    %7408 = vmatpush1.bf16.msra.mxu0 0
    %7409 = vmatprep.subr.bf16.mxu0 0
    %7410 = vmatpush1.bf16.msra.mxu0 0
    %7411 = vmatprep.subr.bf16.mxu0 0
    %7412 = vmatpush1.bf16.msra.mxu0 0
    %7413 = vmatprep.subr.bf16.mxu0 0
    %7414 = vmatpush1.bf16.msra.mxu0 0
    %7415 = vmatprep.mubr.bf16.mxu0 0
    %7416 = vmatmul.mubr.bf16.gmra.mrb[0].mxu0 %v7378
    %v7417 = vpop.f32.mrb[0].mxu0
    %v7418 = vadd.f32 0.0, %v7417
    %v7419 = vpop.f32.mrb[0].mxu0
    %v7420 = vpop.f32.mrb[0].mxu0
    %v7421 = vpop.f32.mrb[0].mxu0
    %7422 = vdwg.mxu0
    %v7424 = vsel %vm168, %v7362, 0
    %v7427 = vsel %vm766, %v7370, 0
    %7429 = vmatprep.subr.bf16.mxu0 0
    %7430 = vmatpush1.bf16.msra.mxu0 %v7427
    %7431 = vmatprep.subr.bf16.mxu0 0
    %7432 = vmatpush1.bf16.msra.mxu0 0
    %7433 = vmatprep.subr.bf16.mxu0 0
    %7434 = vmatpush1.bf16.msra.mxu0 0
    %7435 = vmatprep.subr.bf16.mxu0 0
    %7436 = vmatpush1.bf16.msra.mxu0 0
    %7437 = vmatprep.subr.bf16.mxu0 0
    %7438 = vmatpush1.bf16.msra.mxu0 0
    %7439 = vmatprep.subr.bf16.mxu0 0
    %7440 = vmatpush1.bf16.msra.mxu0 0
    %7441 = vmatprep.subr.bf16.mxu0 0
    %7442 = vmatpush1.bf16.msra.mxu0 0
    %7443 = vmatprep.subr.bf16.mxu0 0
    %7444 = vmatpush1.bf16.msra.mxu0 0
    %7445 = vmatprep.subr.bf16.mxu0 0
    %7446 = vmatpush1.bf16.msra.mxu0 0
    %7447 = vmatprep.subr.bf16.mxu0 0
    %7448 = vmatpush1.bf16.msra.mxu0 0
    %7449 = vmatprep.subr.bf16.mxu0 0
    %7450 = vmatpush1.bf16.msra.mxu0 0
    %7451 = vmatprep.subr.bf16.mxu0 0
    %7452 = vmatpush1.bf16.msra.mxu0 0
    %7453 = vmatprep.subr.bf16.mxu0 0
    %7454 = vmatpush1.bf16.msra.mxu0 0
    %7455 = vmatprep.subr.bf16.mxu0 0
    %7456 = vmatpush1.bf16.msra.mxu0 0
    %7457 = vmatprep.subr.bf16.mxu0 0
    %7458 = vmatpush1.bf16.msra.mxu0 0
    %7459 = vmatprep.subr.bf16.mxu0 0
    %7460 = vmatpush1.bf16.msra.mxu0 0
    %7461 = vmatprep.mubr.bf16.mxu0 0
    %7462 = vmatmul.mubr.bf16.gmra.mrb[0].mxu0 %v7424
    %v7463 = vpop.f32.mrb[0].mxu0
    %v7464 = vadd.f32 0.0, %v7463
    %v7465 = vpop.f32.mrb[0].mxu0
    %v7466 = vpop.f32.mrb[0].mxu0
    %v7467 = vpop.f32.mrb[0].mxu0
    %7468 = vdwg.mxu0
    %v7470 = vsel %vm168, %v7363, 0
    %v7473 = vsel %vm766, %v7371, 0
    %7475 = vmatprep.subr.bf16.mxu0 0
    %7476 = vmatpush1.bf16.msra.mxu0 %v7473
    %7477 = vmatprep.subr.bf16.mxu0 0
    %7478 = vmatpush1.bf16.msra.mxu0 0
    %7479 = vmatprep.subr.bf16.mxu0 0
    %7480 = vmatpush1.bf16.msra.mxu0 0
    %7481 = vmatprep.subr.bf16.mxu0 0
    %7482 = vmatpush1.bf16.msra.mxu0 0
    %7483 = vmatprep.subr.bf16.mxu0 0
    %7484 = vmatpush1.bf16.msra.mxu0 0
    %7485 = vmatprep.subr.bf16.mxu0 0
    %7486 = vmatpush1.bf16.msra.mxu0 0
    %7487 = vmatprep.subr.bf16.mxu0 0
    %7488 = vmatpush1.bf16.msra.mxu0 0
    %7489 = vmatprep.subr.bf16.mxu0 0
    %7490 = vmatpush1.bf16.msra.mxu0 0
    %7491 = vmatprep.subr.bf16.mxu0 0
    %7492 = vmatpush1.bf16.msra.mxu0 0
    %7493 = vmatprep.subr.bf16.mxu0 0
    %7494 = vmatpush1.bf16.msra.mxu0 0
    %7495 = vmatprep.subr.bf16.mxu0 0
    %7496 = vmatpush1.bf16.msra.mxu0 0
    %7497 = vmatprep.subr.bf16.mxu0 0
    %7498 = vmatpush1.bf16.msra.mxu0 0
    %7499 = vmatprep.subr.bf16.mxu0 0
    %7500 = vmatpush1.bf16.msra.mxu0 0
    %7501 = vmatprep.subr.bf16.mxu0 0
    %7502 = vmatpush1.bf16.msra.mxu0 0
    %7503 = vmatprep.subr.bf16.mxu0 0
    %7504 = vmatpush1.bf16.msra.mxu0 0
    %7505 = vmatprep.subr.bf16.mxu0 0
    %7506 = vmatpush1.bf16.msra.mxu0 0
    %7507 = vmatprep.mubr.bf16.mxu0 0
    %7508 = vmatmul.mubr.bf16.gmra.mrb[0].mxu0 %v7470
    %v7509 = vpop.f32.mrb[0].mxu0
    %v7510 = vadd.f32 0.0, %v7509
    %v7511 = vpop.f32.mrb[0].mxu0
    %v7512 = vpop.f32.mrb[0].mxu0
    %v7513 = vpop.f32.mrb[0].mxu0
    %7514 = vdwg.mxu0
    %v7516 = vsel %vm168, %v7364, 0
    %v7519 = vsel %vm766, %v7372, 0
    %7521 = vmatprep.subr.bf16.mxu0 0
    %7522 = vmatpush1.bf16.msra.mxu0 %v7519
    %7523 = vmatprep.subr.bf16.mxu0 0
    %7524 = vmatpush1.bf16.msra.mxu0 0
    %7525 = vmatprep.subr.bf16.mxu0 0
    %7526 = vmatpush1.bf16.msra.mxu0 0
    %7527 = vmatprep.subr.bf16.mxu0 0
    %7528 = vmatpush1.bf16.msra.mxu0 0
    %7529 = vmatprep.subr.bf16.mxu0 0
    %7530 = vmatpush1.bf16.msra.mxu0 0
    %7531 = vmatprep.subr.bf16.mxu0 0
    %7532 = vmatpush1.bf16.msra.mxu0 0
    %7533 = vmatprep.subr.bf16.mxu0 0
    %7534 = vmatpush1.bf16.msra.mxu0 0
    %7535 = vmatprep.subr.bf16.mxu0 0
    %7536 = vmatpush1.bf16.msra.mxu0 0
    %7537 = vmatprep.subr.bf16.mxu0 0
    %7538 = vmatpush1.bf16.msra.mxu0 0
    %7539 = vmatprep.subr.bf16.mxu0 0
    %7540 = vmatpush1.bf16.msra.mxu0 0
    %7541 = vmatprep.subr.bf16.mxu0 0
    %7542 = vmatpush1.bf16.msra.mxu0 0
    %7543 = vmatprep.subr.bf16.mxu0 0
    %7544 = vmatpush1.bf16.msra.mxu0 0
    %7545 = vmatprep.subr.bf16.mxu0 0
    %7546 = vmatpush1.bf16.msra.mxu0 0
    %7547 = vmatprep.subr.bf16.mxu0 0
    %7548 = vmatpush1.bf16.msra.mxu0 0
    %7549 = vmatprep.subr.bf16.mxu0 0
    %7550 = vmatpush1.bf16.msra.mxu0 0
    %7551 = vmatprep.subr.bf16.mxu0 0
    %7552 = vmatpush1.bf16.msra.mxu0 0
    %7553 = vmatprep.mubr.bf16.mxu0 0
    %7554 = vmatmul.mubr.bf16.gmra.mrb[0].mxu0 %v7516
    %v7555 = vpop.f32.mrb[0].mxu0
    %v7556 = vadd.f32 0.0, %v7555
    %v7557 = vpop.f32.mrb[0].mxu0
    %v7558 = vpop.f32.mrb[0].mxu0
    %v7559 = vpop.f32.mrb[0].mxu0
    %7560 = vdwg.mxu0
    %v7562 = vsel %vm168, %v7365, 0
    %v7565 = vsel %vm766, %v7373, 0
    %7567 = vmatprep.subr.bf16.mxu0 0
    %7568 = vmatpush1.bf16.msra.mxu0 %v7565
    %7569 = vmatprep.subr.bf16.mxu0 0
    %7570 = vmatpush1.bf16.msra.mxu0 0
    %7571 = vmatprep.subr.bf16.mxu0 0
    %7572 = vmatpush1.bf16.msra.mxu0 0
    %7573 = vmatprep.subr.bf16.mxu0 0
    %7574 = vmatpush1.bf16.msra.mxu0 0
    %7575 = vmatprep.subr.bf16.mxu0 0
    %7576 = vmatpush1.bf16.msra.mxu0 0
    %7577 = vmatprep.subr.bf16.mxu0 0
    %7578 = vmatpush1.bf16.msra.mxu0 0
    %7579 = vmatprep.subr.bf16.mxu0 0
    %7580 = vmatpush1.bf16.msra.mxu0 0
    %7581 = vmatprep.subr.bf16.mxu0 0
    %7582 = vmatpush1.bf16.msra.mxu0 0
    %7583 = vmatprep.subr.bf16.mxu0 0
    %7584 = vmatpush1.bf16.msra.mxu0 0
    %7585 = vmatprep.subr.bf16.mxu0 0
    %7586 = vmatpush1.bf16.msra.mxu0 0
    %7587 = vmatprep.subr.bf16.mxu0 0
    %7588 = vmatpush1.bf16.msra.mxu0 0
    %7589 = vmatprep.subr.bf16.mxu0 0
    %7590 = vmatpush1.bf16.msra.mxu0 0
    %7591 = vmatprep.subr.bf16.mxu0 0
    %7592 = vmatpush1.bf16.msra.mxu0 0
    %7593 = vmatprep.subr.bf16.mxu0 0
    %7594 = vmatpush1.bf16.msra.mxu0 0
    %7595 = vmatprep.subr.bf16.mxu0 0
    %7596 = vmatpush1.bf16.msra.mxu0 0
    %7597 = vmatprep.subr.bf16.mxu0 0
    %7598 = vmatpush1.bf16.msra.mxu0 0
    %7599 = vmatprep.mubr.bf16.mxu0 0
    %7600 = vmatmul.mubr.bf16.gmra.mrb[0].mxu0 %v7562
    %v7601 = vpop.f32.mrb[0].mxu0
    %v7602 = vadd.f32 0.0, %v7601
    %v7603 = vpop.f32.mrb[0].mxu0
    %v7604 = vpop.f32.mrb[0].mxu0
    %v7605 = vpop.f32.mrb[0].mxu0
    %7606 = vdwg.mxu0
    %v7608 = vsel %vm168, %v7366, 0
    %v7611 = vsel %vm766, %v7374, 0
    %7613 = vmatprep.subr.bf16.mxu0 0
    %7614 = vmatpush1.bf16.msra.mxu0 %v7611
    %7615 = vmatprep.subr.bf16.mxu0 0
    %7616 = vmatpush1.bf16.msra.mxu0 0
    %7617 = vmatprep.subr.bf16.mxu0 0
    %7618 = vmatpush1.bf16.msra.mxu0 0
    %7619 = vmatprep.subr.bf16.mxu0 0
    %7620 = vmatpush1.bf16.msra.mxu0 0
    %7621 = vmatprep.subr.bf16.mxu0 0
    %7622 = vmatpush1.bf16.msra.mxu0 0
    %7623 = vmatprep.subr.bf16.mxu0 0
    %7624 = vmatpush1.bf16.msra.mxu0 0
    %7625 = vmatprep.subr.bf16.mxu0 0
    %7626 = vmatpush1.bf16.msra.mxu0 0
    %7627 = vmatprep.subr.bf16.mxu0 0
    %7628 = vmatpush1.bf16.msra.mxu0 0
    %7629 = vmatprep.subr.bf16.mxu0 0
    %7630 = vmatpush1.bf16.msra.mxu0 0
    %7631 = vmatprep.subr.bf16.mxu0 0
    %7632 = vmatpush1.bf16.msra.mxu0 0
    %7633 = vmatprep.subr.bf16.mxu0 0
    %7634 = vmatpush1.bf16.msra.mxu0 0
    %7635 = vmatprep.subr.bf16.mxu0 0
    %7636 = vmatpush1.bf16.msra.mxu0 0
    %7637 = vmatprep.subr.bf16.mxu0 0
    %7638 = vmatpush1.bf16.msra.mxu0 0
    %7639 = vmatprep.subr.bf16.mxu0 0
    %7640 = vmatpush1.bf16.msra.mxu0 0
    %7641 = vmatprep.subr.bf16.mxu0 0
    %7642 = vmatpush1.bf16.msra.mxu0 0
    %7643 = vmatprep.subr.bf16.mxu0 0
    %7644 = vmatpush1.bf16.msra.mxu0 0
    %7645 = vmatprep.mubr.bf16.mxu0 0
    %7646 = vmatmul.mubr.bf16.gmra.mrb[0].mxu0 %v7608
    %v7647 = vpop.f32.mrb[0].mxu0
    %v7648 = vadd.f32 0.0, %v7647
    %v7649 = vpop.f32.mrb[0].mxu0
    %v7650 = vpop.f32.mrb[0].mxu0
    %v7651 = vpop.f32.mrb[0].mxu0
    %7652 = vdwg.mxu0
    %v7654 = vsel %vm168, %v7367, 0
    %v7657 = vsel %vm766, %v7375, 0
    %7659 = vmatprep.subr.bf16.mxu0 0
    %7660 = vmatpush1.bf16.msra.mxu0 %v7657
    %7661 = vmatprep.subr.bf16.mxu0 0
    %7662 = vmatpush1.bf16.msra.mxu0 0
    %7663 = vmatprep.subr.bf16.mxu0 0
    %7664 = vmatpush1.bf16.msra.mxu0 0
    %7665 = vmatprep.subr.bf16.mxu0 0
    %7666 = vmatpush1.bf16.msra.mxu0 0
    %7667 = vmatprep.subr.bf16.mxu0 0
    %7668 = vmatpush1.bf16.msra.mxu0 0
    %7669 = vmatprep.subr.bf16.mxu0 0
    %7670 = vmatpush1.bf16.msra.mxu0 0
    %7671 = vmatprep.subr.bf16.mxu0 0
    %7672 = vmatpush1.bf16.msra.mxu0 0
    %7673 = vmatprep.subr.bf16.mxu0 0
    %7674 = vmatpush1.bf16.msra.mxu0 0
    %7675 = vmatprep.subr.bf16.mxu0 0
    %7676 = vmatpush1.bf16.msra.mxu0 0
    %7677 = vmatprep.subr.bf16.mxu0 0
    %7678 = vmatpush1.bf16.msra.mxu0 0
    %7679 = vmatprep.subr.bf16.mxu0 0
    %7680 = vmatpush1.bf16.msra.mxu0 0
    %7681 = vmatprep.subr.bf16.mxu0 0
    %7682 = vmatpush1.bf16.msra.mxu0 0
    %7683 = vmatprep.subr.bf16.mxu0 0
    %7684 = vmatpush1.bf16.msra.mxu0 0
    %7685 = vmatprep.subr.bf16.mxu0 0
    %7686 = vmatpush1.bf16.msra.mxu0 0
    %7687 = vmatprep.subr.bf16.mxu0 0
    %7688 = vmatpush1.bf16.msra.mxu0 0
    %7689 = vmatprep.subr.bf16.mxu0 0
    %7690 = vmatpush1.bf16.msra.mxu0 0
    %7691 = vmatprep.mubr.bf16.mxu0 0
    %7692 = vmatmul.mubr.bf16.gmra.mrb[0].mxu0 %v7654
    %v7693 = vpop.f32.mrb[0].mxu0
    %v7694 = vadd.f32 0.0, %v7693
    %v7695 = vpop.f32.mrb[0].mxu0
    %v7696 = vpop.f32.mrb[0].mxu0
    %v7697 = vpop.f32.mrb[0].mxu0
    %7698 = vdwg.mxu0
    %v7700 = vsel %vm168, %v7368, 0
    %v7703 = vsel %vm766, %v7376, 0
    %7705 = vmatprep.subr.bf16.mxu0 0
    %7706 = vmatpush1.bf16.msra.mxu0 %v7703
    %7707 = vmatprep.subr.bf16.mxu0 0
    %7708 = vmatpush1.bf16.msra.mxu0 0
    %7709 = vmatprep.subr.bf16.mxu0 0
    %7710 = vmatpush1.bf16.msra.mxu0 0
    %7711 = vmatprep.subr.bf16.mxu0 0
    %7712 = vmatpush1.bf16.msra.mxu0 0
    %7713 = vmatprep.subr.bf16.mxu0 0
    %7714 = vmatpush1.bf16.msra.mxu0 0
    %7715 = vmatprep.subr.bf16.mxu0 0
    %7716 = vmatpush1.bf16.msra.mxu0 0
    %7717 = vmatprep.subr.bf16.mxu0 0
    %7718 = vmatpush1.bf16.msra.mxu0 0
    %7719 = vmatprep.subr.bf16.mxu0 0
    %7720 = vmatpush1.bf16.msra.mxu0 0
    %7721 = vmatprep.subr.bf16.mxu0 0
    %7722 = vmatpush1.bf16.msra.mxu0 0
    %7723 = vmatprep.subr.bf16.mxu0 0
    %7724 = vmatpush1.bf16.msra.mxu0 0
    %7725 = vmatprep.subr.bf16.mxu0 0
    %7726 = vmatpush1.bf16.msra.mxu0 0
    %7727 = vmatprep.subr.bf16.mxu0 0
    %7728 = vmatpush1.bf16.msra.mxu0 0
    %7729 = vmatprep.subr.bf16.mxu0 0
    %7730 = vmatpush1.bf16.msra.mxu0 0
    %7731 = vmatprep.subr.bf16.mxu0 0
    %7732 = vmatpush1.bf16.msra.mxu0 0
    %7733 = vmatprep.subr.bf16.mxu0 0
    %7734 = vmatpush1.bf16.msra.mxu0 0
    %7735 = vmatprep.subr.bf16.mxu0 0
    %7736 = vmatpush1.bf16.msra.mxu0 0
    %7737 = vmatprep.mubr.bf16.mxu0 0
    %7738 = vmatmul.mubr.bf16.gmra.mrb[0].mxu0 %v7700
    %v7739 = vpop.f32.mrb[0].mxu0
    %v7740 = vadd.f32 0.0, %v7739
    %v7741 = vpop.f32.mrb[0].mxu0
    %v7742 = vpop.f32.mrb[0].mxu0
    %v7743 = vpop.f32.mrb[0].mxu0
    %7744 = vdwg.mxu0
    %v7745 = vrcp.pop %v7339
    %v7746 = vrcp.pop %v7342
    %v7747 = vrcp.pop %v7345
    %v7748 = vrcp.pop %v7348
    %v7749 = vrcp.pop %v7351
    %v7750 = vrcp.pop %v7354
    %v7751 = vrcp.pop %v7357
    %v7752 = vrcp.pop %v7360
    %v7753 = vmul.f32 %v7418, %v7745
    %v7754 = vmul.f32 %v7464, %v7746
    %v7755 = vmul.f32 %v7510, %v7747
    %v7756 = vmul.f32 %v7556, %v7748
    %v7757 = vmul.f32 %v7602, %v7749
    %v7758 = vmul.f32 %v7648, %v7750
    %v7759 = vmul.f32 %v7694, %v7751
    %v7760 = vmul.f32 %v7740, %v7752
    %7761 = vst.msk [vmem:[#allocation2] sm:$0xff] %vm168, %v7753
    %7762 = vst.msk [vmem:[#allocation2 + $0x8] sm:$0xff] %vm168, %v7754
    %7765 = vrot.lane.b32.xlu0 %v7755, 8
    %v7766 = vpop.permute.xlu0 %7765
    %7767 = vrot.lane.b32.xlu0 %v7756, 8
    %v7768 = vpop.permute.xlu0 %7767
    %7771 = vst.msk [vmem:[#allocation2] sm:$0xff] %vm3171, %v7766
    %7772 = vst.msk [vmem:[#allocation2 + $0x8] sm:$0xff] %vm3171, %v7768
    %7775 = vrot.lane.b32.xlu0 %v7757, 16
    %v7776 = vpop.permute.xlu0 %7775
    %7777 = vrot.lane.b32.xlu0 %v7758, 16
    %v7778 = vpop.permute.xlu0 %7777
    %7781 = vst.msk [vmem:[#allocation2] sm:$0xff] %vm3182, %v7776
    %7782 = vst.msk [vmem:[#allocation2 + $0x8] sm:$0xff] %vm3182, %v7778
    %7785 = vrot.lane.b32.xlu0 %v7759, 24
    %v7786 = vpop.permute.xlu0 %7785
    %7787 = vrot.lane.b32.xlu0 %v7760, 24
    %v7788 = vpop.permute.xlu0 %7787
    %7791 = vst.msk [vmem:[#allocation2] sm:$0xff] %vm3193, %v7786
    %7792 = vst.msk [vmem:[#allocation2 + $0x8] sm:$0xff] %vm3193, %v7788
    %v7793 = vld [vmem:[#allocation2] sm:$0xff]
    %v7794 = vld [vmem:[#allocation2 + $0x8] sm:$0xff]
    %v7795 = vadd.f32 %v4473, %v7793
    %v7796 = vadd.f32 %v4474, %v7794
    %v7797 = vsel %vm87, %v7795, 0.0
    %7798 = vadd.xlane.f32.xlu0 %v7797
    %v7799 = vpop.xlane.xlu0 %7798
    %v7800 = vsel %vm87, %v7796, 0.0
    %7801 = vadd.xlane.f32.xlu0 %v7800
    %v7802 = vpop.xlane.xlu0 %7801
    %v7803 = vmul.f32 %v7799, %v4436
    %v7804 = vmul.f32 %v7802, %v4436
    %v7805 = vsub.f32 %v7795, %v7803
    %v7806 = vsub.f32 %v7796, %v7804
    %v7807 = vmul.f32 %v7805, %v7805
    %v7808 = vmul.f32 %v7806, %v7806
    %v7809 = vsel %vm87, %v7807, 0.0
    %7810 = vadd.xlane.f32.xlu0 %v7809
    %v7811 = vpop.xlane.xlu0 %7810
    %v7812 = vsel %vm87, %v7808, 0.0
    %7813 = vadd.xlane.f32.xlu0 %v7812
    %v7814 = vpop.xlane.xlu0 %7813
    %v7815 = vmul.f32 %v7811, %v4436
    %v7816 = vmul.f32 %v7814, %v4436
    %v7817 = vadd.f32 %v7815, 1e-05
    %v7818 = vadd.f32 %v7816, 1e-05
    %v7819 = vrsqrt.pop %v7817
    %v7820 = vrsqrt.pop %v7818
    %v7821 = vmul.f32 %v7805, %v7819
    %v7822 = vmul.f32 %v7806, %v7820
    %s7823 = scalar_lea.vmem %s6, 1
    %v7824 = vld [vmem:[%s7823] sm:$0x1]
    %v7826 = vlaneseq
    %v7827 = vshrl.u32 %v7826, 7
    %v7828 = vsub.s32 0, %v7827
    %v7829 = vrot.slane %v7824, %v7828
    %v7831 = vmul.f32 %v7821, %v7829
    %v7832 = vmul.f32 %v7822, %v7829
    %s7833 = scalar_lea.vmem %s7, 1
    %v7834 = vld [vmem:[%s7833] sm:$0x1]
    %v7836 = vlaneseq
    %v7837 = vshrl.u32 %v7836, 7
    %v7838 = vsub.s32 0, %v7837
    %v7839 = vrot.slane %v7834, %v7838
    %v7841 = vadd.f32 %v7831, %v7839
    %v7842 = vadd.f32 %v7832, %v7839
    %v7843 = vpack.c.bf16 %v7842, %v7841
    %v7844 = vld [vmem:[%s8] sm:$0xf]
    %v7845 = vld [vmem:[%s8 + $0x4] sm:$0xf]
    %v7846 = vld [vmem:[%s8 + $0x8] sm:$0xf]
    %v7847 = vld [vmem:[%s8 + $0xc] sm:$0xf]
    %v7848 = vld [vmem:[%s9] sm:$0x1]
    %v7850 = vlaneseq
    %v7851 = vshrl.u32 %v7850, 7
    %v7852 = vsub.s32 0, %v7851
    %v7853 = vrot.slane %v7848, %v7852
    %v7859 = vunpack.c.l.b16 %v7844
    %v7860 = vunpack.c.l.b16 %v7845
    %v7861 = vunpack.c.l.b16 %v7846
    %v7862 = vunpack.c.l.b16 %v7847
    %v7863 = vpack.c.b16 %v7860, %v7859
    %v7864 = vpack.c.b16 %v7862, %v7861
    %v7868 = vsel %vm87, %v7843, 0
    %7870 = vmatprep.subr.bf16.mxu0 0
    %7871 = vmatpush1.bf16.msra.mxu0 %v7863
    %7872 = vmatprep.subr.bf16.mxu0 0
    %7873 = vmatpush1.bf16.msra.mxu0 %v7864
    %7874 = vmatprep.subr.bf16.mxu0 0
    %7875 = vmatpush1.bf16.msra.mxu0 0
    %7876 = vmatprep.subr.bf16.mxu0 0
    %7877 = vmatpush1.bf16.msra.mxu0 0
    %7878 = vmatprep.subr.bf16.mxu0 0
    %7879 = vmatpush1.bf16.msra.mxu0 0
    %7880 = vmatprep.subr.bf16.mxu0 0
    %7881 = vmatpush1.bf16.msra.mxu0 0
    %7882 = vmatprep.subr.bf16.mxu0 0
    %7883 = vmatpush1.bf16.msra.mxu0 0
    %7884 = vmatprep.subr.bf16.mxu0 0
    %7885 = vmatpush1.bf16.msra.mxu0 0
    %7886 = vmatprep.subr.bf16.mxu0 0
    %7887 = vmatpush1.bf16.msra.mxu0 0
    %7888 = vmatprep.subr.bf16.mxu0 0
    %7889 = vmatpush1.bf16.msra.mxu0 0
    %7890 = vmatprep.subr.bf16.mxu0 0
    %7891 = vmatpush1.bf16.msra.mxu0 0
    %7892 = vmatprep.subr.bf16.mxu0 0
    %7893 = vmatpush1.bf16.msra.mxu0 0
    %7894 = vmatprep.subr.bf16.mxu0 0
    %7895 = vmatpush1.bf16.msra.mxu0 0
    %7896 = vmatprep.subr.bf16.mxu0 0
    %7897 = vmatpush1.bf16.msra.mxu0 0
    %7898 = vmatprep.subr.bf16.mxu0 0
    %7899 = vmatpush1.bf16.msra.mxu0 0
    %7900 = vmatprep.subr.bf16.mxu0 0
    %7901 = vmatpush1.bf16.msra.mxu0 0
    %7902 = vmatprep.mubr.bf16.mxu0 0
    %7903 = vmatmul.mubr.bf16.gmra.mrb[0].mxu0 %v7868
    %v7904 = vpop.f32.mrb[0].mxu0
    %v7905 = vadd.f32 %v7853, %v7904
    %v7906 = vpop.f32.mrb[0].mxu0
    %v7907 = vpop.f32.mrb[0].mxu0
    %v7908 = vadd.f32 %v7853, %v7907
    %v7909 = vpop.f32.mrb[0].mxu0
    %7910 = vdwg.mxu0
    %v7911 = vmul.f32 %v7905, 0.5
    %v7912 = vmul.f32 %v7908, 0.5
    %v7913 = vmul.f32 %v7905, 0.70710677
    %v7914 = vmul.f32 %v7908, 0.70710677
    %v7915 = verf.f32.pop %v7913
    %v7916 = verf.f32.pop %v7914
    %v7917 = vadd.f32 %v7915, 1.0
    %v7918 = vadd.f32 %v7916, 1.0
    %v7919 = vmul.f32 %v7911, %v7917
    %v7920 = vmul.f32 %v7912, %v7918
    %v7921 = vpack.c.bf16 %v7920, %v7919
    %v7922 = vld [vmem:[%s10] sm:$0xf]
    %v7923 = vld [vmem:[%s10 + $0x4] sm:$0xf]
    %v7924 = vld [vmem:[%s10 + $0x8] sm:$0xf]
    %v7925 = vld [vmem:[%s10 + $0xc] sm:$0xf]
    %v7926 = vld [vmem:[%s10 + $0x10] sm:$0xf]
    %v7927 = vld [vmem:[%s10 + $0x14] sm:$0xf]
    %v7928 = vld [vmem:[%s10 + $0x18] sm:$0xf]
    %v7929 = vld [vmem:[%s10 + $0x1c] sm:$0xf]
    %v7930 = vld [vmem:[%s10 + $0x20] sm:$0xf]
    %v7931 = vld [vmem:[%s10 + $0x24] sm:$0xf]
    %v7932 = vld [vmem:[%s10 + $0x28] sm:$0xf]
    %v7933 = vld [vmem:[%s10 + $0x2c] sm:$0xf]
    %v7934 = vld [vmem:[%s10 + $0x30] sm:$0xf]
    %v7935 = vld [vmem:[%s10 + $0x34] sm:$0xf]
    %v7936 = vld [vmem:[%s10 + $0x38] sm:$0xf]
    %v7937 = vld [vmem:[%s10 + $0x3c] sm:$0xf]
    %v7938 = vld [vmem:[%s11] sm:$0x1]
    %v7940 = vlaneseq
    %v7941 = vshrl.u32 %v7940, 7
    %v7942 = vsub.s32 0, %v7941
    %v7943 = vrot.slane %v7938, %v7942
    %v7961 = vunpack.c.l.b16 %v7922
    %v7962 = vunpack.c.l.b16 %v7923
    %v7963 = vunpack.c.l.b16 %v7924
    %v7964 = vunpack.c.l.b16 %v7925
    %v7965 = vunpack.c.l.b16 %v7926
    %v7966 = vunpack.c.l.b16 %v7927
    %v7967 = vunpack.c.l.b16 %v7928
    %v7968 = vunpack.c.l.b16 %v7929
    %v7969 = vunpack.c.l.b16 %v7930
    %v7970 = vunpack.c.l.b16 %v7931
    %v7971 = vunpack.c.l.b16 %v7932
    %v7972 = vunpack.c.l.b16 %v7933
    %v7973 = vunpack.c.l.b16 %v7934
    %v7974 = vunpack.c.l.b16 %v7935
    %v7975 = vunpack.c.l.b16 %v7936
    %v7976 = vunpack.c.l.b16 %v7937
    %v7977 = vpack.c.b16 %v7962, %v7961
    %v7978 = vpack.c.b16 %v7964, %v7963
    %v7979 = vpack.c.b16 %v7966, %v7965
    %v7980 = vpack.c.b16 %v7968, %v7967
    %v7981 = vpack.c.b16 %v7970, %v7969
    %v7982 = vpack.c.b16 %v7972, %v7971
    %v7983 = vpack.c.b16 %v7974, %v7973
    %v7984 = vpack.c.b16 %v7976, %v7975
    %7993 = vmatprep.subr.bf16.mxu0 0
    %7994 = vmatpush1.bf16.msra.mxu0 %v7977
    %7995 = vmatprep.subr.bf16.mxu0 0
    %7996 = vmatpush1.bf16.msra.mxu0 %v7978
    %7997 = vmatprep.subr.bf16.mxu0 0
    %7998 = vmatpush1.bf16.msra.mxu0 %v7979
    %7999 = vmatprep.subr.bf16.mxu0 0
    %8000 = vmatpush1.bf16.msra.mxu0 %v7980
    %8001 = vmatprep.subr.bf16.mxu0 0
    %8002 = vmatpush1.bf16.msra.mxu0 %v7981
    %8003 = vmatprep.subr.bf16.mxu0 0
    %8004 = vmatpush1.bf16.msra.mxu0 %v7982
    %8005 = vmatprep.subr.bf16.mxu0 0
    %8006 = vmatpush1.bf16.msra.mxu0 %v7983
    %8007 = vmatprep.subr.bf16.mxu0 0
    %8008 = vmatpush1.bf16.msra.mxu0 %v7984
    %8009 = vmatprep.subr.bf16.mxu0 0
    %8010 = vmatpush1.bf16.msra.mxu0 0
    %8011 = vmatprep.subr.bf16.mxu0 0
    %8012 = vmatpush1.bf16.msra.mxu0 0
    %8013 = vmatprep.subr.bf16.mxu0 0
    %8014 = vmatpush1.bf16.msra.mxu0 0
    %8015 = vmatprep.subr.bf16.mxu0 0
    %8016 = vmatpush1.bf16.msra.mxu0 0
    %8017 = vmatprep.subr.bf16.mxu0 0
    %8018 = vmatpush1.bf16.msra.mxu0 0
    %8019 = vmatprep.subr.bf16.mxu0 0
    %8020 = vmatpush1.bf16.msra.mxu0 0
    %8021 = vmatprep.subr.bf16.mxu0 0
    %8022 = vmatpush1.bf16.msra.mxu0 0
    %8023 = vmatprep.subr.bf16.mxu0 0
    %8024 = vmatpush1.bf16.msra.mxu0 0
    %8025 = vmatprep.mubr.bf16.mxu0 0
    %8026 = vmatmul.mubr.bf16.gmra.mrb[0].mxu0 %v7921
    %v8027 = vpop.f32.mrb[0].mxu0
    %v8028 = vadd.f32 %v7943, %v8027
    %v8029 = vpop.f32.mrb[0].mxu0
    %v8030 = vpop.f32.mrb[0].mxu0
    %v8031 = vadd.f32 %v7943, %v8030
    %v8032 = vpop.f32.mrb[0].mxu0
    %8033 = vdwg.mxu0
    %v8034 = vadd.f32 %v7841, %v8028
    %v8035 = vadd.f32 %v7842, %v8031
    %v8036 = vsel %vm87, %v8034, 0.0
    %8037 = vadd.xlane.f32.xlu0 %v8036
    %v8038 = vpop.xlane.xlu0 %8037
    %v8039 = vsel %vm87, %v8035, 0.0
    %8040 = vadd.xlane.f32.xlu0 %v8039
    %v8041 = vpop.xlane.xlu0 %8040
    %v8042 = vmul.f32 %v8038, %v4436
    %v8043 = vmul.f32 %v8041, %v4436
    %v8044 = vsub.f32 %v8034, %v8042
    %v8045 = vsub.f32 %v8035, %v8043
    %v8046 = vmul.f32 %v8044, %v8044
    %v8047 = vmul.f32 %v8045, %v8045
    %v8048 = vsel %vm87, %v8046, 0.0
    %8049 = vadd.xlane.f32.xlu0 %v8048
    %v8050 = vpop.xlane.xlu0 %8049
    %v8051 = vsel %vm87, %v8047, 0.0
    %8052 = vadd.xlane.f32.xlu0 %v8051
    %v8053 = vpop.xlane.xlu0 %8052
    %v8054 = vmul.f32 %v8050, %v4436
    %v8055 = vmul.f32 %v8053, %v4436
    %v8056 = vadd.f32 %v8054, 1e-05
    %v8057 = vadd.f32 %v8055, 1e-05
    %v8058 = vrsqrt.pop %v8056
    %v8059 = vrsqrt.pop %v8057
    %v8060 = vmul.f32 %v8044, %v8058
    %v8061 = vmul.f32 %v8045, %v8059
    %s8062 = scalar_lea.vmem %s6, 2
    %v8063 = vld [vmem:[%s8062] sm:$0x1]
    %v8065 = vlaneseq
    %v8066 = vshrl.u32 %v8065, 7
    %v8067 = vsub.s32 0, %v8066
    %v8068 = vrot.slane %v8063, %v8067
    %v8070 = vmul.f32 %v8060, %v8068
    %v8071 = vmul.f32 %v8061, %v8068
    %s8072 = scalar_lea.vmem %s7, 2
    %v8073 = vld [vmem:[%s8072] sm:$0x1]
    %v8075 = vlaneseq
    %v8076 = vshrl.u32 %v8075, 7
    %v8077 = vsub.s32 0, %v8076
    %v8078 = vrot.slane %v8073, %v8077
    %v8080 = vadd.f32 %v8070, %v8078
    %v8081 = vadd.f32 %v8071, %v8078
    %8082 = vst.msk [vmem:[#allocation3] sm:$0xff] %vm87, %v8080
    %8083 = vst.msk [vmem:[#allocation3 + $0x8] sm:$0xff] %vm87, %v8081
    // Predicated region
    $region50: #{rat_decoder_layer.1} parent=1 // pred_check
      _
    $region51: #{rat_decoder_layer.1} parent=1 // pred_check_branch
      %8085 = sbr.rel (0) target = $region53
    $region52: #{rat_decoder_layer.1} parent=1 // pred_region
      %s8087 = ssub.s32 256, 256
      %8088 = vsyncadd [#allocation4], %s8087
      %s8089 = sshll.u32 [#allocation3], 4
      %s8090 = int_to_ptr.vmem [resolvable:$true] %s8089
      %8095 = dma.vmem_to_hbm [thread:$0]  %s8090, 256, %s12, [#allocation4], 128, 128, 8
    $region53: #{rat_decoder_layer.1} parent=1 // pred_fallthru
      _
    // Predicated region
    $region54: #{rat_decoder_layer.1} parent=1 // pred_check
      _
    $region55: #{rat_decoder_layer.1} parent=1 // pred_check_branch
      %8097 = sbr.rel (0) target = $region57
    $region56: #{rat_decoder_layer.1} parent=1 // pred_region
      %8098 = dma.done [#allocation4], 256
    $region57: #{rat_decoder_layer.1} parent=1 // pred_fallthru
      _
    %8099 = vsyncpa [#allocation4], 1

</llo_original>
